<compile_context>
chip_gen: v7x
topology: tpu7x:2x2x1
jax: 0.10.0
libtpu: 0.0.40
codegen_flags: <defaults>
</compile_context>

<pallas_src>
import functools

import jax
import jax.numpy as jnp
import numpy as np
from jax.experimental import pallas as pl
from jax.experimental.pallas import tpu as pltpu


def _rating_kernel(uid_ref, iid_ref, u_tbl_ref, i_tbl_ref, o_ref, *,
                   lane_dense, precision):
    """One grid step = TB batch elements, fully vectorized.

    uid_ref / iid_ref : (TB, 1) int32 id columns for this tile (VMEM block)
    u_tbl_ref         : (n_user, D) f32, whole-array VMEM resident
    i_tbl_ref         : (n_item, D) f32, whole-array VMEM resident
    o_ref             : (TB//128, 128) f32 lane-dense block   (lane_dense=True)
                        (TB, 1)       f32 column block        (lane_dense=False)
    """
    uid = uid_ref[...]                                   # (TB, 1)
    iid = iid_ref[...]                                   # (TB, 1)
    u_tbl = u_tbl_ref[...]                               # (n_user, D)
    i_tbl = i_tbl_ref[...]                               # (n_item, D)
    tb = uid.shape[0]
    n_user = u_tbl.shape[0]
    n_item = i_tbl.shape[0]

    # One-hot gather on the MXU: onehot(ids) @ table.  Exact in f32 (each
    # gathered row is 1.0 * table row + 0.0 * the rest); keeps the gather off
    # the XLU / dynamic-sublane path entirely.
    u_oh = (uid == jax.lax.broadcasted_iota(jnp.int32, (tb, n_user), 1)
            ).astype(jnp.float32)
    i_oh = (iid == jax.lax.broadcasted_iota(jnp.int32, (tb, n_item), 1)
            ).astype(jnp.float32)
    u_rows = jnp.dot(u_oh, u_tbl, preferred_element_type=jnp.float32,
                     precision=precision)                # (TB, D)
    i_rows = jnp.dot(i_oh, i_tbl, preferred_element_type=jnp.float32,
                     precision=precision)                # (TB, D)

    # Per-row dot product: one VPU multiply pass + one lane reduction.
    prod = u_rows * i_rows                               # (TB, D)
    if lane_dense:
        # (TB,) -> (TB/128, 128): single unmasked full-tile store.
        o_ref[...] = jnp.sum(prod, axis=-1).reshape(o_ref.shape)
    else:
        # Fallback: (TB, 1) column output (no sublane->lane relayout needed).
        o_ref[...] = jnp.sum(prod, axis=-1, keepdims=True)


def _build_rating_call(n_tiles, tb, vmem_limit, semantics, lane_dense,
                       precision):
    sub = tb // 128
    if lane_dense:
        out_shape = jax.ShapeDtypeStruct((n_tiles * sub, 128), jnp.float32)
        out_spec = pl.BlockSpec((sub, 128), lambda t: (t, 0))
    else:
        out_shape = jax.ShapeDtypeStruct((n_tiles * tb, 1), jnp.float32)
        out_spec = pl.BlockSpec((tb, 1), lambda t: (t, 0))

    kernel = functools.partial(_rating_kernel, lane_dense=lane_dense,
                               precision=precision)
    return pl.pallas_call(
        kernel,
        out_shape=out_shape,
        grid=(n_tiles,),
        in_specs=[
            pl.BlockSpec((tb, 1), lambda t: (t, 0)),     # user ids tile
            pl.BlockSpec((tb, 1), lambda t: (t, 0)),     # item ids tile
            # Whole tables, VMEM-resident for the entire grid (single copy,
            # no double-buffer duplication).
            pl.BlockSpec(memory_space=pltpu.MemorySpace.VMEM),
            pl.BlockSpec(memory_space=pltpu.MemorySpace.VMEM),
        ],
        out_specs=out_spec,
        compiler_params=pltpu.CompilerParams(
            dimension_semantics=semantics,
            vmem_limit_bytes=vmem_limit),
    )


def predict_ratings(user_idx, item_idx, embd_user, embd_item, *,
                    tile_batch=1024):
    """Pallas equivalent of Model.forward (eval mode).

    user_idx, item_idx: (B,) integer ids
    embd_user: (user_size, D) f32;  embd_item: (item_size, D) f32
    Returns: (B,) f32 ratings.
    """
    B = user_idx.shape[0]
    n_user, d = embd_user.shape
    n_item, d_i = embd_item.shape
    assert d == d_i

    # Batch tile: one 128-multiple tile for small batches (block == full array,
    # always layout-legal); otherwise 1024-element tiles so the lane-dense
    # output blocks are (8, 128)-aligned.
    if B <= tile_batch:
        tb = ((max(B, 1) + 127) // 128) * 128
    else:
        tb = tile_batch
    n_tiles = pl.cdiv(B, tb)
    b_pad = n_tiles * tb

    # Padded slots gather row 0 and are sliced off at the end.
    uid = jnp.pad(user_idx.astype(jnp.int32), (0, b_pad - B)).reshape(b_pad, 1)
    iid = jnp.pad(item_idx.astype(jnp.int32), (0, b_pad - B)).reshape(b_pad, 1)

    # Scoped VMEM budget: single-copy resident tables + id/out blocks + slack,
    # capped below the physical per-core VMEM (64 MiB on v7x, 128 MiB v5e/v6e).
    table_bytes = (n_user + n_item) * d * 4
    try:
        hw_vmem = int(pltpu.get_tpu_info().vmem_capacity_bytes)
    except Exception:
        hw_vmem = 64 * 1024 * 1024        # conservative: v7x per-TensorCore
    need = table_bytes + 16 * tb * 4 + (4 << 20)
    vmem_limit = int(min(max(need, 32 << 20), hw_vmem - (4 << 20)))

    # Megacore: sharding tiles across TensorCores duplicates the resident
    # tables, so only worth it when there are enough independent tiles.
    semantics = ("parallel",) if n_tiles >= 4 else ("arbitrary",)

    def run(lane_dense, precision):
        call = _build_rating_call(n_tiles, tb, vmem_limit, semantics,
                                  lane_dense, precision)
        out = call(uid, iid, embd_user, embd_item)
        return jax.block_until_ready(out)

    # Preference order:  lane-dense output + HIGHEST-precision f32 gather.
    # Fallbacks only exist to stay robust against Mosaic versions that reject
    # the final sublane->lane reshape or an explicit matmul precision; the
    # math is identical in every variant.
    attempts = (
        dict(lane_dense=True, precision=jax.lax.Precision.HIGHEST),
        dict(lane_dense=True, precision=None),
        dict(lane_dense=False, precision=jax.lax.Precision.HIGHEST),
        dict(lane_dense=False, precision=None),
    )
    out = None
    last_err = None
    for cfg in attempts:
        try:
            out = run(**cfg)
            break
        except Exception as e:            # lowering/compile rejection -> next
            last_err = e
    if out is None:
        raise last_err

    # torch.bmm((B,1,D),(B,D,1)).squeeze() -> (B,)
    return out.reshape(-1)[:B]


if __name__ == "__main__":
    key = jax.random.PRNGKey(0)

    def run_case(user_size, item_size, embd_dim, batch, case_key):
        k_u, k_i, k_uid, k_iid = jax.random.split(case_key, 4)
        # nn.Embedding default init ~ N(0, 1); deterministic here.
        embd_user = jax.random.normal(k_u, (user_size, embd_dim),
                                      dtype=jnp.float32)
        embd_item = jax.random.normal(k_i, (item_size, embd_dim),
                                      dtype=jnp.float32)
        user = jax.random.randint(k_uid, (batch,), 0, user_size,
                                  dtype=jnp.int32)
        item = jax.random.randint(k_iid, (batch,), 0, item_size,
                                  dtype=jnp.int32)

        got = jax.block_until_ready(
            predict_ratings(user, item, embd_user, embd_item))
        assert got.shape == (batch,)

        # Pure-JAX reference (eval-mode forward).
        ref = jnp.sum(embd_user[user] * embd_item[item], axis=-1)
        np.testing.assert_allclose(np.asarray(got), np.asarray(ref),
                                   rtol=1e-4, atol=2e-4)

    k1, k2 = jax.random.split(key)
    # Small single-tile case (matches the module-style tiny config) and a
    # multi-tile case exercising the real (8,128)-blocked grid path.
    run_case(user_size=64, item_size=48, embd_dim=128, batch=8, case_key=k1)
    run_case(user_size=200, item_size=112, embd_dim=96, batch=2500, case_key=k2)

    print("KERNEL_OK")
</pallas_src>

<mosaic_0001>
module attributes {stable_mosaic.version = 11 : i64} {
  func.func @_rating_kernel(%arg0: i32, %arg1: memref<128x1xi32, #tpu.memory_space<vmem>>, %arg2: memref<128x1xi32, #tpu.memory_space<vmem>>, %arg3: memref<64x128xf32, #tpu.memory_space<vmem>>, %arg4: memref<48x128xf32, #tpu.memory_space<vmem>>, %arg5: memref<1x128xf32, #tpu.memory_space<vmem>>) attributes {dimension_semantics = [#tpu.dimension_semantics<arbitrary>], iteration_bounds = array<i64: 1>, scalar_prefetch = 0 : i64, scratch_operands = 0 : i64, tpu.core_type = #tpu.core_type<tc>, window_params = [{transform_indices = @transform_0, window_bounds = array<i64: 128, 1>}, {transform_indices = @transform_1, window_bounds = array<i64: 128, 1>}, {pipeline_mode = #tpu.pipeline_mode<synchronous>, transform_indices = @transform_2, window_bounds = array<i64: 64, 128>}, {pipeline_mode = #tpu.pipeline_mode<synchronous>, transform_indices = @transform_3, window_bounds = array<i64: 48, 128>}, {transform_indices = @transform_4, window_bounds = array<i64: 1, 128>}]} {
    %c0 = arith.constant 0 : index
    %c0_0 = arith.constant 0 : index
    %0 = vector.load %arg1[%c0, %c0_0] : memref<128x1xi32, #tpu.memory_space<vmem>>, vector<128x1xi32>
    %c0_1 = arith.constant 0 : index
    %c0_2 = arith.constant 0 : index
    %1 = vector.load %arg2[%c0_1, %c0_2] : memref<128x1xi32, #tpu.memory_space<vmem>>, vector<128x1xi32>
    %c0_3 = arith.constant 0 : index
    %c0_4 = arith.constant 0 : index
    %2 = vector.load %arg3[%c0_3, %c0_4] : memref<64x128xf32, #tpu.memory_space<vmem>>, vector<64x128xf32>
    %c0_5 = arith.constant 0 : index
    %c0_6 = arith.constant 0 : index
    %3 = vector.load %arg4[%c0_5, %c0_6] : memref<48x128xf32, #tpu.memory_space<vmem>>, vector<48x128xf32>
    %4 = tpu.iota {dimensions = array<i32: 1>} : vector<128x64xi32>
    %5 = vector.broadcast %0 : vector<128x1xi32> to vector<128x64xi32>
    %6 = arith.cmpi eq, %5, %4 : vector<128x64xi32>
    %7 = arith.extui %6 : vector<128x64xi1> to vector<128x64xi32>
    %8 = arith.sitofp %7 : vector<128x64xi32> to vector<128x64xf32>
    %9 = tpu.iota {dimensions = array<i32: 1>} : vector<128x48xi32>
    %10 = vector.broadcast %1 : vector<128x1xi32> to vector<128x48xi32>
    %11 = arith.cmpi eq, %10, %9 : vector<128x48xi32>
    %12 = arith.extui %11 : vector<128x48xi1> to vector<128x48xi32>
    %13 = arith.sitofp %12 : vector<128x48xi32> to vector<128x48xf32>
    %cst = arith.constant dense<0.000000e+00> : vector<128x128xf32>
    %14 = tpu.matmul %8, %2, %cst {dimension_numbers = #tpu.dot_dimension_numbers<[1], [0], [0], [1], [0, 0, 1, 1], [], []>, precision = #tpu.contract_precision<fp32>} : vector<128x64xf32>, vector<64x128xf32>, vector<128x128xf32> -> vector<128x128xf32>
    %cst_7 = arith.constant dense<0.000000e+00> : vector<128x128xf32>
    %15 = tpu.matmul %13, %3, %cst_7 {dimension_numbers = #tpu.dot_dimension_numbers<[1], [0], [0], [1], [0, 0, 1, 1], [], []>, precision = #tpu.contract_precision<fp32>} : vector<128x48xf32>, vector<48x128xf32>, vector<128x128xf32> -> vector<128x128xf32>
    %16 = arith.mulf %14, %15 : vector<128x128xf32>
    %cst_8 = arith.constant dense<0.000000e+00> : vector<128xf32>
    %17 = vector.multi_reduction <add>, %16, %cst_8 [1] : vector<128x128xf32> to vector<128xf32>
    %18 = vector.shape_cast %17 : vector<128xf32> to vector<1x128xf32>
    %c0_9 = arith.constant 0 : index
    %c0_10 = arith.constant 0 : index
    %19 = vector.load %arg5[%c0_9, %c0_10] : memref<1x128xf32, #tpu.memory_space<vmem>>, vector<1x128xf32>
    tpu.vector_store %arg5[%c0_9, %c0_10], %18 {strides = array<i32>} : memref<1x128xf32, #tpu.memory_space<vmem>>, vector<1x128xf32>,
    return
  }
  func.func @transform_0(%arg0: i32) -> (i32, i32) {
    %c0_i32 = arith.constant 0 : i32
    %c0_i32_0 = arith.constant 0 : i32
    return %arg0, %c0_i32 : i32, i32
  }
  func.func @transform_1(%arg0: i32) -> (i32, i32) {
    %c0_i32 = arith.constant 0 : i32
    %c0_i32_0 = arith.constant 0 : i32
    return %arg0, %c0_i32 : i32, i32
  }
  func.func @transform_2(%arg0: i32) -> (i32, i32) {
    %c0_i32 = arith.constant 0 : i32
    %c0_i32_0 = arith.constant 0 : i32
    %c0_i32_1 = arith.constant 0 : i32
    return %c0_i32, %c0_i32_0 : i32, i32
  }
  func.func @transform_3(%arg0: i32) -> (i32, i32) {
    %c0_i32 = arith.constant 0 : i32
    %c0_i32_0 = arith.constant 0 : i32
    %c0_i32_1 = arith.constant 0 : i32
    return %c0_i32, %c0_i32_0 : i32, i32
  }
  func.func @transform_4(%arg0: i32) -> (i32, i32) {
    %c0_i32 = arith.constant 0 : i32
    %c0_i32_0 = arith.constant 0 : i32
    return %arg0, %c0_i32 : i32, i32
  }
}

module attributes {stable_mosaic.version = 11 : i64} {
  func.func @_rating_kernel(%arg0: i32, %arg1: memref<128x1xi32, #tpu.memory_space<vmem>>, %arg2: memref<128x1xi32, #tpu.memory_space<vmem>>, %arg3: memref<64x128xf32, #tpu.memory_space<vmem>>, %arg4: memref<48x128xf32, #tpu.memory_space<vmem>>, %arg5: memref<1x128xf32, #tpu.memory_space<vmem>>) attributes {dimension_semantics = [#tpu.dimension_semantics<arbitrary>], iteration_bounds = array<i64: 1>, scalar_prefetch = 0 : i64, scratch_operands = 0 : i64, tpu.core_type = #tpu.core_type<tc>, window_params = [{transform_indices = @transform_0, window_bounds = array<i64: 128, 1>}, {transform_indices = @transform_1, window_bounds = array<i64: 128, 1>}, {pipeline_mode = #tpu.pipeline_mode<synchronous>, transform_indices = @transform_2, window_bounds = array<i64: 64, 128>}, {pipeline_mode = #tpu.pipeline_mode<synchronous>, transform_indices = @transform_3, window_bounds = array<i64: 48, 128>}, {transform_indices = @transform_4, window_bounds = array<i64: 1, 128>}]} {
    %c0 = arith.constant 0 : index
    %c0_0 = arith.constant 0 : index
    %0 = vector.load %arg1[%c0, %c0_0] : memref<128x1xi32, #tpu.memory_space<vmem>>, vector<128x1xi32>
    %c0_1 = arith.constant 0 : index
    %c0_2 = arith.constant 0 : index
    %1 = vector.load %arg2[%c0_1, %c0_2] : memref<128x1xi32, #tpu.memory_space<vmem>>, vector<128x1xi32>
    %c0_3 = arith.constant 0 : index
    %c0_4 = arith.constant 0 : index
    %2 = vector.load %arg3[%c0_3, %c0_4] : memref<64x128xf32, #tpu.memory_space<vmem>>, vector<64x128xf32>
    %c0_5 = arith.constant 0 : index
    %c0_6 = arith.constant 0 : index
    %3 = vector.load %arg4[%c0_5, %c0_6] : memref<48x128xf32, #tpu.memory_space<vmem>>, vector<48x128xf32>
    %4 = tpu.iota {dimensions = array<i32: 1>} : vector<128x64xi32>
    %5 = vector.broadcast %0 : vector<128x1xi32> to vector<128x64xi32>
    %6 = arith.cmpi eq, %5, %4 : vector<128x64xi32>
    %7 = arith.extui %6 : vector<128x64xi1> to vector<128x64xi32>
    %8 = arith.sitofp %7 : vector<128x64xi32> to vector<128x64xf32>
    %9 = tpu.iota {dimensions = array<i32: 1>} : vector<128x48xi32>
    %10 = vector.broadcast %1 : vector<128x1xi32> to vector<128x48xi32>
    %11 = arith.cmpi eq, %10, %9 : vector<128x48xi32>
    %12 = arith.extui %11 : vector<128x48xi1> to vector<128x48xi32>
    %13 = arith.sitofp %12 : vector<128x48xi32> to vector<128x48xf32>
    %cst = arith.constant dense<0.000000e+00> : vector<128x128xf32>
    %14 = tpu.matmul %8, %2, %cst {dimension_numbers = #tpu.dot_dimension_numbers<[1], [0], [0], [1], [0, 0, 1, 1], [], []>} : vector<128x64xf32>, vector<64x128xf32>, vector<128x128xf32> -> vector<128x128xf32>
    %cst_7 = arith.constant dense<0.000000e+00> : vector<128x128xf32>
    %15 = tpu.matmul %13, %3, %cst_7 {dimension_numbers = #tpu.dot_dimension_numbers<[1], [0], [0], [1], [0, 0, 1, 1], [], []>} : vector<128x48xf32>, vector<48x128xf32>, vector<128x128xf32> -> vector<128x128xf32>
    %16 = arith.mulf %14, %15 : vector<128x128xf32>
    %cst_8 = arith.constant dense<0.000000e+00> : vector<128xf32>
    %17 = vector.multi_reduction <add>, %16, %cst_8 [1] : vector<128x128xf32> to vector<128xf32>
    %18 = vector.shape_cast %17 : vector<128xf32> to vector<1x128xf32>
    %c0_9 = arith.constant 0 : index
    %c0_10 = arith.constant 0 : index
    %19 = vector.load %arg5[%c0_9, %c0_10] : memref<1x128xf32, #tpu.memory_space<vmem>>, vector<1x128xf32>
    tpu.vector_store %arg5[%c0_9, %c0_10], %18 {strides = array<i32>} : memref<1x128xf32, #tpu.memory_space<vmem>>, vector<1x128xf32>,
    return
  }
  func.func @transform_0(%arg0: i32) -> (i32, i32) {
    %c0_i32 = arith.constant 0 : i32
    %c0_i32_0 = arith.constant 0 : i32
    return %arg0, %c0_i32 : i32, i32
  }
  func.func @transform_1(%arg0: i32) -> (i32, i32) {
    %c0_i32 = arith.constant 0 : i32
    %c0_i32_0 = arith.constant 0 : i32
    return %arg0, %c0_i32 : i32, i32
  }
  func.func @transform_2(%arg0: i32) -> (i32, i32) {
    %c0_i32 = arith.constant 0 : i32
    %c0_i32_0 = arith.constant 0 : i32
    %c0_i32_1 = arith.constant 0 : i32
    return %c0_i32, %c0_i32_0 : i32, i32
  }
  func.func @transform_3(%arg0: i32) -> (i32, i32) {
    %c0_i32 = arith.constant 0 : i32
    %c0_i32_0 = arith.constant 0 : i32
    %c0_i32_1 = arith.constant 0 : i32
    return %c0_i32, %c0_i32_0 : i32, i32
  }
  func.func @transform_4(%arg0: i32) -> (i32, i32) {
    %c0_i32 = arith.constant 0 : i32
    %c0_i32_0 = arith.constant 0 : i32
    return %arg0, %c0_i32 : i32, i32
  }
}

module attributes {stable_mosaic.version = 11 : i64} {
  func.func @_rating_kernel(%arg0: i32, %arg1: memref<128x1xi32, #tpu.memory_space<vmem>>, %arg2: memref<128x1xi32, #tpu.memory_space<vmem>>, %arg3: memref<64x128xf32, #tpu.memory_space<vmem>>, %arg4: memref<48x128xf32, #tpu.memory_space<vmem>>, %arg5: memref<128x1xf32, #tpu.memory_space<vmem>>) attributes {dimension_semantics = [#tpu.dimension_semantics<arbitrary>], iteration_bounds = array<i64: 1>, scalar_prefetch = 0 : i64, scratch_operands = 0 : i64, tpu.core_type = #tpu.core_type<tc>, window_params = [{transform_indices = @transform_0, window_bounds = array<i64: 128, 1>}, {transform_indices = @transform_1, window_bounds = array<i64: 128, 1>}, {pipeline_mode = #tpu.pipeline_mode<synchronous>, transform_indices = @transform_2, window_bounds = array<i64: 64, 128>}, {pipeline_mode = #tpu.pipeline_mode<synchronous>, transform_indices = @transform_3, window_bounds = array<i64: 48, 128>}, {transform_indices = @transform_4, window_bounds = array<i64: 128, 1>}]} {
    %c0 = arith.constant 0 : index
    %c0_0 = arith.constant 0 : index
    %0 = vector.load %arg1[%c0, %c0_0] : memref<128x1xi32, #tpu.memory_space<vmem>>, vector<128x1xi32>
    %c0_1 = arith.constant 0 : index
    %c0_2 = arith.constant 0 : index
    %1 = vector.load %arg2[%c0_1, %c0_2] : memref<128x1xi32, #tpu.memory_space<vmem>>, vector<128x1xi32>
    %c0_3 = arith.constant 0 : index
    %c0_4 = arith.constant 0 : index
    %2 = vector.load %arg3[%c0_3, %c0_4] : memref<64x128xf32, #tpu.memory_space<vmem>>, vector<64x128xf32>
    %c0_5 = arith.constant 0 : index
    %c0_6 = arith.constant 0 : index
    %3 = vector.load %arg4[%c0_5, %c0_6] : memref<48x128xf32, #tpu.memory_space<vmem>>, vector<48x128xf32>
    %4 = tpu.iota {dimensions = array<i32: 1>} : vector<128x64xi32>
    %5 = vector.broadcast %0 : vector<128x1xi32> to vector<128x64xi32>
    %6 = arith.cmpi eq, %5, %4 : vector<128x64xi32>
    %7 = arith.extui %6 : vector<128x64xi1> to vector<128x64xi32>
    %8 = arith.sitofp %7 : vector<128x64xi32> to vector<128x64xf32>
    %9 = tpu.iota {dimensions = array<i32: 1>} : vector<128x48xi32>
    %10 = vector.broadcast %1 : vector<128x1xi32> to vector<128x48xi32>
    %11 = arith.cmpi eq, %10, %9 : vector<128x48xi32>
    %12 = arith.extui %11 : vector<128x48xi1> to vector<128x48xi32>
    %13 = arith.sitofp %12 : vector<128x48xi32> to vector<128x48xf32>
    %cst = arith.constant dense<0.000000e+00> : vector<128x128xf32>
    %14 = tpu.matmul %8, %2, %cst {dimension_numbers = #tpu.dot_dimension_numbers<[1], [0], [0], [1], [0, 0, 1, 1], [], []>, precision = #tpu.contract_precision<fp32>} : vector<128x64xf32>, vector<64x128xf32>, vector<128x128xf32> -> vector<128x128xf32>
    %cst_7 = arith.constant dense<0.000000e+00> : vector<128x128xf32>
    %15 = tpu.matmul %13, %3, %cst_7 {dimension_numbers = #tpu.dot_dimension_numbers<[1], [0], [0], [1], [0, 0, 1, 1], [], []>, precision = #tpu.contract_precision<fp32>} : vector<128x48xf32>, vector<48x128xf32>, vector<128x128xf32> -> vector<128x128xf32>
    %16 = arith.mulf %14, %15 : vector<128x128xf32>
    %cst_8 = arith.constant dense<0.000000e+00> : vector<128xf32>
    %17 = vector.multi_reduction <add>, %16, %cst_8 [1] : vector<128x128xf32> to vector<128xf32>
    %18 = vector.shape_cast %17 : vector<128xf32> to vector<128x1xf32>
    %c0_9 = arith.constant 0 : index
    %c0_10 = arith.constant 0 : index
    %19 = vector.load %arg5[%c0_9, %c0_10] : memref<128x1xf32, #tpu.memory_space<vmem>>, vector<128x1xf32>
    tpu.vector_store %arg5[%c0_9, %c0_10], %18 {strides = array<i32>} : memref<128x1xf32, #tpu.memory_space<vmem>>, vector<128x1xf32>,
    return
  }
  func.func @transform_0(%arg0: i32) -> (i32, i32) {
    %c0_i32 = arith.constant 0 : i32
    %c0_i32_0 = arith.constant 0 : i32
    return %arg0, %c0_i32 : i32, i32
  }
  func.func @transform_1(%arg0: i32) -> (i32, i32) {
    %c0_i32 = arith.constant 0 : i32
    %c0_i32_0 = arith.constant 0 : i32
    return %arg0, %c0_i32 : i32, i32
  }
  func.func @transform_2(%arg0: i32) -> (i32, i32) {
    %c0_i32 = arith.constant 0 : i32
    %c0_i32_0 = arith.constant 0 : i32
    %c0_i32_1 = arith.constant 0 : i32
    return %c0_i32, %c0_i32_0 : i32, i32
  }
  func.func @transform_3(%arg0: i32) -> (i32, i32) {
    %c0_i32 = arith.constant 0 : i32
    %c0_i32_0 = arith.constant 0 : i32
    %c0_i32_1 = arith.constant 0 : i32
    return %c0_i32, %c0_i32_0 : i32, i32
  }
  func.func @transform_4(%arg0: i32) -> (i32, i32) {
    %c0_i32 = arith.constant 0 : i32
    %c0_i32_0 = arith.constant 0 : i32
    return %arg0, %c0_i32 : i32, i32
  }
}

module attributes {stable_mosaic.version = 11 : i64} {
  func.func @_rating_kernel(%arg0: i32, %arg1: memref<128x1xi32, #tpu.memory_space<vmem>>, %arg2: memref<128x1xi32, #tpu.memory_space<vmem>>, %arg3: memref<64x128xf32, #tpu.memory_space<vmem>>, %arg4: memref<48x128xf32, #tpu.memory_space<vmem>>, %arg5: memref<128x1xf32, #tpu.memory_space<vmem>>) attributes {dimension_semantics = [#tpu.dimension_semantics<arbitrary>], iteration_bounds = array<i64: 1>, scalar_prefetch = 0 : i64, scratch_operands = 0 : i64, tpu.core_type = #tpu.core_type<tc>, window_params = [{transform_indices = @transform_0, window_bounds = array<i64: 128, 1>}, {transform_indices = @transform_1, window_bounds = array<i64: 128, 1>}, {pipeline_mode = #tpu.pipeline_mode<synchronous>, transform_indices = @transform_2, window_bounds = array<i64: 64, 128>}, {pipeline_mode = #tpu.pipeline_mode<synchronous>, transform_indices = @transform_3, window_bounds = array<i64: 48, 128>}, {transform_indices = @transform_4, window_bounds = array<i64: 128, 1>}]} {
    %c0 = arith.constant 0 : index
    %c0_0 = arith.constant 0 : index
    %0 = vector.load %arg1[%c0, %c0_0] : memref<128x1xi32, #tpu.memory_space<vmem>>, vector<128x1xi32>
    %c0_1 = arith.constant 0 : index
    %c0_2 = arith.constant 0 : index
    %1 = vector.load %arg2[%c0_1, %c0_2] : memref<128x1xi32, #tpu.memory_space<vmem>>, vector<128x1xi32>
    %c0_3 = arith.constant 0 : index
    %c0_4 = arith.constant 0 : index
    %2 = vector.load %arg3[%c0_3, %c0_4] : memref<64x128xf32, #tpu.memory_space<vmem>>, vector<64x128xf32>
    %c0_5 = arith.constant 0 : index
    %c0_6 = arith.constant 0 : index
    %3 = vector.load %arg4[%c0_5, %c0_6] : memref<48x128xf32, #tpu.memory_space<vmem>>, vector<48x128xf32>
    %4 = tpu.iota {dimensions = array<i32: 1>} : vector<128x64xi32>
    %5 = vector.broadcast %0 : vector<128x1xi32> to vector<128x64xi32>
    %6 = arith.cmpi eq, %5, %4 : vector<128x64xi32>
    %7 = arith.extui %6 : vector<128x64xi1> to vector<128x64xi32>
    %8 = arith.sitofp %7 : vector<128x64xi32> to vector<128x64xf32>
    %9 = tpu.iota {dimensions = array<i32: 1>} : vector<128x48xi32>
    %10 = vector.broadcast %1 : vector<128x1xi32> to vector<128x48xi32>
    %11 = arith.cmpi eq, %10, %9 : vector<128x48xi32>
    %12 = arith.extui %11 : vector<128x48xi1> to vector<128x48xi32>
    %13 = arith.sitofp %12 : vector<128x48xi32> to vector<128x48xf32>
    %cst = arith.constant dense<0.000000e+00> : vector<128x128xf32>
    %14 = tpu.matmul %8, %2, %cst {dimension_numbers = #tpu.dot_dimension_numbers<[1], [0], [0], [1], [0, 0, 1, 1], [], []>} : vector<128x64xf32>, vector<64x128xf32>, vector<128x128xf32> -> vector<128x128xf32>
    %cst_7 = arith.constant dense<0.000000e+00> : vector<128x128xf32>
    %15 = tpu.matmul %13, %3, %cst_7 {dimension_numbers = #tpu.dot_dimension_numbers<[1], [0], [0], [1], [0, 0, 1, 1], [], []>} : vector<128x48xf32>, vector<48x128xf32>, vector<128x128xf32> -> vector<128x128xf32>
    %16 = arith.mulf %14, %15 : vector<128x128xf32>
    %cst_8 = arith.constant dense<0.000000e+00> : vector<128xf32>
    %17 = vector.multi_reduction <add>, %16, %cst_8 [1] : vector<128x128xf32> to vector<128xf32>
    %18 = vector.shape_cast %17 : vector<128xf32> to vector<128x1xf32>
    %c0_9 = arith.constant 0 : index
    %c0_10 = arith.constant 0 : index
    %19 = vector.load %arg5[%c0_9, %c0_10] : memref<128x1xf32, #tpu.memory_space<vmem>>, vector<128x1xf32>
    tpu.vector_store %arg5[%c0_9, %c0_10], %18 {strides = array<i32>} : memref<128x1xf32, #tpu.memory_space<vmem>>, vector<128x1xf32>,
    return
  }
  func.func @transform_0(%arg0: i32) -> (i32, i32) {
    %c0_i32 = arith.constant 0 : i32
    %c0_i32_0 = arith.constant 0 : i32
    return %arg0, %c0_i32 : i32, i32
  }
  func.func @transform_1(%arg0: i32) -> (i32, i32) {
    %c0_i32 = arith.constant 0 : i32
    %c0_i32_0 = arith.constant 0 : i32
    return %arg0, %c0_i32 : i32, i32
  }
  func.func @transform_2(%arg0: i32) -> (i32, i32) {
    %c0_i32 = arith.constant 0 : i32
    %c0_i32_0 = arith.constant 0 : i32
    %c0_i32_1 = arith.constant 0 : i32
    return %c0_i32, %c0_i32_0 : i32, i32
  }
  func.func @transform_3(%arg0: i32) -> (i32, i32) {
    %c0_i32 = arith.constant 0 : i32
    %c0_i32_0 = arith.constant 0 : i32
    %c0_i32_1 = arith.constant 0 : i32
    return %c0_i32, %c0_i32_0 : i32, i32
  }
  func.func @transform_4(%arg0: i32) -> (i32, i32) {
    %c0_i32 = arith.constant 0 : i32
    %c0_i32_0 = arith.constant 0 : i32
    return %arg0, %c0_i32 : i32, i32
  }
}

</mosaic_0001>

<llo_original>
// kernel: tpu_custom_call.1
$region0: #{tpu_custom_call.1}
  #allocation0 [shape = 'u32[]', space=smem, size = 0x4, offset = 0x4, fixed_abs, tag = 'smem constant byte address 0x4 - core index']
  #allocation1 [shape = 'u32[144,128]{1,0:T(1,128)}', space=vmem, size = 0x12000, scoped, tag = 'internal scratch']
  %s0 = inlined_call_operand.vmem [shape: s32[128,1], index: 0, kind: input, shape index: {}]
  %s1 = inlined_call_operand.vmem [shape: s32[128,1], index: 1, kind: input, shape index: {}]
  %s2 = inlined_call_operand.vmem [shape: f32[64,128], index: 2, kind: input, shape index: {}]
  %s3 = inlined_call_operand.vmem [shape: f32[48,128], index: 3, kind: input, shape index: {}]
  %s4 = inlined_call_operand.hbm [shape: f32[1,128], index: 4, kind: output, shape index: {}]
  %s5 = sld [smem:[#allocation0]]
  $region26: #{tpu_custom_call.1} parent=0
    _
  %s7 = ssub.s32 1, %s5
  %s8 = scalar_select 0, %s7, %s5
  $region1: #{tpu_custom_call.1} parent=0
    #allocation2 [shape = 'u8[512]{0}', space=vmem, size = 0x400, scoped, tag = 'output window, operand 0, single buffered']
    #allocation3 [shape = 's32[1]{0}', space=sflag, size = 0x4, scoped, tag = 'scoped memory for tpu_custom_call.1']
    %9 = vsyncpa [#allocation3], 0
    // Predicated region
    $region2: #{tpu_custom_call.1} parent=1 // pred_check
      _
    $region3: #{tpu_custom_call.1} parent=1 // pred_check_branch
      %11 = sbr.rel (0) target = $region5
    $region4: #{tpu_custom_call.1} parent=1 // pred_region
      _
    $region5: #{tpu_custom_call.1} parent=1 // pred_fallthru
      _
    // Predicated region
    $region6: #{tpu_custom_call.1} parent=1 // pred_check
      _
    $region7: #{tpu_custom_call.1} parent=1 // pred_check_branch
      %13 = sbr.rel (0) target = $region9
    $region8: #{tpu_custom_call.1} parent=1 // pred_region
      _
    $region9: #{tpu_custom_call.1} parent=1 // pred_fallthru
      _
    // Predicated region
    $region10: #{tpu_custom_call.1} parent=1 // pred_check
      _
    $region11: #{tpu_custom_call.1} parent=1 // pred_check_branch
      %15 = sbr.rel (0) target = $region13
    $region12: #{tpu_custom_call.1} parent=1 // pred_region
      _
    $region13: #{tpu_custom_call.1} parent=1 // pred_fallthru
      _
    // Predicated region
    $region14: #{tpu_custom_call.1} parent=1 // pred_check
      _
    $region15: #{tpu_custom_call.1} parent=1 // pred_check_branch
      %17 = sbr.rel (0) target = $region17
    $region16: #{tpu_custom_call.1} parent=1 // pred_region
      _
    $region17: #{tpu_custom_call.1} parent=1 // pred_fallthru
      _
    %v18 = vld [vmem:[%s0] sm:$0xff]
    %v19 = vld [vmem:[%s0 + $0x8] sm:$0xff]
    %v20 = vld [vmem:[%s0 + $0x10] sm:$0xff]
    %v21 = vld [vmem:[%s0 + $0x18] sm:$0xff]
    %v22 = vld [vmem:[%s0 + $0x20] sm:$0xff]
    %v23 = vld [vmem:[%s0 + $0x28] sm:$0xff]
    %v24 = vld [vmem:[%s0 + $0x30] sm:$0xff]
    %v25 = vld [vmem:[%s0 + $0x38] sm:$0xff]
    %v26 = vld [vmem:[%s0 + $0x40] sm:$0xff]
    %v27 = vld [vmem:[%s0 + $0x48] sm:$0xff]
    %v28 = vld [vmem:[%s0 + $0x50] sm:$0xff]
    %v29 = vld [vmem:[%s0 + $0x58] sm:$0xff]
    %v30 = vld [vmem:[%s0 + $0x60] sm:$0xff]
    %v31 = vld [vmem:[%s0 + $0x68] sm:$0xff]
    %v32 = vld [vmem:[%s0 + $0x70] sm:$0xff]
    %v33 = vld [vmem:[%s0 + $0x78] sm:$0xff]
    %v34 = vld [vmem:[%s1] sm:$0xff]
    %v35 = vld [vmem:[%s1 + $0x8] sm:$0xff]
    %v36 = vld [vmem:[%s1 + $0x10] sm:$0xff]
    %v37 = vld [vmem:[%s1 + $0x18] sm:$0xff]
    %v38 = vld [vmem:[%s1 + $0x20] sm:$0xff]
    %v39 = vld [vmem:[%s1 + $0x28] sm:$0xff]
    %v40 = vld [vmem:[%s1 + $0x30] sm:$0xff]
    %v41 = vld [vmem:[%s1 + $0x38] sm:$0xff]
    %v42 = vld [vmem:[%s1 + $0x40] sm:$0xff]
    %v43 = vld [vmem:[%s1 + $0x48] sm:$0xff]
    %v44 = vld [vmem:[%s1 + $0x50] sm:$0xff]
    %v45 = vld [vmem:[%s1 + $0x58] sm:$0xff]
    %v46 = vld [vmem:[%s1 + $0x60] sm:$0xff]
    %v47 = vld [vmem:[%s1 + $0x68] sm:$0xff]
    %v48 = vld [vmem:[%s1 + $0x70] sm:$0xff]
    %v49 = vld [vmem:[%s1 + $0x78] sm:$0xff]
    %v50 = vld [vmem:[%s2] sm:$0xff]
    %v51 = vld [vmem:[%s2 + $0x8] sm:$0xff]
    %v52 = vld [vmem:[%s2 + $0x10] sm:$0xff]
    %v53 = vld [vmem:[%s2 + $0x18] sm:$0xff]
    %v54 = vld [vmem:[%s2 + $0x20] sm:$0xff]
    %v55 = vld [vmem:[%s2 + $0x28] sm:$0xff]
    %v56 = vld [vmem:[%s2 + $0x30] sm:$0xff]
    %v57 = vld [vmem:[%s2 + $0x38] sm:$0xff]
    %v58 = vld [vmem:[%s3] sm:$0xff]
    %v59 = vld [vmem:[%s3 + $0x8] sm:$0xff]
    %v60 = vld [vmem:[%s3 + $0x10] sm:$0xff]
    %v61 = vld [vmem:[%s3 + $0x18] sm:$0xff]
    %v62 = vld [vmem:[%s3 + $0x20] sm:$0xff]
    %v63 = vld [vmem:[%s3 + $0x28] sm:$0xff]
    %v64 = vlaneseq
    %v65 = vand.u32 %v64, 127
    %66 = vset.pattern.permute.xlu0 0
    %67 = vperm.xlu0 %66, %v18
    %v68 = vpop.permute.xlu0 %67
    %69 = vset.pattern.permute.xlu0 0
    %70 = vperm.xlu0 %69, %v19
    %v71 = vpop.permute.xlu0 %70
    %72 = vset.pattern.permute.xlu0 0
    %73 = vperm.xlu0 %72, %v20
    %v74 = vpop.permute.xlu0 %73
    %75 = vset.pattern.permute.xlu0 0
    %76 = vperm.xlu0 %75, %v21
    %v77 = vpop.permute.xlu0 %76
    %78 = vset.pattern.permute.xlu0 0
    %79 = vperm.xlu0 %78, %v22
    %v80 = vpop.permute.xlu0 %79
    %81 = vset.pattern.permute.xlu0 0
    %82 = vperm.xlu0 %81, %v23
    %v83 = vpop.permute.xlu0 %82
    %84 = vset.pattern.permute.xlu0 0
    %85 = vperm.xlu0 %84, %v24
    %v86 = vpop.permute.xlu0 %85
    %87 = vset.pattern.permute.xlu0 0
    %88 = vperm.xlu0 %87, %v25
    %v89 = vpop.permute.xlu0 %88
    %90 = vset.pattern.permute.xlu0 0
    %91 = vperm.xlu0 %90, %v26
    %v92 = vpop.permute.xlu0 %91
    %93 = vset.pattern.permute.xlu0 0
    %94 = vperm.xlu0 %93, %v27
    %v95 = vpop.permute.xlu0 %94
    %96 = vset.pattern.permute.xlu0 0
    %97 = vperm.xlu0 %96, %v28
    %v98 = vpop.permute.xlu0 %97
    %99 = vset.pattern.permute.xlu0 0
    %100 = vperm.xlu0 %99, %v29
    %v101 = vpop.permute.xlu0 %100
    %102 = vset.pattern.permute.xlu0 0
    %103 = vperm.xlu0 %102, %v30
    %v104 = vpop.permute.xlu0 %103
    %105 = vset.pattern.permute.xlu0 0
    %106 = vperm.xlu0 %105, %v31
    %v107 = vpop.permute.xlu0 %106
    %108 = vset.pattern.permute.xlu0 0
    %109 = vperm.xlu0 %108, %v32
    %v110 = vpop.permute.xlu0 %109
    %111 = vset.pattern.permute.xlu0 0
    %112 = vperm.xlu0 %111, %v33
    %v113 = vpop.permute.xlu0 %112
    %vm114 = vcmp.eq.s32.totalorder %v68, %v65
    %vm115 = vcmp.eq.s32.totalorder %v71, %v65
    %vm116 = vcmp.eq.s32.totalorder %v74, %v65
    %vm117 = vcmp.eq.s32.totalorder %v77, %v65
    %vm118 = vcmp.eq.s32.totalorder %v80, %v65
    %vm119 = vcmp.eq.s32.totalorder %v83, %v65
    %vm120 = vcmp.eq.s32.totalorder %v86, %v65
    %vm121 = vcmp.eq.s32.totalorder %v89, %v65
    %vm122 = vcmp.eq.s32.totalorder %v92, %v65
    %vm123 = vcmp.eq.s32.totalorder %v95, %v65
    %vm124 = vcmp.eq.s32.totalorder %v98, %v65
    %vm125 = vcmp.eq.s32.totalorder %v101, %v65
    %vm126 = vcmp.eq.s32.totalorder %v104, %v65
    %vm127 = vcmp.eq.s32.totalorder %v107, %v65
    %vm128 = vcmp.eq.s32.totalorder %v110, %v65
    %vm129 = vcmp.eq.s32.totalorder %v113, %v65
    %v130 = vsel %vm114, 1, 0
    %v131 = vsel %vm115, 1, 0
    %v132 = vsel %vm116, 1, 0
    %v133 = vsel %vm117, 1, 0
    %v134 = vsel %vm118, 1, 0
    %v135 = vsel %vm119, 1, 0
    %v136 = vsel %vm120, 1, 0
    %v137 = vsel %vm121, 1, 0
    %v138 = vsel %vm122, 1, 0
    %v139 = vsel %vm123, 1, 0
    %v140 = vsel %vm124, 1, 0
    %v141 = vsel %vm125, 1, 0
    %v142 = vsel %vm126, 1, 0
    %v143 = vsel %vm127, 1, 0
    %v144 = vsel %vm128, 1, 0
    %v145 = vsel %vm129, 1, 0
    %v146 = vcvt.s32.f32 %v130
    %v147 = vcvt.s32.f32 %v131
    %v148 = vcvt.s32.f32 %v132
    %v149 = vcvt.s32.f32 %v133
    %v150 = vcvt.s32.f32 %v134
    %v151 = vcvt.s32.f32 %v135
    %v152 = vcvt.s32.f32 %v136
    %v153 = vcvt.s32.f32 %v137
    %v154 = vcvt.s32.f32 %v138
    %v155 = vcvt.s32.f32 %v139
    %v156 = vcvt.s32.f32 %v140
    %v157 = vcvt.s32.f32 %v141
    %v158 = vcvt.s32.f32 %v142
    %v159 = vcvt.s32.f32 %v143
    %v160 = vcvt.s32.f32 %v144
    %v161 = vcvt.s32.f32 %v145
    %162 = vset.pattern.permute.xlu0 0
    %163 = vperm.xlu0 %162, %v34
    %v164 = vpop.permute.xlu0 %163
    %165 = vset.pattern.permute.xlu0 0
    %166 = vperm.xlu0 %165, %v35
    %v167 = vpop.permute.xlu0 %166
    %168 = vset.pattern.permute.xlu0 0
    %169 = vperm.xlu0 %168, %v36
    %v170 = vpop.permute.xlu0 %169
    %171 = vset.pattern.permute.xlu0 0
    %172 = vperm.xlu0 %171, %v37
    %v173 = vpop.permute.xlu0 %172
    %174 = vset.pattern.permute.xlu0 0
    %175 = vperm.xlu0 %174, %v38
    %v176 = vpop.permute.xlu0 %175
    %177 = vset.pattern.permute.xlu0 0
    %178 = vperm.xlu0 %177, %v39
    %v179 = vpop.permute.xlu0 %178
    %180 = vset.pattern.permute.xlu0 0
    %181 = vperm.xlu0 %180, %v40
    %v182 = vpop.permute.xlu0 %181
    %183 = vset.pattern.permute.xlu0 0
    %184 = vperm.xlu0 %183, %v41
    %v185 = vpop.permute.xlu0 %184
    %186 = vset.pattern.permute.xlu0 0
    %187 = vperm.xlu0 %186, %v42
    %v188 = vpop.permute.xlu0 %187
    %189 = vset.pattern.permute.xlu0 0
    %190 = vperm.xlu0 %189, %v43
    %v191 = vpop.permute.xlu0 %190
    %192 = vset.pattern.permute.xlu0 0
    %193 = vperm.xlu0 %192, %v44
    %v194 = vpop.permute.xlu0 %193
    %195 = vset.pattern.permute.xlu0 0
    %196 = vperm.xlu0 %195, %v45
    %v197 = vpop.permute.xlu0 %196
    %198 = vset.pattern.permute.xlu0 0
    %199 = vperm.xlu0 %198, %v46
    %v200 = vpop.permute.xlu0 %199
    %201 = vset.pattern.permute.xlu0 0
    %202 = vperm.xlu0 %201, %v47
    %v203 = vpop.permute.xlu0 %202
    %204 = vset.pattern.permute.xlu0 0
    %205 = vperm.xlu0 %204, %v48
    %v206 = vpop.permute.xlu0 %205
    %207 = vset.pattern.permute.xlu0 0
    %208 = vperm.xlu0 %207, %v49
    %v209 = vpop.permute.xlu0 %208
    %vm210 = vcmp.eq.s32.totalorder %v164, %v65
    %vm211 = vcmp.eq.s32.totalorder %v167, %v65
    %vm212 = vcmp.eq.s32.totalorder %v170, %v65
    %vm213 = vcmp.eq.s32.totalorder %v173, %v65
    %vm214 = vcmp.eq.s32.totalorder %v176, %v65
    %vm215 = vcmp.eq.s32.totalorder %v179, %v65
    %vm216 = vcmp.eq.s32.totalorder %v182, %v65
    %vm217 = vcmp.eq.s32.totalorder %v185, %v65
    %vm218 = vcmp.eq.s32.totalorder %v188, %v65
    %vm219 = vcmp.eq.s32.totalorder %v191, %v65
    %vm220 = vcmp.eq.s32.totalorder %v194, %v65
    %vm221 = vcmp.eq.s32.totalorder %v197, %v65
    %vm222 = vcmp.eq.s32.totalorder %v200, %v65
    %vm223 = vcmp.eq.s32.totalorder %v203, %v65
    %vm224 = vcmp.eq.s32.totalorder %v206, %v65
    %vm225 = vcmp.eq.s32.totalorder %v209, %v65
    %v226 = vsel %vm210, 1, 0
    %v227 = vsel %vm211, 1, 0
    %v228 = vsel %vm212, 1, 0
    %v229 = vsel %vm213, 1, 0
    %v230 = vsel %vm214, 1, 0
    %v231 = vsel %vm215, 1, 0
    %v232 = vsel %vm216, 1, 0
    %v233 = vsel %vm217, 1, 0
    %v234 = vsel %vm218, 1, 0
    %v235 = vsel %vm219, 1, 0
    %v236 = vsel %vm220, 1, 0
    %v237 = vsel %vm221, 1, 0
    %v238 = vsel %vm222, 1, 0
    %v239 = vsel %vm223, 1, 0
    %v240 = vsel %vm224, 1, 0
    %v241 = vsel %vm225, 1, 0
    %v242 = vcvt.s32.f32 %v226
    %v243 = vcvt.s32.f32 %v227
    %v244 = vcvt.s32.f32 %v228
    %v245 = vcvt.s32.f32 %v229
    %v246 = vcvt.s32.f32 %v230
    %v247 = vcvt.s32.f32 %v231
    %v248 = vcvt.s32.f32 %v232
    %v249 = vcvt.s32.f32 %v233
    %v250 = vcvt.s32.f32 %v234
    %v251 = vcvt.s32.f32 %v235
    %v252 = vcvt.s32.f32 %v236
    %v253 = vcvt.s32.f32 %v237
    %v254 = vcvt.s32.f32 %v238
    %v255 = vcvt.s32.f32 %v239
    %v256 = vcvt.s32.f32 %v240
    %v257 = vcvt.s32.f32 %v241
    %vm258 = vcmask 523264
    %v260 = vsel %vm258, %v146, 0
    %v263 = vsel %vm258, %v147, 0
    %v266 = vsel %vm258, %v148, 0
    %v269 = vsel %vm258, %v149, 0
    %v272 = vsel %vm258, %v150, 0
    %v275 = vsel %vm258, %v151, 0
    %v278 = vsel %vm258, %v152, 0
    %v281 = vsel %vm258, %v153, 0
    %v284 = vsel %vm258, %v154, 0
    %v287 = vsel %vm258, %v155, 0
    %v290 = vsel %vm258, %v156, 0
    %v293 = vsel %vm258, %v157, 0
    %v296 = vsel %vm258, %v158, 0
    %v299 = vsel %vm258, %v159, 0
    %v302 = vsel %vm258, %v160, 0
    %v305 = vsel %vm258, %v161, 0
    %307 = vmatprep.subr.mxu0 0.0
    %v308 = vand.u32 %v50, 4294901760
    %309 = vmatpush1.msra.mxu0 %v308
    %310 = vmatprep.subr.mxu0 0.0
    %v311 = vand.u32 %v51, 4294901760
    %312 = vmatpush1.msra.mxu0 %v311
    %313 = vmatprep.subr.mxu0 0.0
    %v314 = vand.u32 %v52, 4294901760
    %315 = vmatpush1.msra.mxu0 %v314
    %316 = vmatprep.subr.mxu0 0.0
    %v317 = vand.u32 %v53, 4294901760
    %318 = vmatpush1.msra.mxu0 %v317
    %319 = vmatprep.subr.mxu0 0.0
    %v320 = vand.u32 %v54, 4294901760
    %321 = vmatpush1.msra.mxu0 %v320
    %322 = vmatprep.subr.mxu0 0.0
    %v323 = vand.u32 %v55, 4294901760
    %324 = vmatpush1.msra.mxu0 %v323
    %325 = vmatprep.subr.mxu0 0.0
    %v326 = vand.u32 %v56, 4294901760
    %327 = vmatpush1.msra.mxu0 %v326
    %328 = vmatprep.subr.mxu0 0.0
    %v329 = vand.u32 %v57, 4294901760
    %330 = vmatpush1.msra.mxu0 %v329
    %331 = vmatprep.subr.mxu0 0.0
    %332 = vmatpush1.msra.mxu0 0.0
    %333 = vmatprep.subr.mxu0 0.0
    %334 = vmatpush1.msra.mxu0 0.0
    %335 = vmatprep.subr.mxu0 0.0
    %336 = vmatpush1.msra.mxu0 0.0
    %337 = vmatprep.subr.mxu0 0.0
    %338 = vmatpush1.msra.mxu0 0.0
    %339 = vmatprep.subr.mxu0 0.0
    %340 = vmatpush1.msra.mxu0 0.0
    %341 = vmatprep.subr.mxu0 0.0
    %342 = vmatpush1.msra.mxu0 0.0
    %343 = vmatprep.subr.mxu0 0.0
    %344 = vmatpush1.msra.mxu0 0.0
    %345 = vmatprep.subr.mxu0 0.0
    %346 = vmatpush1.msra.mxu0 0.0
    %347 = vmatprep.subr.mxu0 0.0
    %348 = vmatpush1.msra.mxu0 0.0
    %349 = vmatprep.subr.mxu0 0.0
    %350 = vmatpush1.msra.mxu0 0.0
    %351 = vmatprep.subr.mxu0 0.0
    %352 = vmatpush1.msra.mxu0 0.0
    %353 = vmatprep.subr.mxu0 0.0
    %354 = vmatpush1.msra.mxu0 0.0
    %355 = vmatprep.subr.mxu0 0.0
    %356 = vmatpush1.msra.mxu0 0.0
    %357 = vmatprep.subr.mxu0 0.0
    %358 = vmatpush1.msra.mxu0 0.0
    %359 = vmatprep.subr.mxu0 0.0
    %360 = vmatpush1.msra.mxu0 0.0
    %361 = vmatprep.subr.mxu0 0.0
    %362 = vmatpush1.msra.mxu0 0.0
    %363 = vmatprep.subr.mxu0 0.0
    %364 = vmatpush1.msra.mxu0 0.0
    %365 = vmatprep.subr.mxu0 0.0
    %366 = vmatpush1.msra.mxu0 0.0
    %367 = vmatprep.subr.mxu0 0.0
    %368 = vmatpush1.msra.mxu0 0.0
    %369 = vmatprep.subr.mxu0 0.0
    %370 = vmatpush1.msra.mxu0 0.0
    %371 = vmatprep.subr.mxu0 0.0
    %372 = vmatpush1.msra.mxu0 0.0
    %373 = vmatprep.subr.mxu0 0.0
    %374 = vmatpush1.msra.mxu0 0.0
    %375 = vmatprep.subr.mxu0 0.0
    %376 = vmatpush1.msra.mxu0 0.0
    %377 = vmatprep.subr.mxu0 0.0
    %378 = vmatpush1.msra.mxu0 0.0
    %379 = vmatprep.mubr.f32.mxu0 0.0
    %v380 = vand.u32 %v260, 4294901760
    %v381 = vsub.f32 %v260, %v380
    %v382 = vand.u32 %v381, 4294901760
    %v383 = vsub.f32 %v381, %v382
    %v384 = vand.u32 %v383, 4294901760
    %385 = vmatmul.mubr.f32.gmra.mrb[0].mxu0 %v384
    %v386 = vpop.f32.mrb[0].mxu0
    %v387 = vadd.f32 0.0, %v386
    %v388 = vpop.f32.mrb[0].mxu0
    %389 = vmatprep.mubr.f32.mxu0 0.0
    %v390 = vand.u32 %v263, 4294901760
    %v391 = vsub.f32 %v263, %v390
    %v392 = vand.u32 %v391, 4294901760
    %v393 = vsub.f32 %v391, %v392
    %v394 = vand.u32 %v393, 4294901760
    %395 = vmatmul.mubr.f32.gmra.mrb[0].mxu0 %v394
    %v396 = vpop.f32.mrb[0].mxu0
    %v397 = vadd.f32 0.0, %v396
    %v398 = vpop.f32.mrb[0].mxu0
    %399 = vmatprep.mubr.f32.mxu0 0.0
    %v400 = vand.u32 %v266, 4294901760
    %v401 = vsub.f32 %v266, %v400
    %v402 = vand.u32 %v401, 4294901760
    %v403 = vsub.f32 %v401, %v402
    %v404 = vand.u32 %v403, 4294901760
    %405 = vmatmul.mubr.f32.gmra.mrb[0].mxu0 %v404
    %v406 = vpop.f32.mrb[0].mxu0
    %v407 = vadd.f32 0.0, %v406
    %v408 = vpop.f32.mrb[0].mxu0
    %409 = vmatprep.mubr.f32.mxu0 0.0
    %v410 = vand.u32 %v269, 4294901760
    %v411 = vsub.f32 %v269, %v410
    %v412 = vand.u32 %v411, 4294901760
    %v413 = vsub.f32 %v411, %v412
    %v414 = vand.u32 %v413, 4294901760
    %415 = vmatmul.mubr.f32.gmra.mrb[0].mxu0 %v414
    %v416 = vpop.f32.mrb[0].mxu0
    %v417 = vadd.f32 0.0, %v416
    %v418 = vpop.f32.mrb[0].mxu0
    %419 = vmatprep.mubr.f32.mxu0 0.0
    %v420 = vand.u32 %v272, 4294901760
    %v421 = vsub.f32 %v272, %v420
    %v422 = vand.u32 %v421, 4294901760
    %v423 = vsub.f32 %v421, %v422
    %v424 = vand.u32 %v423, 4294901760
    %425 = vmatmul.mubr.f32.gmra.mrb[0].mxu0 %v424
    %v426 = vpop.f32.mrb[0].mxu0
    %v427 = vadd.f32 0.0, %v426
    %v428 = vpop.f32.mrb[0].mxu0
    %429 = vmatprep.mubr.f32.mxu0 0.0
    %v430 = vand.u32 %v275, 4294901760
    %v431 = vsub.f32 %v275, %v430
    %v432 = vand.u32 %v431, 4294901760
    %v433 = vsub.f32 %v431, %v432
    %v434 = vand.u32 %v433, 4294901760
    %435 = vmatmul.mubr.f32.gmra.mrb[0].mxu0 %v434
    %v436 = vpop.f32.mrb[0].mxu0
    %v437 = vadd.f32 0.0, %v436
    %v438 = vpop.f32.mrb[0].mxu0
    %439 = vmatprep.mubr.f32.mxu0 0.0
    %v440 = vand.u32 %v278, 4294901760
    %v441 = vsub.f32 %v278, %v440
    %v442 = vand.u32 %v441, 4294901760
    %v443 = vsub.f32 %v441, %v442
    %v444 = vand.u32 %v443, 4294901760
    %445 = vmatmul.mubr.f32.gmra.mrb[0].mxu0 %v444
    %v446 = vpop.f32.mrb[0].mxu0
    %v447 = vadd.f32 0.0, %v446
    %v448 = vpop.f32.mrb[0].mxu0
    %449 = vmatprep.mubr.f32.mxu0 0.0
    %v450 = vand.u32 %v281, 4294901760
    %v451 = vsub.f32 %v281, %v450
    %v452 = vand.u32 %v451, 4294901760
    %v453 = vsub.f32 %v451, %v452
    %v454 = vand.u32 %v453, 4294901760
    %455 = vmatmul.mubr.f32.gmra.mrb[0].mxu0 %v454
    %v456 = vpop.f32.mrb[0].mxu0
    %v457 = vadd.f32 0.0, %v456
    %v458 = vpop.f32.mrb[0].mxu0
    %459 = vmatprep.mubr.f32.mxu0 0.0
    %v460 = vand.u32 %v284, 4294901760
    %v461 = vsub.f32 %v284, %v460
    %v462 = vand.u32 %v461, 4294901760
    %v463 = vsub.f32 %v461, %v462
    %v464 = vand.u32 %v463, 4294901760
    %465 = vmatmul.mubr.f32.gmra.mrb[0].mxu0 %v464
    %v466 = vpop.f32.mrb[0].mxu0
    %v467 = vadd.f32 0.0, %v466
    %v468 = vpop.f32.mrb[0].mxu0
    %469 = vmatprep.mubr.f32.mxu0 0.0
    %v470 = vand.u32 %v287, 4294901760
    %v471 = vsub.f32 %v287, %v470
    %v472 = vand.u32 %v471, 4294901760
    %v473 = vsub.f32 %v471, %v472
    %v474 = vand.u32 %v473, 4294901760
    %475 = vmatmul.mubr.f32.gmra.mrb[0].mxu0 %v474
    %v476 = vpop.f32.mrb[0].mxu0
    %v477 = vadd.f32 0.0, %v476
    %v478 = vpop.f32.mrb[0].mxu0
    %479 = vmatprep.mubr.f32.mxu0 0.0
    %v480 = vand.u32 %v290, 4294901760
    %v481 = vsub.f32 %v290, %v480
    %v482 = vand.u32 %v481, 4294901760
    %v483 = vsub.f32 %v481, %v482
    %v484 = vand.u32 %v483, 4294901760
    %485 = vmatmul.mubr.f32.gmra.mrb[0].mxu0 %v484
    %v486 = vpop.f32.mrb[0].mxu0
    %v487 = vadd.f32 0.0, %v486
    %v488 = vpop.f32.mrb[0].mxu0
    %489 = vmatprep.mubr.f32.mxu0 0.0
    %v490 = vand.u32 %v293, 4294901760
    %v491 = vsub.f32 %v293, %v490
    %v492 = vand.u32 %v491, 4294901760
    %v493 = vsub.f32 %v491, %v492
    %v494 = vand.u32 %v493, 4294901760
    %495 = vmatmul.mubr.f32.gmra.mrb[0].mxu0 %v494
    %v496 = vpop.f32.mrb[0].mxu0
    %v497 = vadd.f32 0.0, %v496
    %v498 = vpop.f32.mrb[0].mxu0
    %499 = vmatprep.mubr.f32.mxu0 0.0
    %v500 = vand.u32 %v296, 4294901760
    %v501 = vsub.f32 %v296, %v500
    %v502 = vand.u32 %v501, 4294901760
    %v503 = vsub.f32 %v501, %v502
    %v504 = vand.u32 %v503, 4294901760
    %505 = vmatmul.mubr.f32.gmra.mrb[0].mxu0 %v504
    %v506 = vpop.f32.mrb[0].mxu0
    %v507 = vadd.f32 0.0, %v506
    %v508 = vpop.f32.mrb[0].mxu0
    %509 = vmatprep.mubr.f32.mxu0 0.0
    %v510 = vand.u32 %v299, 4294901760
    %v511 = vsub.f32 %v299, %v510
    %v512 = vand.u32 %v511, 4294901760
    %v513 = vsub.f32 %v511, %v512
    %v514 = vand.u32 %v513, 4294901760
    %515 = vmatmul.mubr.f32.gmra.mrb[0].mxu0 %v514
    %v516 = vpop.f32.mrb[0].mxu0
    %v517 = vadd.f32 0.0, %v516
    %v518 = vpop.f32.mrb[0].mxu0
    %519 = vmatprep.mubr.f32.mxu0 0.0
    %v520 = vand.u32 %v302, 4294901760
    %v521 = vsub.f32 %v302, %v520
    %v522 = vand.u32 %v521, 4294901760
    %v523 = vsub.f32 %v521, %v522
    %v524 = vand.u32 %v523, 4294901760
    %525 = vmatmul.mubr.f32.gmra.mrb[0].mxu0 %v524
    %v526 = vpop.f32.mrb[0].mxu0
    %v527 = vadd.f32 0.0, %v526
    %v528 = vpop.f32.mrb[0].mxu0
    %529 = vmatprep.mubr.f32.mxu0 0.0
    %v530 = vand.u32 %v305, 4294901760
    %v531 = vsub.f32 %v305, %v530
    %v532 = vand.u32 %v531, 4294901760
    %v533 = vsub.f32 %v531, %v532
    %v534 = vand.u32 %v533, 4294901760
    %535 = vmatmul.mubr.f32.gmra.mrb[0].mxu0 %v534
    %v536 = vpop.f32.mrb[0].mxu0
    %v537 = vadd.f32 0.0, %v536
    %v538 = vpop.f32.mrb[0].mxu0
    %539 = vdwg.mxu0
    %540 = vmatprep.subr.mxu0 0.0
    %v541 = vand.u32 %v50, 4294901760
    %v542 = vsub.f32 %v50, %v541
    %v543 = vand.u32 %v542, 4294901760
    %v544 = vsub.f32 %v542, %v543
    %v545 = vand.u32 %v544, 4294901760
    %546 = vmatpush1.msra.mxu0 %v545
    %547 = vmatprep.subr.mxu0 0.0
    %v548 = vand.u32 %v51, 4294901760
    %v549 = vsub.f32 %v51, %v548
    %v550 = vand.u32 %v549, 4294901760
    %v551 = vsub.f32 %v549, %v550
    %v552 = vand.u32 %v551, 4294901760
    %553 = vmatpush1.msra.mxu0 %v552
    %554 = vmatprep.subr.mxu0 0.0
    %v555 = vand.u32 %v52, 4294901760
    %v556 = vsub.f32 %v52, %v555
    %v557 = vand.u32 %v556, 4294901760
    %v558 = vsub.f32 %v556, %v557
    %v559 = vand.u32 %v558, 4294901760
    %560 = vmatpush1.msra.mxu0 %v559
    %561 = vmatprep.subr.mxu0 0.0
    %v562 = vand.u32 %v53, 4294901760
    %v563 = vsub.f32 %v53, %v562
    %v564 = vand.u32 %v563, 4294901760
    %v565 = vsub.f32 %v563, %v564
    %v566 = vand.u32 %v565, 4294901760
    %567 = vmatpush1.msra.mxu0 %v566
    %568 = vmatprep.subr.mxu0 0.0
    %v569 = vand.u32 %v54, 4294901760
    %v570 = vsub.f32 %v54, %v569
    %v571 = vand.u32 %v570, 4294901760
    %v572 = vsub.f32 %v570, %v571
    %v573 = vand.u32 %v572, 4294901760
    %574 = vmatpush1.msra.mxu0 %v573
    %575 = vmatprep.subr.mxu0 0.0
    %v576 = vand.u32 %v55, 4294901760
    %v577 = vsub.f32 %v55, %v576
    %v578 = vand.u32 %v577, 4294901760
    %v579 = vsub.f32 %v577, %v578
    %v580 = vand.u32 %v579, 4294901760
    %581 = vmatpush1.msra.mxu0 %v580
    %582 = vmatprep.subr.mxu0 0.0
    %v583 = vand.u32 %v56, 4294901760
    %v584 = vsub.f32 %v56, %v583
    %v585 = vand.u32 %v584, 4294901760
    %v586 = vsub.f32 %v584, %v585
    %v587 = vand.u32 %v586, 4294901760
    %588 = vmatpush1.msra.mxu0 %v587
    %589 = vmatprep.subr.mxu0 0.0
    %v590 = vand.u32 %v57, 4294901760
    %v591 = vsub.f32 %v57, %v590
    %v592 = vand.u32 %v591, 4294901760
    %v593 = vsub.f32 %v591, %v592
    %v594 = vand.u32 %v593, 4294901760
    %595 = vmatpush1.msra.mxu0 %v594
    %596 = vmatprep.subr.mxu0 0.0
    %597 = vmatpush1.msra.mxu0 0.0
    %598 = vmatprep.subr.mxu0 0.0
    %599 = vmatpush1.msra.mxu0 0.0
    %600 = vmatprep.subr.mxu0 0.0
    %601 = vmatpush1.msra.mxu0 0.0
    %602 = vmatprep.subr.mxu0 0.0
    %603 = vmatpush1.msra.mxu0 0.0
    %604 = vmatprep.subr.mxu0 0.0
    %605 = vmatpush1.msra.mxu0 0.0
    %606 = vmatprep.subr.mxu0 0.0
    %607 = vmatpush1.msra.mxu0 0.0
    %608 = vmatprep.subr.mxu0 0.0
    %609 = vmatpush1.msra.mxu0 0.0
    %610 = vmatprep.subr.mxu0 0.0
    %611 = vmatpush1.msra.mxu0 0.0
    %612 = vmatprep.subr.mxu0 0.0
    %613 = vmatpush1.msra.mxu0 0.0
    %614 = vmatprep.subr.mxu0 0.0
    %615 = vmatpush1.msra.mxu0 0.0
    %616 = vmatprep.subr.mxu0 0.0
    %617 = vmatpush1.msra.mxu0 0.0
    %618 = vmatprep.subr.mxu0 0.0
    %619 = vmatpush1.msra.mxu0 0.0
    %620 = vmatprep.subr.mxu0 0.0
    %621 = vmatpush1.msra.mxu0 0.0
    %622 = vmatprep.subr.mxu0 0.0
    %623 = vmatpush1.msra.mxu0 0.0
    %624 = vmatprep.subr.mxu0 0.0
    %625 = vmatpush1.msra.mxu0 0.0
    %626 = vmatprep.subr.mxu0 0.0
    %627 = vmatpush1.msra.mxu0 0.0
    %628 = vmatprep.subr.mxu0 0.0
    %629 = vmatpush1.msra.mxu0 0.0
    %630 = vmatprep.subr.mxu0 0.0
    %631 = vmatpush1.msra.mxu0 0.0
    %632 = vmatprep.subr.mxu0 0.0
    %633 = vmatpush1.msra.mxu0 0.0
    %634 = vmatprep.subr.mxu0 0.0
    %635 = vmatpush1.msra.mxu0 0.0
    %636 = vmatprep.subr.mxu0 0.0
    %637 = vmatpush1.msra.mxu0 0.0
    %638 = vmatprep.subr.mxu0 0.0
    %639 = vmatpush1.msra.mxu0 0.0
    %640 = vmatprep.subr.mxu0 0.0
    %641 = vmatpush1.msra.mxu0 0.0
    %642 = vmatprep.subr.mxu0 0.0
    %643 = vmatpush1.msra.mxu0 0.0
    %644 = vmatprep.mubr.f32.mxu0 0.0
    %v645 = vand.u32 %v260, 4294901760
    %646 = vmatmul.mubr.f32.gmra.mrb[0].mxu0 %v645
    %v647 = vpop.f32.mrb[0].mxu0
    %v648 = vadd.f32 %v387, %v647
    %v649 = vpop.f32.mrb[0].mxu0
    %650 = vmatprep.mubr.f32.mxu0 0.0
    %v651 = vand.u32 %v263, 4294901760
    %652 = vmatmul.mubr.f32.gmra.mrb[0].mxu0 %v651
    %v653 = vpop.f32.mrb[0].mxu0
    %v654 = vadd.f32 %v397, %v653
    %v655 = vpop.f32.mrb[0].mxu0
    %656 = vmatprep.mubr.f32.mxu0 0.0
    %v657 = vand.u32 %v266, 4294901760
    %658 = vmatmul.mubr.f32.gmra.mrb[0].mxu0 %v657
    %v659 = vpop.f32.mrb[0].mxu0
    %v660 = vadd.f32 %v407, %v659
    %v661 = vpop.f32.mrb[0].mxu0
    %662 = vmatprep.mubr.f32.mxu0 0.0
    %v663 = vand.u32 %v269, 4294901760
    %664 = vmatmul.mubr.f32.gmra.mrb[0].mxu0 %v663
    %v665 = vpop.f32.mrb[0].mxu0
    %v666 = vadd.f32 %v417, %v665
    %v667 = vpop.f32.mrb[0].mxu0
    %668 = vmatprep.mubr.f32.mxu0 0.0
    %v669 = vand.u32 %v272, 4294901760
    %670 = vmatmul.mubr.f32.gmra.mrb[0].mxu0 %v669
    %v671 = vpop.f32.mrb[0].mxu0
    %v672 = vadd.f32 %v427, %v671
    %v673 = vpop.f32.mrb[0].mxu0
    %674 = vmatprep.mubr.f32.mxu0 0.0
    %v675 = vand.u32 %v275, 4294901760
    %676 = vmatmul.mubr.f32.gmra.mrb[0].mxu0 %v675
    %v677 = vpop.f32.mrb[0].mxu0
    %v678 = vadd.f32 %v437, %v677
    %v679 = vpop.f32.mrb[0].mxu0
    %680 = vmatprep.mubr.f32.mxu0 0.0
    %v681 = vand.u32 %v278, 4294901760
    %682 = vmatmul.mubr.f32.gmra.mrb[0].mxu0 %v681
    %v683 = vpop.f32.mrb[0].mxu0
    %v684 = vadd.f32 %v447, %v683
    %v685 = vpop.f32.mrb[0].mxu0
    %686 = vmatprep.mubr.f32.mxu0 0.0
    %v687 = vand.u32 %v281, 4294901760
    %688 = vmatmul.mubr.f32.gmra.mrb[0].mxu0 %v687
    %v689 = vpop.f32.mrb[0].mxu0
    %v690 = vadd.f32 %v457, %v689
    %v691 = vpop.f32.mrb[0].mxu0
    %692 = vmatprep.mubr.f32.mxu0 0.0
    %v693 = vand.u32 %v284, 4294901760
    %694 = vmatmul.mubr.f32.gmra.mrb[0].mxu0 %v693
    %v695 = vpop.f32.mrb[0].mxu0
    %v696 = vadd.f32 %v467, %v695
    %v697 = vpop.f32.mrb[0].mxu0
    %698 = vmatprep.mubr.f32.mxu0 0.0
    %v699 = vand.u32 %v287, 4294901760
    %700 = vmatmul.mubr.f32.gmra.mrb[0].mxu0 %v699
    %v701 = vpop.f32.mrb[0].mxu0
    %v702 = vadd.f32 %v477, %v701
    %v703 = vpop.f32.mrb[0].mxu0
    %704 = vmatprep.mubr.f32.mxu0 0.0
    %v705 = vand.u32 %v290, 4294901760
    %706 = vmatmul.mubr.f32.gmra.mrb[0].mxu0 %v705
    %v707 = vpop.f32.mrb[0].mxu0
    %v708 = vadd.f32 %v487, %v707
    %v709 = vpop.f32.mrb[0].mxu0
    %710 = vmatprep.mubr.f32.mxu0 0.0
    %v711 = vand.u32 %v293, 4294901760
    %712 = vmatmul.mubr.f32.gmra.mrb[0].mxu0 %v711
    %v713 = vpop.f32.mrb[0].mxu0
    %v714 = vadd.f32 %v497, %v713
    %v715 = vpop.f32.mrb[0].mxu0
    %716 = vmatprep.mubr.f32.mxu0 0.0
    %v717 = vand.u32 %v296, 4294901760
    %718 = vmatmul.mubr.f32.gmra.mrb[0].mxu0 %v717
    %v719 = vpop.f32.mrb[0].mxu0
    %v720 = vadd.f32 %v507, %v719
    %v721 = vpop.f32.mrb[0].mxu0
    %722 = vmatprep.mubr.f32.mxu0 0.0
    %v723 = vand.u32 %v299, 4294901760
    %724 = vmatmul.mubr.f32.gmra.mrb[0].mxu0 %v723
    %v725 = vpop.f32.mrb[0].mxu0
    %v726 = vadd.f32 %v517, %v725
    %v727 = vpop.f32.mrb[0].mxu0
    %728 = vmatprep.mubr.f32.mxu0 0.0
    %v729 = vand.u32 %v302, 4294901760
    %730 = vmatmul.mubr.f32.gmra.mrb[0].mxu0 %v729
    %v731 = vpop.f32.mrb[0].mxu0
    %v732 = vadd.f32 %v527, %v731
    %v733 = vpop.f32.mrb[0].mxu0
    %734 = vmatprep.mubr.f32.mxu0 0.0
    %v735 = vand.u32 %v305, 4294901760
    %736 = vmatmul.mubr.f32.gmra.mrb[0].mxu0 %v735
    %v737 = vpop.f32.mrb[0].mxu0
    %v738 = vadd.f32 %v537, %v737
    %v739 = vpop.f32.mrb[0].mxu0
    %740 = vdwg.mxu0
    %741 = vmatprep.subr.mxu0 0.0
    %v742 = vand.u32 %v50, 4294901760
    %v743 = vsub.f32 %v50, %v742
    %744 = vmatpush1.msra.mxu0 %v743
    %745 = vmatprep.subr.mxu0 0.0
    %v746 = vand.u32 %v51, 4294901760
    %v747 = vsub.f32 %v51, %v746
    %748 = vmatpush1.msra.mxu0 %v747
    %749 = vmatprep.subr.mxu0 0.0
    %v750 = vand.u32 %v52, 4294901760
    %v751 = vsub.f32 %v52, %v750
    %752 = vmatpush1.msra.mxu0 %v751
    %753 = vmatprep.subr.mxu0 0.0
    %v754 = vand.u32 %v53, 4294901760
    %v755 = vsub.f32 %v53, %v754
    %756 = vmatpush1.msra.mxu0 %v755
    %757 = vmatprep.subr.mxu0 0.0
    %v758 = vand.u32 %v54, 4294901760
    %v759 = vsub.f32 %v54, %v758
    %760 = vmatpush1.msra.mxu0 %v759
    %761 = vmatprep.subr.mxu0 0.0
    %v762 = vand.u32 %v55, 4294901760
    %v763 = vsub.f32 %v55, %v762
    %764 = vmatpush1.msra.mxu0 %v763
    %765 = vmatprep.subr.mxu0 0.0
    %v766 = vand.u32 %v56, 4294901760
    %v767 = vsub.f32 %v56, %v766
    %768 = vmatpush1.msra.mxu0 %v767
    %769 = vmatprep.subr.mxu0 0.0
    %v770 = vand.u32 %v57, 4294901760
    %v771 = vsub.f32 %v57, %v770
    %772 = vmatpush1.msra.mxu0 %v771
    %773 = vmatprep.subr.mxu0 0.0
    %774 = vmatpush1.msra.mxu0 0.0
    %775 = vmatprep.subr.mxu0 0.0
    %776 = vmatpush1.msra.mxu0 0.0
    %777 = vmatprep.subr.mxu0 0.0
    %778 = vmatpush1.msra.mxu0 0.0
    %779 = vmatprep.subr.mxu0 0.0
    %780 = vmatpush1.msra.mxu0 0.0
    %781 = vmatprep.subr.mxu0 0.0
    %782 = vmatpush1.msra.mxu0 0.0
    %783 = vmatprep.subr.mxu0 0.0
    %784 = vmatpush1.msra.mxu0 0.0
    %785 = vmatprep.subr.mxu0 0.0
    %786 = vmatpush1.msra.mxu0 0.0
    %787 = vmatprep.subr.mxu0 0.0
    %788 = vmatpush1.msra.mxu0 0.0
    %789 = vmatprep.subr.mxu0 0.0
    %790 = vmatpush1.msra.mxu0 0.0
    %791 = vmatprep.subr.mxu0 0.0
    %792 = vmatpush1.msra.mxu0 0.0
    %793 = vmatprep.subr.mxu0 0.0
    %794 = vmatpush1.msra.mxu0 0.0
    %795 = vmatprep.subr.mxu0 0.0
    %796 = vmatpush1.msra.mxu0 0.0
    %797 = vmatprep.subr.mxu0 0.0
    %798 = vmatpush1.msra.mxu0 0.0
    %799 = vmatprep.subr.mxu0 0.0
    %800 = vmatpush1.msra.mxu0 0.0
    %801 = vmatprep.subr.mxu0 0.0
    %802 = vmatpush1.msra.mxu0 0.0
    %803 = vmatprep.subr.mxu0 0.0
    %804 = vmatpush1.msra.mxu0 0.0
    %805 = vmatprep.subr.mxu0 0.0
    %806 = vmatpush1.msra.mxu0 0.0
    %807 = vmatprep.subr.mxu0 0.0
    %808 = vmatpush1.msra.mxu0 0.0
    %809 = vmatprep.subr.mxu0 0.0
    %810 = vmatpush1.msra.mxu0 0.0
    %811 = vmatprep.subr.mxu0 0.0
    %812 = vmatpush1.msra.mxu0 0.0
    %813 = vmatprep.subr.mxu0 0.0
    %814 = vmatpush1.msra.mxu0 0.0
    %815 = vmatprep.subr.mxu0 0.0
    %816 = vmatpush1.msra.mxu0 0.0
    %817 = vmatprep.subr.mxu0 0.0
    %818 = vmatpush1.msra.mxu0 0.0
    %819 = vmatprep.subr.mxu0 0.0
    %820 = vmatpush1.msra.mxu0 0.0
    %821 = vmatprep.mubr.f32.mxu0 0.0
    %v822 = vand.u32 %v260, 4294901760
    %v823 = vsub.f32 %v260, %v822
    %824 = vmatmul.mubr.f32.gmra.mrb[0].mxu0 %v823
    %v825 = vpop.f32.mrb[0].mxu0
    %v826 = vadd.f32 %v648, %v825
    %v827 = vpop.f32.mrb[0].mxu0
    %828 = vmatprep.mubr.f32.mxu0 0.0
    %v829 = vand.u32 %v263, 4294901760
    %v830 = vsub.f32 %v263, %v829
    %831 = vmatmul.mubr.f32.gmra.mrb[0].mxu0 %v830
    %v832 = vpop.f32.mrb[0].mxu0
    %v833 = vadd.f32 %v654, %v832
    %v834 = vpop.f32.mrb[0].mxu0
    %835 = vmatprep.mubr.f32.mxu0 0.0
    %v836 = vand.u32 %v266, 4294901760
    %v837 = vsub.f32 %v266, %v836
    %838 = vmatmul.mubr.f32.gmra.mrb[0].mxu0 %v837
    %v839 = vpop.f32.mrb[0].mxu0
    %v840 = vadd.f32 %v660, %v839
    %v841 = vpop.f32.mrb[0].mxu0
    %842 = vmatprep.mubr.f32.mxu0 0.0
    %v843 = vand.u32 %v269, 4294901760
    %v844 = vsub.f32 %v269, %v843
    %845 = vmatmul.mubr.f32.gmra.mrb[0].mxu0 %v844
    %v846 = vpop.f32.mrb[0].mxu0
    %v847 = vadd.f32 %v666, %v846
    %v848 = vpop.f32.mrb[0].mxu0
    %849 = vmatprep.mubr.f32.mxu0 0.0
    %v850 = vand.u32 %v272, 4294901760
    %v851 = vsub.f32 %v272, %v850
    %852 = vmatmul.mubr.f32.gmra.mrb[0].mxu0 %v851
    %v853 = vpop.f32.mrb[0].mxu0
    %v854 = vadd.f32 %v672, %v853
    %v855 = vpop.f32.mrb[0].mxu0
    %856 = vmatprep.mubr.f32.mxu0 0.0
    %v857 = vand.u32 %v275, 4294901760
    %v858 = vsub.f32 %v275, %v857
    %859 = vmatmul.mubr.f32.gmra.mrb[0].mxu0 %v858
    %v860 = vpop.f32.mrb[0].mxu0
    %v861 = vadd.f32 %v678, %v860
    %v862 = vpop.f32.mrb[0].mxu0
    %863 = vmatprep.mubr.f32.mxu0 0.0
    %v864 = vand.u32 %v278, 4294901760
    %v865 = vsub.f32 %v278, %v864
    %866 = vmatmul.mubr.f32.gmra.mrb[0].mxu0 %v865
    %v867 = vpop.f32.mrb[0].mxu0
    %v868 = vadd.f32 %v684, %v867
    %v869 = vpop.f32.mrb[0].mxu0
    %870 = vmatprep.mubr.f32.mxu0 0.0
    %v871 = vand.u32 %v281, 4294901760
    %v872 = vsub.f32 %v281, %v871
    %873 = vmatmul.mubr.f32.gmra.mrb[0].mxu0 %v872
    %v874 = vpop.f32.mrb[0].mxu0
    %v875 = vadd.f32 %v690, %v874
    %v876 = vpop.f32.mrb[0].mxu0
    %877 = vmatprep.mubr.f32.mxu0 0.0
    %v878 = vand.u32 %v284, 4294901760
    %v879 = vsub.f32 %v284, %v878
    %880 = vmatmul.mubr.f32.gmra.mrb[0].mxu0 %v879
    %v881 = vpop.f32.mrb[0].mxu0
    %v882 = vadd.f32 %v696, %v881
    %v883 = vpop.f32.mrb[0].mxu0
    %884 = vmatprep.mubr.f32.mxu0 0.0
    %v885 = vand.u32 %v287, 4294901760
    %v886 = vsub.f32 %v287, %v885
    %887 = vmatmul.mubr.f32.gmra.mrb[0].mxu0 %v886
    %v888 = vpop.f32.mrb[0].mxu0
    %v889 = vadd.f32 %v702, %v888
    %v890 = vpop.f32.mrb[0].mxu0
    %891 = vmatprep.mubr.f32.mxu0 0.0
    %v892 = vand.u32 %v290, 4294901760
    %v893 = vsub.f32 %v290, %v892
    %894 = vmatmul.mubr.f32.gmra.mrb[0].mxu0 %v893
    %v895 = vpop.f32.mrb[0].mxu0
    %v896 = vadd.f32 %v708, %v895
    %v897 = vpop.f32.mrb[0].mxu0
    %898 = vmatprep.mubr.f32.mxu0 0.0
    %v899 = vand.u32 %v293, 4294901760
    %v900 = vsub.f32 %v293, %v899
    %901 = vmatmul.mubr.f32.gmra.mrb[0].mxu0 %v900
    %v902 = vpop.f32.mrb[0].mxu0
    %v903 = vadd.f32 %v714, %v902
    %v904 = vpop.f32.mrb[0].mxu0
    %905 = vmatprep.mubr.f32.mxu0 0.0
    %v906 = vand.u32 %v296, 4294901760
    %v907 = vsub.f32 %v296, %v906
    %908 = vmatmul.mubr.f32.gmra.mrb[0].mxu0 %v907
    %v909 = vpop.f32.mrb[0].mxu0
    %v910 = vadd.f32 %v720, %v909
    %v911 = vpop.f32.mrb[0].mxu0
    %912 = vmatprep.mubr.f32.mxu0 0.0
    %v913 = vand.u32 %v299, 4294901760
    %v914 = vsub.f32 %v299, %v913
    %915 = vmatmul.mubr.f32.gmra.mrb[0].mxu0 %v914
    %v916 = vpop.f32.mrb[0].mxu0
    %v917 = vadd.f32 %v726, %v916
    %v918 = vpop.f32.mrb[0].mxu0
    %919 = vmatprep.mubr.f32.mxu0 0.0
    %v920 = vand.u32 %v302, 4294901760
    %v921 = vsub.f32 %v302, %v920
    %922 = vmatmul.mubr.f32.gmra.mrb[0].mxu0 %v921
    %v923 = vpop.f32.mrb[0].mxu0
    %v924 = vadd.f32 %v732, %v923
    %v925 = vpop.f32.mrb[0].mxu0
    %926 = vmatprep.mubr.f32.mxu0 0.0
    %v927 = vand.u32 %v305, 4294901760
    %v928 = vsub.f32 %v305, %v927
    %929 = vmatmul.mubr.f32.gmra.mrb[0].mxu0 %v928
    %v930 = vpop.f32.mrb[0].mxu0
    %v931 = vadd.f32 %v738, %v930
    %v932 = vpop.f32.mrb[0].mxu0
    %933 = vdwg.mxu0
    %934 = vmatprep.subr.mxu0 0.0
    %v935 = vand.u32 %v50, 4294901760
    %936 = vmatpush1.msra.mxu0 %v935
    %937 = vmatprep.subr.mxu0 0.0
    %v938 = vand.u32 %v51, 4294901760
    %939 = vmatpush1.msra.mxu0 %v938
    %940 = vmatprep.subr.mxu0 0.0
    %v941 = vand.u32 %v52, 4294901760
    %942 = vmatpush1.msra.mxu0 %v941
    %943 = vmatprep.subr.mxu0 0.0
    %v944 = vand.u32 %v53, 4294901760
    %945 = vmatpush1.msra.mxu0 %v944
    %946 = vmatprep.subr.mxu0 0.0
    %v947 = vand.u32 %v54, 4294901760
    %948 = vmatpush1.msra.mxu0 %v947
    %949 = vmatprep.subr.mxu0 0.0
    %v950 = vand.u32 %v55, 4294901760
    %951 = vmatpush1.msra.mxu0 %v950
    %952 = vmatprep.subr.mxu0 0.0
    %v953 = vand.u32 %v56, 4294901760
    %954 = vmatpush1.msra.mxu0 %v953
    %955 = vmatprep.subr.mxu0 0.0
    %v956 = vand.u32 %v57, 4294901760
    %957 = vmatpush1.msra.mxu0 %v956
    %958 = vmatprep.subr.mxu0 0.0
    %959 = vmatpush1.msra.mxu0 0.0
    %960 = vmatprep.subr.mxu0 0.0
    %961 = vmatpush1.msra.mxu0 0.0
    %962 = vmatprep.subr.mxu0 0.0
    %963 = vmatpush1.msra.mxu0 0.0
    %964 = vmatprep.subr.mxu0 0.0
    %965 = vmatpush1.msra.mxu0 0.0
    %966 = vmatprep.subr.mxu0 0.0
    %967 = vmatpush1.msra.mxu0 0.0
    %968 = vmatprep.subr.mxu0 0.0
    %969 = vmatpush1.msra.mxu0 0.0
    %970 = vmatprep.subr.mxu0 0.0
    %971 = vmatpush1.msra.mxu0 0.0
    %972 = vmatprep.subr.mxu0 0.0
    %973 = vmatpush1.msra.mxu0 0.0
    %974 = vmatprep.subr.mxu0 0.0
    %975 = vmatpush1.msra.mxu0 0.0
    %976 = vmatprep.subr.mxu0 0.0
    %977 = vmatpush1.msra.mxu0 0.0
    %978 = vmatprep.subr.mxu0 0.0
    %979 = vmatpush1.msra.mxu0 0.0
    %980 = vmatprep.subr.mxu0 0.0
    %981 = vmatpush1.msra.mxu0 0.0
    %982 = vmatprep.subr.mxu0 0.0
    %983 = vmatpush1.msra.mxu0 0.0
    %984 = vmatprep.subr.mxu0 0.0
    %985 = vmatpush1.msra.mxu0 0.0
    %986 = vmatprep.subr.mxu0 0.0
    %987 = vmatpush1.msra.mxu0 0.0
    %988 = vmatprep.subr.mxu0 0.0
    %989 = vmatpush1.msra.mxu0 0.0
    %990 = vmatprep.subr.mxu0 0.0
    %991 = vmatpush1.msra.mxu0 0.0
    %992 = vmatprep.subr.mxu0 0.0
    %993 = vmatpush1.msra.mxu0 0.0
    %994 = vmatprep.subr.mxu0 0.0
    %995 = vmatpush1.msra.mxu0 0.0
    %996 = vmatprep.subr.mxu0 0.0
    %997 = vmatpush1.msra.mxu0 0.0
    %998 = vmatprep.subr.mxu0 0.0
    %999 = vmatpush1.msra.mxu0 0.0
    %1000 = vmatprep.subr.mxu0 0.0
    %1001 = vmatpush1.msra.mxu0 0.0
    %1002 = vmatprep.subr.mxu0 0.0
    %1003 = vmatpush1.msra.mxu0 0.0
    %1004 = vmatprep.subr.mxu0 0.0
    %1005 = vmatpush1.msra.mxu0 0.0
    %1006 = vmatprep.mubr.f32.mxu0 0.0
    %v1007 = vand.u32 %v260, 4294901760
    %v1008 = vsub.f32 %v260, %v1007
    %v1009 = vand.u32 %v1008, 4294901760
    %1010 = vmatmul.mubr.f32.gmra.mrb[0].mxu0 %v1009
    %v1011 = vpop.f32.mrb[0].mxu0
    %v1012 = vadd.f32 %v826, %v1011
    %v1013 = vpop.f32.mrb[0].mxu0
    %1014 = vmatprep.mubr.f32.mxu0 0.0
    %v1015 = vand.u32 %v263, 4294901760
    %v1016 = vsub.f32 %v263, %v1015
    %v1017 = vand.u32 %v1016, 4294901760
    %1018 = vmatmul.mubr.f32.gmra.mrb[0].mxu0 %v1017
    %v1019 = vpop.f32.mrb[0].mxu0
    %v1020 = vadd.f32 %v833, %v1019
    %v1021 = vpop.f32.mrb[0].mxu0
    %1022 = vmatprep.mubr.f32.mxu0 0.0
    %v1023 = vand.u32 %v266, 4294901760
    %v1024 = vsub.f32 %v266, %v1023
    %v1025 = vand.u32 %v1024, 4294901760
    %1026 = vmatmul.mubr.f32.gmra.mrb[0].mxu0 %v1025
    %v1027 = vpop.f32.mrb[0].mxu0
    %v1028 = vadd.f32 %v840, %v1027
    %v1029 = vpop.f32.mrb[0].mxu0
    %1030 = vmatprep.mubr.f32.mxu0 0.0
    %v1031 = vand.u32 %v269, 4294901760
    %v1032 = vsub.f32 %v269, %v1031
    %v1033 = vand.u32 %v1032, 4294901760
    %1034 = vmatmul.mubr.f32.gmra.mrb[0].mxu0 %v1033
    %v1035 = vpop.f32.mrb[0].mxu0
    %v1036 = vadd.f32 %v847, %v1035
    %v1037 = vpop.f32.mrb[0].mxu0
    %1038 = vmatprep.mubr.f32.mxu0 0.0
    %v1039 = vand.u32 %v272, 4294901760
    %v1040 = vsub.f32 %v272, %v1039
    %v1041 = vand.u32 %v1040, 4294901760
    %1042 = vmatmul.mubr.f32.gmra.mrb[0].mxu0 %v1041
    %v1043 = vpop.f32.mrb[0].mxu0
    %v1044 = vadd.f32 %v854, %v1043
    %v1045 = vpop.f32.mrb[0].mxu0
    %1046 = vmatprep.mubr.f32.mxu0 0.0
    %v1047 = vand.u32 %v275, 4294901760
    %v1048 = vsub.f32 %v275, %v1047
    %v1049 = vand.u32 %v1048, 4294901760
    %1050 = vmatmul.mubr.f32.gmra.mrb[0].mxu0 %v1049
    %v1051 = vpop.f32.mrb[0].mxu0
    %v1052 = vadd.f32 %v861, %v1051
    %v1053 = vpop.f32.mrb[0].mxu0
    %1054 = vmatprep.mubr.f32.mxu0 0.0
    %v1055 = vand.u32 %v278, 4294901760
    %v1056 = vsub.f32 %v278, %v1055
    %v1057 = vand.u32 %v1056, 4294901760
    %1058 = vmatmul.mubr.f32.gmra.mrb[0].mxu0 %v1057
    %v1059 = vpop.f32.mrb[0].mxu0
    %v1060 = vadd.f32 %v868, %v1059
    %v1061 = vpop.f32.mrb[0].mxu0
    %1062 = vmatprep.mubr.f32.mxu0 0.0
    %v1063 = vand.u32 %v281, 4294901760
    %v1064 = vsub.f32 %v281, %v1063
    %v1065 = vand.u32 %v1064, 4294901760
    %1066 = vmatmul.mubr.f32.gmra.mrb[0].mxu0 %v1065
    %v1067 = vpop.f32.mrb[0].mxu0
    %v1068 = vadd.f32 %v875, %v1067
    %v1069 = vpop.f32.mrb[0].mxu0
    %1070 = vmatprep.mubr.f32.mxu0 0.0
    %v1071 = vand.u32 %v284, 4294901760
    %v1072 = vsub.f32 %v284, %v1071
    %v1073 = vand.u32 %v1072, 4294901760
    %1074 = vmatmul.mubr.f32.gmra.mrb[0].mxu0 %v1073
    %v1075 = vpop.f32.mrb[0].mxu0
    %v1076 = vadd.f32 %v882, %v1075
    %v1077 = vpop.f32.mrb[0].mxu0
    %1078 = vmatprep.mubr.f32.mxu0 0.0
    %v1079 = vand.u32 %v287, 4294901760
    %v1080 = vsub.f32 %v287, %v1079
    %v1081 = vand.u32 %v1080, 4294901760
    %1082 = vmatmul.mubr.f32.gmra.mrb[0].mxu0 %v1081
    %v1083 = vpop.f32.mrb[0].mxu0
    %v1084 = vadd.f32 %v889, %v1083
    %v1085 = vpop.f32.mrb[0].mxu0
    %1086 = vmatprep.mubr.f32.mxu0 0.0
    %v1087 = vand.u32 %v290, 4294901760
    %v1088 = vsub.f32 %v290, %v1087
    %v1089 = vand.u32 %v1088, 4294901760
    %1090 = vmatmul.mubr.f32.gmra.mrb[0].mxu0 %v1089
    %v1091 = vpop.f32.mrb[0].mxu0
    %v1092 = vadd.f32 %v896, %v1091
    %v1093 = vpop.f32.mrb[0].mxu0
    %1094 = vmatprep.mubr.f32.mxu0 0.0
    %v1095 = vand.u32 %v293, 4294901760
    %v1096 = vsub.f32 %v293, %v1095
    %v1097 = vand.u32 %v1096, 4294901760
    %1098 = vmatmul.mubr.f32.gmra.mrb[0].mxu0 %v1097
    %v1099 = vpop.f32.mrb[0].mxu0
    %v1100 = vadd.f32 %v903, %v1099
    %v1101 = vpop.f32.mrb[0].mxu0
    %1102 = vmatprep.mubr.f32.mxu0 0.0
    %v1103 = vand.u32 %v296, 4294901760
    %v1104 = vsub.f32 %v296, %v1103
    %v1105 = vand.u32 %v1104, 4294901760
    %1106 = vmatmul.mubr.f32.gmra.mrb[0].mxu0 %v1105
    %v1107 = vpop.f32.mrb[0].mxu0
    %v1108 = vadd.f32 %v910, %v1107
    %v1109 = vpop.f32.mrb[0].mxu0
    %1110 = vmatprep.mubr.f32.mxu0 0.0
    %v1111 = vand.u32 %v299, 4294901760
    %v1112 = vsub.f32 %v299, %v1111
    %v1113 = vand.u32 %v1112, 4294901760
    %1114 = vmatmul.mubr.f32.gmra.mrb[0].mxu0 %v1113
    %v1115 = vpop.f32.mrb[0].mxu0
    %v1116 = vadd.f32 %v917, %v1115
    %v1117 = vpop.f32.mrb[0].mxu0
    %1118 = vmatprep.mubr.f32.mxu0 0.0
    %v1119 = vand.u32 %v302, 4294901760
    %v1120 = vsub.f32 %v302, %v1119
    %v1121 = vand.u32 %v1120, 4294901760
    %1122 = vmatmul.mubr.f32.gmra.mrb[0].mxu0 %v1121
    %v1123 = vpop.f32.mrb[0].mxu0
    %v1124 = vadd.f32 %v924, %v1123
    %v1125 = vpop.f32.mrb[0].mxu0
    %1126 = vmatprep.mubr.f32.mxu0 0.0
    %v1127 = vand.u32 %v305, 4294901760
    %v1128 = vsub.f32 %v305, %v1127
    %v1129 = vand.u32 %v1128, 4294901760
    %1130 = vmatmul.mubr.f32.gmra.mrb[0].mxu0 %v1129
    %v1131 = vpop.f32.mrb[0].mxu0
    %v1132 = vadd.f32 %v931, %v1131
    %v1133 = vpop.f32.mrb[0].mxu0
    %1134 = vdwg.mxu0
    %1135 = vmatprep.subr.mxu0 0.0
    %v1136 = vand.u32 %v50, 4294901760
    %v1137 = vsub.f32 %v50, %v1136
    %v1138 = vand.u32 %v1137, 4294901760
    %1139 = vmatpush1.msra.mxu0 %v1138
    %1140 = vmatprep.subr.mxu0 0.0
    %v1141 = vand.u32 %v51, 4294901760
    %v1142 = vsub.f32 %v51, %v1141
    %v1143 = vand.u32 %v1142, 4294901760
    %1144 = vmatpush1.msra.mxu0 %v1143
    %1145 = vmatprep.subr.mxu0 0.0
    %v1146 = vand.u32 %v52, 4294901760
    %v1147 = vsub.f32 %v52, %v1146
    %v1148 = vand.u32 %v1147, 4294901760
    %1149 = vmatpush1.msra.mxu0 %v1148
    %1150 = vmatprep.subr.mxu0 0.0
    %v1151 = vand.u32 %v53, 4294901760
    %v1152 = vsub.f32 %v53, %v1151
    %v1153 = vand.u32 %v1152, 4294901760
    %1154 = vmatpush1.msra.mxu0 %v1153
    %1155 = vmatprep.subr.mxu0 0.0
    %v1156 = vand.u32 %v54, 4294901760
    %v1157 = vsub.f32 %v54, %v1156
    %v1158 = vand.u32 %v1157, 4294901760
    %1159 = vmatpush1.msra.mxu0 %v1158
    %1160 = vmatprep.subr.mxu0 0.0
    %v1161 = vand.u32 %v55, 4294901760
    %v1162 = vsub.f32 %v55, %v1161
    %v1163 = vand.u32 %v1162, 4294901760
    %1164 = vmatpush1.msra.mxu0 %v1163
    %1165 = vmatprep.subr.mxu0 0.0
    %v1166 = vand.u32 %v56, 4294901760
    %v1167 = vsub.f32 %v56, %v1166
    %v1168 = vand.u32 %v1167, 4294901760
    %1169 = vmatpush1.msra.mxu0 %v1168
    %1170 = vmatprep.subr.mxu0 0.0
    %v1171 = vand.u32 %v57, 4294901760
    %v1172 = vsub.f32 %v57, %v1171
    %v1173 = vand.u32 %v1172, 4294901760
    %1174 = vmatpush1.msra.mxu0 %v1173
    %1175 = vmatprep.subr.mxu0 0.0
    %1176 = vmatpush1.msra.mxu0 0.0
    %1177 = vmatprep.subr.mxu0 0.0
    %1178 = vmatpush1.msra.mxu0 0.0
    %1179 = vmatprep.subr.mxu0 0.0
    %1180 = vmatpush1.msra.mxu0 0.0
    %1181 = vmatprep.subr.mxu0 0.0
    %1182 = vmatpush1.msra.mxu0 0.0
    %1183 = vmatprep.subr.mxu0 0.0
    %1184 = vmatpush1.msra.mxu0 0.0
    %1185 = vmatprep.subr.mxu0 0.0
    %1186 = vmatpush1.msra.mxu0 0.0
    %1187 = vmatprep.subr.mxu0 0.0
    %1188 = vmatpush1.msra.mxu0 0.0
    %1189 = vmatprep.subr.mxu0 0.0
    %1190 = vmatpush1.msra.mxu0 0.0
    %1191 = vmatprep.subr.mxu0 0.0
    %1192 = vmatpush1.msra.mxu0 0.0
    %1193 = vmatprep.subr.mxu0 0.0
    %1194 = vmatpush1.msra.mxu0 0.0
    %1195 = vmatprep.subr.mxu0 0.0
    %1196 = vmatpush1.msra.mxu0 0.0
    %1197 = vmatprep.subr.mxu0 0.0
    %1198 = vmatpush1.msra.mxu0 0.0
    %1199 = vmatprep.subr.mxu0 0.0
    %1200 = vmatpush1.msra.mxu0 0.0
    %1201 = vmatprep.subr.mxu0 0.0
    %1202 = vmatpush1.msra.mxu0 0.0
    %1203 = vmatprep.subr.mxu0 0.0
    %1204 = vmatpush1.msra.mxu0 0.0
    %1205 = vmatprep.subr.mxu0 0.0
    %1206 = vmatpush1.msra.mxu0 0.0
    %1207 = vmatprep.subr.mxu0 0.0
    %1208 = vmatpush1.msra.mxu0 0.0
    %1209 = vmatprep.subr.mxu0 0.0
    %1210 = vmatpush1.msra.mxu0 0.0
    %1211 = vmatprep.subr.mxu0 0.0
    %1212 = vmatpush1.msra.mxu0 0.0
    %1213 = vmatprep.subr.mxu0 0.0
    %1214 = vmatpush1.msra.mxu0 0.0
    %1215 = vmatprep.subr.mxu0 0.0
    %1216 = vmatpush1.msra.mxu0 0.0
    %1217 = vmatprep.subr.mxu0 0.0
    %1218 = vmatpush1.msra.mxu0 0.0
    %1219 = vmatprep.subr.mxu0 0.0
    %1220 = vmatpush1.msra.mxu0 0.0
    %1221 = vmatprep.subr.mxu0 0.0
    %1222 = vmatpush1.msra.mxu0 0.0
    %1223 = vmatprep.mubr.f32.mxu0 0.0
    %v1224 = vand.u32 %v260, 4294901760
    %1225 = vmatmul.mubr.f32.gmra.mrb[0].mxu0 %v1224
    %v1226 = vpop.f32.mrb[0].mxu0
    %v1227 = vadd.f32 %v1012, %v1226
    %v1228 = vpop.f32.mrb[0].mxu0
    %1229 = vmatprep.mubr.f32.mxu0 0.0
    %v1230 = vand.u32 %v263, 4294901760
    %1231 = vmatmul.mubr.f32.gmra.mrb[0].mxu0 %v1230
    %v1232 = vpop.f32.mrb[0].mxu0
    %v1233 = vadd.f32 %v1020, %v1232
    %v1234 = vpop.f32.mrb[0].mxu0
    %1235 = vmatprep.mubr.f32.mxu0 0.0
    %v1236 = vand.u32 %v266, 4294901760
    %1237 = vmatmul.mubr.f32.gmra.mrb[0].mxu0 %v1236
    %v1238 = vpop.f32.mrb[0].mxu0
    %v1239 = vadd.f32 %v1028, %v1238
    %v1240 = vpop.f32.mrb[0].mxu0
    %1241 = vmatprep.mubr.f32.mxu0 0.0
    %v1242 = vand.u32 %v269, 4294901760
    %1243 = vmatmul.mubr.f32.gmra.mrb[0].mxu0 %v1242
    %v1244 = vpop.f32.mrb[0].mxu0
    %v1245 = vadd.f32 %v1036, %v1244
    %v1246 = vpop.f32.mrb[0].mxu0
    %1247 = vmatprep.mubr.f32.mxu0 0.0
    %v1248 = vand.u32 %v272, 4294901760
    %1249 = vmatmul.mubr.f32.gmra.mrb[0].mxu0 %v1248
    %v1250 = vpop.f32.mrb[0].mxu0
    %v1251 = vadd.f32 %v1044, %v1250
    %v1252 = vpop.f32.mrb[0].mxu0
    %1253 = vmatprep.mubr.f32.mxu0 0.0
    %v1254 = vand.u32 %v275, 4294901760
    %1255 = vmatmul.mubr.f32.gmra.mrb[0].mxu0 %v1254
    %v1256 = vpop.f32.mrb[0].mxu0
    %v1257 = vadd.f32 %v1052, %v1256
    %v1258 = vpop.f32.mrb[0].mxu0
    %1259 = vmatprep.mubr.f32.mxu0 0.0
    %v1260 = vand.u32 %v278, 4294901760
    %1261 = vmatmul.mubr.f32.gmra.mrb[0].mxu0 %v1260
    %v1262 = vpop.f32.mrb[0].mxu0
    %v1263 = vadd.f32 %v1060, %v1262
    %v1264 = vpop.f32.mrb[0].mxu0
    %1265 = vmatprep.mubr.f32.mxu0 0.0
    %v1266 = vand.u32 %v281, 4294901760
    %1267 = vmatmul.mubr.f32.gmra.mrb[0].mxu0 %v1266
    %v1268 = vpop.f32.mrb[0].mxu0
    %v1269 = vadd.f32 %v1068, %v1268
    %v1270 = vpop.f32.mrb[0].mxu0
    %1271 = vmatprep.mubr.f32.mxu0 0.0
    %v1272 = vand.u32 %v284, 4294901760
    %1273 = vmatmul.mubr.f32.gmra.mrb[0].mxu0 %v1272
    %v1274 = vpop.f32.mrb[0].mxu0
    %v1275 = vadd.f32 %v1076, %v1274
    %v1276 = vpop.f32.mrb[0].mxu0
    %1277 = vmatprep.mubr.f32.mxu0 0.0
    %v1278 = vand.u32 %v287, 4294901760
    %1279 = vmatmul.mubr.f32.gmra.mrb[0].mxu0 %v1278
    %v1280 = vpop.f32.mrb[0].mxu0
    %v1281 = vadd.f32 %v1084, %v1280
    %v1282 = vpop.f32.mrb[0].mxu0
    %1283 = vmatprep.mubr.f32.mxu0 0.0
    %v1284 = vand.u32 %v290, 4294901760
    %1285 = vmatmul.mubr.f32.gmra.mrb[0].mxu0 %v1284
    %v1286 = vpop.f32.mrb[0].mxu0
    %v1287 = vadd.f32 %v1092, %v1286
    %v1288 = vpop.f32.mrb[0].mxu0
    %1289 = vmatprep.mubr.f32.mxu0 0.0
    %v1290 = vand.u32 %v293, 4294901760
    %1291 = vmatmul.mubr.f32.gmra.mrb[0].mxu0 %v1290
    %v1292 = vpop.f32.mrb[0].mxu0
    %v1293 = vadd.f32 %v1100, %v1292
    %v1294 = vpop.f32.mrb[0].mxu0
    %1295 = vmatprep.mubr.f32.mxu0 0.0
    %v1296 = vand.u32 %v296, 4294901760
    %1297 = vmatmul.mubr.f32.gmra.mrb[0].mxu0 %v1296
    %v1298 = vpop.f32.mrb[0].mxu0
    %v1299 = vadd.f32 %v1108, %v1298
    %v1300 = vpop.f32.mrb[0].mxu0
    %1301 = vmatprep.mubr.f32.mxu0 0.0
    %v1302 = vand.u32 %v299, 4294901760
    %1303 = vmatmul.mubr.f32.gmra.mrb[0].mxu0 %v1302
    %v1304 = vpop.f32.mrb[0].mxu0
    %v1305 = vadd.f32 %v1116, %v1304
    %v1306 = vpop.f32.mrb[0].mxu0
    %1307 = vmatprep.mubr.f32.mxu0 0.0
    %v1308 = vand.u32 %v302, 4294901760
    %1309 = vmatmul.mubr.f32.gmra.mrb[0].mxu0 %v1308
    %v1310 = vpop.f32.mrb[0].mxu0
    %v1311 = vadd.f32 %v1124, %v1310
    %v1312 = vpop.f32.mrb[0].mxu0
    %1313 = vmatprep.mubr.f32.mxu0 0.0
    %v1314 = vand.u32 %v305, 4294901760
    %1315 = vmatmul.mubr.f32.gmra.mrb[0].mxu0 %v1314
    %v1316 = vpop.f32.mrb[0].mxu0
    %v1317 = vadd.f32 %v1132, %v1316
    %v1318 = vpop.f32.mrb[0].mxu0
    %1319 = vdwg.mxu0
    %1320 = vmatprep.subr.mxu0 0.0
    %v1321 = vand.u32 %v50, 4294901760
    %1322 = vmatpush1.msra.mxu0 %v1321
    %1323 = vmatprep.subr.mxu0 0.0
    %v1324 = vand.u32 %v51, 4294901760
    %1325 = vmatpush1.msra.mxu0 %v1324
    %1326 = vmatprep.subr.mxu0 0.0
    %v1327 = vand.u32 %v52, 4294901760
    %1328 = vmatpush1.msra.mxu0 %v1327
    %1329 = vmatprep.subr.mxu0 0.0
    %v1330 = vand.u32 %v53, 4294901760
    %1331 = vmatpush1.msra.mxu0 %v1330
    %1332 = vmatprep.subr.mxu0 0.0
    %v1333 = vand.u32 %v54, 4294901760
    %1334 = vmatpush1.msra.mxu0 %v1333
    %1335 = vmatprep.subr.mxu0 0.0
    %v1336 = vand.u32 %v55, 4294901760
    %1337 = vmatpush1.msra.mxu0 %v1336
    %1338 = vmatprep.subr.mxu0 0.0
    %v1339 = vand.u32 %v56, 4294901760
    %1340 = vmatpush1.msra.mxu0 %v1339
    %1341 = vmatprep.subr.mxu0 0.0
    %v1342 = vand.u32 %v57, 4294901760
    %1343 = vmatpush1.msra.mxu0 %v1342
    %1344 = vmatprep.subr.mxu0 0.0
    %1345 = vmatpush1.msra.mxu0 0.0
    %1346 = vmatprep.subr.mxu0 0.0
    %1347 = vmatpush1.msra.mxu0 0.0
    %1348 = vmatprep.subr.mxu0 0.0
    %1349 = vmatpush1.msra.mxu0 0.0
    %1350 = vmatprep.subr.mxu0 0.0
    %1351 = vmatpush1.msra.mxu0 0.0
    %1352 = vmatprep.subr.mxu0 0.0
    %1353 = vmatpush1.msra.mxu0 0.0
    %1354 = vmatprep.subr.mxu0 0.0
    %1355 = vmatpush1.msra.mxu0 0.0
    %1356 = vmatprep.subr.mxu0 0.0
    %1357 = vmatpush1.msra.mxu0 0.0
    %1358 = vmatprep.subr.mxu0 0.0
    %1359 = vmatpush1.msra.mxu0 0.0
    %1360 = vmatprep.subr.mxu0 0.0
    %1361 = vmatpush1.msra.mxu0 0.0
    %1362 = vmatprep.subr.mxu0 0.0
    %1363 = vmatpush1.msra.mxu0 0.0
    %1364 = vmatprep.subr.mxu0 0.0
    %1365 = vmatpush1.msra.mxu0 0.0
    %1366 = vmatprep.subr.mxu0 0.0
    %1367 = vmatpush1.msra.mxu0 0.0
    %1368 = vmatprep.subr.mxu0 0.0
    %1369 = vmatpush1.msra.mxu0 0.0
    %1370 = vmatprep.subr.mxu0 0.0
    %1371 = vmatpush1.msra.mxu0 0.0
    %1372 = vmatprep.subr.mxu0 0.0
    %1373 = vmatpush1.msra.mxu0 0.0
    %1374 = vmatprep.subr.mxu0 0.0
    %1375 = vmatpush1.msra.mxu0 0.0
    %1376 = vmatprep.subr.mxu0 0.0
    %1377 = vmatpush1.msra.mxu0 0.0
    %1378 = vmatprep.subr.mxu0 0.0
    %1379 = vmatpush1.msra.mxu0 0.0
    %1380 = vmatprep.subr.mxu0 0.0
    %1381 = vmatpush1.msra.mxu0 0.0
    %1382 = vmatprep.subr.mxu0 0.0
    %1383 = vmatpush1.msra.mxu0 0.0
    %1384 = vmatprep.subr.mxu0 0.0
    %1385 = vmatpush1.msra.mxu0 0.0
    %1386 = vmatprep.subr.mxu0 0.0
    %1387 = vmatpush1.msra.mxu0 0.0
    %1388 = vmatprep.subr.mxu0 0.0
    %1389 = vmatpush1.msra.mxu0 0.0
    %1390 = vmatprep.subr.mxu0 0.0
    %1391 = vmatpush1.msra.mxu0 0.0
    %1392 = vmatprep.mubr.f32.mxu0 0.0
    %v1393 = vand.u32 %v260, 4294901760
    %1394 = vmatmul.mubr.f32.gmra.mrb[0].mxu0 %v1393
    %v1395 = vpop.f32.mrb[0].mxu0
    %v1396 = vadd.f32 %v1227, %v1395
    %v1397 = vpop.f32.mrb[0].mxu0
    %1398 = vmatprep.mubr.f32.mxu0 0.0
    %v1399 = vand.u32 %v263, 4294901760
    %1400 = vmatmul.mubr.f32.gmra.mrb[0].mxu0 %v1399
    %v1401 = vpop.f32.mrb[0].mxu0
    %v1402 = vadd.f32 %v1233, %v1401
    %v1403 = vpop.f32.mrb[0].mxu0
    %1404 = vmatprep.mubr.f32.mxu0 0.0
    %v1405 = vand.u32 %v266, 4294901760
    %1406 = vmatmul.mubr.f32.gmra.mrb[0].mxu0 %v1405
    %v1407 = vpop.f32.mrb[0].mxu0
    %v1408 = vadd.f32 %v1239, %v1407
    %v1409 = vpop.f32.mrb[0].mxu0
    %1410 = vmatprep.mubr.f32.mxu0 0.0
    %v1411 = vand.u32 %v269, 4294901760
    %1412 = vmatmul.mubr.f32.gmra.mrb[0].mxu0 %v1411
    %v1413 = vpop.f32.mrb[0].mxu0
    %v1414 = vadd.f32 %v1245, %v1413
    %v1415 = vpop.f32.mrb[0].mxu0
    %1416 = vmatprep.mubr.f32.mxu0 0.0
    %v1417 = vand.u32 %v272, 4294901760
    %1418 = vmatmul.mubr.f32.gmra.mrb[0].mxu0 %v1417
    %v1419 = vpop.f32.mrb[0].mxu0
    %v1420 = vadd.f32 %v1251, %v1419
    %v1421 = vpop.f32.mrb[0].mxu0
    %1422 = vmatprep.mubr.f32.mxu0 0.0
    %v1423 = vand.u32 %v275, 4294901760
    %1424 = vmatmul.mubr.f32.gmra.mrb[0].mxu0 %v1423
    %v1425 = vpop.f32.mrb[0].mxu0
    %v1426 = vadd.f32 %v1257, %v1425
    %v1427 = vpop.f32.mrb[0].mxu0
    %1428 = vmatprep.mubr.f32.mxu0 0.0
    %v1429 = vand.u32 %v278, 4294901760
    %1430 = vmatmul.mubr.f32.gmra.mrb[0].mxu0 %v1429
    %v1431 = vpop.f32.mrb[0].mxu0
    %v1432 = vadd.f32 %v1263, %v1431
    %v1433 = vpop.f32.mrb[0].mxu0
    %1434 = vmatprep.mubr.f32.mxu0 0.0
    %v1435 = vand.u32 %v281, 4294901760
    %1436 = vmatmul.mubr.f32.gmra.mrb[0].mxu0 %v1435
    %v1437 = vpop.f32.mrb[0].mxu0
    %v1438 = vadd.f32 %v1269, %v1437
    %v1439 = vpop.f32.mrb[0].mxu0
    %1440 = vmatprep.mubr.f32.mxu0 0.0
    %v1441 = vand.u32 %v284, 4294901760
    %1442 = vmatmul.mubr.f32.gmra.mrb[0].mxu0 %v1441
    %v1443 = vpop.f32.mrb[0].mxu0
    %v1444 = vadd.f32 %v1275, %v1443
    %v1445 = vpop.f32.mrb[0].mxu0
    %1446 = vmatprep.mubr.f32.mxu0 0.0
    %v1447 = vand.u32 %v287, 4294901760
    %1448 = vmatmul.mubr.f32.gmra.mrb[0].mxu0 %v1447
    %v1449 = vpop.f32.mrb[0].mxu0
    %v1450 = vadd.f32 %v1281, %v1449
    %v1451 = vpop.f32.mrb[0].mxu0
    %1452 = vmatprep.mubr.f32.mxu0 0.0
    %v1453 = vand.u32 %v290, 4294901760
    %1454 = vmatmul.mubr.f32.gmra.mrb[0].mxu0 %v1453
    %v1455 = vpop.f32.mrb[0].mxu0
    %v1456 = vadd.f32 %v1287, %v1455
    %v1457 = vpop.f32.mrb[0].mxu0
    %1458 = vmatprep.mubr.f32.mxu0 0.0
    %v1459 = vand.u32 %v293, 4294901760
    %1460 = vmatmul.mubr.f32.gmra.mrb[0].mxu0 %v1459
    %v1461 = vpop.f32.mrb[0].mxu0
    %v1462 = vadd.f32 %v1293, %v1461
    %v1463 = vpop.f32.mrb[0].mxu0
    %1464 = vmatprep.mubr.f32.mxu0 0.0
    %v1465 = vand.u32 %v296, 4294901760
    %1466 = vmatmul.mubr.f32.gmra.mrb[0].mxu0 %v1465
    %v1467 = vpop.f32.mrb[0].mxu0
    %v1468 = vadd.f32 %v1299, %v1467
    %v1469 = vpop.f32.mrb[0].mxu0
    %1470 = vmatprep.mubr.f32.mxu0 0.0
    %v1471 = vand.u32 %v299, 4294901760
    %1472 = vmatmul.mubr.f32.gmra.mrb[0].mxu0 %v1471
    %v1473 = vpop.f32.mrb[0].mxu0
    %v1474 = vadd.f32 %v1305, %v1473
    %v1475 = vpop.f32.mrb[0].mxu0
    %1476 = vmatprep.mubr.f32.mxu0 0.0
    %v1477 = vand.u32 %v302, 4294901760
    %1478 = vmatmul.mubr.f32.gmra.mrb[0].mxu0 %v1477
    %v1479 = vpop.f32.mrb[0].mxu0
    %v1480 = vadd.f32 %v1311, %v1479
    %v1481 = vpop.f32.mrb[0].mxu0
    %1482 = vmatprep.mubr.f32.mxu0 0.0
    %v1483 = vand.u32 %v305, 4294901760
    %1484 = vmatmul.mubr.f32.gmra.mrb[0].mxu0 %v1483
    %v1485 = vpop.f32.mrb[0].mxu0
    %v1486 = vadd.f32 %v1317, %v1485
    %v1487 = vpop.f32.mrb[0].mxu0
    %1488 = vdwg.mxu0
    %vm1489 = vcmask 392192
    %v1491 = vsel %vm1489, %v242, 0
    %v1494 = vsel %vm1489, %v243, 0
    %v1497 = vsel %vm1489, %v244, 0
    %v1500 = vsel %vm1489, %v245, 0
    %v1503 = vsel %vm1489, %v246, 0
    %v1506 = vsel %vm1489, %v247, 0
    %v1509 = vsel %vm1489, %v248, 0
    %v1512 = vsel %vm1489, %v249, 0
    %v1515 = vsel %vm1489, %v250, 0
    %v1518 = vsel %vm1489, %v251, 0
    %v1521 = vsel %vm1489, %v252, 0
    %v1524 = vsel %vm1489, %v253, 0
    %v1527 = vsel %vm1489, %v254, 0
    %v1530 = vsel %vm1489, %v255, 0
    %v1533 = vsel %vm1489, %v256, 0
    %v1536 = vsel %vm1489, %v257, 0
    %1538 = vmatprep.subr.mxu0 0.0
    %v1539 = vand.u32 %v58, 4294901760
    %1540 = vmatpush1.msra.mxu0 %v1539
    %1541 = vmatprep.subr.mxu0 0.0
    %v1542 = vand.u32 %v59, 4294901760
    %1543 = vmatpush1.msra.mxu0 %v1542
    %1544 = vmatprep.subr.mxu0 0.0
    %v1545 = vand.u32 %v60, 4294901760
    %1546 = vmatpush1.msra.mxu0 %v1545
    %1547 = vmatprep.subr.mxu0 0.0
    %v1548 = vand.u32 %v61, 4294901760
    %1549 = vmatpush1.msra.mxu0 %v1548
    %1550 = vmatprep.subr.mxu0 0.0
    %v1551 = vand.u32 %v62, 4294901760
    %1552 = vmatpush1.msra.mxu0 %v1551
    %1553 = vmatprep.subr.mxu0 0.0
    %v1554 = vand.u32 %v63, 4294901760
    %1555 = vmatpush1.msra.mxu0 %v1554
    %1556 = vmatprep.subr.mxu0 0.0
    %1557 = vmatpush1.msra.mxu0 0.0
    %1558 = vmatprep.subr.mxu0 0.0
    %1559 = vmatpush1.msra.mxu0 0.0
    %1560 = vmatprep.subr.mxu0 0.0
    %1561 = vmatpush1.msra.mxu0 0.0
    %1562 = vmatprep.subr.mxu0 0.0
    %1563 = vmatpush1.msra.mxu0 0.0
    %1564 = vmatprep.subr.mxu0 0.0
    %1565 = vmatpush1.msra.mxu0 0.0
    %1566 = vmatprep.subr.mxu0 0.0
    %1567 = vmatpush1.msra.mxu0 0.0
    %1568 = vmatprep.subr.mxu0 0.0
    %1569 = vmatpush1.msra.mxu0 0.0
    %1570 = vmatprep.subr.mxu0 0.0
    %1571 = vmatpush1.msra.mxu0 0.0
    %1572 = vmatprep.subr.mxu0 0.0
    %1573 = vmatpush1.msra.mxu0 0.0
    %1574 = vmatprep.subr.mxu0 0.0
    %1575 = vmatpush1.msra.mxu0 0.0
    %1576 = vmatprep.subr.mxu0 0.0
    %1577 = vmatpush1.msra.mxu0 0.0
    %1578 = vmatprep.subr.mxu0 0.0
    %1579 = vmatpush1.msra.mxu0 0.0
    %1580 = vmatprep.subr.mxu0 0.0
    %1581 = vmatpush1.msra.mxu0 0.0
    %1582 = vmatprep.subr.mxu0 0.0
    %1583 = vmatpush1.msra.mxu0 0.0
    %1584 = vmatprep.subr.mxu0 0.0
    %1585 = vmatpush1.msra.mxu0 0.0
    %1586 = vmatprep.subr.mxu0 0.0
    %1587 = vmatpush1.msra.mxu0 0.0
    %1588 = vmatprep.subr.mxu0 0.0
    %1589 = vmatpush1.msra.mxu0 0.0
    %1590 = vmatprep.subr.mxu0 0.0
    %1591 = vmatpush1.msra.mxu0 0.0
    %1592 = vmatprep.subr.mxu0 0.0
    %1593 = vmatpush1.msra.mxu0 0.0
    %1594 = vmatprep.subr.mxu0 0.0
    %1595 = vmatpush1.msra.mxu0 0.0
    %1596 = vmatprep.subr.mxu0 0.0
    %1597 = vmatpush1.msra.mxu0 0.0
    %1598 = vmatprep.subr.mxu0 0.0
    %1599 = vmatpush1.msra.mxu0 0.0
    %1600 = vmatprep.subr.mxu0 0.0
    %1601 = vmatpush1.msra.mxu0 0.0
    %1602 = vmatprep.subr.mxu0 0.0
    %1603 = vmatpush1.msra.mxu0 0.0
    %1604 = vmatprep.subr.mxu0 0.0
    %1605 = vmatpush1.msra.mxu0 0.0
    %1606 = vmatprep.subr.mxu0 0.0
    %1607 = vmatpush1.msra.mxu0 0.0
    %1608 = vmatprep.mubr.f32.mxu0 0.0
    %v1609 = vand.u32 %v1491, 4294901760
    %v1610 = vsub.f32 %v1491, %v1609
    %v1611 = vand.u32 %v1610, 4294901760
    %v1612 = vsub.f32 %v1610, %v1611
    %v1613 = vand.u32 %v1612, 4294901760
    %1614 = vmatmul.mubr.f32.gmra.mrb[0].mxu0 %v1613
    %v1615 = vpop.f32.mrb[0].mxu0
    %v1616 = vadd.f32 0.0, %v1615
    %v1617 = vpop.f32.mrb[0].mxu0
    %1618 = vmatprep.mubr.f32.mxu0 0.0
    %v1619 = vand.u32 %v1494, 4294901760
    %v1620 = vsub.f32 %v1494, %v1619
    %v1621 = vand.u32 %v1620, 4294901760
    %v1622 = vsub.f32 %v1620, %v1621
    %v1623 = vand.u32 %v1622, 4294901760
    %1624 = vmatmul.mubr.f32.gmra.mrb[0].mxu0 %v1623
    %v1625 = vpop.f32.mrb[0].mxu0
    %v1626 = vadd.f32 0.0, %v1625
    %v1627 = vpop.f32.mrb[0].mxu0
    %1628 = vmatprep.mubr.f32.mxu0 0.0
    %v1629 = vand.u32 %v1497, 4294901760
    %v1630 = vsub.f32 %v1497, %v1629
    %v1631 = vand.u32 %v1630, 4294901760
    %v1632 = vsub.f32 %v1630, %v1631
    %v1633 = vand.u32 %v1632, 4294901760
    %1634 = vmatmul.mubr.f32.gmra.mrb[0].mxu0 %v1633
    %v1635 = vpop.f32.mrb[0].mxu0
    %v1636 = vadd.f32 0.0, %v1635
    %v1637 = vpop.f32.mrb[0].mxu0
    %1638 = vmatprep.mubr.f32.mxu0 0.0
    %v1639 = vand.u32 %v1500, 4294901760
    %v1640 = vsub.f32 %v1500, %v1639
    %v1641 = vand.u32 %v1640, 4294901760
    %v1642 = vsub.f32 %v1640, %v1641
    %v1643 = vand.u32 %v1642, 4294901760
    %1644 = vmatmul.mubr.f32.gmra.mrb[0].mxu0 %v1643
    %v1645 = vpop.f32.mrb[0].mxu0
    %v1646 = vadd.f32 0.0, %v1645
    %v1647 = vpop.f32.mrb[0].mxu0
    %1648 = vmatprep.mubr.f32.mxu0 0.0
    %v1649 = vand.u32 %v1503, 4294901760
    %v1650 = vsub.f32 %v1503, %v1649
    %v1651 = vand.u32 %v1650, 4294901760
    %v1652 = vsub.f32 %v1650, %v1651
    %v1653 = vand.u32 %v1652, 4294901760
    %1654 = vmatmul.mubr.f32.gmra.mrb[0].mxu0 %v1653
    %v1655 = vpop.f32.mrb[0].mxu0
    %v1656 = vadd.f32 0.0, %v1655
    %v1657 = vpop.f32.mrb[0].mxu0
    %1658 = vmatprep.mubr.f32.mxu0 0.0
    %v1659 = vand.u32 %v1506, 4294901760
    %v1660 = vsub.f32 %v1506, %v1659
    %v1661 = vand.u32 %v1660, 4294901760
    %v1662 = vsub.f32 %v1660, %v1661
    %v1663 = vand.u32 %v1662, 4294901760
    %1664 = vmatmul.mubr.f32.gmra.mrb[0].mxu0 %v1663
    %v1665 = vpop.f32.mrb[0].mxu0
    %v1666 = vadd.f32 0.0, %v1665
    %v1667 = vpop.f32.mrb[0].mxu0
    %1668 = vmatprep.mubr.f32.mxu0 0.0
    %v1669 = vand.u32 %v1509, 4294901760
    %v1670 = vsub.f32 %v1509, %v1669
    %v1671 = vand.u32 %v1670, 4294901760
    %v1672 = vsub.f32 %v1670, %v1671
    %v1673 = vand.u32 %v1672, 4294901760
    %1674 = vmatmul.mubr.f32.gmra.mrb[0].mxu0 %v1673
    %v1675 = vpop.f32.mrb[0].mxu0
    %v1676 = vadd.f32 0.0, %v1675
    %v1677 = vpop.f32.mrb[0].mxu0
    %1678 = vmatprep.mubr.f32.mxu0 0.0
    %v1679 = vand.u32 %v1512, 4294901760
    %v1680 = vsub.f32 %v1512, %v1679
    %v1681 = vand.u32 %v1680, 4294901760
    %v1682 = vsub.f32 %v1680, %v1681
    %v1683 = vand.u32 %v1682, 4294901760
    %1684 = vmatmul.mubr.f32.gmra.mrb[0].mxu0 %v1683
    %v1685 = vpop.f32.mrb[0].mxu0
    %v1686 = vadd.f32 0.0, %v1685
    %v1687 = vpop.f32.mrb[0].mxu0
    %1688 = vmatprep.mubr.f32.mxu0 0.0
    %v1689 = vand.u32 %v1515, 4294901760
    %v1690 = vsub.f32 %v1515, %v1689
    %v1691 = vand.u32 %v1690, 4294901760
    %v1692 = vsub.f32 %v1690, %v1691
    %v1693 = vand.u32 %v1692, 4294901760
    %1694 = vmatmul.mubr.f32.gmra.mrb[0].mxu0 %v1693
    %v1695 = vpop.f32.mrb[0].mxu0
    %v1696 = vadd.f32 0.0, %v1695
    %v1697 = vpop.f32.mrb[0].mxu0
    %1698 = vmatprep.mubr.f32.mxu0 0.0
    %v1699 = vand.u32 %v1518, 4294901760
    %v1700 = vsub.f32 %v1518, %v1699
    %v1701 = vand.u32 %v1700, 4294901760
    %v1702 = vsub.f32 %v1700, %v1701
    %v1703 = vand.u32 %v1702, 4294901760
    %1704 = vmatmul.mubr.f32.gmra.mrb[0].mxu0 %v1703
    %v1705 = vpop.f32.mrb[0].mxu0
    %v1706 = vadd.f32 0.0, %v1705
    %v1707 = vpop.f32.mrb[0].mxu0
    %1708 = vmatprep.mubr.f32.mxu0 0.0
    %v1709 = vand.u32 %v1521, 4294901760
    %v1710 = vsub.f32 %v1521, %v1709
    %v1711 = vand.u32 %v1710, 4294901760
    %v1712 = vsub.f32 %v1710, %v1711
    %v1713 = vand.u32 %v1712, 4294901760
    %1714 = vmatmul.mubr.f32.gmra.mrb[0].mxu0 %v1713
    %v1715 = vpop.f32.mrb[0].mxu0
    %v1716 = vadd.f32 0.0, %v1715
    %v1717 = vpop.f32.mrb[0].mxu0
    %1718 = vmatprep.mubr.f32.mxu0 0.0
    %v1719 = vand.u32 %v1524, 4294901760
    %v1720 = vsub.f32 %v1524, %v1719
    %v1721 = vand.u32 %v1720, 4294901760
    %v1722 = vsub.f32 %v1720, %v1721
    %v1723 = vand.u32 %v1722, 4294901760
    %1724 = vmatmul.mubr.f32.gmra.mrb[0].mxu0 %v1723
    %v1725 = vpop.f32.mrb[0].mxu0
    %v1726 = vadd.f32 0.0, %v1725
    %v1727 = vpop.f32.mrb[0].mxu0
    %1728 = vmatprep.mubr.f32.mxu0 0.0
    %v1729 = vand.u32 %v1527, 4294901760
    %v1730 = vsub.f32 %v1527, %v1729
    %v1731 = vand.u32 %v1730, 4294901760
    %v1732 = vsub.f32 %v1730, %v1731
    %v1733 = vand.u32 %v1732, 4294901760
    %1734 = vmatmul.mubr.f32.gmra.mrb[0].mxu0 %v1733
    %v1735 = vpop.f32.mrb[0].mxu0
    %v1736 = vadd.f32 0.0, %v1735
    %v1737 = vpop.f32.mrb[0].mxu0
    %1738 = vmatprep.mubr.f32.mxu0 0.0
    %v1739 = vand.u32 %v1530, 4294901760
    %v1740 = vsub.f32 %v1530, %v1739
    %v1741 = vand.u32 %v1740, 4294901760
    %v1742 = vsub.f32 %v1740, %v1741
    %v1743 = vand.u32 %v1742, 4294901760
    %1744 = vmatmul.mubr.f32.gmra.mrb[0].mxu0 %v1743
    %v1745 = vpop.f32.mrb[0].mxu0
    %v1746 = vadd.f32 0.0, %v1745
    %v1747 = vpop.f32.mrb[0].mxu0
    %1748 = vmatprep.mubr.f32.mxu0 0.0
    %v1749 = vand.u32 %v1533, 4294901760
    %v1750 = vsub.f32 %v1533, %v1749
    %v1751 = vand.u32 %v1750, 4294901760
    %v1752 = vsub.f32 %v1750, %v1751
    %v1753 = vand.u32 %v1752, 4294901760
    %1754 = vmatmul.mubr.f32.gmra.mrb[0].mxu0 %v1753
    %v1755 = vpop.f32.mrb[0].mxu0
    %v1756 = vadd.f32 0.0, %v1755
    %v1757 = vpop.f32.mrb[0].mxu0
    %1758 = vmatprep.mubr.f32.mxu0 0.0
    %v1759 = vand.u32 %v1536, 4294901760
    %v1760 = vsub.f32 %v1536, %v1759
    %v1761 = vand.u32 %v1760, 4294901760
    %v1762 = vsub.f32 %v1760, %v1761
    %v1763 = vand.u32 %v1762, 4294901760
    %1764 = vmatmul.mubr.f32.gmra.mrb[0].mxu0 %v1763
    %v1765 = vpop.f32.mrb[0].mxu0
    %v1766 = vadd.f32 0.0, %v1765
    %v1767 = vpop.f32.mrb[0].mxu0
    %1768 = vdwg.mxu0
    %1769 = vmatprep.subr.mxu0 0.0
    %v1770 = vand.u32 %v58, 4294901760
    %v1771 = vsub.f32 %v58, %v1770
    %v1772 = vand.u32 %v1771, 4294901760
    %v1773 = vsub.f32 %v1771, %v1772
    %v1774 = vand.u32 %v1773, 4294901760
    %1775 = vmatpush1.msra.mxu0 %v1774
    %1776 = vmatprep.subr.mxu0 0.0
    %v1777 = vand.u32 %v59, 4294901760
    %v1778 = vsub.f32 %v59, %v1777
    %v1779 = vand.u32 %v1778, 4294901760
    %v1780 = vsub.f32 %v1778, %v1779
    %v1781 = vand.u32 %v1780, 4294901760
    %1782 = vmatpush1.msra.mxu0 %v1781
    %1783 = vmatprep.subr.mxu0 0.0
    %v1784 = vand.u32 %v60, 4294901760
    %v1785 = vsub.f32 %v60, %v1784
    %v1786 = vand.u32 %v1785, 4294901760
    %v1787 = vsub.f32 %v1785, %v1786
    %v1788 = vand.u32 %v1787, 4294901760
    %1789 = vmatpush1.msra.mxu0 %v1788
    %1790 = vmatprep.subr.mxu0 0.0
    %v1791 = vand.u32 %v61, 4294901760
    %v1792 = vsub.f32 %v61, %v1791
    %v1793 = vand.u32 %v1792, 4294901760
    %v1794 = vsub.f32 %v1792, %v1793
    %v1795 = vand.u32 %v1794, 4294901760
    %1796 = vmatpush1.msra.mxu0 %v1795
    %1797 = vmatprep.subr.mxu0 0.0
    %v1798 = vand.u32 %v62, 4294901760
    %v1799 = vsub.f32 %v62, %v1798
    %v1800 = vand.u32 %v1799, 4294901760
    %v1801 = vsub.f32 %v1799, %v1800
    %v1802 = vand.u32 %v1801, 4294901760
    %1803 = vmatpush1.msra.mxu0 %v1802
    %1804 = vmatprep.subr.mxu0 0.0
    %v1805 = vand.u32 %v63, 4294901760
    %v1806 = vsub.f32 %v63, %v1805
    %v1807 = vand.u32 %v1806, 4294901760
    %v1808 = vsub.f32 %v1806, %v1807
    %v1809 = vand.u32 %v1808, 4294901760
    %1810 = vmatpush1.msra.mxu0 %v1809
    %1811 = vmatprep.subr.mxu0 0.0
    %1812 = vmatpush1.msra.mxu0 0.0
    %1813 = vmatprep.subr.mxu0 0.0
    %1814 = vmatpush1.msra.mxu0 0.0
    %1815 = vmatprep.subr.mxu0 0.0
    %1816 = vmatpush1.msra.mxu0 0.0
    %1817 = vmatprep.subr.mxu0 0.0
    %1818 = vmatpush1.msra.mxu0 0.0
    %1819 = vmatprep.subr.mxu0 0.0
    %1820 = vmatpush1.msra.mxu0 0.0
    %1821 = vmatprep.subr.mxu0 0.0
    %1822 = vmatpush1.msra.mxu0 0.0
    %1823 = vmatprep.subr.mxu0 0.0
    %1824 = vmatpush1.msra.mxu0 0.0
    %1825 = vmatprep.subr.mxu0 0.0
    %1826 = vmatpush1.msra.mxu0 0.0
    %1827 = vmatprep.subr.mxu0 0.0
    %1828 = vmatpush1.msra.mxu0 0.0
    %1829 = vmatprep.subr.mxu0 0.0
    %1830 = vmatpush1.msra.mxu0 0.0
    %1831 = vmatprep.subr.mxu0 0.0
    %1832 = vmatpush1.msra.mxu0 0.0
    %1833 = vmatprep.subr.mxu0 0.0
    %1834 = vmatpush1.msra.mxu0 0.0
    %1835 = vmatprep.subr.mxu0 0.0
    %1836 = vmatpush1.msra.mxu0 0.0
    %1837 = vmatprep.subr.mxu0 0.0
    %1838 = vmatpush1.msra.mxu0 0.0
    %1839 = vmatprep.subr.mxu0 0.0
    %1840 = vmatpush1.msra.mxu0 0.0
    %1841 = vmatprep.subr.mxu0 0.0
    %1842 = vmatpush1.msra.mxu0 0.0
    %1843 = vmatprep.subr.mxu0 0.0
    %1844 = vmatpush1.msra.mxu0 0.0
    %1845 = vmatprep.subr.mxu0 0.0
    %1846 = vmatpush1.msra.mxu0 0.0
    %1847 = vmatprep.subr.mxu0 0.0
    %1848 = vmatpush1.msra.mxu0 0.0
    %1849 = vmatprep.subr.mxu0 0.0
    %1850 = vmatpush1.msra.mxu0 0.0
    %1851 = vmatprep.subr.mxu0 0.0
    %1852 = vmatpush1.msra.mxu0 0.0
    %1853 = vmatprep.subr.mxu0 0.0
    %1854 = vmatpush1.msra.mxu0 0.0
    %1855 = vmatprep.subr.mxu0 0.0
    %1856 = vmatpush1.msra.mxu0 0.0
    %1857 = vmatprep.subr.mxu0 0.0
    %1858 = vmatpush1.msra.mxu0 0.0
    %1859 = vmatprep.subr.mxu0 0.0
    %1860 = vmatpush1.msra.mxu0 0.0
    %1861 = vmatprep.subr.mxu0 0.0
    %1862 = vmatpush1.msra.mxu0 0.0
    %1863 = vmatprep.mubr.f32.mxu0 0.0
    %v1864 = vand.u32 %v1491, 4294901760
    %1865 = vmatmul.mubr.f32.gmra.mrb[0].mxu0 %v1864
    %v1866 = vpop.f32.mrb[0].mxu0
    %v1867 = vadd.f32 %v1616, %v1866
    %v1868 = vpop.f32.mrb[0].mxu0
    %1869 = vmatprep.mubr.f32.mxu0 0.0
    %v1870 = vand.u32 %v1494, 4294901760
    %1871 = vmatmul.mubr.f32.gmra.mrb[0].mxu0 %v1870
    %v1872 = vpop.f32.mrb[0].mxu0
    %v1873 = vadd.f32 %v1626, %v1872
    %v1874 = vpop.f32.mrb[0].mxu0
    %1875 = vmatprep.mubr.f32.mxu0 0.0
    %v1876 = vand.u32 %v1497, 4294901760
    %1877 = vmatmul.mubr.f32.gmra.mrb[0].mxu0 %v1876
    %v1878 = vpop.f32.mrb[0].mxu0
    %v1879 = vadd.f32 %v1636, %v1878
    %v1880 = vpop.f32.mrb[0].mxu0
    %1881 = vmatprep.mubr.f32.mxu0 0.0
    %v1882 = vand.u32 %v1500, 4294901760
    %1883 = vmatmul.mubr.f32.gmra.mrb[0].mxu0 %v1882
    %v1884 = vpop.f32.mrb[0].mxu0
    %v1885 = vadd.f32 %v1646, %v1884
    %v1886 = vpop.f32.mrb[0].mxu0
    %1887 = vmatprep.mubr.f32.mxu0 0.0
    %v1888 = vand.u32 %v1503, 4294901760
    %1889 = vmatmul.mubr.f32.gmra.mrb[0].mxu0 %v1888
    %v1890 = vpop.f32.mrb[0].mxu0
    %v1891 = vadd.f32 %v1656, %v1890
    %v1892 = vpop.f32.mrb[0].mxu0
    %1893 = vmatprep.mubr.f32.mxu0 0.0
    %v1894 = vand.u32 %v1506, 4294901760
    %1895 = vmatmul.mubr.f32.gmra.mrb[0].mxu0 %v1894
    %v1896 = vpop.f32.mrb[0].mxu0
    %v1897 = vadd.f32 %v1666, %v1896
    %v1898 = vpop.f32.mrb[0].mxu0
    %1899 = vmatprep.mubr.f32.mxu0 0.0
    %v1900 = vand.u32 %v1509, 4294901760
    %1901 = vmatmul.mubr.f32.gmra.mrb[0].mxu0 %v1900
    %v1902 = vpop.f32.mrb[0].mxu0
    %v1903 = vadd.f32 %v1676, %v1902
    %v1904 = vpop.f32.mrb[0].mxu0
    %1905 = vmatprep.mubr.f32.mxu0 0.0
    %v1906 = vand.u32 %v1512, 4294901760
    %1907 = vmatmul.mubr.f32.gmra.mrb[0].mxu0 %v1906
    %v1908 = vpop.f32.mrb[0].mxu0
    %v1909 = vadd.f32 %v1686, %v1908
    %v1910 = vpop.f32.mrb[0].mxu0
    %1911 = vmatprep.mubr.f32.mxu0 0.0
    %v1912 = vand.u32 %v1515, 4294901760
    %1913 = vmatmul.mubr.f32.gmra.mrb[0].mxu0 %v1912
    %v1914 = vpop.f32.mrb[0].mxu0
    %v1915 = vadd.f32 %v1696, %v1914
    %v1916 = vpop.f32.mrb[0].mxu0
    %1917 = vmatprep.mubr.f32.mxu0 0.0
    %v1918 = vand.u32 %v1518, 4294901760
    %1919 = vmatmul.mubr.f32.gmra.mrb[0].mxu0 %v1918
    %v1920 = vpop.f32.mrb[0].mxu0
    %v1921 = vadd.f32 %v1706, %v1920
    %v1922 = vpop.f32.mrb[0].mxu0
    %1923 = vmatprep.mubr.f32.mxu0 0.0
    %v1924 = vand.u32 %v1521, 4294901760
    %1925 = vmatmul.mubr.f32.gmra.mrb[0].mxu0 %v1924
    %v1926 = vpop.f32.mrb[0].mxu0
    %v1927 = vadd.f32 %v1716, %v1926
    %v1928 = vpop.f32.mrb[0].mxu0
    %1929 = vmatprep.mubr.f32.mxu0 0.0
    %v1930 = vand.u32 %v1524, 4294901760
    %1931 = vmatmul.mubr.f32.gmra.mrb[0].mxu0 %v1930
    %v1932 = vpop.f32.mrb[0].mxu0
    %v1933 = vadd.f32 %v1726, %v1932
    %v1934 = vpop.f32.mrb[0].mxu0
    %1935 = vmatprep.mubr.f32.mxu0 0.0
    %v1936 = vand.u32 %v1527, 4294901760
    %1937 = vmatmul.mubr.f32.gmra.mrb[0].mxu0 %v1936
    %v1938 = vpop.f32.mrb[0].mxu0
    %v1939 = vadd.f32 %v1736, %v1938
    %v1940 = vpop.f32.mrb[0].mxu0
    %1941 = vmatprep.mubr.f32.mxu0 0.0
    %v1942 = vand.u32 %v1530, 4294901760
    %1943 = vmatmul.mubr.f32.gmra.mrb[0].mxu0 %v1942
    %v1944 = vpop.f32.mrb[0].mxu0
    %v1945 = vadd.f32 %v1746, %v1944
    %v1946 = vpop.f32.mrb[0].mxu0
    %1947 = vmatprep.mubr.f32.mxu0 0.0
    %v1948 = vand.u32 %v1533, 4294901760
    %1949 = vmatmul.mubr.f32.gmra.mrb[0].mxu0 %v1948
    %v1950 = vpop.f32.mrb[0].mxu0
    %v1951 = vadd.f32 %v1756, %v1950
    %v1952 = vpop.f32.mrb[0].mxu0
    %1953 = vmatprep.mubr.f32.mxu0 0.0
    %v1954 = vand.u32 %v1536, 4294901760
    %1955 = vmatmul.mubr.f32.gmra.mrb[0].mxu0 %v1954
    %v1956 = vpop.f32.mrb[0].mxu0
    %v1957 = vadd.f32 %v1766, %v1956
    %v1958 = vpop.f32.mrb[0].mxu0
    %1959 = vdwg.mxu0
    %1960 = vmatprep.subr.mxu0 0.0
    %v1961 = vand.u32 %v58, 4294901760
    %v1962 = vsub.f32 %v58, %v1961
    %1963 = vmatpush1.msra.mxu0 %v1962
    %1964 = vmatprep.subr.mxu0 0.0
    %v1965 = vand.u32 %v59, 4294901760
    %v1966 = vsub.f32 %v59, %v1965
    %1967 = vmatpush1.msra.mxu0 %v1966
    %1968 = vmatprep.subr.mxu0 0.0
    %v1969 = vand.u32 %v60, 4294901760
    %v1970 = vsub.f32 %v60, %v1969
    %1971 = vmatpush1.msra.mxu0 %v1970
    %1972 = vmatprep.subr.mxu0 0.0
    %v1973 = vand.u32 %v61, 4294901760
    %v1974 = vsub.f32 %v61, %v1973
    %1975 = vmatpush1.msra.mxu0 %v1974
    %1976 = vmatprep.subr.mxu0 0.0
    %v1977 = vand.u32 %v62, 4294901760
    %v1978 = vsub.f32 %v62, %v1977
    %1979 = vmatpush1.msra.mxu0 %v1978
    %1980 = vmatprep.subr.mxu0 0.0
    %v1981 = vand.u32 %v63, 4294901760
    %v1982 = vsub.f32 %v63, %v1981
    %1983 = vmatpush1.msra.mxu0 %v1982
    %1984 = vmatprep.subr.mxu0 0.0
    %1985 = vmatpush1.msra.mxu0 0.0
    %1986 = vmatprep.subr.mxu0 0.0
    %1987 = vmatpush1.msra.mxu0 0.0
    %1988 = vmatprep.subr.mxu0 0.0
    %1989 = vmatpush1.msra.mxu0 0.0
    %1990 = vmatprep.subr.mxu0 0.0
    %1991 = vmatpush1.msra.mxu0 0.0
    %1992 = vmatprep.subr.mxu0 0.0
    %1993 = vmatpush1.msra.mxu0 0.0
    %1994 = vmatprep.subr.mxu0 0.0
    %1995 = vmatpush1.msra.mxu0 0.0
    %1996 = vmatprep.subr.mxu0 0.0
    %1997 = vmatpush1.msra.mxu0 0.0
    %1998 = vmatprep.subr.mxu0 0.0
    %1999 = vmatpush1.msra.mxu0 0.0
    %2000 = vmatprep.subr.mxu0 0.0
    %2001 = vmatpush1.msra.mxu0 0.0
    %2002 = vmatprep.subr.mxu0 0.0
    %2003 = vmatpush1.msra.mxu0 0.0
    %2004 = vmatprep.subr.mxu0 0.0
    %2005 = vmatpush1.msra.mxu0 0.0
    %2006 = vmatprep.subr.mxu0 0.0
    %2007 = vmatpush1.msra.mxu0 0.0
    %2008 = vmatprep.subr.mxu0 0.0
    %2009 = vmatpush1.msra.mxu0 0.0
    %2010 = vmatprep.subr.mxu0 0.0
    %2011 = vmatpush1.msra.mxu0 0.0
    %2012 = vmatprep.subr.mxu0 0.0
    %2013 = vmatpush1.msra.mxu0 0.0
    %2014 = vmatprep.subr.mxu0 0.0
    %2015 = vmatpush1.msra.mxu0 0.0
    %2016 = vmatprep.subr.mxu0 0.0
    %2017 = vmatpush1.msra.mxu0 0.0
    %2018 = vmatprep.subr.mxu0 0.0
    %2019 = vmatpush1.msra.mxu0 0.0
    %2020 = vmatprep.subr.mxu0 0.0
    %2021 = vmatpush1.msra.mxu0 0.0
    %2022 = vmatprep.subr.mxu0 0.0
    %2023 = vmatpush1.msra.mxu0 0.0
    %2024 = vmatprep.subr.mxu0 0.0
    %2025 = vmatpush1.msra.mxu0 0.0
    %2026 = vmatprep.subr.mxu0 0.0
    %2027 = vmatpush1.msra.mxu0 0.0
    %2028 = vmatprep.subr.mxu0 0.0
    %2029 = vmatpush1.msra.mxu0 0.0
    %2030 = vmatprep.subr.mxu0 0.0
    %2031 = vmatpush1.msra.mxu0 0.0
    %2032 = vmatprep.subr.mxu0 0.0
    %2033 = vmatpush1.msra.mxu0 0.0
    %2034 = vmatprep.subr.mxu0 0.0
    %2035 = vmatpush1.msra.mxu0 0.0
    %2036 = vmatprep.mubr.f32.mxu0 0.0
    %v2037 = vand.u32 %v1491, 4294901760
    %v2038 = vsub.f32 %v1491, %v2037
    %2039 = vmatmul.mubr.f32.gmra.mrb[0].mxu0 %v2038
    %v2040 = vpop.f32.mrb[0].mxu0
    %v2041 = vadd.f32 %v1867, %v2040
    %v2042 = vpop.f32.mrb[0].mxu0
    %2043 = vmatprep.mubr.f32.mxu0 0.0
    %v2044 = vand.u32 %v1494, 4294901760
    %v2045 = vsub.f32 %v1494, %v2044
    %2046 = vmatmul.mubr.f32.gmra.mrb[0].mxu0 %v2045
    %v2047 = vpop.f32.mrb[0].mxu0
    %v2048 = vadd.f32 %v1873, %v2047
    %v2049 = vpop.f32.mrb[0].mxu0
    %2050 = vmatprep.mubr.f32.mxu0 0.0
    %v2051 = vand.u32 %v1497, 4294901760
    %v2052 = vsub.f32 %v1497, %v2051
    %2053 = vmatmul.mubr.f32.gmra.mrb[0].mxu0 %v2052
    %v2054 = vpop.f32.mrb[0].mxu0
    %v2055 = vadd.f32 %v1879, %v2054
    %v2056 = vpop.f32.mrb[0].mxu0
    %2057 = vmatprep.mubr.f32.mxu0 0.0
    %v2058 = vand.u32 %v1500, 4294901760
    %v2059 = vsub.f32 %v1500, %v2058
    %2060 = vmatmul.mubr.f32.gmra.mrb[0].mxu0 %v2059
    %v2061 = vpop.f32.mrb[0].mxu0
    %v2062 = vadd.f32 %v1885, %v2061
    %v2063 = vpop.f32.mrb[0].mxu0
    %2064 = vmatprep.mubr.f32.mxu0 0.0
    %v2065 = vand.u32 %v1503, 4294901760
    %v2066 = vsub.f32 %v1503, %v2065
    %2067 = vmatmul.mubr.f32.gmra.mrb[0].mxu0 %v2066
    %v2068 = vpop.f32.mrb[0].mxu0
    %v2069 = vadd.f32 %v1891, %v2068
    %v2070 = vpop.f32.mrb[0].mxu0
    %2071 = vmatprep.mubr.f32.mxu0 0.0
    %v2072 = vand.u32 %v1506, 4294901760
    %v2073 = vsub.f32 %v1506, %v2072
    %2074 = vmatmul.mubr.f32.gmra.mrb[0].mxu0 %v2073
    %v2075 = vpop.f32.mrb[0].mxu0
    %v2076 = vadd.f32 %v1897, %v2075
    %v2077 = vpop.f32.mrb[0].mxu0
    %2078 = vmatprep.mubr.f32.mxu0 0.0
    %v2079 = vand.u32 %v1509, 4294901760
    %v2080 = vsub.f32 %v1509, %v2079
    %2081 = vmatmul.mubr.f32.gmra.mrb[0].mxu0 %v2080
    %v2082 = vpop.f32.mrb[0].mxu0
    %v2083 = vadd.f32 %v1903, %v2082
    %v2084 = vpop.f32.mrb[0].mxu0
    %2085 = vmatprep.mubr.f32.mxu0 0.0
    %v2086 = vand.u32 %v1512, 4294901760
    %v2087 = vsub.f32 %v1512, %v2086
    %2088 = vmatmul.mubr.f32.gmra.mrb[0].mxu0 %v2087
    %v2089 = vpop.f32.mrb[0].mxu0
    %v2090 = vadd.f32 %v1909, %v2089
    %v2091 = vpop.f32.mrb[0].mxu0
    %2092 = vmatprep.mubr.f32.mxu0 0.0
    %v2093 = vand.u32 %v1515, 4294901760
    %v2094 = vsub.f32 %v1515, %v2093
    %2095 = vmatmul.mubr.f32.gmra.mrb[0].mxu0 %v2094
    %v2096 = vpop.f32.mrb[0].mxu0
    %v2097 = vadd.f32 %v1915, %v2096
    %v2098 = vpop.f32.mrb[0].mxu0
    %2099 = vmatprep.mubr.f32.mxu0 0.0
    %v2100 = vand.u32 %v1518, 4294901760
    %v2101 = vsub.f32 %v1518, %v2100
    %2102 = vmatmul.mubr.f32.gmra.mrb[0].mxu0 %v2101
    %v2103 = vpop.f32.mrb[0].mxu0
    %v2104 = vadd.f32 %v1921, %v2103
    %v2105 = vpop.f32.mrb[0].mxu0
    %2106 = vmatprep.mubr.f32.mxu0 0.0
    %v2107 = vand.u32 %v1521, 4294901760
    %v2108 = vsub.f32 %v1521, %v2107
    %2109 = vmatmul.mubr.f32.gmra.mrb[0].mxu0 %v2108
    %v2110 = vpop.f32.mrb[0].mxu0
    %v2111 = vadd.f32 %v1927, %v2110
    %v2112 = vpop.f32.mrb[0].mxu0
    %2113 = vmatprep.mubr.f32.mxu0 0.0
    %v2114 = vand.u32 %v1524, 4294901760
    %v2115 = vsub.f32 %v1524, %v2114
    %2116 = vmatmul.mubr.f32.gmra.mrb[0].mxu0 %v2115
    %v2117 = vpop.f32.mrb[0].mxu0
    %v2118 = vadd.f32 %v1933, %v2117
    %v2119 = vpop.f32.mrb[0].mxu0
    %2120 = vmatprep.mubr.f32.mxu0 0.0
    %v2121 = vand.u32 %v1527, 4294901760
    %v2122 = vsub.f32 %v1527, %v2121
    %2123 = vmatmul.mubr.f32.gmra.mrb[0].mxu0 %v2122
    %v2124 = vpop.f32.mrb[0].mxu0
    %v2125 = vadd.f32 %v1939, %v2124
    %v2126 = vpop.f32.mrb[0].mxu0
    %2127 = vmatprep.mubr.f32.mxu0 0.0
    %v2128 = vand.u32 %v1530, 4294901760
    %v2129 = vsub.f32 %v1530, %v2128
    %2130 = vmatmul.mubr.f32.gmra.mrb[0].mxu0 %v2129
    %v2131 = vpop.f32.mrb[0].mxu0
    %v2132 = vadd.f32 %v1945, %v2131
    %v2133 = vpop.f32.mrb[0].mxu0
    %2134 = vmatprep.mubr.f32.mxu0 0.0
    %v2135 = vand.u32 %v1533, 4294901760
    %v2136 = vsub.f32 %v1533, %v2135
    %2137 = vmatmul.mubr.f32.gmra.mrb[0].mxu0 %v2136
    %v2138 = vpop.f32.mrb[0].mxu0
    %v2139 = vadd.f32 %v1951, %v2138
    %v2140 = vpop.f32.mrb[0].mxu0
    %2141 = vmatprep.mubr.f32.mxu0 0.0
    %v2142 = vand.u32 %v1536, 4294901760
    %v2143 = vsub.f32 %v1536, %v2142
    %2144 = vmatmul.mubr.f32.gmra.mrb[0].mxu0 %v2143
    %v2145 = vpop.f32.mrb[0].mxu0
    %v2146 = vadd.f32 %v1957, %v2145
    %v2147 = vpop.f32.mrb[0].mxu0
    %2148 = vdwg.mxu0
    %2149 = vmatprep.subr.mxu0 0.0
    %v2150 = vand.u32 %v58, 4294901760
    %2151 = vmatpush1.msra.mxu0 %v2150
    %2152 = vmatprep.subr.mxu0 0.0
    %v2153 = vand.u32 %v59, 4294901760
    %2154 = vmatpush1.msra.mxu0 %v2153
    %2155 = vmatprep.subr.mxu0 0.0
    %v2156 = vand.u32 %v60, 4294901760
    %2157 = vmatpush1.msra.mxu0 %v2156
    %2158 = vmatprep.subr.mxu0 0.0
    %v2159 = vand.u32 %v61, 4294901760
    %2160 = vmatpush1.msra.mxu0 %v2159
    %2161 = vmatprep.subr.mxu0 0.0
    %v2162 = vand.u32 %v62, 4294901760
    %2163 = vmatpush1.msra.mxu0 %v2162
    %2164 = vmatprep.subr.mxu0 0.0
    %v2165 = vand.u32 %v63, 4294901760
    %2166 = vmatpush1.msra.mxu0 %v2165
    %2167 = vmatprep.subr.mxu0 0.0
    %2168 = vmatpush1.msra.mxu0 0.0
    %2169 = vmatprep.subr.mxu0 0.0
    %2170 = vmatpush1.msra.mxu0 0.0
    %2171 = vmatprep.subr.mxu0 0.0
    %2172 = vmatpush1.msra.mxu0 0.0
    %2173 = vmatprep.subr.mxu0 0.0
    %2174 = vmatpush1.msra.mxu0 0.0
    %2175 = vmatprep.subr.mxu0 0.0
    %2176 = vmatpush1.msra.mxu0 0.0
    %2177 = vmatprep.subr.mxu0 0.0
    %2178 = vmatpush1.msra.mxu0 0.0
    %2179 = vmatprep.subr.mxu0 0.0
    %2180 = vmatpush1.msra.mxu0 0.0
    %2181 = vmatprep.subr.mxu0 0.0
    %2182 = vmatpush1.msra.mxu0 0.0
    %2183 = vmatprep.subr.mxu0 0.0
    %2184 = vmatpush1.msra.mxu0 0.0
    %2185 = vmatprep.subr.mxu0 0.0
    %2186 = vmatpush1.msra.mxu0 0.0
    %2187 = vmatprep.subr.mxu0 0.0
    %2188 = vmatpush1.msra.mxu0 0.0
    %2189 = vmatprep.subr.mxu0 0.0
    %2190 = vmatpush1.msra.mxu0 0.0
    %2191 = vmatprep.subr.mxu0 0.0
    %2192 = vmatpush1.msra.mxu0 0.0
    %2193 = vmatprep.subr.mxu0 0.0
    %2194 = vmatpush1.msra.mxu0 0.0
    %2195 = vmatprep.subr.mxu0 0.0
    %2196 = vmatpush1.msra.mxu0 0.0
    %2197 = vmatprep.subr.mxu0 0.0
    %2198 = vmatpush1.msra.mxu0 0.0
    %2199 = vmatprep.subr.mxu0 0.0
    %2200 = vmatpush1.msra.mxu0 0.0
    %2201 = vmatprep.subr.mxu0 0.0
    %2202 = vmatpush1.msra.mxu0 0.0
    %2203 = vmatprep.subr.mxu0 0.0
    %2204 = vmatpush1.msra.mxu0 0.0
    %2205 = vmatprep.subr.mxu0 0.0
    %2206 = vmatpush1.msra.mxu0 0.0
    %2207 = vmatprep.subr.mxu0 0.0
    %2208 = vmatpush1.msra.mxu0 0.0
    %2209 = vmatprep.subr.mxu0 0.0
    %2210 = vmatpush1.msra.mxu0 0.0
    %2211 = vmatprep.subr.mxu0 0.0
    %2212 = vmatpush1.msra.mxu0 0.0
    %2213 = vmatprep.subr.mxu0 0.0
    %2214 = vmatpush1.msra.mxu0 0.0
    %2215 = vmatprep.subr.mxu0 0.0
    %2216 = vmatpush1.msra.mxu0 0.0
    %2217 = vmatprep.subr.mxu0 0.0
    %2218 = vmatpush1.msra.mxu0 0.0
    %2219 = vmatprep.mubr.f32.mxu0 0.0
    %v2220 = vand.u32 %v1491, 4294901760
    %v2221 = vsub.f32 %v1491, %v2220
    %v2222 = vand.u32 %v2221, 4294901760
    %2223 = vmatmul.mubr.f32.gmra.mrb[0].mxu0 %v2222
    %v2224 = vpop.f32.mrb[0].mxu0
    %v2225 = vadd.f32 %v2041, %v2224
    %v2226 = vpop.f32.mrb[0].mxu0
    %2227 = vmatprep.mubr.f32.mxu0 0.0
    %v2228 = vand.u32 %v1494, 4294901760
    %v2229 = vsub.f32 %v1494, %v2228
    %v2230 = vand.u32 %v2229, 4294901760
    %2231 = vmatmul.mubr.f32.gmra.mrb[0].mxu0 %v2230
    %v2232 = vpop.f32.mrb[0].mxu0
    %v2233 = vadd.f32 %v2048, %v2232
    %v2234 = vpop.f32.mrb[0].mxu0
    %2235 = vmatprep.mubr.f32.mxu0 0.0
    %v2236 = vand.u32 %v1497, 4294901760
    %v2237 = vsub.f32 %v1497, %v2236
    %v2238 = vand.u32 %v2237, 4294901760
    %2239 = vmatmul.mubr.f32.gmra.mrb[0].mxu0 %v2238
    %v2240 = vpop.f32.mrb[0].mxu0
    %v2241 = vadd.f32 %v2055, %v2240
    %v2242 = vpop.f32.mrb[0].mxu0
    %2243 = vmatprep.mubr.f32.mxu0 0.0
    %v2244 = vand.u32 %v1500, 4294901760
    %v2245 = vsub.f32 %v1500, %v2244
    %v2246 = vand.u32 %v2245, 4294901760
    %2247 = vmatmul.mubr.f32.gmra.mrb[0].mxu0 %v2246
    %v2248 = vpop.f32.mrb[0].mxu0
    %v2249 = vadd.f32 %v2062, %v2248
    %v2250 = vpop.f32.mrb[0].mxu0
    %2251 = vmatprep.mubr.f32.mxu0 0.0
    %v2252 = vand.u32 %v1503, 4294901760
    %v2253 = vsub.f32 %v1503, %v2252
    %v2254 = vand.u32 %v2253, 4294901760
    %2255 = vmatmul.mubr.f32.gmra.mrb[0].mxu0 %v2254
    %v2256 = vpop.f32.mrb[0].mxu0
    %v2257 = vadd.f32 %v2069, %v2256
    %v2258 = vpop.f32.mrb[0].mxu0
    %2259 = vmatprep.mubr.f32.mxu0 0.0
    %v2260 = vand.u32 %v1506, 4294901760
    %v2261 = vsub.f32 %v1506, %v2260
    %v2262 = vand.u32 %v2261, 4294901760
    %2263 = vmatmul.mubr.f32.gmra.mrb[0].mxu0 %v2262
    %v2264 = vpop.f32.mrb[0].mxu0
    %v2265 = vadd.f32 %v2076, %v2264
    %v2266 = vpop.f32.mrb[0].mxu0
    %2267 = vmatprep.mubr.f32.mxu0 0.0
    %v2268 = vand.u32 %v1509, 4294901760
    %v2269 = vsub.f32 %v1509, %v2268
    %v2270 = vand.u32 %v2269, 4294901760
    %2271 = vmatmul.mubr.f32.gmra.mrb[0].mxu0 %v2270
    %v2272 = vpop.f32.mrb[0].mxu0
    %v2273 = vadd.f32 %v2083, %v2272
    %v2274 = vpop.f32.mrb[0].mxu0
    %2275 = vmatprep.mubr.f32.mxu0 0.0
    %v2276 = vand.u32 %v1512, 4294901760
    %v2277 = vsub.f32 %v1512, %v2276
    %v2278 = vand.u32 %v2277, 4294901760
    %2279 = vmatmul.mubr.f32.gmra.mrb[0].mxu0 %v2278
    %v2280 = vpop.f32.mrb[0].mxu0
    %v2281 = vadd.f32 %v2090, %v2280
    %v2282 = vpop.f32.mrb[0].mxu0
    %2283 = vmatprep.mubr.f32.mxu0 0.0
    %v2284 = vand.u32 %v1515, 4294901760
    %v2285 = vsub.f32 %v1515, %v2284
    %v2286 = vand.u32 %v2285, 4294901760
    %2287 = vmatmul.mubr.f32.gmra.mrb[0].mxu0 %v2286
    %v2288 = vpop.f32.mrb[0].mxu0
    %v2289 = vadd.f32 %v2097, %v2288
    %v2290 = vpop.f32.mrb[0].mxu0
    %2291 = vmatprep.mubr.f32.mxu0 0.0
    %v2292 = vand.u32 %v1518, 4294901760
    %v2293 = vsub.f32 %v1518, %v2292
    %v2294 = vand.u32 %v2293, 4294901760
    %2295 = vmatmul.mubr.f32.gmra.mrb[0].mxu0 %v2294
    %v2296 = vpop.f32.mrb[0].mxu0
    %v2297 = vadd.f32 %v2104, %v2296
    %v2298 = vpop.f32.mrb[0].mxu0
    %2299 = vmatprep.mubr.f32.mxu0 0.0
    %v2300 = vand.u32 %v1521, 4294901760
    %v2301 = vsub.f32 %v1521, %v2300
    %v2302 = vand.u32 %v2301, 4294901760
    %2303 = vmatmul.mubr.f32.gmra.mrb[0].mxu0 %v2302
    %v2304 = vpop.f32.mrb[0].mxu0
    %v2305 = vadd.f32 %v2111, %v2304
    %v2306 = vpop.f32.mrb[0].mxu0
    %2307 = vmatprep.mubr.f32.mxu0 0.0
    %v2308 = vand.u32 %v1524, 4294901760
    %v2309 = vsub.f32 %v1524, %v2308
    %v2310 = vand.u32 %v2309, 4294901760
    %2311 = vmatmul.mubr.f32.gmra.mrb[0].mxu0 %v2310
    %v2312 = vpop.f32.mrb[0].mxu0
    %v2313 = vadd.f32 %v2118, %v2312
    %v2314 = vpop.f32.mrb[0].mxu0
    %2315 = vmatprep.mubr.f32.mxu0 0.0
    %v2316 = vand.u32 %v1527, 4294901760
    %v2317 = vsub.f32 %v1527, %v2316
    %v2318 = vand.u32 %v2317, 4294901760
    %2319 = vmatmul.mubr.f32.gmra.mrb[0].mxu0 %v2318
    %v2320 = vpop.f32.mrb[0].mxu0
    %v2321 = vadd.f32 %v2125, %v2320
    %v2322 = vpop.f32.mrb[0].mxu0
    %2323 = vmatprep.mubr.f32.mxu0 0.0
    %v2324 = vand.u32 %v1530, 4294901760
    %v2325 = vsub.f32 %v1530, %v2324
    %v2326 = vand.u32 %v2325, 4294901760
    %2327 = vmatmul.mubr.f32.gmra.mrb[0].mxu0 %v2326
    %v2328 = vpop.f32.mrb[0].mxu0
    %v2329 = vadd.f32 %v2132, %v2328
    %v2330 = vpop.f32.mrb[0].mxu0
    %2331 = vmatprep.mubr.f32.mxu0 0.0
    %v2332 = vand.u32 %v1533, 4294901760
    %v2333 = vsub.f32 %v1533, %v2332
    %v2334 = vand.u32 %v2333, 4294901760
    %2335 = vmatmul.mubr.f32.gmra.mrb[0].mxu0 %v2334
    %v2336 = vpop.f32.mrb[0].mxu0
    %v2337 = vadd.f32 %v2139, %v2336
    %v2338 = vpop.f32.mrb[0].mxu0
    %2339 = vmatprep.mubr.f32.mxu0 0.0
    %v2340 = vand.u32 %v1536, 4294901760
    %v2341 = vsub.f32 %v1536, %v2340
    %v2342 = vand.u32 %v2341, 4294901760
    %2343 = vmatmul.mubr.f32.gmra.mrb[0].mxu0 %v2342
    %v2344 = vpop.f32.mrb[0].mxu0
    %v2345 = vadd.f32 %v2146, %v2344
    %v2346 = vpop.f32.mrb[0].mxu0
    %2347 = vdwg.mxu0
    %2348 = vmatprep.subr.mxu0 0.0
    %v2349 = vand.u32 %v58, 4294901760
    %v2350 = vsub.f32 %v58, %v2349
    %v2351 = vand.u32 %v2350, 4294901760
    %2352 = vmatpush1.msra.mxu0 %v2351
    %2353 = vmatprep.subr.mxu0 0.0
    %v2354 = vand.u32 %v59, 4294901760
    %v2355 = vsub.f32 %v59, %v2354
    %v2356 = vand.u32 %v2355, 4294901760
    %2357 = vmatpush1.msra.mxu0 %v2356
    %2358 = vmatprep.subr.mxu0 0.0
    %v2359 = vand.u32 %v60, 4294901760
    %v2360 = vsub.f32 %v60, %v2359
    %v2361 = vand.u32 %v2360, 4294901760
    %2362 = vmatpush1.msra.mxu0 %v2361
    %2363 = vmatprep.subr.mxu0 0.0
    %v2364 = vand.u32 %v61, 4294901760
    %v2365 = vsub.f32 %v61, %v2364
    %v2366 = vand.u32 %v2365, 4294901760
    %2367 = vmatpush1.msra.mxu0 %v2366
    %2368 = vmatprep.subr.mxu0 0.0
    %v2369 = vand.u32 %v62, 4294901760
    %v2370 = vsub.f32 %v62, %v2369
    %v2371 = vand.u32 %v2370, 4294901760
    %2372 = vmatpush1.msra.mxu0 %v2371
    %2373 = vmatprep.subr.mxu0 0.0
    %v2374 = vand.u32 %v63, 4294901760
    %v2375 = vsub.f32 %v63, %v2374
    %v2376 = vand.u32 %v2375, 4294901760
    %2377 = vmatpush1.msra.mxu0 %v2376
    %2378 = vmatprep.subr.mxu0 0.0
    %2379 = vmatpush1.msra.mxu0 0.0
    %2380 = vmatprep.subr.mxu0 0.0
    %2381 = vmatpush1.msra.mxu0 0.0
    %2382 = vmatprep.subr.mxu0 0.0
    %2383 = vmatpush1.msra.mxu0 0.0
    %2384 = vmatprep.subr.mxu0 0.0
    %2385 = vmatpush1.msra.mxu0 0.0
    %2386 = vmatprep.subr.mxu0 0.0
    %2387 = vmatpush1.msra.mxu0 0.0
    %2388 = vmatprep.subr.mxu0 0.0
    %2389 = vmatpush1.msra.mxu0 0.0
    %2390 = vmatprep.subr.mxu0 0.0
    %2391 = vmatpush1.msra.mxu0 0.0
    %2392 = vmatprep.subr.mxu0 0.0
    %2393 = vmatpush1.msra.mxu0 0.0
    %2394 = vmatprep.subr.mxu0 0.0
    %2395 = vmatpush1.msra.mxu0 0.0
    %2396 = vmatprep.subr.mxu0 0.0
    %2397 = vmatpush1.msra.mxu0 0.0
    %2398 = vmatprep.subr.mxu0 0.0
    %2399 = vmatpush1.msra.mxu0 0.0
    %2400 = vmatprep.subr.mxu0 0.0
    %2401 = vmatpush1.msra.mxu0 0.0
    %2402 = vmatprep.subr.mxu0 0.0
    %2403 = vmatpush1.msra.mxu0 0.0
    %2404 = vmatprep.subr.mxu0 0.0
    %2405 = vmatpush1.msra.mxu0 0.0
    %2406 = vmatprep.subr.mxu0 0.0
    %2407 = vmatpush1.msra.mxu0 0.0
    %2408 = vmatprep.subr.mxu0 0.0
    %2409 = vmatpush1.msra.mxu0 0.0
    %2410 = vmatprep.subr.mxu0 0.0
    %2411 = vmatpush1.msra.mxu0 0.0
    %2412 = vmatprep.subr.mxu0 0.0
    %2413 = vmatpush1.msra.mxu0 0.0
    %2414 = vmatprep.subr.mxu0 0.0
    %2415 = vmatpush1.msra.mxu0 0.0
    %2416 = vmatprep.subr.mxu0 0.0
    %2417 = vmatpush1.msra.mxu0 0.0
    %2418 = vmatprep.subr.mxu0 0.0
    %2419 = vmatpush1.msra.mxu0 0.0
    %2420 = vmatprep.subr.mxu0 0.0
    %2421 = vmatpush1.msra.mxu0 0.0
    %2422 = vmatprep.subr.mxu0 0.0
    %2423 = vmatpush1.msra.mxu0 0.0
    %2424 = vmatprep.subr.mxu0 0.0
    %2425 = vmatpush1.msra.mxu0 0.0
    %2426 = vmatprep.subr.mxu0 0.0
    %2427 = vmatpush1.msra.mxu0 0.0
    %2428 = vmatprep.subr.mxu0 0.0
    %2429 = vmatpush1.msra.mxu0 0.0
    %2430 = vmatprep.mubr.f32.mxu0 0.0
    %v2431 = vand.u32 %v1491, 4294901760
    %2432 = vmatmul.mubr.f32.gmra.mrb[0].mxu0 %v2431
    %v2433 = vpop.f32.mrb[0].mxu0
    %v2434 = vadd.f32 %v2225, %v2433
    %v2435 = vpop.f32.mrb[0].mxu0
    %2436 = vmatprep.mubr.f32.mxu0 0.0
    %v2437 = vand.u32 %v1494, 4294901760
    %2438 = vmatmul.mubr.f32.gmra.mrb[0].mxu0 %v2437
    %v2439 = vpop.f32.mrb[0].mxu0
    %v2440 = vadd.f32 %v2233, %v2439
    %v2441 = vpop.f32.mrb[0].mxu0
    %2442 = vmatprep.mubr.f32.mxu0 0.0
    %v2443 = vand.u32 %v1497, 4294901760
    %2444 = vmatmul.mubr.f32.gmra.mrb[0].mxu0 %v2443
    %v2445 = vpop.f32.mrb[0].mxu0
    %v2446 = vadd.f32 %v2241, %v2445
    %v2447 = vpop.f32.mrb[0].mxu0
    %2448 = vmatprep.mubr.f32.mxu0 0.0
    %v2449 = vand.u32 %v1500, 4294901760
    %2450 = vmatmul.mubr.f32.gmra.mrb[0].mxu0 %v2449
    %v2451 = vpop.f32.mrb[0].mxu0
    %v2452 = vadd.f32 %v2249, %v2451
    %v2453 = vpop.f32.mrb[0].mxu0
    %2454 = vmatprep.mubr.f32.mxu0 0.0
    %v2455 = vand.u32 %v1503, 4294901760
    %2456 = vmatmul.mubr.f32.gmra.mrb[0].mxu0 %v2455
    %v2457 = vpop.f32.mrb[0].mxu0
    %v2458 = vadd.f32 %v2257, %v2457
    %v2459 = vpop.f32.mrb[0].mxu0
    %2460 = vmatprep.mubr.f32.mxu0 0.0
    %v2461 = vand.u32 %v1506, 4294901760
    %2462 = vmatmul.mubr.f32.gmra.mrb[0].mxu0 %v2461
    %v2463 = vpop.f32.mrb[0].mxu0
    %v2464 = vadd.f32 %v2265, %v2463
    %v2465 = vpop.f32.mrb[0].mxu0
    %2466 = vmatprep.mubr.f32.mxu0 0.0
    %v2467 = vand.u32 %v1509, 4294901760
    %2468 = vmatmul.mubr.f32.gmra.mrb[0].mxu0 %v2467
    %v2469 = vpop.f32.mrb[0].mxu0
    %v2470 = vadd.f32 %v2273, %v2469
    %v2471 = vpop.f32.mrb[0].mxu0
    %2472 = vmatprep.mubr.f32.mxu0 0.0
    %v2473 = vand.u32 %v1512, 4294901760
    %2474 = vmatmul.mubr.f32.gmra.mrb[0].mxu0 %v2473
    %v2475 = vpop.f32.mrb[0].mxu0
    %v2476 = vadd.f32 %v2281, %v2475
    %v2477 = vpop.f32.mrb[0].mxu0
    %2478 = vmatprep.mubr.f32.mxu0 0.0
    %v2479 = vand.u32 %v1515, 4294901760
    %2480 = vmatmul.mubr.f32.gmra.mrb[0].mxu0 %v2479
    %v2481 = vpop.f32.mrb[0].mxu0
    %v2482 = vadd.f32 %v2289, %v2481
    %v2483 = vpop.f32.mrb[0].mxu0
    %2484 = vmatprep.mubr.f32.mxu0 0.0
    %v2485 = vand.u32 %v1518, 4294901760
    %2486 = vmatmul.mubr.f32.gmra.mrb[0].mxu0 %v2485
    %v2487 = vpop.f32.mrb[0].mxu0
    %v2488 = vadd.f32 %v2297, %v2487
    %v2489 = vpop.f32.mrb[0].mxu0
    %2490 = vmatprep.mubr.f32.mxu0 0.0
    %v2491 = vand.u32 %v1521, 4294901760
    %2492 = vmatmul.mubr.f32.gmra.mrb[0].mxu0 %v2491
    %v2493 = vpop.f32.mrb[0].mxu0
    %v2494 = vadd.f32 %v2305, %v2493
    %v2495 = vpop.f32.mrb[0].mxu0
    %2496 = vmatprep.mubr.f32.mxu0 0.0
    %v2497 = vand.u32 %v1524, 4294901760
    %2498 = vmatmul.mubr.f32.gmra.mrb[0].mxu0 %v2497
    %v2499 = vpop.f32.mrb[0].mxu0
    %v2500 = vadd.f32 %v2313, %v2499
    %v2501 = vpop.f32.mrb[0].mxu0
    %2502 = vmatprep.mubr.f32.mxu0 0.0
    %v2503 = vand.u32 %v1527, 4294901760
    %2504 = vmatmul.mubr.f32.gmra.mrb[0].mxu0 %v2503
    %v2505 = vpop.f32.mrb[0].mxu0
    %v2506 = vadd.f32 %v2321, %v2505
    %v2507 = vpop.f32.mrb[0].mxu0
    %2508 = vmatprep.mubr.f32.mxu0 0.0
    %v2509 = vand.u32 %v1530, 4294901760
    %2510 = vmatmul.mubr.f32.gmra.mrb[0].mxu0 %v2509
    %v2511 = vpop.f32.mrb[0].mxu0
    %v2512 = vadd.f32 %v2329, %v2511
    %v2513 = vpop.f32.mrb[0].mxu0
    %2514 = vmatprep.mubr.f32.mxu0 0.0
    %v2515 = vand.u32 %v1533, 4294901760
    %2516 = vmatmul.mubr.f32.gmra.mrb[0].mxu0 %v2515
    %v2517 = vpop.f32.mrb[0].mxu0
    %v2518 = vadd.f32 %v2337, %v2517
    %v2519 = vpop.f32.mrb[0].mxu0
    %2520 = vmatprep.mubr.f32.mxu0 0.0
    %v2521 = vand.u32 %v1536, 4294901760
    %2522 = vmatmul.mubr.f32.gmra.mrb[0].mxu0 %v2521
    %v2523 = vpop.f32.mrb[0].mxu0
    %v2524 = vadd.f32 %v2345, %v2523
    %v2525 = vpop.f32.mrb[0].mxu0
    %2526 = vdwg.mxu0
    %2527 = vmatprep.subr.mxu0 0.0
    %v2528 = vand.u32 %v58, 4294901760
    %2529 = vmatpush1.msra.mxu0 %v2528
    %2530 = vmatprep.subr.mxu0 0.0
    %v2531 = vand.u32 %v59, 4294901760
    %2532 = vmatpush1.msra.mxu0 %v2531
    %2533 = vmatprep.subr.mxu0 0.0
    %v2534 = vand.u32 %v60, 4294901760
    %2535 = vmatpush1.msra.mxu0 %v2534
    %2536 = vmatprep.subr.mxu0 0.0
    %v2537 = vand.u32 %v61, 4294901760
    %2538 = vmatpush1.msra.mxu0 %v2537
    %2539 = vmatprep.subr.mxu0 0.0
    %v2540 = vand.u32 %v62, 4294901760
    %2541 = vmatpush1.msra.mxu0 %v2540
    %2542 = vmatprep.subr.mxu0 0.0
    %v2543 = vand.u32 %v63, 4294901760
    %2544 = vmatpush1.msra.mxu0 %v2543
    %2545 = vmatprep.subr.mxu0 0.0
    %2546 = vmatpush1.msra.mxu0 0.0
    %2547 = vmatprep.subr.mxu0 0.0
    %2548 = vmatpush1.msra.mxu0 0.0
    %2549 = vmatprep.subr.mxu0 0.0
    %2550 = vmatpush1.msra.mxu0 0.0
    %2551 = vmatprep.subr.mxu0 0.0
    %2552 = vmatpush1.msra.mxu0 0.0
    %2553 = vmatprep.subr.mxu0 0.0
    %2554 = vmatpush1.msra.mxu0 0.0
    %2555 = vmatprep.subr.mxu0 0.0
    %2556 = vmatpush1.msra.mxu0 0.0
    %2557 = vmatprep.subr.mxu0 0.0
    %2558 = vmatpush1.msra.mxu0 0.0
    %2559 = vmatprep.subr.mxu0 0.0
    %2560 = vmatpush1.msra.mxu0 0.0
    %2561 = vmatprep.subr.mxu0 0.0
    %2562 = vmatpush1.msra.mxu0 0.0
    %2563 = vmatprep.subr.mxu0 0.0
    %2564 = vmatpush1.msra.mxu0 0.0
    %2565 = vmatprep.subr.mxu0 0.0
    %2566 = vmatpush1.msra.mxu0 0.0
    %2567 = vmatprep.subr.mxu0 0.0
    %2568 = vmatpush1.msra.mxu0 0.0
    %2569 = vmatprep.subr.mxu0 0.0
    %2570 = vmatpush1.msra.mxu0 0.0
    %2571 = vmatprep.subr.mxu0 0.0
    %2572 = vmatpush1.msra.mxu0 0.0
    %2573 = vmatprep.subr.mxu0 0.0
    %2574 = vmatpush1.msra.mxu0 0.0
    %2575 = vmatprep.subr.mxu0 0.0
    %2576 = vmatpush1.msra.mxu0 0.0
    %2577 = vmatprep.subr.mxu0 0.0
    %2578 = vmatpush1.msra.mxu0 0.0
    %2579 = vmatprep.subr.mxu0 0.0
    %2580 = vmatpush1.msra.mxu0 0.0
    %2581 = vmatprep.subr.mxu0 0.0
    %2582 = vmatpush1.msra.mxu0 0.0
    %2583 = vmatprep.subr.mxu0 0.0
    %2584 = vmatpush1.msra.mxu0 0.0
    %2585 = vmatprep.subr.mxu0 0.0
    %2586 = vmatpush1.msra.mxu0 0.0
    %2587 = vmatprep.subr.mxu0 0.0
    %2588 = vmatpush1.msra.mxu0 0.0
    %2589 = vmatprep.subr.mxu0 0.0
    %2590 = vmatpush1.msra.mxu0 0.0
    %2591 = vmatprep.subr.mxu0 0.0
    %2592 = vmatpush1.msra.mxu0 0.0
    %2593 = vmatprep.subr.mxu0 0.0
    %2594 = vmatpush1.msra.mxu0 0.0
    %2595 = vmatprep.subr.mxu0 0.0
    %2596 = vmatpush1.msra.mxu0 0.0
    %2597 = vmatprep.mubr.f32.mxu0 0.0
    %v2598 = vand.u32 %v1491, 4294901760
    %2599 = vmatmul.mubr.f32.gmra.mrb[0].mxu0 %v2598
    %v2600 = vpop.f32.mrb[0].mxu0
    %v2601 = vadd.f32 %v2434, %v2600
    %v2602 = vpop.f32.mrb[0].mxu0
    %2603 = vmatprep.mubr.f32.mxu0 0.0
    %v2604 = vand.u32 %v1494, 4294901760
    %2605 = vmatmul.mubr.f32.gmra.mrb[0].mxu0 %v2604
    %v2606 = vpop.f32.mrb[0].mxu0
    %v2607 = vadd.f32 %v2440, %v2606
    %v2608 = vpop.f32.mrb[0].mxu0
    %2609 = vmatprep.mubr.f32.mxu0 0.0
    %v2610 = vand.u32 %v1497, 4294901760
    %2611 = vmatmul.mubr.f32.gmra.mrb[0].mxu0 %v2610
    %v2612 = vpop.f32.mrb[0].mxu0
    %v2613 = vadd.f32 %v2446, %v2612
    %v2614 = vpop.f32.mrb[0].mxu0
    %2615 = vmatprep.mubr.f32.mxu0 0.0
    %v2616 = vand.u32 %v1500, 4294901760
    %2617 = vmatmul.mubr.f32.gmra.mrb[0].mxu0 %v2616
    %v2618 = vpop.f32.mrb[0].mxu0
    %v2619 = vadd.f32 %v2452, %v2618
    %v2620 = vpop.f32.mrb[0].mxu0
    %2621 = vmatprep.mubr.f32.mxu0 0.0
    %v2622 = vand.u32 %v1503, 4294901760
    %2623 = vmatmul.mubr.f32.gmra.mrb[0].mxu0 %v2622
    %v2624 = vpop.f32.mrb[0].mxu0
    %v2625 = vadd.f32 %v2458, %v2624
    %v2626 = vpop.f32.mrb[0].mxu0
    %2627 = vmatprep.mubr.f32.mxu0 0.0
    %v2628 = vand.u32 %v1506, 4294901760
    %2629 = vmatmul.mubr.f32.gmra.mrb[0].mxu0 %v2628
    %v2630 = vpop.f32.mrb[0].mxu0
    %v2631 = vadd.f32 %v2464, %v2630
    %v2632 = vpop.f32.mrb[0].mxu0
    %2633 = vmatprep.mubr.f32.mxu0 0.0
    %v2634 = vand.u32 %v1509, 4294901760
    %2635 = vmatmul.mubr.f32.gmra.mrb[0].mxu0 %v2634
    %v2636 = vpop.f32.mrb[0].mxu0
    %v2637 = vadd.f32 %v2470, %v2636
    %v2638 = vpop.f32.mrb[0].mxu0
    %2639 = vmatprep.mubr.f32.mxu0 0.0
    %v2640 = vand.u32 %v1512, 4294901760
    %2641 = vmatmul.mubr.f32.gmra.mrb[0].mxu0 %v2640
    %v2642 = vpop.f32.mrb[0].mxu0
    %v2643 = vadd.f32 %v2476, %v2642
    %v2644 = vpop.f32.mrb[0].mxu0
    %2645 = vmatprep.mubr.f32.mxu0 0.0
    %v2646 = vand.u32 %v1515, 4294901760
    %2647 = vmatmul.mubr.f32.gmra.mrb[0].mxu0 %v2646
    %v2648 = vpop.f32.mrb[0].mxu0
    %v2649 = vadd.f32 %v2482, %v2648
    %v2650 = vpop.f32.mrb[0].mxu0
    %2651 = vmatprep.mubr.f32.mxu0 0.0
    %v2652 = vand.u32 %v1518, 4294901760
    %2653 = vmatmul.mubr.f32.gmra.mrb[0].mxu0 %v2652
    %v2654 = vpop.f32.mrb[0].mxu0
    %v2655 = vadd.f32 %v2488, %v2654
    %v2656 = vpop.f32.mrb[0].mxu0
    %2657 = vmatprep.mubr.f32.mxu0 0.0
    %v2658 = vand.u32 %v1521, 4294901760
    %2659 = vmatmul.mubr.f32.gmra.mrb[0].mxu0 %v2658
    %v2660 = vpop.f32.mrb[0].mxu0
    %v2661 = vadd.f32 %v2494, %v2660
    %v2662 = vpop.f32.mrb[0].mxu0
    %2663 = vmatprep.mubr.f32.mxu0 0.0
    %v2664 = vand.u32 %v1524, 4294901760
    %2665 = vmatmul.mubr.f32.gmra.mrb[0].mxu0 %v2664
    %v2666 = vpop.f32.mrb[0].mxu0
    %v2667 = vadd.f32 %v2500, %v2666
    %v2668 = vpop.f32.mrb[0].mxu0
    %2669 = vmatprep.mubr.f32.mxu0 0.0
    %v2670 = vand.u32 %v1527, 4294901760
    %2671 = vmatmul.mubr.f32.gmra.mrb[0].mxu0 %v2670
    %v2672 = vpop.f32.mrb[0].mxu0
    %v2673 = vadd.f32 %v2506, %v2672
    %v2674 = vpop.f32.mrb[0].mxu0
    %2675 = vmatprep.mubr.f32.mxu0 0.0
    %v2676 = vand.u32 %v1530, 4294901760
    %2677 = vmatmul.mubr.f32.gmra.mrb[0].mxu0 %v2676
    %v2678 = vpop.f32.mrb[0].mxu0
    %v2679 = vadd.f32 %v2512, %v2678
    %v2680 = vpop.f32.mrb[0].mxu0
    %2681 = vmatprep.mubr.f32.mxu0 0.0
    %v2682 = vand.u32 %v1533, 4294901760
    %2683 = vmatmul.mubr.f32.gmra.mrb[0].mxu0 %v2682
    %v2684 = vpop.f32.mrb[0].mxu0
    %v2685 = vadd.f32 %v2518, %v2684
    %v2686 = vpop.f32.mrb[0].mxu0
    %2687 = vmatprep.mubr.f32.mxu0 0.0
    %v2688 = vand.u32 %v1536, 4294901760
    %2689 = vmatmul.mubr.f32.gmra.mrb[0].mxu0 %v2688
    %v2690 = vpop.f32.mrb[0].mxu0
    %v2691 = vadd.f32 %v2524, %v2690
    %v2692 = vpop.f32.mrb[0].mxu0
    %2693 = vdwg.mxu0
    %v2694 = vmul.f32 %v1396, %v2601
    %v2695 = vmul.f32 %v1402, %v2607
    %v2696 = vmul.f32 %v1408, %v2613
    %v2697 = vmul.f32 %v1414, %v2619
    %v2698 = vmul.f32 %v1420, %v2625
    %v2699 = vmul.f32 %v1426, %v2631
    %v2700 = vmul.f32 %v1432, %v2637
    %v2701 = vmul.f32 %v1438, %v2643
    %v2702 = vmul.f32 %v1444, %v2649
    %v2703 = vmul.f32 %v1450, %v2655
    %v2704 = vmul.f32 %v1456, %v2661
    %v2705 = vmul.f32 %v1462, %v2667
    %v2706 = vmul.f32 %v1468, %v2673
    %v2707 = vmul.f32 %v1474, %v2679
    %v2708 = vmul.f32 %v1480, %v2685
    %v2709 = vmul.f32 %v1486, %v2691
    %2710 = vadd.xlane.f32.xlu0 %v2694
    %v2711 = vpop.xlane.xlu0 %2710
    %2712 = vadd.xlane.f32.xlu0 %v2695
    %v2713 = vpop.xlane.xlu0 %2712
    %2714 = vadd.xlane.f32.xlu0 %v2696
    %v2715 = vpop.xlane.xlu0 %2714
    %2716 = vadd.xlane.f32.xlu0 %v2697
    %v2717 = vpop.xlane.xlu0 %2716
    %2718 = vadd.xlane.f32.xlu0 %v2698
    %v2719 = vpop.xlane.xlu0 %2718
    %2720 = vadd.xlane.f32.xlu0 %v2699
    %v2721 = vpop.xlane.xlu0 %2720
    %2722 = vadd.xlane.f32.xlu0 %v2700
    %v2723 = vpop.xlane.xlu0 %2722
    %2724 = vadd.xlane.f32.xlu0 %v2701
    %v2725 = vpop.xlane.xlu0 %2724
    %2726 = vadd.xlane.f32.xlu0 %v2702
    %v2727 = vpop.xlane.xlu0 %2726
    %2728 = vadd.xlane.f32.xlu0 %v2703
    %v2729 = vpop.xlane.xlu0 %2728
    %2730 = vadd.xlane.f32.xlu0 %v2704
    %v2731 = vpop.xlane.xlu0 %2730
    %2732 = vadd.xlane.f32.xlu0 %v2705
    %v2733 = vpop.xlane.xlu0 %2732
    %2734 = vadd.xlane.f32.xlu0 %v2706
    %v2735 = vpop.xlane.xlu0 %2734
    %2736 = vadd.xlane.f32.xlu0 %v2707
    %v2737 = vpop.xlane.xlu0 %2736
    %2738 = vadd.xlane.f32.xlu0 %v2708
    %v2739 = vpop.xlane.xlu0 %2738
    %2740 = vadd.xlane.f32.xlu0 %v2709
    %v2741 = vpop.xlane.xlu0 %2740
    %v2758 = vlaneseq
    %v2759 = vshrl.u32 %v2758, 7
    %v2760 = vsub.s32 %v65, %v2759
    %v2761 = vrot.slane %v2711, %v2760
    %v2762 = vadd.s32 %v65, 4294967288
    %v2763 = vlaneseq
    %v2764 = vshrl.u32 %v2763, 7
    %v2765 = vsub.s32 %v2762, %v2764
    %v2766 = vrot.slane %v2713, %v2765
    %vm2767 = vcmask 130112
    %v2768 = vsel %vm2767, %v2766, %v2761
    %v2769 = vadd.s32 %v65, 4294967280
    %v2770 = vlaneseq
    %v2771 = vshrl.u32 %v2770, 7
    %v2772 = vsub.s32 %v2769, %v2771
    %v2773 = vrot.slane %v2715, %v2772
    %vm2774 = vcmask 195712
    %v2775 = vsel %vm2774, %v2773, %v2768
    %v2776 = vadd.s32 %v65, 4294967272
    %v2777 = vlaneseq
    %v2778 = vshrl.u32 %v2777, 7
    %v2779 = vsub.s32 %v2776, %v2778
    %v2780 = vrot.slane %v2717, %v2779
    %vm2781 = vcmask 261312
    %v2782 = vsel %vm2781, %v2780, %v2775
    %v2783 = vadd.s32 %v65, 4294967264
    %v2784 = vlaneseq
    %v2785 = vshrl.u32 %v2784, 7
    %v2786 = vsub.s32 %v2783, %v2785
    %v2787 = vrot.slane %v2719, %v2786
    %vm2788 = vcmask 326912
    %v2789 = vsel %vm2788, %v2787, %v2782
    %v2790 = vadd.s32 %v65, 4294967256
    %v2791 = vlaneseq
    %v2792 = vshrl.u32 %v2791, 7
    %v2793 = vsub.s32 %v2790, %v2792
    %v2794 = vrot.slane %v2721, %v2793
    %vm2795 = vcmask 392512
    %v2796 = vsel %vm2795, %v2794, %v2789
    %v2797 = vadd.s32 %v65, 4294967248
    %v2798 = vlaneseq
    %v2799 = vshrl.u32 %v2798, 7
    %v2800 = vsub.s32 %v2797, %v2799
    %v2801 = vrot.slane %v2723, %v2800
    %vm2802 = vcmask 458112
    %v2803 = vsel %vm2802, %v2801, %v2796
    %v2804 = vadd.s32 %v65, 4294967240
    %v2805 = vlaneseq
    %v2806 = vshrl.u32 %v2805, 7
    %v2807 = vsub.s32 %v2804, %v2806
    %v2808 = vrot.slane %v2725, %v2807
    %vm2809 = vcmask 523712
    %v2810 = vsel %vm2809, %v2808, %v2803
    %v2811 = vadd.s32 %v65, 4294967232
    %v2812 = vlaneseq
    %v2813 = vshrl.u32 %v2812, 7
    %v2814 = vsub.s32 %v2811, %v2813
    %v2815 = vrot.slane %v2727, %v2814
    %vm2816 = vcmask 589312
    %v2817 = vsel %vm2816, %v2815, %v2810
    %v2818 = vadd.s32 %v65, 4294967224
    %v2819 = vlaneseq
    %v2820 = vshrl.u32 %v2819, 7
    %v2821 = vsub.s32 %v2818, %v2820
    %v2822 = vrot.slane %v2729, %v2821
    %vm2823 = vcmask 654912
    %v2824 = vsel %vm2823, %v2822, %v2817
    %v2825 = vadd.s32 %v65, 4294967216
    %v2826 = vlaneseq
    %v2827 = vshrl.u32 %v2826, 7
    %v2828 = vsub.s32 %v2825, %v2827
    %v2829 = vrot.slane %v2731, %v2828
    %vm2830 = vcmask 720512
    %v2831 = vsel %vm2830, %v2829, %v2824
    %v2832 = vadd.s32 %v65, 4294967208
    %v2833 = vlaneseq
    %v2834 = vshrl.u32 %v2833, 7
    %v2835 = vsub.s32 %v2832, %v2834
    %v2836 = vrot.slane %v2733, %v2835
    %vm2837 = vcmask 786112
    %v2838 = vsel %vm2837, %v2836, %v2831
    %v2839 = vadd.s32 %v65, 4294967200
    %v2840 = vlaneseq
    %v2841 = vshrl.u32 %v2840, 7
    %v2842 = vsub.s32 %v2839, %v2841
    %v2843 = vrot.slane %v2735, %v2842
    %vm2844 = vcmask 851712
    %v2845 = vsel %vm2844, %v2843, %v2838
    %v2846 = vadd.s32 %v65, 4294967192
    %v2847 = vlaneseq
    %v2848 = vshrl.u32 %v2847, 7
    %v2849 = vsub.s32 %v2846, %v2848
    %v2850 = vrot.slane %v2737, %v2849
    %vm2851 = vcmask 917312
    %v2852 = vsel %vm2851, %v2850, %v2845
    %v2853 = vadd.s32 %v65, 4294967184
    %v2854 = vlaneseq
    %v2855 = vshrl.u32 %v2854, 7
    %v2856 = vsub.s32 %v2853, %v2855
    %v2857 = vrot.slane %v2739, %v2856
    %vm2858 = vcmask 982912
    %v2859 = vsel %vm2858, %v2857, %v2852
    %v2860 = vadd.s32 %v65, 4294967176
    %v2861 = vlaneseq
    %v2862 = vshrl.u32 %v2861, 7
    %v2863 = vsub.s32 %v2860, %v2862
    %v2864 = vrot.slane %v2741, %v2863
    %vm2865 = vcmask 1048512
    %v2866 = vsel %vm2865, %v2864, %v2859
    %2868 = vst [vmem:[#allocation2] sm:$0x1] %v2866
    // Predicated region
    $region18: #{tpu_custom_call.1} parent=1 // pred_check
      _
    $region19: #{tpu_custom_call.1} parent=1 // pred_check_branch
      %2870 = sbr.rel (0) target = $region21
    $region20: #{tpu_custom_call.1} parent=1 // pred_region
      %s2872 = ssub.s32 16, 16
      %2873 = vsyncadd [#allocation3], %s2872
      %s2875 = sshll.u32 [#allocation2], 4
      %s2876 = int_to_ptr.vmem [resolvable:$true] %s2875
      %2878 = dma.vmem_to_hbm [thread:$0]  %s2876, 16, %s4, [#allocation3]
    $region21: #{tpu_custom_call.1} parent=1 // pred_fallthru
      _
    // Predicated region
    $region22: #{tpu_custom_call.1} parent=1 // pred_check
      _
    $region23: #{tpu_custom_call.1} parent=1 // pred_check_branch
      %2880 = sbr.rel (0) target = $region25
    $region24: #{tpu_custom_call.1} parent=1 // pred_region
      %2881 = dma.done [#allocation3], 16
    $region25: #{tpu_custom_call.1} parent=1 // pred_fallthru
      _
    %2882 = vsyncpa [#allocation3], 1

// kernel: tpu_custom_call.1
$region0: #{tpu_custom_call.1}
  #allocation0 [shape = 'u32[]', space=smem, size = 0x4, offset = 0x4, fixed_abs, tag = 'smem constant byte address 0x4 - core index']
  #allocation1 [shape = 'u32[144,128]{1,0:T(1,128)}', space=vmem, size = 0x12000, scoped, tag = 'internal scratch']
  %s0 = inlined_call_operand.vmem [shape: s32[128,1], index: 0, kind: input, shape index: {}]
  %s1 = inlined_call_operand.vmem [shape: s32[128,1], index: 1, kind: input, shape index: {}]
  %s2 = inlined_call_operand.vmem [shape: f32[64,128], index: 2, kind: input, shape index: {}]
  %s3 = inlined_call_operand.vmem [shape: f32[48,128], index: 3, kind: input, shape index: {}]
  %s4 = inlined_call_operand.hbm [shape: f32[1,128], index: 4, kind: output, shape index: {}]
  %s5 = sld [smem:[#allocation0]]
  $region26: #{tpu_custom_call.1} parent=0
    _
  %s7 = ssub.s32 1, %s5
  %s8 = scalar_select 0, %s7, %s5
  $region1: #{tpu_custom_call.1} parent=0
    #allocation2 [shape = 'u8[512]{0}', space=vmem, size = 0x400, scoped, tag = 'output window, operand 0, single buffered']
    #allocation3 [shape = 's32[1]{0}', space=sflag, size = 0x4, scoped, tag = 'scoped memory for tpu_custom_call.1']
    %9 = vsyncpa [#allocation3], 0
    // Predicated region
    $region2: #{tpu_custom_call.1} parent=1 // pred_check
      _
    $region3: #{tpu_custom_call.1} parent=1 // pred_check_branch
      %11 = sbr.rel (0) target = $region5
    $region4: #{tpu_custom_call.1} parent=1 // pred_region
      _
    $region5: #{tpu_custom_call.1} parent=1 // pred_fallthru
      _
    // Predicated region
    $region6: #{tpu_custom_call.1} parent=1 // pred_check
      _
    $region7: #{tpu_custom_call.1} parent=1 // pred_check_branch
      %13 = sbr.rel (0) target = $region9
    $region8: #{tpu_custom_call.1} parent=1 // pred_region
      _
    $region9: #{tpu_custom_call.1} parent=1 // pred_fallthru
      _
    // Predicated region
    $region10: #{tpu_custom_call.1} parent=1 // pred_check
      _
    $region11: #{tpu_custom_call.1} parent=1 // pred_check_branch
      %15 = sbr.rel (0) target = $region13
    $region12: #{tpu_custom_call.1} parent=1 // pred_region
      _
    $region13: #{tpu_custom_call.1} parent=1 // pred_fallthru
      _
    // Predicated region
    $region14: #{tpu_custom_call.1} parent=1 // pred_check
      _
    $region15: #{tpu_custom_call.1} parent=1 // pred_check_branch
      %17 = sbr.rel (0) target = $region17
    $region16: #{tpu_custom_call.1} parent=1 // pred_region
      _
    $region17: #{tpu_custom_call.1} parent=1 // pred_fallthru
      _
    %v18 = vld [vmem:[%s0] sm:$0xff]
    %v19 = vld [vmem:[%s0 + $0x8] sm:$0xff]
    %v20 = vld [vmem:[%s0 + $0x10] sm:$0xff]
    %v21 = vld [vmem:[%s0 + $0x18] sm:$0xff]
    %v22 = vld [vmem:[%s0 + $0x20] sm:$0xff]
    %v23 = vld [vmem:[%s0 + $0x28] sm:$0xff]
    %v24 = vld [vmem:[%s0 + $0x30] sm:$0xff]
    %v25 = vld [vmem:[%s0 + $0x38] sm:$0xff]
    %v26 = vld [vmem:[%s0 + $0x40] sm:$0xff]
    %v27 = vld [vmem:[%s0 + $0x48] sm:$0xff]
    %v28 = vld [vmem:[%s0 + $0x50] sm:$0xff]
    %v29 = vld [vmem:[%s0 + $0x58] sm:$0xff]
    %v30 = vld [vmem:[%s0 + $0x60] sm:$0xff]
    %v31 = vld [vmem:[%s0 + $0x68] sm:$0xff]
    %v32 = vld [vmem:[%s0 + $0x70] sm:$0xff]
    %v33 = vld [vmem:[%s0 + $0x78] sm:$0xff]
    %v34 = vld [vmem:[%s1] sm:$0xff]
    %v35 = vld [vmem:[%s1 + $0x8] sm:$0xff]
    %v36 = vld [vmem:[%s1 + $0x10] sm:$0xff]
    %v37 = vld [vmem:[%s1 + $0x18] sm:$0xff]
    %v38 = vld [vmem:[%s1 + $0x20] sm:$0xff]
    %v39 = vld [vmem:[%s1 + $0x28] sm:$0xff]
    %v40 = vld [vmem:[%s1 + $0x30] sm:$0xff]
    %v41 = vld [vmem:[%s1 + $0x38] sm:$0xff]
    %v42 = vld [vmem:[%s1 + $0x40] sm:$0xff]
    %v43 = vld [vmem:[%s1 + $0x48] sm:$0xff]
    %v44 = vld [vmem:[%s1 + $0x50] sm:$0xff]
    %v45 = vld [vmem:[%s1 + $0x58] sm:$0xff]
    %v46 = vld [vmem:[%s1 + $0x60] sm:$0xff]
    %v47 = vld [vmem:[%s1 + $0x68] sm:$0xff]
    %v48 = vld [vmem:[%s1 + $0x70] sm:$0xff]
    %v49 = vld [vmem:[%s1 + $0x78] sm:$0xff]
    %v50 = vld [vmem:[%s2] sm:$0xff]
    %v51 = vld [vmem:[%s2 + $0x8] sm:$0xff]
    %v52 = vld [vmem:[%s2 + $0x10] sm:$0xff]
    %v53 = vld [vmem:[%s2 + $0x18] sm:$0xff]
    %v54 = vld [vmem:[%s2 + $0x20] sm:$0xff]
    %v55 = vld [vmem:[%s2 + $0x28] sm:$0xff]
    %v56 = vld [vmem:[%s2 + $0x30] sm:$0xff]
    %v57 = vld [vmem:[%s2 + $0x38] sm:$0xff]
    %v58 = vld [vmem:[%s3] sm:$0xff]
    %v59 = vld [vmem:[%s3 + $0x8] sm:$0xff]
    %v60 = vld [vmem:[%s3 + $0x10] sm:$0xff]
    %v61 = vld [vmem:[%s3 + $0x18] sm:$0xff]
    %v62 = vld [vmem:[%s3 + $0x20] sm:$0xff]
    %v63 = vld [vmem:[%s3 + $0x28] sm:$0xff]
    %v64 = vlaneseq
    %v65 = vand.u32 %v64, 127
    %66 = vset.pattern.permute.xlu0 0
    %67 = vperm.xlu0 %66, %v18
    %v68 = vpop.permute.xlu0 %67
    %69 = vset.pattern.permute.xlu0 0
    %70 = vperm.xlu0 %69, %v19
    %v71 = vpop.permute.xlu0 %70
    %72 = vset.pattern.permute.xlu0 0
    %73 = vperm.xlu0 %72, %v20
    %v74 = vpop.permute.xlu0 %73
    %75 = vset.pattern.permute.xlu0 0
    %76 = vperm.xlu0 %75, %v21
    %v77 = vpop.permute.xlu0 %76
    %78 = vset.pattern.permute.xlu0 0
    %79 = vperm.xlu0 %78, %v22
    %v80 = vpop.permute.xlu0 %79
    %81 = vset.pattern.permute.xlu0 0
    %82 = vperm.xlu0 %81, %v23
    %v83 = vpop.permute.xlu0 %82
    %84 = vset.pattern.permute.xlu0 0
    %85 = vperm.xlu0 %84, %v24
    %v86 = vpop.permute.xlu0 %85
    %87 = vset.pattern.permute.xlu0 0
    %88 = vperm.xlu0 %87, %v25
    %v89 = vpop.permute.xlu0 %88
    %90 = vset.pattern.permute.xlu0 0
    %91 = vperm.xlu0 %90, %v26
    %v92 = vpop.permute.xlu0 %91
    %93 = vset.pattern.permute.xlu0 0
    %94 = vperm.xlu0 %93, %v27
    %v95 = vpop.permute.xlu0 %94
    %96 = vset.pattern.permute.xlu0 0
    %97 = vperm.xlu0 %96, %v28
    %v98 = vpop.permute.xlu0 %97
    %99 = vset.pattern.permute.xlu0 0
    %100 = vperm.xlu0 %99, %v29
    %v101 = vpop.permute.xlu0 %100
    %102 = vset.pattern.permute.xlu0 0
    %103 = vperm.xlu0 %102, %v30
    %v104 = vpop.permute.xlu0 %103
    %105 = vset.pattern.permute.xlu0 0
    %106 = vperm.xlu0 %105, %v31
    %v107 = vpop.permute.xlu0 %106
    %108 = vset.pattern.permute.xlu0 0
    %109 = vperm.xlu0 %108, %v32
    %v110 = vpop.permute.xlu0 %109
    %111 = vset.pattern.permute.xlu0 0
    %112 = vperm.xlu0 %111, %v33
    %v113 = vpop.permute.xlu0 %112
    %vm114 = vcmp.eq.s32.totalorder %v68, %v65
    %vm115 = vcmp.eq.s32.totalorder %v71, %v65
    %vm116 = vcmp.eq.s32.totalorder %v74, %v65
    %vm117 = vcmp.eq.s32.totalorder %v77, %v65
    %vm118 = vcmp.eq.s32.totalorder %v80, %v65
    %vm119 = vcmp.eq.s32.totalorder %v83, %v65
    %vm120 = vcmp.eq.s32.totalorder %v86, %v65
    %vm121 = vcmp.eq.s32.totalorder %v89, %v65
    %vm122 = vcmp.eq.s32.totalorder %v92, %v65
    %vm123 = vcmp.eq.s32.totalorder %v95, %v65
    %vm124 = vcmp.eq.s32.totalorder %v98, %v65
    %vm125 = vcmp.eq.s32.totalorder %v101, %v65
    %vm126 = vcmp.eq.s32.totalorder %v104, %v65
    %vm127 = vcmp.eq.s32.totalorder %v107, %v65
    %vm128 = vcmp.eq.s32.totalorder %v110, %v65
    %vm129 = vcmp.eq.s32.totalorder %v113, %v65
    %v130 = vsel %vm114, 1, 0
    %v131 = vsel %vm115, 1, 0
    %v132 = vsel %vm116, 1, 0
    %v133 = vsel %vm117, 1, 0
    %v134 = vsel %vm118, 1, 0
    %v135 = vsel %vm119, 1, 0
    %v136 = vsel %vm120, 1, 0
    %v137 = vsel %vm121, 1, 0
    %v138 = vsel %vm122, 1, 0
    %v139 = vsel %vm123, 1, 0
    %v140 = vsel %vm124, 1, 0
    %v141 = vsel %vm125, 1, 0
    %v142 = vsel %vm126, 1, 0
    %v143 = vsel %vm127, 1, 0
    %v144 = vsel %vm128, 1, 0
    %v145 = vsel %vm129, 1, 0
    %v146 = vcvt.s32.f32 %v130
    %v147 = vcvt.s32.f32 %v131
    %v148 = vcvt.s32.f32 %v132
    %v149 = vcvt.s32.f32 %v133
    %v150 = vcvt.s32.f32 %v134
    %v151 = vcvt.s32.f32 %v135
    %v152 = vcvt.s32.f32 %v136
    %v153 = vcvt.s32.f32 %v137
    %v154 = vcvt.s32.f32 %v138
    %v155 = vcvt.s32.f32 %v139
    %v156 = vcvt.s32.f32 %v140
    %v157 = vcvt.s32.f32 %v141
    %v158 = vcvt.s32.f32 %v142
    %v159 = vcvt.s32.f32 %v143
    %v160 = vcvt.s32.f32 %v144
    %v161 = vcvt.s32.f32 %v145
    %162 = vset.pattern.permute.xlu0 0
    %163 = vperm.xlu0 %162, %v34
    %v164 = vpop.permute.xlu0 %163
    %165 = vset.pattern.permute.xlu0 0
    %166 = vperm.xlu0 %165, %v35
    %v167 = vpop.permute.xlu0 %166
    %168 = vset.pattern.permute.xlu0 0
    %169 = vperm.xlu0 %168, %v36
    %v170 = vpop.permute.xlu0 %169
    %171 = vset.pattern.permute.xlu0 0
    %172 = vperm.xlu0 %171, %v37
    %v173 = vpop.permute.xlu0 %172
    %174 = vset.pattern.permute.xlu0 0
    %175 = vperm.xlu0 %174, %v38
    %v176 = vpop.permute.xlu0 %175
    %177 = vset.pattern.permute.xlu0 0
    %178 = vperm.xlu0 %177, %v39
    %v179 = vpop.permute.xlu0 %178
    %180 = vset.pattern.permute.xlu0 0
    %181 = vperm.xlu0 %180, %v40
    %v182 = vpop.permute.xlu0 %181
    %183 = vset.pattern.permute.xlu0 0
    %184 = vperm.xlu0 %183, %v41
    %v185 = vpop.permute.xlu0 %184
    %186 = vset.pattern.permute.xlu0 0
    %187 = vperm.xlu0 %186, %v42
    %v188 = vpop.permute.xlu0 %187
    %189 = vset.pattern.permute.xlu0 0
    %190 = vperm.xlu0 %189, %v43
    %v191 = vpop.permute.xlu0 %190
    %192 = vset.pattern.permute.xlu0 0
    %193 = vperm.xlu0 %192, %v44
    %v194 = vpop.permute.xlu0 %193
    %195 = vset.pattern.permute.xlu0 0
    %196 = vperm.xlu0 %195, %v45
    %v197 = vpop.permute.xlu0 %196
    %198 = vset.pattern.permute.xlu0 0
    %199 = vperm.xlu0 %198, %v46
    %v200 = vpop.permute.xlu0 %199
    %201 = vset.pattern.permute.xlu0 0
    %202 = vperm.xlu0 %201, %v47
    %v203 = vpop.permute.xlu0 %202
    %204 = vset.pattern.permute.xlu0 0
    %205 = vperm.xlu0 %204, %v48
    %v206 = vpop.permute.xlu0 %205
    %207 = vset.pattern.permute.xlu0 0
    %208 = vperm.xlu0 %207, %v49
    %v209 = vpop.permute.xlu0 %208
    %vm210 = vcmp.eq.s32.totalorder %v164, %v65
    %vm211 = vcmp.eq.s32.totalorder %v167, %v65
    %vm212 = vcmp.eq.s32.totalorder %v170, %v65
    %vm213 = vcmp.eq.s32.totalorder %v173, %v65
    %vm214 = vcmp.eq.s32.totalorder %v176, %v65
    %vm215 = vcmp.eq.s32.totalorder %v179, %v65
    %vm216 = vcmp.eq.s32.totalorder %v182, %v65
    %vm217 = vcmp.eq.s32.totalorder %v185, %v65
    %vm218 = vcmp.eq.s32.totalorder %v188, %v65
    %vm219 = vcmp.eq.s32.totalorder %v191, %v65
    %vm220 = vcmp.eq.s32.totalorder %v194, %v65
    %vm221 = vcmp.eq.s32.totalorder %v197, %v65
    %vm222 = vcmp.eq.s32.totalorder %v200, %v65
    %vm223 = vcmp.eq.s32.totalorder %v203, %v65
    %vm224 = vcmp.eq.s32.totalorder %v206, %v65
    %vm225 = vcmp.eq.s32.totalorder %v209, %v65
    %v226 = vsel %vm210, 1, 0
    %v227 = vsel %vm211, 1, 0
    %v228 = vsel %vm212, 1, 0
    %v229 = vsel %vm213, 1, 0
    %v230 = vsel %vm214, 1, 0
    %v231 = vsel %vm215, 1, 0
    %v232 = vsel %vm216, 1, 0
    %v233 = vsel %vm217, 1, 0
    %v234 = vsel %vm218, 1, 0
    %v235 = vsel %vm219, 1, 0
    %v236 = vsel %vm220, 1, 0
    %v237 = vsel %vm221, 1, 0
    %v238 = vsel %vm222, 1, 0
    %v239 = vsel %vm223, 1, 0
    %v240 = vsel %vm224, 1, 0
    %v241 = vsel %vm225, 1, 0
    %v242 = vcvt.s32.f32 %v226
    %v243 = vcvt.s32.f32 %v227
    %v244 = vcvt.s32.f32 %v228
    %v245 = vcvt.s32.f32 %v229
    %v246 = vcvt.s32.f32 %v230
    %v247 = vcvt.s32.f32 %v231
    %v248 = vcvt.s32.f32 %v232
    %v249 = vcvt.s32.f32 %v233
    %v250 = vcvt.s32.f32 %v234
    %v251 = vcvt.s32.f32 %v235
    %v252 = vcvt.s32.f32 %v236
    %v253 = vcvt.s32.f32 %v237
    %v254 = vcvt.s32.f32 %v238
    %v255 = vcvt.s32.f32 %v239
    %v256 = vcvt.s32.f32 %v240
    %v257 = vcvt.s32.f32 %v241
    %vm258 = vcmask 523264
    %v260 = vsel %vm258, %v146, 0
    %v263 = vsel %vm258, %v147, 0
    %v266 = vsel %vm258, %v148, 0
    %v269 = vsel %vm258, %v149, 0
    %v272 = vsel %vm258, %v150, 0
    %v275 = vsel %vm258, %v151, 0
    %v278 = vsel %vm258, %v152, 0
    %v281 = vsel %vm258, %v153, 0
    %v284 = vsel %vm258, %v154, 0
    %v287 = vsel %vm258, %v155, 0
    %v290 = vsel %vm258, %v156, 0
    %v293 = vsel %vm258, %v157, 0
    %v296 = vsel %vm258, %v158, 0
    %v299 = vsel %vm258, %v159, 0
    %v302 = vsel %vm258, %v160, 0
    %v305 = vsel %vm258, %v161, 0
    %307 = vmatprep.subr.mxu0 0.0
    %308 = vmatpush1.msra.mxu0 %v50
    %309 = vmatprep.subr.mxu0 0.0
    %310 = vmatpush1.msra.mxu0 %v51
    %311 = vmatprep.subr.mxu0 0.0
    %312 = vmatpush1.msra.mxu0 %v52
    %313 = vmatprep.subr.mxu0 0.0
    %314 = vmatpush1.msra.mxu0 %v53
    %315 = vmatprep.subr.mxu0 0.0
    %316 = vmatpush1.msra.mxu0 %v54
    %317 = vmatprep.subr.mxu0 0.0
    %318 = vmatpush1.msra.mxu0 %v55
    %319 = vmatprep.subr.mxu0 0.0
    %320 = vmatpush1.msra.mxu0 %v56
    %321 = vmatprep.subr.mxu0 0.0
    %322 = vmatpush1.msra.mxu0 %v57
    %323 = vmatprep.subr.mxu0 0.0
    %324 = vmatpush1.msra.mxu0 0.0
    %325 = vmatprep.subr.mxu0 0.0
    %326 = vmatpush1.msra.mxu0 0.0
    %327 = vmatprep.subr.mxu0 0.0
    %328 = vmatpush1.msra.mxu0 0.0
    %329 = vmatprep.subr.mxu0 0.0
    %330 = vmatpush1.msra.mxu0 0.0
    %331 = vmatprep.subr.mxu0 0.0
    %332 = vmatpush1.msra.mxu0 0.0
    %333 = vmatprep.subr.mxu0 0.0
    %334 = vmatpush1.msra.mxu0 0.0
    %335 = vmatprep.subr.mxu0 0.0
    %336 = vmatpush1.msra.mxu0 0.0
    %337 = vmatprep.subr.mxu0 0.0
    %338 = vmatpush1.msra.mxu0 0.0
    %339 = vmatprep.subr.mxu0 0.0
    %340 = vmatpush1.msra.mxu0 0.0
    %341 = vmatprep.subr.mxu0 0.0
    %342 = vmatpush1.msra.mxu0 0.0
    %343 = vmatprep.subr.mxu0 0.0
    %344 = vmatpush1.msra.mxu0 0.0
    %345 = vmatprep.subr.mxu0 0.0
    %346 = vmatpush1.msra.mxu0 0.0
    %347 = vmatprep.subr.mxu0 0.0
    %348 = vmatpush1.msra.mxu0 0.0
    %349 = vmatprep.subr.mxu0 0.0
    %350 = vmatpush1.msra.mxu0 0.0
    %351 = vmatprep.subr.mxu0 0.0
    %352 = vmatpush1.msra.mxu0 0.0
    %353 = vmatprep.subr.mxu0 0.0
    %354 = vmatpush1.msra.mxu0 0.0
    %355 = vmatprep.subr.mxu0 0.0
    %356 = vmatpush1.msra.mxu0 0.0
    %357 = vmatprep.subr.mxu0 0.0
    %358 = vmatpush1.msra.mxu0 0.0
    %359 = vmatprep.subr.mxu0 0.0
    %360 = vmatpush1.msra.mxu0 0.0
    %361 = vmatprep.subr.mxu0 0.0
    %362 = vmatpush1.msra.mxu0 0.0
    %363 = vmatprep.subr.mxu0 0.0
    %364 = vmatpush1.msra.mxu0 0.0
    %365 = vmatprep.subr.mxu0 0.0
    %366 = vmatpush1.msra.mxu0 0.0
    %367 = vmatprep.subr.mxu0 0.0
    %368 = vmatpush1.msra.mxu0 0.0
    %369 = vmatprep.subr.mxu0 0.0
    %370 = vmatpush1.msra.mxu0 0.0
    %371 = vmatprep.mubr.f32.mxu0 0.0
    %372 = vmatmul.mubr.f32.gmra.mrb[0].mxu0 %v260
    %v373 = vpop.f32.mrb[0].mxu0
    %v374 = vadd.f32 0.0, %v373
    %v375 = vpop.f32.mrb[0].mxu0
    %376 = vmatprep.mubr.f32.mxu0 0.0
    %377 = vmatmul.mubr.f32.gmra.mrb[0].mxu0 %v263
    %v378 = vpop.f32.mrb[0].mxu0
    %v379 = vadd.f32 0.0, %v378
    %v380 = vpop.f32.mrb[0].mxu0
    %381 = vmatprep.mubr.f32.mxu0 0.0
    %382 = vmatmul.mubr.f32.gmra.mrb[0].mxu0 %v266
    %v383 = vpop.f32.mrb[0].mxu0
    %v384 = vadd.f32 0.0, %v383
    %v385 = vpop.f32.mrb[0].mxu0
    %386 = vmatprep.mubr.f32.mxu0 0.0
    %387 = vmatmul.mubr.f32.gmra.mrb[0].mxu0 %v269
    %v388 = vpop.f32.mrb[0].mxu0
    %v389 = vadd.f32 0.0, %v388
    %v390 = vpop.f32.mrb[0].mxu0
    %391 = vmatprep.mubr.f32.mxu0 0.0
    %392 = vmatmul.mubr.f32.gmra.mrb[0].mxu0 %v272
    %v393 = vpop.f32.mrb[0].mxu0
    %v394 = vadd.f32 0.0, %v393
    %v395 = vpop.f32.mrb[0].mxu0
    %396 = vmatprep.mubr.f32.mxu0 0.0
    %397 = vmatmul.mubr.f32.gmra.mrb[0].mxu0 %v275
    %v398 = vpop.f32.mrb[0].mxu0
    %v399 = vadd.f32 0.0, %v398
    %v400 = vpop.f32.mrb[0].mxu0
    %401 = vmatprep.mubr.f32.mxu0 0.0
    %402 = vmatmul.mubr.f32.gmra.mrb[0].mxu0 %v278
    %v403 = vpop.f32.mrb[0].mxu0
    %v404 = vadd.f32 0.0, %v403
    %v405 = vpop.f32.mrb[0].mxu0
    %406 = vmatprep.mubr.f32.mxu0 0.0
    %407 = vmatmul.mubr.f32.gmra.mrb[0].mxu0 %v281
    %v408 = vpop.f32.mrb[0].mxu0
    %v409 = vadd.f32 0.0, %v408
    %v410 = vpop.f32.mrb[0].mxu0
    %411 = vmatprep.mubr.f32.mxu0 0.0
    %412 = vmatmul.mubr.f32.gmra.mrb[0].mxu0 %v284
    %v413 = vpop.f32.mrb[0].mxu0
    %v414 = vadd.f32 0.0, %v413
    %v415 = vpop.f32.mrb[0].mxu0
    %416 = vmatprep.mubr.f32.mxu0 0.0
    %417 = vmatmul.mubr.f32.gmra.mrb[0].mxu0 %v287
    %v418 = vpop.f32.mrb[0].mxu0
    %v419 = vadd.f32 0.0, %v418
    %v420 = vpop.f32.mrb[0].mxu0
    %421 = vmatprep.mubr.f32.mxu0 0.0
    %422 = vmatmul.mubr.f32.gmra.mrb[0].mxu0 %v290
    %v423 = vpop.f32.mrb[0].mxu0
    %v424 = vadd.f32 0.0, %v423
    %v425 = vpop.f32.mrb[0].mxu0
    %426 = vmatprep.mubr.f32.mxu0 0.0
    %427 = vmatmul.mubr.f32.gmra.mrb[0].mxu0 %v293
    %v428 = vpop.f32.mrb[0].mxu0
    %v429 = vadd.f32 0.0, %v428
    %v430 = vpop.f32.mrb[0].mxu0
    %431 = vmatprep.mubr.f32.mxu0 0.0
    %432 = vmatmul.mubr.f32.gmra.mrb[0].mxu0 %v296
    %v433 = vpop.f32.mrb[0].mxu0
    %v434 = vadd.f32 0.0, %v433
    %v435 = vpop.f32.mrb[0].mxu0
    %436 = vmatprep.mubr.f32.mxu0 0.0
    %437 = vmatmul.mubr.f32.gmra.mrb[0].mxu0 %v299
    %v438 = vpop.f32.mrb[0].mxu0
    %v439 = vadd.f32 0.0, %v438
    %v440 = vpop.f32.mrb[0].mxu0
    %441 = vmatprep.mubr.f32.mxu0 0.0
    %442 = vmatmul.mubr.f32.gmra.mrb[0].mxu0 %v302
    %v443 = vpop.f32.mrb[0].mxu0
    %v444 = vadd.f32 0.0, %v443
    %v445 = vpop.f32.mrb[0].mxu0
    %446 = vmatprep.mubr.f32.mxu0 0.0
    %447 = vmatmul.mubr.f32.gmra.mrb[0].mxu0 %v305
    %v448 = vpop.f32.mrb[0].mxu0
    %v449 = vadd.f32 0.0, %v448
    %v450 = vpop.f32.mrb[0].mxu0
    %451 = vdwg.mxu0
    %vm452 = vcmask 392192
    %v454 = vsel %vm452, %v242, 0
    %v457 = vsel %vm452, %v243, 0
    %v460 = vsel %vm452, %v244, 0
    %v463 = vsel %vm452, %v245, 0
    %v466 = vsel %vm452, %v246, 0
    %v469 = vsel %vm452, %v247, 0
    %v472 = vsel %vm452, %v248, 0
    %v475 = vsel %vm452, %v249, 0
    %v478 = vsel %vm452, %v250, 0
    %v481 = vsel %vm452, %v251, 0
    %v484 = vsel %vm452, %v252, 0
    %v487 = vsel %vm452, %v253, 0
    %v490 = vsel %vm452, %v254, 0
    %v493 = vsel %vm452, %v255, 0
    %v496 = vsel %vm452, %v256, 0
    %v499 = vsel %vm452, %v257, 0
    %501 = vmatprep.subr.mxu0 0.0
    %502 = vmatpush1.msra.mxu0 %v58
    %503 = vmatprep.subr.mxu0 0.0
    %504 = vmatpush1.msra.mxu0 %v59
    %505 = vmatprep.subr.mxu0 0.0
    %506 = vmatpush1.msra.mxu0 %v60
    %507 = vmatprep.subr.mxu0 0.0
    %508 = vmatpush1.msra.mxu0 %v61
    %509 = vmatprep.subr.mxu0 0.0
    %510 = vmatpush1.msra.mxu0 %v62
    %511 = vmatprep.subr.mxu0 0.0
    %512 = vmatpush1.msra.mxu0 %v63
    %513 = vmatprep.subr.mxu0 0.0
    %514 = vmatpush1.msra.mxu0 0.0
    %515 = vmatprep.subr.mxu0 0.0
    %516 = vmatpush1.msra.mxu0 0.0
    %517 = vmatprep.subr.mxu0 0.0
    %518 = vmatpush1.msra.mxu0 0.0
    %519 = vmatprep.subr.mxu0 0.0
    %520 = vmatpush1.msra.mxu0 0.0
    %521 = vmatprep.subr.mxu0 0.0
    %522 = vmatpush1.msra.mxu0 0.0
    %523 = vmatprep.subr.mxu0 0.0
    %524 = vmatpush1.msra.mxu0 0.0
    %525 = vmatprep.subr.mxu0 0.0
    %526 = vmatpush1.msra.mxu0 0.0
    %527 = vmatprep.subr.mxu0 0.0
    %528 = vmatpush1.msra.mxu0 0.0
    %529 = vmatprep.subr.mxu0 0.0
    %530 = vmatpush1.msra.mxu0 0.0
    %531 = vmatprep.subr.mxu0 0.0
    %532 = vmatpush1.msra.mxu0 0.0
    %533 = vmatprep.subr.mxu0 0.0
    %534 = vmatpush1.msra.mxu0 0.0
    %535 = vmatprep.subr.mxu0 0.0
    %536 = vmatpush1.msra.mxu0 0.0
    %537 = vmatprep.subr.mxu0 0.0
    %538 = vmatpush1.msra.mxu0 0.0
    %539 = vmatprep.subr.mxu0 0.0
    %540 = vmatpush1.msra.mxu0 0.0
    %541 = vmatprep.subr.mxu0 0.0
    %542 = vmatpush1.msra.mxu0 0.0
    %543 = vmatprep.subr.mxu0 0.0
    %544 = vmatpush1.msra.mxu0 0.0
    %545 = vmatprep.subr.mxu0 0.0
    %546 = vmatpush1.msra.mxu0 0.0
    %547 = vmatprep.subr.mxu0 0.0
    %548 = vmatpush1.msra.mxu0 0.0
    %549 = vmatprep.subr.mxu0 0.0
    %550 = vmatpush1.msra.mxu0 0.0
    %551 = vmatprep.subr.mxu0 0.0
    %552 = vmatpush1.msra.mxu0 0.0
    %553 = vmatprep.subr.mxu0 0.0
    %554 = vmatpush1.msra.mxu0 0.0
    %555 = vmatprep.subr.mxu0 0.0
    %556 = vmatpush1.msra.mxu0 0.0
    %557 = vmatprep.subr.mxu0 0.0
    %558 = vmatpush1.msra.mxu0 0.0
    %559 = vmatprep.subr.mxu0 0.0
    %560 = vmatpush1.msra.mxu0 0.0
    %561 = vmatprep.subr.mxu0 0.0
    %562 = vmatpush1.msra.mxu0 0.0
    %563 = vmatprep.subr.mxu0 0.0
    %564 = vmatpush1.msra.mxu0 0.0
    %565 = vmatprep.mubr.f32.mxu0 0.0
    %566 = vmatmul.mubr.f32.gmra.mrb[0].mxu0 %v454
    %v567 = vpop.f32.mrb[0].mxu0
    %v568 = vadd.f32 0.0, %v567
    %v569 = vpop.f32.mrb[0].mxu0
    %570 = vmatprep.mubr.f32.mxu0 0.0
    %571 = vmatmul.mubr.f32.gmra.mrb[0].mxu0 %v457
    %v572 = vpop.f32.mrb[0].mxu0
    %v573 = vadd.f32 0.0, %v572
    %v574 = vpop.f32.mrb[0].mxu0
    %575 = vmatprep.mubr.f32.mxu0 0.0
    %576 = vmatmul.mubr.f32.gmra.mrb[0].mxu0 %v460
    %v577 = vpop.f32.mrb[0].mxu0
    %v578 = vadd.f32 0.0, %v577
    %v579 = vpop.f32.mrb[0].mxu0
    %580 = vmatprep.mubr.f32.mxu0 0.0
    %581 = vmatmul.mubr.f32.gmra.mrb[0].mxu0 %v463
    %v582 = vpop.f32.mrb[0].mxu0
    %v583 = vadd.f32 0.0, %v582
    %v584 = vpop.f32.mrb[0].mxu0
    %585 = vmatprep.mubr.f32.mxu0 0.0
    %586 = vmatmul.mubr.f32.gmra.mrb[0].mxu0 %v466
    %v587 = vpop.f32.mrb[0].mxu0
    %v588 = vadd.f32 0.0, %v587
    %v589 = vpop.f32.mrb[0].mxu0
    %590 = vmatprep.mubr.f32.mxu0 0.0
    %591 = vmatmul.mubr.f32.gmra.mrb[0].mxu0 %v469
    %v592 = vpop.f32.mrb[0].mxu0
    %v593 = vadd.f32 0.0, %v592
    %v594 = vpop.f32.mrb[0].mxu0
    %595 = vmatprep.mubr.f32.mxu0 0.0
    %596 = vmatmul.mubr.f32.gmra.mrb[0].mxu0 %v472
    %v597 = vpop.f32.mrb[0].mxu0
    %v598 = vadd.f32 0.0, %v597
    %v599 = vpop.f32.mrb[0].mxu0
    %600 = vmatprep.mubr.f32.mxu0 0.0
    %601 = vmatmul.mubr.f32.gmra.mrb[0].mxu0 %v475
    %v602 = vpop.f32.mrb[0].mxu0
    %v603 = vadd.f32 0.0, %v602
    %v604 = vpop.f32.mrb[0].mxu0
    %605 = vmatprep.mubr.f32.mxu0 0.0
    %606 = vmatmul.mubr.f32.gmra.mrb[0].mxu0 %v478
    %v607 = vpop.f32.mrb[0].mxu0
    %v608 = vadd.f32 0.0, %v607
    %v609 = vpop.f32.mrb[0].mxu0
    %610 = vmatprep.mubr.f32.mxu0 0.0
    %611 = vmatmul.mubr.f32.gmra.mrb[0].mxu0 %v481
    %v612 = vpop.f32.mrb[0].mxu0
    %v613 = vadd.f32 0.0, %v612
    %v614 = vpop.f32.mrb[0].mxu0
    %615 = vmatprep.mubr.f32.mxu0 0.0
    %616 = vmatmul.mubr.f32.gmra.mrb[0].mxu0 %v484
    %v617 = vpop.f32.mrb[0].mxu0
    %v618 = vadd.f32 0.0, %v617
    %v619 = vpop.f32.mrb[0].mxu0
    %620 = vmatprep.mubr.f32.mxu0 0.0
    %621 = vmatmul.mubr.f32.gmra.mrb[0].mxu0 %v487
    %v622 = vpop.f32.mrb[0].mxu0
    %v623 = vadd.f32 0.0, %v622
    %v624 = vpop.f32.mrb[0].mxu0
    %625 = vmatprep.mubr.f32.mxu0 0.0
    %626 = vmatmul.mubr.f32.gmra.mrb[0].mxu0 %v490
    %v627 = vpop.f32.mrb[0].mxu0
    %v628 = vadd.f32 0.0, %v627
    %v629 = vpop.f32.mrb[0].mxu0
    %630 = vmatprep.mubr.f32.mxu0 0.0
    %631 = vmatmul.mubr.f32.gmra.mrb[0].mxu0 %v493
    %v632 = vpop.f32.mrb[0].mxu0
    %v633 = vadd.f32 0.0, %v632
    %v634 = vpop.f32.mrb[0].mxu0
    %635 = vmatprep.mubr.f32.mxu0 0.0
    %636 = vmatmul.mubr.f32.gmra.mrb[0].mxu0 %v496
    %v637 = vpop.f32.mrb[0].mxu0
    %v638 = vadd.f32 0.0, %v637
    %v639 = vpop.f32.mrb[0].mxu0
    %640 = vmatprep.mubr.f32.mxu0 0.0
    %641 = vmatmul.mubr.f32.gmra.mrb[0].mxu0 %v499
    %v642 = vpop.f32.mrb[0].mxu0
    %v643 = vadd.f32 0.0, %v642
    %v644 = vpop.f32.mrb[0].mxu0
    %645 = vdwg.mxu0
    %v646 = vmul.f32 %v374, %v568
    %v647 = vmul.f32 %v379, %v573
    %v648 = vmul.f32 %v384, %v578
    %v649 = vmul.f32 %v389, %v583
    %v650 = vmul.f32 %v394, %v588
    %v651 = vmul.f32 %v399, %v593
    %v652 = vmul.f32 %v404, %v598
    %v653 = vmul.f32 %v409, %v603
    %v654 = vmul.f32 %v414, %v608
    %v655 = vmul.f32 %v419, %v613
    %v656 = vmul.f32 %v424, %v618
    %v657 = vmul.f32 %v429, %v623
    %v658 = vmul.f32 %v434, %v628
    %v659 = vmul.f32 %v439, %v633
    %v660 = vmul.f32 %v444, %v638
    %v661 = vmul.f32 %v449, %v643
    %662 = vadd.xlane.f32.xlu0 %v646
    %v663 = vpop.xlane.xlu0 %662
    %664 = vadd.xlane.f32.xlu0 %v647
    %v665 = vpop.xlane.xlu0 %664
    %666 = vadd.xlane.f32.xlu0 %v648
    %v667 = vpop.xlane.xlu0 %666
    %668 = vadd.xlane.f32.xlu0 %v649
    %v669 = vpop.xlane.xlu0 %668
    %670 = vadd.xlane.f32.xlu0 %v650
    %v671 = vpop.xlane.xlu0 %670
    %672 = vadd.xlane.f32.xlu0 %v651
    %v673 = vpop.xlane.xlu0 %672
    %674 = vadd.xlane.f32.xlu0 %v652
    %v675 = vpop.xlane.xlu0 %674
    %676 = vadd.xlane.f32.xlu0 %v653
    %v677 = vpop.xlane.xlu0 %676
    %678 = vadd.xlane.f32.xlu0 %v654
    %v679 = vpop.xlane.xlu0 %678
    %680 = vadd.xlane.f32.xlu0 %v655
    %v681 = vpop.xlane.xlu0 %680
    %682 = vadd.xlane.f32.xlu0 %v656
    %v683 = vpop.xlane.xlu0 %682
    %684 = vadd.xlane.f32.xlu0 %v657
    %v685 = vpop.xlane.xlu0 %684
    %686 = vadd.xlane.f32.xlu0 %v658
    %v687 = vpop.xlane.xlu0 %686
    %688 = vadd.xlane.f32.xlu0 %v659
    %v689 = vpop.xlane.xlu0 %688
    %690 = vadd.xlane.f32.xlu0 %v660
    %v691 = vpop.xlane.xlu0 %690
    %692 = vadd.xlane.f32.xlu0 %v661
    %v693 = vpop.xlane.xlu0 %692
    %v710 = vlaneseq
    %v711 = vshrl.u32 %v710, 7
    %v712 = vsub.s32 %v65, %v711
    %v713 = vrot.slane %v663, %v712
    %v714 = vadd.s32 %v65, 4294967288
    %v715 = vlaneseq
    %v716 = vshrl.u32 %v715, 7
    %v717 = vsub.s32 %v714, %v716
    %v718 = vrot.slane %v665, %v717
    %vm719 = vcmask 130112
    %v720 = vsel %vm719, %v718, %v713
    %v721 = vadd.s32 %v65, 4294967280
    %v722 = vlaneseq
    %v723 = vshrl.u32 %v722, 7
    %v724 = vsub.s32 %v721, %v723
    %v725 = vrot.slane %v667, %v724
    %vm726 = vcmask 195712
    %v727 = vsel %vm726, %v725, %v720
    %v728 = vadd.s32 %v65, 4294967272
    %v729 = vlaneseq
    %v730 = vshrl.u32 %v729, 7
    %v731 = vsub.s32 %v728, %v730
    %v732 = vrot.slane %v669, %v731
    %vm733 = vcmask 261312
    %v734 = vsel %vm733, %v732, %v727
    %v735 = vadd.s32 %v65, 4294967264
    %v736 = vlaneseq
    %v737 = vshrl.u32 %v736, 7
    %v738 = vsub.s32 %v735, %v737
    %v739 = vrot.slane %v671, %v738
    %vm740 = vcmask 326912
    %v741 = vsel %vm740, %v739, %v734
    %v742 = vadd.s32 %v65, 4294967256
    %v743 = vlaneseq
    %v744 = vshrl.u32 %v743, 7
    %v745 = vsub.s32 %v742, %v744
    %v746 = vrot.slane %v673, %v745
    %vm747 = vcmask 392512
    %v748 = vsel %vm747, %v746, %v741
    %v749 = vadd.s32 %v65, 4294967248
    %v750 = vlaneseq
    %v751 = vshrl.u32 %v750, 7
    %v752 = vsub.s32 %v749, %v751
    %v753 = vrot.slane %v675, %v752
    %vm754 = vcmask 458112
    %v755 = vsel %vm754, %v753, %v748
    %v756 = vadd.s32 %v65, 4294967240
    %v757 = vlaneseq
    %v758 = vshrl.u32 %v757, 7
    %v759 = vsub.s32 %v756, %v758
    %v760 = vrot.slane %v677, %v759
    %vm761 = vcmask 523712
    %v762 = vsel %vm761, %v760, %v755
    %v763 = vadd.s32 %v65, 4294967232
    %v764 = vlaneseq
    %v765 = vshrl.u32 %v764, 7
    %v766 = vsub.s32 %v763, %v765
    %v767 = vrot.slane %v679, %v766
    %vm768 = vcmask 589312
    %v769 = vsel %vm768, %v767, %v762
    %v770 = vadd.s32 %v65, 4294967224
    %v771 = vlaneseq
    %v772 = vshrl.u32 %v771, 7
    %v773 = vsub.s32 %v770, %v772
    %v774 = vrot.slane %v681, %v773
    %vm775 = vcmask 654912
    %v776 = vsel %vm775, %v774, %v769
    %v777 = vadd.s32 %v65, 4294967216
    %v778 = vlaneseq
    %v779 = vshrl.u32 %v778, 7
    %v780 = vsub.s32 %v777, %v779
    %v781 = vrot.slane %v683, %v780
    %vm782 = vcmask 720512
    %v783 = vsel %vm782, %v781, %v776
    %v784 = vadd.s32 %v65, 4294967208
    %v785 = vlaneseq
    %v786 = vshrl.u32 %v785, 7
    %v787 = vsub.s32 %v784, %v786
    %v788 = vrot.slane %v685, %v787
    %vm789 = vcmask 786112
    %v790 = vsel %vm789, %v788, %v783
    %v791 = vadd.s32 %v65, 4294967200
    %v792 = vlaneseq
    %v793 = vshrl.u32 %v792, 7
    %v794 = vsub.s32 %v791, %v793
    %v795 = vrot.slane %v687, %v794
    %vm796 = vcmask 851712
    %v797 = vsel %vm796, %v795, %v790
    %v798 = vadd.s32 %v65, 4294967192
    %v799 = vlaneseq
    %v800 = vshrl.u32 %v799, 7
    %v801 = vsub.s32 %v798, %v800
    %v802 = vrot.slane %v689, %v801
    %vm803 = vcmask 917312
    %v804 = vsel %vm803, %v802, %v797
    %v805 = vadd.s32 %v65, 4294967184
    %v806 = vlaneseq
    %v807 = vshrl.u32 %v806, 7
    %v808 = vsub.s32 %v805, %v807
    %v809 = vrot.slane %v691, %v808
    %vm810 = vcmask 982912
    %v811 = vsel %vm810, %v809, %v804
    %v812 = vadd.s32 %v65, 4294967176
    %v813 = vlaneseq
    %v814 = vshrl.u32 %v813, 7
    %v815 = vsub.s32 %v812, %v814
    %v816 = vrot.slane %v693, %v815
    %vm817 = vcmask 1048512
    %v818 = vsel %vm817, %v816, %v811
    %820 = vst [vmem:[#allocation2] sm:$0x1] %v818
    // Predicated region
    $region18: #{tpu_custom_call.1} parent=1 // pred_check
      _
    $region19: #{tpu_custom_call.1} parent=1 // pred_check_branch
      %822 = sbr.rel (0) target = $region21
    $region20: #{tpu_custom_call.1} parent=1 // pred_region
      %s824 = ssub.s32 16, 16
      %825 = vsyncadd [#allocation3], %s824
      %s827 = sshll.u32 [#allocation2], 4
      %s828 = int_to_ptr.vmem [resolvable:$true] %s827
      %830 = dma.vmem_to_hbm [thread:$0]  %s828, 16, %s4, [#allocation3]
    $region21: #{tpu_custom_call.1} parent=1 // pred_fallthru
      _
    // Predicated region
    $region22: #{tpu_custom_call.1} parent=1 // pred_check
      _
    $region23: #{tpu_custom_call.1} parent=1 // pred_check_branch
      %832 = sbr.rel (0) target = $region25
    $region24: #{tpu_custom_call.1} parent=1 // pred_region
      %833 = dma.done [#allocation3], 16
    $region25: #{tpu_custom_call.1} parent=1 // pred_fallthru
      _
    %834 = vsyncpa [#allocation3], 1

// kernel: tpu_custom_call.1
$region0: #{tpu_custom_call.1}
  #allocation0 [shape = 'u32[]', space=smem, size = 0x4, offset = 0x4, fixed_abs, tag = 'smem constant byte address 0x4 - core index']
  #allocation1 [shape = 'u32[144,128]{1,0:T(1,128)}', space=vmem, size = 0x12000, scoped, tag = 'internal scratch']
  %s0 = inlined_call_operand.vmem [shape: s32[128,1], index: 0, kind: input, shape index: {}]
  %s1 = inlined_call_operand.vmem [shape: s32[128,1], index: 1, kind: input, shape index: {}]
  %s2 = inlined_call_operand.vmem [shape: f32[64,128], index: 2, kind: input, shape index: {}]
  %s3 = inlined_call_operand.vmem [shape: f32[48,128], index: 3, kind: input, shape index: {}]
  %s4 = inlined_call_operand.vmem [shape: f32[128,1], index: 4, kind: output, shape index: {}]
  %s5 = sld [smem:[#allocation0]]
  $region26: #{tpu_custom_call.1} parent=0
    _
  %s7 = ssub.s32 1, %s5
  %s8 = scalar_select 0, %s7, %s5
  // Predicated region
  $region2: #{tpu_custom_call.1} parent=0 // pred_check
    _
  $region3: #{tpu_custom_call.1} parent=0 // pred_check_branch
    %10 = sbr.rel (0) target = $region5
  $region4: #{tpu_custom_call.1} parent=0 // pred_region
    _
  $region5: #{tpu_custom_call.1} parent=0 // pred_fallthru
    _
  // Predicated region
  $region6: #{tpu_custom_call.1} parent=0 // pred_check
    _
  $region7: #{tpu_custom_call.1} parent=0 // pred_check_branch
    %12 = sbr.rel (0) target = $region9
  $region8: #{tpu_custom_call.1} parent=0 // pred_region
    _
  $region9: #{tpu_custom_call.1} parent=0 // pred_fallthru
    _
  // Predicated region
  $region10: #{tpu_custom_call.1} parent=0 // pred_check
    _
  $region11: #{tpu_custom_call.1} parent=0 // pred_check_branch
    %14 = sbr.rel (0) target = $region13
  $region12: #{tpu_custom_call.1} parent=0 // pred_region
    _
  $region13: #{tpu_custom_call.1} parent=0 // pred_fallthru
    _
  // Predicated region
  $region14: #{tpu_custom_call.1} parent=0 // pred_check
    _
  $region15: #{tpu_custom_call.1} parent=0 // pred_check_branch
    %16 = sbr.rel (0) target = $region17
  $region16: #{tpu_custom_call.1} parent=0 // pred_region
    _
  $region17: #{tpu_custom_call.1} parent=0 // pred_fallthru
    _
  %v17 = vld [vmem:[%s0] sm:$0xff]
  %v18 = vld [vmem:[%s0 + $0x8] sm:$0xff]
  %v19 = vld [vmem:[%s0 + $0x10] sm:$0xff]
  %v20 = vld [vmem:[%s0 + $0x18] sm:$0xff]
  %v21 = vld [vmem:[%s0 + $0x20] sm:$0xff]
  %v22 = vld [vmem:[%s0 + $0x28] sm:$0xff]
  %v23 = vld [vmem:[%s0 + $0x30] sm:$0xff]
  %v24 = vld [vmem:[%s0 + $0x38] sm:$0xff]
  %v25 = vld [vmem:[%s0 + $0x40] sm:$0xff]
  %v26 = vld [vmem:[%s0 + $0x48] sm:$0xff]
  %v27 = vld [vmem:[%s0 + $0x50] sm:$0xff]
  %v28 = vld [vmem:[%s0 + $0x58] sm:$0xff]
  %v29 = vld [vmem:[%s0 + $0x60] sm:$0xff]
  %v30 = vld [vmem:[%s0 + $0x68] sm:$0xff]
  %v31 = vld [vmem:[%s0 + $0x70] sm:$0xff]
  %v32 = vld [vmem:[%s0 + $0x78] sm:$0xff]
  %v33 = vld [vmem:[%s1] sm:$0xff]
  %v34 = vld [vmem:[%s1 + $0x8] sm:$0xff]
  %v35 = vld [vmem:[%s1 + $0x10] sm:$0xff]
  %v36 = vld [vmem:[%s1 + $0x18] sm:$0xff]
  %v37 = vld [vmem:[%s1 + $0x20] sm:$0xff]
  %v38 = vld [vmem:[%s1 + $0x28] sm:$0xff]
  %v39 = vld [vmem:[%s1 + $0x30] sm:$0xff]
  %v40 = vld [vmem:[%s1 + $0x38] sm:$0xff]
  %v41 = vld [vmem:[%s1 + $0x40] sm:$0xff]
  %v42 = vld [vmem:[%s1 + $0x48] sm:$0xff]
  %v43 = vld [vmem:[%s1 + $0x50] sm:$0xff]
  %v44 = vld [vmem:[%s1 + $0x58] sm:$0xff]
  %v45 = vld [vmem:[%s1 + $0x60] sm:$0xff]
  %v46 = vld [vmem:[%s1 + $0x68] sm:$0xff]
  %v47 = vld [vmem:[%s1 + $0x70] sm:$0xff]
  %v48 = vld [vmem:[%s1 + $0x78] sm:$0xff]
  %v49 = vld [vmem:[%s2] sm:$0xff]
  %v50 = vld [vmem:[%s2 + $0x8] sm:$0xff]
  %v51 = vld [vmem:[%s2 + $0x10] sm:$0xff]
  %v52 = vld [vmem:[%s2 + $0x18] sm:$0xff]
  %v53 = vld [vmem:[%s2 + $0x20] sm:$0xff]
  %v54 = vld [vmem:[%s2 + $0x28] sm:$0xff]
  %v55 = vld [vmem:[%s2 + $0x30] sm:$0xff]
  %v56 = vld [vmem:[%s2 + $0x38] sm:$0xff]
  %v57 = vld [vmem:[%s3] sm:$0xff]
  %v58 = vld [vmem:[%s3 + $0x8] sm:$0xff]
  %v59 = vld [vmem:[%s3 + $0x10] sm:$0xff]
  %v60 = vld [vmem:[%s3 + $0x18] sm:$0xff]
  %v61 = vld [vmem:[%s3 + $0x20] sm:$0xff]
  %v62 = vld [vmem:[%s3 + $0x28] sm:$0xff]
  %v63 = vlaneseq
  %v64 = vand.u32 %v63, 127
  %65 = vset.pattern.permute.xlu0 0
  %66 = vperm.xlu0 %65, %v17
  %v67 = vpop.permute.xlu0 %66
  %68 = vset.pattern.permute.xlu0 0
  %69 = vperm.xlu0 %68, %v18
  %v70 = vpop.permute.xlu0 %69
  %71 = vset.pattern.permute.xlu0 0
  %72 = vperm.xlu0 %71, %v19
  %v73 = vpop.permute.xlu0 %72
  %74 = vset.pattern.permute.xlu0 0
  %75 = vperm.xlu0 %74, %v20
  %v76 = vpop.permute.xlu0 %75
  %77 = vset.pattern.permute.xlu0 0
  %78 = vperm.xlu0 %77, %v21
  %v79 = vpop.permute.xlu0 %78
  %80 = vset.pattern.permute.xlu0 0
  %81 = vperm.xlu0 %80, %v22
  %v82 = vpop.permute.xlu0 %81
  %83 = vset.pattern.permute.xlu0 0
  %84 = vperm.xlu0 %83, %v23
  %v85 = vpop.permute.xlu0 %84
  %86 = vset.pattern.permute.xlu0 0
  %87 = vperm.xlu0 %86, %v24
  %v88 = vpop.permute.xlu0 %87
  %89 = vset.pattern.permute.xlu0 0
  %90 = vperm.xlu0 %89, %v25
  %v91 = vpop.permute.xlu0 %90
  %92 = vset.pattern.permute.xlu0 0
  %93 = vperm.xlu0 %92, %v26
  %v94 = vpop.permute.xlu0 %93
  %95 = vset.pattern.permute.xlu0 0
  %96 = vperm.xlu0 %95, %v27
  %v97 = vpop.permute.xlu0 %96
  %98 = vset.pattern.permute.xlu0 0
  %99 = vperm.xlu0 %98, %v28
  %v100 = vpop.permute.xlu0 %99
  %101 = vset.pattern.permute.xlu0 0
  %102 = vperm.xlu0 %101, %v29
  %v103 = vpop.permute.xlu0 %102
  %104 = vset.pattern.permute.xlu0 0
  %105 = vperm.xlu0 %104, %v30
  %v106 = vpop.permute.xlu0 %105
  %107 = vset.pattern.permute.xlu0 0
  %108 = vperm.xlu0 %107, %v31
  %v109 = vpop.permute.xlu0 %108
  %110 = vset.pattern.permute.xlu0 0
  %111 = vperm.xlu0 %110, %v32
  %v112 = vpop.permute.xlu0 %111
  %vm113 = vcmp.eq.s32.totalorder %v67, %v64
  %vm114 = vcmp.eq.s32.totalorder %v70, %v64
  %vm115 = vcmp.eq.s32.totalorder %v73, %v64
  %vm116 = vcmp.eq.s32.totalorder %v76, %v64
  %vm117 = vcmp.eq.s32.totalorder %v79, %v64
  %vm118 = vcmp.eq.s32.totalorder %v82, %v64
  %vm119 = vcmp.eq.s32.totalorder %v85, %v64
  %vm120 = vcmp.eq.s32.totalorder %v88, %v64
  %vm121 = vcmp.eq.s32.totalorder %v91, %v64
  %vm122 = vcmp.eq.s32.totalorder %v94, %v64
  %vm123 = vcmp.eq.s32.totalorder %v97, %v64
  %vm124 = vcmp.eq.s32.totalorder %v100, %v64
  %vm125 = vcmp.eq.s32.totalorder %v103, %v64
  %vm126 = vcmp.eq.s32.totalorder %v106, %v64
  %vm127 = vcmp.eq.s32.totalorder %v109, %v64
  %vm128 = vcmp.eq.s32.totalorder %v112, %v64
  %v129 = vsel %vm113, 1, 0
  %v130 = vsel %vm114, 1, 0
  %v131 = vsel %vm115, 1, 0
  %v132 = vsel %vm116, 1, 0
  %v133 = vsel %vm117, 1, 0
  %v134 = vsel %vm118, 1, 0
  %v135 = vsel %vm119, 1, 0
  %v136 = vsel %vm120, 1, 0
  %v137 = vsel %vm121, 1, 0
  %v138 = vsel %vm122, 1, 0
  %v139 = vsel %vm123, 1, 0
  %v140 = vsel %vm124, 1, 0
  %v141 = vsel %vm125, 1, 0
  %v142 = vsel %vm126, 1, 0
  %v143 = vsel %vm127, 1, 0
  %v144 = vsel %vm128, 1, 0
  %v145 = vcvt.s32.f32 %v129
  %v146 = vcvt.s32.f32 %v130
  %v147 = vcvt.s32.f32 %v131
  %v148 = vcvt.s32.f32 %v132
  %v149 = vcvt.s32.f32 %v133
  %v150 = vcvt.s32.f32 %v134
  %v151 = vcvt.s32.f32 %v135
  %v152 = vcvt.s32.f32 %v136
  %v153 = vcvt.s32.f32 %v137
  %v154 = vcvt.s32.f32 %v138
  %v155 = vcvt.s32.f32 %v139
  %v156 = vcvt.s32.f32 %v140
  %v157 = vcvt.s32.f32 %v141
  %v158 = vcvt.s32.f32 %v142
  %v159 = vcvt.s32.f32 %v143
  %v160 = vcvt.s32.f32 %v144
  %161 = vset.pattern.permute.xlu0 0
  %162 = vperm.xlu0 %161, %v33
  %v163 = vpop.permute.xlu0 %162
  %164 = vset.pattern.permute.xlu0 0
  %165 = vperm.xlu0 %164, %v34
  %v166 = vpop.permute.xlu0 %165
  %167 = vset.pattern.permute.xlu0 0
  %168 = vperm.xlu0 %167, %v35
  %v169 = vpop.permute.xlu0 %168
  %170 = vset.pattern.permute.xlu0 0
  %171 = vperm.xlu0 %170, %v36
  %v172 = vpop.permute.xlu0 %171
  %173 = vset.pattern.permute.xlu0 0
  %174 = vperm.xlu0 %173, %v37
  %v175 = vpop.permute.xlu0 %174
  %176 = vset.pattern.permute.xlu0 0
  %177 = vperm.xlu0 %176, %v38
  %v178 = vpop.permute.xlu0 %177
  %179 = vset.pattern.permute.xlu0 0
  %180 = vperm.xlu0 %179, %v39
  %v181 = vpop.permute.xlu0 %180
  %182 = vset.pattern.permute.xlu0 0
  %183 = vperm.xlu0 %182, %v40
  %v184 = vpop.permute.xlu0 %183
  %185 = vset.pattern.permute.xlu0 0
  %186 = vperm.xlu0 %185, %v41
  %v187 = vpop.permute.xlu0 %186
  %188 = vset.pattern.permute.xlu0 0
  %189 = vperm.xlu0 %188, %v42
  %v190 = vpop.permute.xlu0 %189
  %191 = vset.pattern.permute.xlu0 0
  %192 = vperm.xlu0 %191, %v43
  %v193 = vpop.permute.xlu0 %192
  %194 = vset.pattern.permute.xlu0 0
  %195 = vperm.xlu0 %194, %v44
  %v196 = vpop.permute.xlu0 %195
  %197 = vset.pattern.permute.xlu0 0
  %198 = vperm.xlu0 %197, %v45
  %v199 = vpop.permute.xlu0 %198
  %200 = vset.pattern.permute.xlu0 0
  %201 = vperm.xlu0 %200, %v46
  %v202 = vpop.permute.xlu0 %201
  %203 = vset.pattern.permute.xlu0 0
  %204 = vperm.xlu0 %203, %v47
  %v205 = vpop.permute.xlu0 %204
  %206 = vset.pattern.permute.xlu0 0
  %207 = vperm.xlu0 %206, %v48
  %v208 = vpop.permute.xlu0 %207
  %vm209 = vcmp.eq.s32.totalorder %v163, %v64
  %vm210 = vcmp.eq.s32.totalorder %v166, %v64
  %vm211 = vcmp.eq.s32.totalorder %v169, %v64
  %vm212 = vcmp.eq.s32.totalorder %v172, %v64
  %vm213 = vcmp.eq.s32.totalorder %v175, %v64
  %vm214 = vcmp.eq.s32.totalorder %v178, %v64
  %vm215 = vcmp.eq.s32.totalorder %v181, %v64
  %vm216 = vcmp.eq.s32.totalorder %v184, %v64
  %vm217 = vcmp.eq.s32.totalorder %v187, %v64
  %vm218 = vcmp.eq.s32.totalorder %v190, %v64
  %vm219 = vcmp.eq.s32.totalorder %v193, %v64
  %vm220 = vcmp.eq.s32.totalorder %v196, %v64
  %vm221 = vcmp.eq.s32.totalorder %v199, %v64
  %vm222 = vcmp.eq.s32.totalorder %v202, %v64
  %vm223 = vcmp.eq.s32.totalorder %v205, %v64
  %vm224 = vcmp.eq.s32.totalorder %v208, %v64
  %v225 = vsel %vm209, 1, 0
  %v226 = vsel %vm210, 1, 0
  %v227 = vsel %vm211, 1, 0
  %v228 = vsel %vm212, 1, 0
  %v229 = vsel %vm213, 1, 0
  %v230 = vsel %vm214, 1, 0
  %v231 = vsel %vm215, 1, 0
  %v232 = vsel %vm216, 1, 0
  %v233 = vsel %vm217, 1, 0
  %v234 = vsel %vm218, 1, 0
  %v235 = vsel %vm219, 1, 0
  %v236 = vsel %vm220, 1, 0
  %v237 = vsel %vm221, 1, 0
  %v238 = vsel %vm222, 1, 0
  %v239 = vsel %vm223, 1, 0
  %v240 = vsel %vm224, 1, 0
  %v241 = vcvt.s32.f32 %v225
  %v242 = vcvt.s32.f32 %v226
  %v243 = vcvt.s32.f32 %v227
  %v244 = vcvt.s32.f32 %v228
  %v245 = vcvt.s32.f32 %v229
  %v246 = vcvt.s32.f32 %v230
  %v247 = vcvt.s32.f32 %v231
  %v248 = vcvt.s32.f32 %v232
  %v249 = vcvt.s32.f32 %v233
  %v250 = vcvt.s32.f32 %v234
  %v251 = vcvt.s32.f32 %v235
  %v252 = vcvt.s32.f32 %v236
  %v253 = vcvt.s32.f32 %v237
  %v254 = vcvt.s32.f32 %v238
  %v255 = vcvt.s32.f32 %v239
  %v256 = vcvt.s32.f32 %v240
  %vm257 = vcmask 523264
  %v259 = vsel %vm257, %v145, 0
  %v262 = vsel %vm257, %v146, 0
  %v265 = vsel %vm257, %v147, 0
  %v268 = vsel %vm257, %v148, 0
  %v271 = vsel %vm257, %v149, 0
  %v274 = vsel %vm257, %v150, 0
  %v277 = vsel %vm257, %v151, 0
  %v280 = vsel %vm257, %v152, 0
  %v283 = vsel %vm257, %v153, 0
  %v286 = vsel %vm257, %v154, 0
  %v289 = vsel %vm257, %v155, 0
  %v292 = vsel %vm257, %v156, 0
  %v295 = vsel %vm257, %v157, 0
  %v298 = vsel %vm257, %v158, 0
  %v301 = vsel %vm257, %v159, 0
  %v304 = vsel %vm257, %v160, 0
  %306 = vmatprep.subr.mxu0 0.0
  %v307 = vand.u32 %v49, 4294901760
  %308 = vmatpush1.msra.mxu0 %v307
  %309 = vmatprep.subr.mxu0 0.0
  %v310 = vand.u32 %v50, 4294901760
  %311 = vmatpush1.msra.mxu0 %v310
  %312 = vmatprep.subr.mxu0 0.0
  %v313 = vand.u32 %v51, 4294901760
  %314 = vmatpush1.msra.mxu0 %v313
  %315 = vmatprep.subr.mxu0 0.0
  %v316 = vand.u32 %v52, 4294901760
  %317 = vmatpush1.msra.mxu0 %v316
  %318 = vmatprep.subr.mxu0 0.0
  %v319 = vand.u32 %v53, 4294901760
  %320 = vmatpush1.msra.mxu0 %v319
  %321 = vmatprep.subr.mxu0 0.0
  %v322 = vand.u32 %v54, 4294901760
  %323 = vmatpush1.msra.mxu0 %v322
  %324 = vmatprep.subr.mxu0 0.0
  %v325 = vand.u32 %v55, 4294901760
  %326 = vmatpush1.msra.mxu0 %v325
  %327 = vmatprep.subr.mxu0 0.0
  %v328 = vand.u32 %v56, 4294901760
  %329 = vmatpush1.msra.mxu0 %v328
  %330 = vmatprep.subr.mxu0 0.0
  %331 = vmatpush1.msra.mxu0 0.0
  %332 = vmatprep.subr.mxu0 0.0
  %333 = vmatpush1.msra.mxu0 0.0
  %334 = vmatprep.subr.mxu0 0.0
  %335 = vmatpush1.msra.mxu0 0.0
  %336 = vmatprep.subr.mxu0 0.0
  %337 = vmatpush1.msra.mxu0 0.0
  %338 = vmatprep.subr.mxu0 0.0
  %339 = vmatpush1.msra.mxu0 0.0
  %340 = vmatprep.subr.mxu0 0.0
  %341 = vmatpush1.msra.mxu0 0.0
  %342 = vmatprep.subr.mxu0 0.0
  %343 = vmatpush1.msra.mxu0 0.0
  %344 = vmatprep.subr.mxu0 0.0
  %345 = vmatpush1.msra.mxu0 0.0
  %346 = vmatprep.subr.mxu0 0.0
  %347 = vmatpush1.msra.mxu0 0.0
  %348 = vmatprep.subr.mxu0 0.0
  %349 = vmatpush1.msra.mxu0 0.0
  %350 = vmatprep.subr.mxu0 0.0
  %351 = vmatpush1.msra.mxu0 0.0
  %352 = vmatprep.subr.mxu0 0.0
  %353 = vmatpush1.msra.mxu0 0.0
  %354 = vmatprep.subr.mxu0 0.0
  %355 = vmatpush1.msra.mxu0 0.0
  %356 = vmatprep.subr.mxu0 0.0
  %357 = vmatpush1.msra.mxu0 0.0
  %358 = vmatprep.subr.mxu0 0.0
  %359 = vmatpush1.msra.mxu0 0.0
  %360 = vmatprep.subr.mxu0 0.0
  %361 = vmatpush1.msra.mxu0 0.0
  %362 = vmatprep.subr.mxu0 0.0
  %363 = vmatpush1.msra.mxu0 0.0
  %364 = vmatprep.subr.mxu0 0.0
  %365 = vmatpush1.msra.mxu0 0.0
  %366 = vmatprep.subr.mxu0 0.0
  %367 = vmatpush1.msra.mxu0 0.0
  %368 = vmatprep.subr.mxu0 0.0
  %369 = vmatpush1.msra.mxu0 0.0
  %370 = vmatprep.subr.mxu0 0.0
  %371 = vmatpush1.msra.mxu0 0.0
  %372 = vmatprep.subr.mxu0 0.0
  %373 = vmatpush1.msra.mxu0 0.0
  %374 = vmatprep.subr.mxu0 0.0
  %375 = vmatpush1.msra.mxu0 0.0
  %376 = vmatprep.subr.mxu0 0.0
  %377 = vmatpush1.msra.mxu0 0.0
  %378 = vmatprep.mubr.f32.mxu0 0.0
  %v379 = vand.u32 %v259, 4294901760
  %v380 = vsub.f32 %v259, %v379
  %v381 = vand.u32 %v380, 4294901760
  %v382 = vsub.f32 %v380, %v381
  %v383 = vand.u32 %v382, 4294901760
  %384 = vmatmul.mubr.f32.gmra.mrb[0].mxu0 %v383
  %v385 = vpop.f32.mrb[0].mxu0
  %v386 = vadd.f32 0.0, %v385
  %v387 = vpop.f32.mrb[0].mxu0
  %388 = vmatprep.mubr.f32.mxu0 0.0
  %v389 = vand.u32 %v262, 4294901760
  %v390 = vsub.f32 %v262, %v389
  %v391 = vand.u32 %v390, 4294901760
  %v392 = vsub.f32 %v390, %v391
  %v393 = vand.u32 %v392, 4294901760
  %394 = vmatmul.mubr.f32.gmra.mrb[0].mxu0 %v393
  %v395 = vpop.f32.mrb[0].mxu0
  %v396 = vadd.f32 0.0, %v395
  %v397 = vpop.f32.mrb[0].mxu0
  %398 = vmatprep.mubr.f32.mxu0 0.0
  %v399 = vand.u32 %v265, 4294901760
  %v400 = vsub.f32 %v265, %v399
  %v401 = vand.u32 %v400, 4294901760
  %v402 = vsub.f32 %v400, %v401
  %v403 = vand.u32 %v402, 4294901760
  %404 = vmatmul.mubr.f32.gmra.mrb[0].mxu0 %v403
  %v405 = vpop.f32.mrb[0].mxu0
  %v406 = vadd.f32 0.0, %v405
  %v407 = vpop.f32.mrb[0].mxu0
  %408 = vmatprep.mubr.f32.mxu0 0.0
  %v409 = vand.u32 %v268, 4294901760
  %v410 = vsub.f32 %v268, %v409
  %v411 = vand.u32 %v410, 4294901760
  %v412 = vsub.f32 %v410, %v411
  %v413 = vand.u32 %v412, 4294901760
  %414 = vmatmul.mubr.f32.gmra.mrb[0].mxu0 %v413
  %v415 = vpop.f32.mrb[0].mxu0
  %v416 = vadd.f32 0.0, %v415
  %v417 = vpop.f32.mrb[0].mxu0
  %418 = vmatprep.mubr.f32.mxu0 0.0
  %v419 = vand.u32 %v271, 4294901760
  %v420 = vsub.f32 %v271, %v419
  %v421 = vand.u32 %v420, 4294901760
  %v422 = vsub.f32 %v420, %v421
  %v423 = vand.u32 %v422, 4294901760
  %424 = vmatmul.mubr.f32.gmra.mrb[0].mxu0 %v423
  %v425 = vpop.f32.mrb[0].mxu0
  %v426 = vadd.f32 0.0, %v425
  %v427 = vpop.f32.mrb[0].mxu0
  %428 = vmatprep.mubr.f32.mxu0 0.0
  %v429 = vand.u32 %v274, 4294901760
  %v430 = vsub.f32 %v274, %v429
  %v431 = vand.u32 %v430, 4294901760
  %v432 = vsub.f32 %v430, %v431
  %v433 = vand.u32 %v432, 4294901760
  %434 = vmatmul.mubr.f32.gmra.mrb[0].mxu0 %v433
  %v435 = vpop.f32.mrb[0].mxu0
  %v436 = vadd.f32 0.0, %v435
  %v437 = vpop.f32.mrb[0].mxu0
  %438 = vmatprep.mubr.f32.mxu0 0.0
  %v439 = vand.u32 %v277, 4294901760
  %v440 = vsub.f32 %v277, %v439
  %v441 = vand.u32 %v440, 4294901760
  %v442 = vsub.f32 %v440, %v441
  %v443 = vand.u32 %v442, 4294901760
  %444 = vmatmul.mubr.f32.gmra.mrb[0].mxu0 %v443
  %v445 = vpop.f32.mrb[0].mxu0
  %v446 = vadd.f32 0.0, %v445
  %v447 = vpop.f32.mrb[0].mxu0
  %448 = vmatprep.mubr.f32.mxu0 0.0
  %v449 = vand.u32 %v280, 4294901760
  %v450 = vsub.f32 %v280, %v449
  %v451 = vand.u32 %v450, 4294901760
  %v452 = vsub.f32 %v450, %v451
  %v453 = vand.u32 %v452, 4294901760
  %454 = vmatmul.mubr.f32.gmra.mrb[0].mxu0 %v453
  %v455 = vpop.f32.mrb[0].mxu0
  %v456 = vadd.f32 0.0, %v455
  %v457 = vpop.f32.mrb[0].mxu0
  %458 = vmatprep.mubr.f32.mxu0 0.0
  %v459 = vand.u32 %v283, 4294901760
  %v460 = vsub.f32 %v283, %v459
  %v461 = vand.u32 %v460, 4294901760
  %v462 = vsub.f32 %v460, %v461
  %v463 = vand.u32 %v462, 4294901760
  %464 = vmatmul.mubr.f32.gmra.mrb[0].mxu0 %v463
  %v465 = vpop.f32.mrb[0].mxu0
  %v466 = vadd.f32 0.0, %v465
  %v467 = vpop.f32.mrb[0].mxu0
  %468 = vmatprep.mubr.f32.mxu0 0.0
  %v469 = vand.u32 %v286, 4294901760
  %v470 = vsub.f32 %v286, %v469
  %v471 = vand.u32 %v470, 4294901760
  %v472 = vsub.f32 %v470, %v471
  %v473 = vand.u32 %v472, 4294901760
  %474 = vmatmul.mubr.f32.gmra.mrb[0].mxu0 %v473
  %v475 = vpop.f32.mrb[0].mxu0
  %v476 = vadd.f32 0.0, %v475
  %v477 = vpop.f32.mrb[0].mxu0
  %478 = vmatprep.mubr.f32.mxu0 0.0
  %v479 = vand.u32 %v289, 4294901760
  %v480 = vsub.f32 %v289, %v479
  %v481 = vand.u32 %v480, 4294901760
  %v482 = vsub.f32 %v480, %v481
  %v483 = vand.u32 %v482, 4294901760
  %484 = vmatmul.mubr.f32.gmra.mrb[0].mxu0 %v483
  %v485 = vpop.f32.mrb[0].mxu0
  %v486 = vadd.f32 0.0, %v485
  %v487 = vpop.f32.mrb[0].mxu0
  %488 = vmatprep.mubr.f32.mxu0 0.0
  %v489 = vand.u32 %v292, 4294901760
  %v490 = vsub.f32 %v292, %v489
  %v491 = vand.u32 %v490, 4294901760
  %v492 = vsub.f32 %v490, %v491
  %v493 = vand.u32 %v492, 4294901760
  %494 = vmatmul.mubr.f32.gmra.mrb[0].mxu0 %v493
  %v495 = vpop.f32.mrb[0].mxu0
  %v496 = vadd.f32 0.0, %v495
  %v497 = vpop.f32.mrb[0].mxu0
  %498 = vmatprep.mubr.f32.mxu0 0.0
  %v499 = vand.u32 %v295, 4294901760
  %v500 = vsub.f32 %v295, %v499
  %v501 = vand.u32 %v500, 4294901760
  %v502 = vsub.f32 %v500, %v501
  %v503 = vand.u32 %v502, 4294901760
  %504 = vmatmul.mubr.f32.gmra.mrb[0].mxu0 %v503
  %v505 = vpop.f32.mrb[0].mxu0
  %v506 = vadd.f32 0.0, %v505
  %v507 = vpop.f32.mrb[0].mxu0
  %508 = vmatprep.mubr.f32.mxu0 0.0
  %v509 = vand.u32 %v298, 4294901760
  %v510 = vsub.f32 %v298, %v509
  %v511 = vand.u32 %v510, 4294901760
  %v512 = vsub.f32 %v510, %v511
  %v513 = vand.u32 %v512, 4294901760
  %514 = vmatmul.mubr.f32.gmra.mrb[0].mxu0 %v513
  %v515 = vpop.f32.mrb[0].mxu0
  %v516 = vadd.f32 0.0, %v515
  %v517 = vpop.f32.mrb[0].mxu0
  %518 = vmatprep.mubr.f32.mxu0 0.0
  %v519 = vand.u32 %v301, 4294901760
  %v520 = vsub.f32 %v301, %v519
  %v521 = vand.u32 %v520, 4294901760
  %v522 = vsub.f32 %v520, %v521
  %v523 = vand.u32 %v522, 4294901760
  %524 = vmatmul.mubr.f32.gmra.mrb[0].mxu0 %v523
  %v525 = vpop.f32.mrb[0].mxu0
  %v526 = vadd.f32 0.0, %v525
  %v527 = vpop.f32.mrb[0].mxu0
  %528 = vmatprep.mubr.f32.mxu0 0.0
  %v529 = vand.u32 %v304, 4294901760
  %v530 = vsub.f32 %v304, %v529
  %v531 = vand.u32 %v530, 4294901760
  %v532 = vsub.f32 %v530, %v531
  %v533 = vand.u32 %v532, 4294901760
  %534 = vmatmul.mubr.f32.gmra.mrb[0].mxu0 %v533
  %v535 = vpop.f32.mrb[0].mxu0
  %v536 = vadd.f32 0.0, %v535
  %v537 = vpop.f32.mrb[0].mxu0
  %538 = vdwg.mxu0
  %539 = vmatprep.subr.mxu0 0.0
  %v540 = vand.u32 %v49, 4294901760
  %v541 = vsub.f32 %v49, %v540
  %v542 = vand.u32 %v541, 4294901760
  %v543 = vsub.f32 %v541, %v542
  %v544 = vand.u32 %v543, 4294901760
  %545 = vmatpush1.msra.mxu0 %v544
  %546 = vmatprep.subr.mxu0 0.0
  %v547 = vand.u32 %v50, 4294901760
  %v548 = vsub.f32 %v50, %v547
  %v549 = vand.u32 %v548, 4294901760
  %v550 = vsub.f32 %v548, %v549
  %v551 = vand.u32 %v550, 4294901760
  %552 = vmatpush1.msra.mxu0 %v551
  %553 = vmatprep.subr.mxu0 0.0
  %v554 = vand.u32 %v51, 4294901760
  %v555 = vsub.f32 %v51, %v554
  %v556 = vand.u32 %v555, 4294901760
  %v557 = vsub.f32 %v555, %v556
  %v558 = vand.u32 %v557, 4294901760
  %559 = vmatpush1.msra.mxu0 %v558
  %560 = vmatprep.subr.mxu0 0.0
  %v561 = vand.u32 %v52, 4294901760
  %v562 = vsub.f32 %v52, %v561
  %v563 = vand.u32 %v562, 4294901760
  %v564 = vsub.f32 %v562, %v563
  %v565 = vand.u32 %v564, 4294901760
  %566 = vmatpush1.msra.mxu0 %v565
  %567 = vmatprep.subr.mxu0 0.0
  %v568 = vand.u32 %v53, 4294901760
  %v569 = vsub.f32 %v53, %v568
  %v570 = vand.u32 %v569, 4294901760
  %v571 = vsub.f32 %v569, %v570
  %v572 = vand.u32 %v571, 4294901760
  %573 = vmatpush1.msra.mxu0 %v572
  %574 = vmatprep.subr.mxu0 0.0
  %v575 = vand.u32 %v54, 4294901760
  %v576 = vsub.f32 %v54, %v575
  %v577 = vand.u32 %v576, 4294901760
  %v578 = vsub.f32 %v576, %v577
  %v579 = vand.u32 %v578, 4294901760
  %580 = vmatpush1.msra.mxu0 %v579
  %581 = vmatprep.subr.mxu0 0.0
  %v582 = vand.u32 %v55, 4294901760
  %v583 = vsub.f32 %v55, %v582
  %v584 = vand.u32 %v583, 4294901760
  %v585 = vsub.f32 %v583, %v584
  %v586 = vand.u32 %v585, 4294901760
  %587 = vmatpush1.msra.mxu0 %v586
  %588 = vmatprep.subr.mxu0 0.0
  %v589 = vand.u32 %v56, 4294901760
  %v590 = vsub.f32 %v56, %v589
  %v591 = vand.u32 %v590, 4294901760
  %v592 = vsub.f32 %v590, %v591
  %v593 = vand.u32 %v592, 4294901760
  %594 = vmatpush1.msra.mxu0 %v593
  %595 = vmatprep.subr.mxu0 0.0
  %596 = vmatpush1.msra.mxu0 0.0
  %597 = vmatprep.subr.mxu0 0.0
  %598 = vmatpush1.msra.mxu0 0.0
  %599 = vmatprep.subr.mxu0 0.0
  %600 = vmatpush1.msra.mxu0 0.0
  %601 = vmatprep.subr.mxu0 0.0
  %602 = vmatpush1.msra.mxu0 0.0
  %603 = vmatprep.subr.mxu0 0.0
  %604 = vmatpush1.msra.mxu0 0.0
  %605 = vmatprep.subr.mxu0 0.0
  %606 = vmatpush1.msra.mxu0 0.0
  %607 = vmatprep.subr.mxu0 0.0
  %608 = vmatpush1.msra.mxu0 0.0
  %609 = vmatprep.subr.mxu0 0.0
  %610 = vmatpush1.msra.mxu0 0.0
  %611 = vmatprep.subr.mxu0 0.0
  %612 = vmatpush1.msra.mxu0 0.0
  %613 = vmatprep.subr.mxu0 0.0
  %614 = vmatpush1.msra.mxu0 0.0
  %615 = vmatprep.subr.mxu0 0.0
  %616 = vmatpush1.msra.mxu0 0.0
  %617 = vmatprep.subr.mxu0 0.0
  %618 = vmatpush1.msra.mxu0 0.0
  %619 = vmatprep.subr.mxu0 0.0
  %620 = vmatpush1.msra.mxu0 0.0
  %621 = vmatprep.subr.mxu0 0.0
  %622 = vmatpush1.msra.mxu0 0.0
  %623 = vmatprep.subr.mxu0 0.0
  %624 = vmatpush1.msra.mxu0 0.0
  %625 = vmatprep.subr.mxu0 0.0
  %626 = vmatpush1.msra.mxu0 0.0
  %627 = vmatprep.subr.mxu0 0.0
  %628 = vmatpush1.msra.mxu0 0.0
  %629 = vmatprep.subr.mxu0 0.0
  %630 = vmatpush1.msra.mxu0 0.0
  %631 = vmatprep.subr.mxu0 0.0
  %632 = vmatpush1.msra.mxu0 0.0
  %633 = vmatprep.subr.mxu0 0.0
  %634 = vmatpush1.msra.mxu0 0.0
  %635 = vmatprep.subr.mxu0 0.0
  %636 = vmatpush1.msra.mxu0 0.0
  %637 = vmatprep.subr.mxu0 0.0
  %638 = vmatpush1.msra.mxu0 0.0
  %639 = vmatprep.subr.mxu0 0.0
  %640 = vmatpush1.msra.mxu0 0.0
  %641 = vmatprep.subr.mxu0 0.0
  %642 = vmatpush1.msra.mxu0 0.0
  %643 = vmatprep.mubr.f32.mxu0 0.0
  %v644 = vand.u32 %v259, 4294901760
  %645 = vmatmul.mubr.f32.gmra.mrb[0].mxu0 %v644
  %v646 = vpop.f32.mrb[0].mxu0
  %v647 = vadd.f32 %v386, %v646
  %v648 = vpop.f32.mrb[0].mxu0
  %649 = vmatprep.mubr.f32.mxu0 0.0
  %v650 = vand.u32 %v262, 4294901760
  %651 = vmatmul.mubr.f32.gmra.mrb[0].mxu0 %v650
  %v652 = vpop.f32.mrb[0].mxu0
  %v653 = vadd.f32 %v396, %v652
  %v654 = vpop.f32.mrb[0].mxu0
  %655 = vmatprep.mubr.f32.mxu0 0.0
  %v656 = vand.u32 %v265, 4294901760
  %657 = vmatmul.mubr.f32.gmra.mrb[0].mxu0 %v656
  %v658 = vpop.f32.mrb[0].mxu0
  %v659 = vadd.f32 %v406, %v658
  %v660 = vpop.f32.mrb[0].mxu0
  %661 = vmatprep.mubr.f32.mxu0 0.0
  %v662 = vand.u32 %v268, 4294901760
  %663 = vmatmul.mubr.f32.gmra.mrb[0].mxu0 %v662
  %v664 = vpop.f32.mrb[0].mxu0
  %v665 = vadd.f32 %v416, %v664
  %v666 = vpop.f32.mrb[0].mxu0
  %667 = vmatprep.mubr.f32.mxu0 0.0
  %v668 = vand.u32 %v271, 4294901760
  %669 = vmatmul.mubr.f32.gmra.mrb[0].mxu0 %v668
  %v670 = vpop.f32.mrb[0].mxu0
  %v671 = vadd.f32 %v426, %v670
  %v672 = vpop.f32.mrb[0].mxu0
  %673 = vmatprep.mubr.f32.mxu0 0.0
  %v674 = vand.u32 %v274, 4294901760
  %675 = vmatmul.mubr.f32.gmra.mrb[0].mxu0 %v674
  %v676 = vpop.f32.mrb[0].mxu0
  %v677 = vadd.f32 %v436, %v676
  %v678 = vpop.f32.mrb[0].mxu0
  %679 = vmatprep.mubr.f32.mxu0 0.0
  %v680 = vand.u32 %v277, 4294901760
  %681 = vmatmul.mubr.f32.gmra.mrb[0].mxu0 %v680
  %v682 = vpop.f32.mrb[0].mxu0
  %v683 = vadd.f32 %v446, %v682
  %v684 = vpop.f32.mrb[0].mxu0
  %685 = vmatprep.mubr.f32.mxu0 0.0
  %v686 = vand.u32 %v280, 4294901760
  %687 = vmatmul.mubr.f32.gmra.mrb[0].mxu0 %v686
  %v688 = vpop.f32.mrb[0].mxu0
  %v689 = vadd.f32 %v456, %v688
  %v690 = vpop.f32.mrb[0].mxu0
  %691 = vmatprep.mubr.f32.mxu0 0.0
  %v692 = vand.u32 %v283, 4294901760
  %693 = vmatmul.mubr.f32.gmra.mrb[0].mxu0 %v692
  %v694 = vpop.f32.mrb[0].mxu0
  %v695 = vadd.f32 %v466, %v694
  %v696 = vpop.f32.mrb[0].mxu0
  %697 = vmatprep.mubr.f32.mxu0 0.0
  %v698 = vand.u32 %v286, 4294901760
  %699 = vmatmul.mubr.f32.gmra.mrb[0].mxu0 %v698
  %v700 = vpop.f32.mrb[0].mxu0
  %v701 = vadd.f32 %v476, %v700
  %v702 = vpop.f32.mrb[0].mxu0
  %703 = vmatprep.mubr.f32.mxu0 0.0
  %v704 = vand.u32 %v289, 4294901760
  %705 = vmatmul.mubr.f32.gmra.mrb[0].mxu0 %v704
  %v706 = vpop.f32.mrb[0].mxu0
  %v707 = vadd.f32 %v486, %v706
  %v708 = vpop.f32.mrb[0].mxu0
  %709 = vmatprep.mubr.f32.mxu0 0.0
  %v710 = vand.u32 %v292, 4294901760
  %711 = vmatmul.mubr.f32.gmra.mrb[0].mxu0 %v710
  %v712 = vpop.f32.mrb[0].mxu0
  %v713 = vadd.f32 %v496, %v712
  %v714 = vpop.f32.mrb[0].mxu0
  %715 = vmatprep.mubr.f32.mxu0 0.0
  %v716 = vand.u32 %v295, 4294901760
  %717 = vmatmul.mubr.f32.gmra.mrb[0].mxu0 %v716
  %v718 = vpop.f32.mrb[0].mxu0
  %v719 = vadd.f32 %v506, %v718
  %v720 = vpop.f32.mrb[0].mxu0
  %721 = vmatprep.mubr.f32.mxu0 0.0
  %v722 = vand.u32 %v298, 4294901760
  %723 = vmatmul.mubr.f32.gmra.mrb[0].mxu0 %v722
  %v724 = vpop.f32.mrb[0].mxu0
  %v725 = vadd.f32 %v516, %v724
  %v726 = vpop.f32.mrb[0].mxu0
  %727 = vmatprep.mubr.f32.mxu0 0.0
  %v728 = vand.u32 %v301, 4294901760
  %729 = vmatmul.mubr.f32.gmra.mrb[0].mxu0 %v728
  %v730 = vpop.f32.mrb[0].mxu0
  %v731 = vadd.f32 %v526, %v730
  %v732 = vpop.f32.mrb[0].mxu0
  %733 = vmatprep.mubr.f32.mxu0 0.0
  %v734 = vand.u32 %v304, 4294901760
  %735 = vmatmul.mubr.f32.gmra.mrb[0].mxu0 %v734
  %v736 = vpop.f32.mrb[0].mxu0
  %v737 = vadd.f32 %v536, %v736
  %v738 = vpop.f32.mrb[0].mxu0
  %739 = vdwg.mxu0
  %740 = vmatprep.subr.mxu0 0.0
  %v741 = vand.u32 %v49, 4294901760
  %v742 = vsub.f32 %v49, %v741
  %743 = vmatpush1.msra.mxu0 %v742
  %744 = vmatprep.subr.mxu0 0.0
  %v745 = vand.u32 %v50, 4294901760
  %v746 = vsub.f32 %v50, %v745
  %747 = vmatpush1.msra.mxu0 %v746
  %748 = vmatprep.subr.mxu0 0.0
  %v749 = vand.u32 %v51, 4294901760
  %v750 = vsub.f32 %v51, %v749
  %751 = vmatpush1.msra.mxu0 %v750
  %752 = vmatprep.subr.mxu0 0.0
  %v753 = vand.u32 %v52, 4294901760
  %v754 = vsub.f32 %v52, %v753
  %755 = vmatpush1.msra.mxu0 %v754
  %756 = vmatprep.subr.mxu0 0.0
  %v757 = vand.u32 %v53, 4294901760
  %v758 = vsub.f32 %v53, %v757
  %759 = vmatpush1.msra.mxu0 %v758
  %760 = vmatprep.subr.mxu0 0.0
  %v761 = vand.u32 %v54, 4294901760
  %v762 = vsub.f32 %v54, %v761
  %763 = vmatpush1.msra.mxu0 %v762
  %764 = vmatprep.subr.mxu0 0.0
  %v765 = vand.u32 %v55, 4294901760
  %v766 = vsub.f32 %v55, %v765
  %767 = vmatpush1.msra.mxu0 %v766
  %768 = vmatprep.subr.mxu0 0.0
  %v769 = vand.u32 %v56, 4294901760
  %v770 = vsub.f32 %v56, %v769
  %771 = vmatpush1.msra.mxu0 %v770
  %772 = vmatprep.subr.mxu0 0.0
  %773 = vmatpush1.msra.mxu0 0.0
  %774 = vmatprep.subr.mxu0 0.0
  %775 = vmatpush1.msra.mxu0 0.0
  %776 = vmatprep.subr.mxu0 0.0
  %777 = vmatpush1.msra.mxu0 0.0
  %778 = vmatprep.subr.mxu0 0.0
  %779 = vmatpush1.msra.mxu0 0.0
  %780 = vmatprep.subr.mxu0 0.0
  %781 = vmatpush1.msra.mxu0 0.0
  %782 = vmatprep.subr.mxu0 0.0
  %783 = vmatpush1.msra.mxu0 0.0
  %784 = vmatprep.subr.mxu0 0.0
  %785 = vmatpush1.msra.mxu0 0.0
  %786 = vmatprep.subr.mxu0 0.0
  %787 = vmatpush1.msra.mxu0 0.0
  %788 = vmatprep.subr.mxu0 0.0
  %789 = vmatpush1.msra.mxu0 0.0
  %790 = vmatprep.subr.mxu0 0.0
  %791 = vmatpush1.msra.mxu0 0.0
  %792 = vmatprep.subr.mxu0 0.0
  %793 = vmatpush1.msra.mxu0 0.0
  %794 = vmatprep.subr.mxu0 0.0
  %795 = vmatpush1.msra.mxu0 0.0
  %796 = vmatprep.subr.mxu0 0.0
  %797 = vmatpush1.msra.mxu0 0.0
  %798 = vmatprep.subr.mxu0 0.0
  %799 = vmatpush1.msra.mxu0 0.0
  %800 = vmatprep.subr.mxu0 0.0
  %801 = vmatpush1.msra.mxu0 0.0
  %802 = vmatprep.subr.mxu0 0.0
  %803 = vmatpush1.msra.mxu0 0.0
  %804 = vmatprep.subr.mxu0 0.0
  %805 = vmatpush1.msra.mxu0 0.0
  %806 = vmatprep.subr.mxu0 0.0
  %807 = vmatpush1.msra.mxu0 0.0
  %808 = vmatprep.subr.mxu0 0.0
  %809 = vmatpush1.msra.mxu0 0.0
  %810 = vmatprep.subr.mxu0 0.0
  %811 = vmatpush1.msra.mxu0 0.0
  %812 = vmatprep.subr.mxu0 0.0
  %813 = vmatpush1.msra.mxu0 0.0
  %814 = vmatprep.subr.mxu0 0.0
  %815 = vmatpush1.msra.mxu0 0.0
  %816 = vmatprep.subr.mxu0 0.0
  %817 = vmatpush1.msra.mxu0 0.0
  %818 = vmatprep.subr.mxu0 0.0
  %819 = vmatpush1.msra.mxu0 0.0
  %820 = vmatprep.mubr.f32.mxu0 0.0
  %v821 = vand.u32 %v259, 4294901760
  %v822 = vsub.f32 %v259, %v821
  %823 = vmatmul.mubr.f32.gmra.mrb[0].mxu0 %v822
  %v824 = vpop.f32.mrb[0].mxu0
  %v825 = vadd.f32 %v647, %v824
  %v826 = vpop.f32.mrb[0].mxu0
  %827 = vmatprep.mubr.f32.mxu0 0.0
  %v828 = vand.u32 %v262, 4294901760
  %v829 = vsub.f32 %v262, %v828
  %830 = vmatmul.mubr.f32.gmra.mrb[0].mxu0 %v829
  %v831 = vpop.f32.mrb[0].mxu0
  %v832 = vadd.f32 %v653, %v831
  %v833 = vpop.f32.mrb[0].mxu0
  %834 = vmatprep.mubr.f32.mxu0 0.0
  %v835 = vand.u32 %v265, 4294901760
  %v836 = vsub.f32 %v265, %v835
  %837 = vmatmul.mubr.f32.gmra.mrb[0].mxu0 %v836
  %v838 = vpop.f32.mrb[0].mxu0
  %v839 = vadd.f32 %v659, %v838
  %v840 = vpop.f32.mrb[0].mxu0
  %841 = vmatprep.mubr.f32.mxu0 0.0
  %v842 = vand.u32 %v268, 4294901760
  %v843 = vsub.f32 %v268, %v842
  %844 = vmatmul.mubr.f32.gmra.mrb[0].mxu0 %v843
  %v845 = vpop.f32.mrb[0].mxu0
  %v846 = vadd.f32 %v665, %v845
  %v847 = vpop.f32.mrb[0].mxu0
  %848 = vmatprep.mubr.f32.mxu0 0.0
  %v849 = vand.u32 %v271, 4294901760
  %v850 = vsub.f32 %v271, %v849
  %851 = vmatmul.mubr.f32.gmra.mrb[0].mxu0 %v850
  %v852 = vpop.f32.mrb[0].mxu0
  %v853 = vadd.f32 %v671, %v852
  %v854 = vpop.f32.mrb[0].mxu0
  %855 = vmatprep.mubr.f32.mxu0 0.0
  %v856 = vand.u32 %v274, 4294901760
  %v857 = vsub.f32 %v274, %v856
  %858 = vmatmul.mubr.f32.gmra.mrb[0].mxu0 %v857
  %v859 = vpop.f32.mrb[0].mxu0
  %v860 = vadd.f32 %v677, %v859
  %v861 = vpop.f32.mrb[0].mxu0
  %862 = vmatprep.mubr.f32.mxu0 0.0
  %v863 = vand.u32 %v277, 4294901760
  %v864 = vsub.f32 %v277, %v863
  %865 = vmatmul.mubr.f32.gmra.mrb[0].mxu0 %v864
  %v866 = vpop.f32.mrb[0].mxu0
  %v867 = vadd.f32 %v683, %v866
  %v868 = vpop.f32.mrb[0].mxu0
  %869 = vmatprep.mubr.f32.mxu0 0.0
  %v870 = vand.u32 %v280, 4294901760
  %v871 = vsub.f32 %v280, %v870
  %872 = vmatmul.mubr.f32.gmra.mrb[0].mxu0 %v871
  %v873 = vpop.f32.mrb[0].mxu0
  %v874 = vadd.f32 %v689, %v873
  %v875 = vpop.f32.mrb[0].mxu0
  %876 = vmatprep.mubr.f32.mxu0 0.0
  %v877 = vand.u32 %v283, 4294901760
  %v878 = vsub.f32 %v283, %v877
  %879 = vmatmul.mubr.f32.gmra.mrb[0].mxu0 %v878
  %v880 = vpop.f32.mrb[0].mxu0
  %v881 = vadd.f32 %v695, %v880
  %v882 = vpop.f32.mrb[0].mxu0
  %883 = vmatprep.mubr.f32.mxu0 0.0
  %v884 = vand.u32 %v286, 4294901760
  %v885 = vsub.f32 %v286, %v884
  %886 = vmatmul.mubr.f32.gmra.mrb[0].mxu0 %v885
  %v887 = vpop.f32.mrb[0].mxu0
  %v888 = vadd.f32 %v701, %v887
  %v889 = vpop.f32.mrb[0].mxu0
  %890 = vmatprep.mubr.f32.mxu0 0.0
  %v891 = vand.u32 %v289, 4294901760
  %v892 = vsub.f32 %v289, %v891
  %893 = vmatmul.mubr.f32.gmra.mrb[0].mxu0 %v892
  %v894 = vpop.f32.mrb[0].mxu0
  %v895 = vadd.f32 %v707, %v894
  %v896 = vpop.f32.mrb[0].mxu0
  %897 = vmatprep.mubr.f32.mxu0 0.0
  %v898 = vand.u32 %v292, 4294901760
  %v899 = vsub.f32 %v292, %v898
  %900 = vmatmul.mubr.f32.gmra.mrb[0].mxu0 %v899
  %v901 = vpop.f32.mrb[0].mxu0
  %v902 = vadd.f32 %v713, %v901
  %v903 = vpop.f32.mrb[0].mxu0
  %904 = vmatprep.mubr.f32.mxu0 0.0
  %v905 = vand.u32 %v295, 4294901760
  %v906 = vsub.f32 %v295, %v905
  %907 = vmatmul.mubr.f32.gmra.mrb[0].mxu0 %v906
  %v908 = vpop.f32.mrb[0].mxu0
  %v909 = vadd.f32 %v719, %v908
  %v910 = vpop.f32.mrb[0].mxu0
  %911 = vmatprep.mubr.f32.mxu0 0.0
  %v912 = vand.u32 %v298, 4294901760
  %v913 = vsub.f32 %v298, %v912
  %914 = vmatmul.mubr.f32.gmra.mrb[0].mxu0 %v913
  %v915 = vpop.f32.mrb[0].mxu0
  %v916 = vadd.f32 %v725, %v915
  %v917 = vpop.f32.mrb[0].mxu0
  %918 = vmatprep.mubr.f32.mxu0 0.0
  %v919 = vand.u32 %v301, 4294901760
  %v920 = vsub.f32 %v301, %v919
  %921 = vmatmul.mubr.f32.gmra.mrb[0].mxu0 %v920
  %v922 = vpop.f32.mrb[0].mxu0
  %v923 = vadd.f32 %v731, %v922
  %v924 = vpop.f32.mrb[0].mxu0
  %925 = vmatprep.mubr.f32.mxu0 0.0
  %v926 = vand.u32 %v304, 4294901760
  %v927 = vsub.f32 %v304, %v926
  %928 = vmatmul.mubr.f32.gmra.mrb[0].mxu0 %v927
  %v929 = vpop.f32.mrb[0].mxu0
  %v930 = vadd.f32 %v737, %v929
  %v931 = vpop.f32.mrb[0].mxu0
  %932 = vdwg.mxu0
  %933 = vmatprep.subr.mxu0 0.0
  %v934 = vand.u32 %v49, 4294901760
  %935 = vmatpush1.msra.mxu0 %v934
  %936 = vmatprep.subr.mxu0 0.0
  %v937 = vand.u32 %v50, 4294901760
  %938 = vmatpush1.msra.mxu0 %v937
  %939 = vmatprep.subr.mxu0 0.0
  %v940 = vand.u32 %v51, 4294901760
  %941 = vmatpush1.msra.mxu0 %v940
  %942 = vmatprep.subr.mxu0 0.0
  %v943 = vand.u32 %v52, 4294901760
  %944 = vmatpush1.msra.mxu0 %v943
  %945 = vmatprep.subr.mxu0 0.0
  %v946 = vand.u32 %v53, 4294901760
  %947 = vmatpush1.msra.mxu0 %v946
  %948 = vmatprep.subr.mxu0 0.0
  %v949 = vand.u32 %v54, 4294901760
  %950 = vmatpush1.msra.mxu0 %v949
  %951 = vmatprep.subr.mxu0 0.0
  %v952 = vand.u32 %v55, 4294901760
  %953 = vmatpush1.msra.mxu0 %v952
  %954 = vmatprep.subr.mxu0 0.0
  %v955 = vand.u32 %v56, 4294901760
  %956 = vmatpush1.msra.mxu0 %v955
  %957 = vmatprep.subr.mxu0 0.0
  %958 = vmatpush1.msra.mxu0 0.0
  %959 = vmatprep.subr.mxu0 0.0
  %960 = vmatpush1.msra.mxu0 0.0
  %961 = vmatprep.subr.mxu0 0.0
  %962 = vmatpush1.msra.mxu0 0.0
  %963 = vmatprep.subr.mxu0 0.0
  %964 = vmatpush1.msra.mxu0 0.0
  %965 = vmatprep.subr.mxu0 0.0
  %966 = vmatpush1.msra.mxu0 0.0
  %967 = vmatprep.subr.mxu0 0.0
  %968 = vmatpush1.msra.mxu0 0.0
  %969 = vmatprep.subr.mxu0 0.0
  %970 = vmatpush1.msra.mxu0 0.0
  %971 = vmatprep.subr.mxu0 0.0
  %972 = vmatpush1.msra.mxu0 0.0
  %973 = vmatprep.subr.mxu0 0.0
  %974 = vmatpush1.msra.mxu0 0.0
  %975 = vmatprep.subr.mxu0 0.0
  %976 = vmatpush1.msra.mxu0 0.0
  %977 = vmatprep.subr.mxu0 0.0
  %978 = vmatpush1.msra.mxu0 0.0
  %979 = vmatprep.subr.mxu0 0.0
  %980 = vmatpush1.msra.mxu0 0.0
  %981 = vmatprep.subr.mxu0 0.0
  %982 = vmatpush1.msra.mxu0 0.0
  %983 = vmatprep.subr.mxu0 0.0
  %984 = vmatpush1.msra.mxu0 0.0
  %985 = vmatprep.subr.mxu0 0.0
  %986 = vmatpush1.msra.mxu0 0.0
  %987 = vmatprep.subr.mxu0 0.0
  %988 = vmatpush1.msra.mxu0 0.0
  %989 = vmatprep.subr.mxu0 0.0
  %990 = vmatpush1.msra.mxu0 0.0
  %991 = vmatprep.subr.mxu0 0.0
  %992 = vmatpush1.msra.mxu0 0.0
  %993 = vmatprep.subr.mxu0 0.0
  %994 = vmatpush1.msra.mxu0 0.0
  %995 = vmatprep.subr.mxu0 0.0
  %996 = vmatpush1.msra.mxu0 0.0
  %997 = vmatprep.subr.mxu0 0.0
  %998 = vmatpush1.msra.mxu0 0.0
  %999 = vmatprep.subr.mxu0 0.0
  %1000 = vmatpush1.msra.mxu0 0.0
  %1001 = vmatprep.subr.mxu0 0.0
  %1002 = vmatpush1.msra.mxu0 0.0
  %1003 = vmatprep.subr.mxu0 0.0
  %1004 = vmatpush1.msra.mxu0 0.0
  %1005 = vmatprep.mubr.f32.mxu0 0.0
  %v1006 = vand.u32 %v259, 4294901760
  %v1007 = vsub.f32 %v259, %v1006
  %v1008 = vand.u32 %v1007, 4294901760
  %1009 = vmatmul.mubr.f32.gmra.mrb[0].mxu0 %v1008
  %v1010 = vpop.f32.mrb[0].mxu0
  %v1011 = vadd.f32 %v825, %v1010
  %v1012 = vpop.f32.mrb[0].mxu0
  %1013 = vmatprep.mubr.f32.mxu0 0.0
  %v1014 = vand.u32 %v262, 4294901760
  %v1015 = vsub.f32 %v262, %v1014
  %v1016 = vand.u32 %v1015, 4294901760
  %1017 = vmatmul.mubr.f32.gmra.mrb[0].mxu0 %v1016
  %v1018 = vpop.f32.mrb[0].mxu0
  %v1019 = vadd.f32 %v832, %v1018
  %v1020 = vpop.f32.mrb[0].mxu0
  %1021 = vmatprep.mubr.f32.mxu0 0.0
  %v1022 = vand.u32 %v265, 4294901760
  %v1023 = vsub.f32 %v265, %v1022
  %v1024 = vand.u32 %v1023, 4294901760
  %1025 = vmatmul.mubr.f32.gmra.mrb[0].mxu0 %v1024
  %v1026 = vpop.f32.mrb[0].mxu0
  %v1027 = vadd.f32 %v839, %v1026
  %v1028 = vpop.f32.mrb[0].mxu0
  %1029 = vmatprep.mubr.f32.mxu0 0.0
  %v1030 = vand.u32 %v268, 4294901760
  %v1031 = vsub.f32 %v268, %v1030
  %v1032 = vand.u32 %v1031, 4294901760
  %1033 = vmatmul.mubr.f32.gmra.mrb[0].mxu0 %v1032
  %v1034 = vpop.f32.mrb[0].mxu0
  %v1035 = vadd.f32 %v846, %v1034
  %v1036 = vpop.f32.mrb[0].mxu0
  %1037 = vmatprep.mubr.f32.mxu0 0.0
  %v1038 = vand.u32 %v271, 4294901760
  %v1039 = vsub.f32 %v271, %v1038
  %v1040 = vand.u32 %v1039, 4294901760
  %1041 = vmatmul.mubr.f32.gmra.mrb[0].mxu0 %v1040
  %v1042 = vpop.f32.mrb[0].mxu0
  %v1043 = vadd.f32 %v853, %v1042
  %v1044 = vpop.f32.mrb[0].mxu0
  %1045 = vmatprep.mubr.f32.mxu0 0.0
  %v1046 = vand.u32 %v274, 4294901760
  %v1047 = vsub.f32 %v274, %v1046
  %v1048 = vand.u32 %v1047, 4294901760
  %1049 = vmatmul.mubr.f32.gmra.mrb[0].mxu0 %v1048
  %v1050 = vpop.f32.mrb[0].mxu0
  %v1051 = vadd.f32 %v860, %v1050
  %v1052 = vpop.f32.mrb[0].mxu0
  %1053 = vmatprep.mubr.f32.mxu0 0.0
  %v1054 = vand.u32 %v277, 4294901760
  %v1055 = vsub.f32 %v277, %v1054
  %v1056 = vand.u32 %v1055, 4294901760
  %1057 = vmatmul.mubr.f32.gmra.mrb[0].mxu0 %v1056
  %v1058 = vpop.f32.mrb[0].mxu0
  %v1059 = vadd.f32 %v867, %v1058
  %v1060 = vpop.f32.mrb[0].mxu0
  %1061 = vmatprep.mubr.f32.mxu0 0.0
  %v1062 = vand.u32 %v280, 4294901760
  %v1063 = vsub.f32 %v280, %v1062
  %v1064 = vand.u32 %v1063, 4294901760
  %1065 = vmatmul.mubr.f32.gmra.mrb[0].mxu0 %v1064
  %v1066 = vpop.f32.mrb[0].mxu0
  %v1067 = vadd.f32 %v874, %v1066
  %v1068 = vpop.f32.mrb[0].mxu0
  %1069 = vmatprep.mubr.f32.mxu0 0.0
  %v1070 = vand.u32 %v283, 4294901760
  %v1071 = vsub.f32 %v283, %v1070
  %v1072 = vand.u32 %v1071, 4294901760
  %1073 = vmatmul.mubr.f32.gmra.mrb[0].mxu0 %v1072
  %v1074 = vpop.f32.mrb[0].mxu0
  %v1075 = vadd.f32 %v881, %v1074
  %v1076 = vpop.f32.mrb[0].mxu0
  %1077 = vmatprep.mubr.f32.mxu0 0.0
  %v1078 = vand.u32 %v286, 4294901760
  %v1079 = vsub.f32 %v286, %v1078
  %v1080 = vand.u32 %v1079, 4294901760
  %1081 = vmatmul.mubr.f32.gmra.mrb[0].mxu0 %v1080
  %v1082 = vpop.f32.mrb[0].mxu0
  %v1083 = vadd.f32 %v888, %v1082
  %v1084 = vpop.f32.mrb[0].mxu0
  %1085 = vmatprep.mubr.f32.mxu0 0.0
  %v1086 = vand.u32 %v289, 4294901760
  %v1087 = vsub.f32 %v289, %v1086
  %v1088 = vand.u32 %v1087, 4294901760
  %1089 = vmatmul.mubr.f32.gmra.mrb[0].mxu0 %v1088
  %v1090 = vpop.f32.mrb[0].mxu0
  %v1091 = vadd.f32 %v895, %v1090
  %v1092 = vpop.f32.mrb[0].mxu0
  %1093 = vmatprep.mubr.f32.mxu0 0.0
  %v1094 = vand.u32 %v292, 4294901760
  %v1095 = vsub.f32 %v292, %v1094
  %v1096 = vand.u32 %v1095, 4294901760
  %1097 = vmatmul.mubr.f32.gmra.mrb[0].mxu0 %v1096
  %v1098 = vpop.f32.mrb[0].mxu0
  %v1099 = vadd.f32 %v902, %v1098
  %v1100 = vpop.f32.mrb[0].mxu0
  %1101 = vmatprep.mubr.f32.mxu0 0.0
  %v1102 = vand.u32 %v295, 4294901760
  %v1103 = vsub.f32 %v295, %v1102
  %v1104 = vand.u32 %v1103, 4294901760
  %1105 = vmatmul.mubr.f32.gmra.mrb[0].mxu0 %v1104
  %v1106 = vpop.f32.mrb[0].mxu0
  %v1107 = vadd.f32 %v909, %v1106
  %v1108 = vpop.f32.mrb[0].mxu0
  %1109 = vmatprep.mubr.f32.mxu0 0.0
  %v1110 = vand.u32 %v298, 4294901760
  %v1111 = vsub.f32 %v298, %v1110
  %v1112 = vand.u32 %v1111, 4294901760
  %1113 = vmatmul.mubr.f32.gmra.mrb[0].mxu0 %v1112
  %v1114 = vpop.f32.mrb[0].mxu0
  %v1115 = vadd.f32 %v916, %v1114
  %v1116 = vpop.f32.mrb[0].mxu0
  %1117 = vmatprep.mubr.f32.mxu0 0.0
  %v1118 = vand.u32 %v301, 4294901760
  %v1119 = vsub.f32 %v301, %v1118
  %v1120 = vand.u32 %v1119, 4294901760
  %1121 = vmatmul.mubr.f32.gmra.mrb[0].mxu0 %v1120
  %v1122 = vpop.f32.mrb[0].mxu0
  %v1123 = vadd.f32 %v923, %v1122
  %v1124 = vpop.f32.mrb[0].mxu0
  %1125 = vmatprep.mubr.f32.mxu0 0.0
  %v1126 = vand.u32 %v304, 4294901760
  %v1127 = vsub.f32 %v304, %v1126
  %v1128 = vand.u32 %v1127, 4294901760
  %1129 = vmatmul.mubr.f32.gmra.mrb[0].mxu0 %v1128
  %v1130 = vpop.f32.mrb[0].mxu0
  %v1131 = vadd.f32 %v930, %v1130
  %v1132 = vpop.f32.mrb[0].mxu0
  %1133 = vdwg.mxu0
  %1134 = vmatprep.subr.mxu0 0.0
  %v1135 = vand.u32 %v49, 4294901760
  %v1136 = vsub.f32 %v49, %v1135
  %v1137 = vand.u32 %v1136, 4294901760
  %1138 = vmatpush1.msra.mxu0 %v1137
  %1139 = vmatprep.subr.mxu0 0.0
  %v1140 = vand.u32 %v50, 4294901760
  %v1141 = vsub.f32 %v50, %v1140
  %v1142 = vand.u32 %v1141, 4294901760
  %1143 = vmatpush1.msra.mxu0 %v1142
  %1144 = vmatprep.subr.mxu0 0.0
  %v1145 = vand.u32 %v51, 4294901760
  %v1146 = vsub.f32 %v51, %v1145
  %v1147 = vand.u32 %v1146, 4294901760
  %1148 = vmatpush1.msra.mxu0 %v1147
  %1149 = vmatprep.subr.mxu0 0.0
  %v1150 = vand.u32 %v52, 4294901760
  %v1151 = vsub.f32 %v52, %v1150
  %v1152 = vand.u32 %v1151, 4294901760
  %1153 = vmatpush1.msra.mxu0 %v1152
  %1154 = vmatprep.subr.mxu0 0.0
  %v1155 = vand.u32 %v53, 4294901760
  %v1156 = vsub.f32 %v53, %v1155
  %v1157 = vand.u32 %v1156, 4294901760
  %1158 = vmatpush1.msra.mxu0 %v1157
  %1159 = vmatprep.subr.mxu0 0.0
  %v1160 = vand.u32 %v54, 4294901760
  %v1161 = vsub.f32 %v54, %v1160
  %v1162 = vand.u32 %v1161, 4294901760
  %1163 = vmatpush1.msra.mxu0 %v1162
  %1164 = vmatprep.subr.mxu0 0.0
  %v1165 = vand.u32 %v55, 4294901760
  %v1166 = vsub.f32 %v55, %v1165
  %v1167 = vand.u32 %v1166, 4294901760
  %1168 = vmatpush1.msra.mxu0 %v1167
  %1169 = vmatprep.subr.mxu0 0.0
  %v1170 = vand.u32 %v56, 4294901760
  %v1171 = vsub.f32 %v56, %v1170
  %v1172 = vand.u32 %v1171, 4294901760
  %1173 = vmatpush1.msra.mxu0 %v1172
  %1174 = vmatprep.subr.mxu0 0.0
  %1175 = vmatpush1.msra.mxu0 0.0
  %1176 = vmatprep.subr.mxu0 0.0
  %1177 = vmatpush1.msra.mxu0 0.0
  %1178 = vmatprep.subr.mxu0 0.0
  %1179 = vmatpush1.msra.mxu0 0.0
  %1180 = vmatprep.subr.mxu0 0.0
  %1181 = vmatpush1.msra.mxu0 0.0
  %1182 = vmatprep.subr.mxu0 0.0
  %1183 = vmatpush1.msra.mxu0 0.0
  %1184 = vmatprep.subr.mxu0 0.0
  %1185 = vmatpush1.msra.mxu0 0.0
  %1186 = vmatprep.subr.mxu0 0.0
  %1187 = vmatpush1.msra.mxu0 0.0
  %1188 = vmatprep.subr.mxu0 0.0
  %1189 = vmatpush1.msra.mxu0 0.0
  %1190 = vmatprep.subr.mxu0 0.0
  %1191 = vmatpush1.msra.mxu0 0.0
  %1192 = vmatprep.subr.mxu0 0.0
  %1193 = vmatpush1.msra.mxu0 0.0
  %1194 = vmatprep.subr.mxu0 0.0
  %1195 = vmatpush1.msra.mxu0 0.0
  %1196 = vmatprep.subr.mxu0 0.0
  %1197 = vmatpush1.msra.mxu0 0.0
  %1198 = vmatprep.subr.mxu0 0.0
  %1199 = vmatpush1.msra.mxu0 0.0
  %1200 = vmatprep.subr.mxu0 0.0
  %1201 = vmatpush1.msra.mxu0 0.0
  %1202 = vmatprep.subr.mxu0 0.0
  %1203 = vmatpush1.msra.mxu0 0.0
  %1204 = vmatprep.subr.mxu0 0.0
  %1205 = vmatpush1.msra.mxu0 0.0
  %1206 = vmatprep.subr.mxu0 0.0
  %1207 = vmatpush1.msra.mxu0 0.0
  %1208 = vmatprep.subr.mxu0 0.0
  %1209 = vmatpush1.msra.mxu0 0.0
  %1210 = vmatprep.subr.mxu0 0.0
  %1211 = vmatpush1.msra.mxu0 0.0
  %1212 = vmatprep.subr.mxu0 0.0
  %1213 = vmatpush1.msra.mxu0 0.0
  %1214 = vmatprep.subr.mxu0 0.0
  %1215 = vmatpush1.msra.mxu0 0.0
  %1216 = vmatprep.subr.mxu0 0.0
  %1217 = vmatpush1.msra.mxu0 0.0
  %1218 = vmatprep.subr.mxu0 0.0
  %1219 = vmatpush1.msra.mxu0 0.0
  %1220 = vmatprep.subr.mxu0 0.0
  %1221 = vmatpush1.msra.mxu0 0.0
  %1222 = vmatprep.mubr.f32.mxu0 0.0
  %v1223 = vand.u32 %v259, 4294901760
  %1224 = vmatmul.mubr.f32.gmra.mrb[0].mxu0 %v1223
  %v1225 = vpop.f32.mrb[0].mxu0
  %v1226 = vadd.f32 %v1011, %v1225
  %v1227 = vpop.f32.mrb[0].mxu0
  %1228 = vmatprep.mubr.f32.mxu0 0.0
  %v1229 = vand.u32 %v262, 4294901760
  %1230 = vmatmul.mubr.f32.gmra.mrb[0].mxu0 %v1229
  %v1231 = vpop.f32.mrb[0].mxu0
  %v1232 = vadd.f32 %v1019, %v1231
  %v1233 = vpop.f32.mrb[0].mxu0
  %1234 = vmatprep.mubr.f32.mxu0 0.0
  %v1235 = vand.u32 %v265, 4294901760
  %1236 = vmatmul.mubr.f32.gmra.mrb[0].mxu0 %v1235
  %v1237 = vpop.f32.mrb[0].mxu0
  %v1238 = vadd.f32 %v1027, %v1237
  %v1239 = vpop.f32.mrb[0].mxu0
  %1240 = vmatprep.mubr.f32.mxu0 0.0
  %v1241 = vand.u32 %v268, 4294901760
  %1242 = vmatmul.mubr.f32.gmra.mrb[0].mxu0 %v1241
  %v1243 = vpop.f32.mrb[0].mxu0
  %v1244 = vadd.f32 %v1035, %v1243
  %v1245 = vpop.f32.mrb[0].mxu0
  %1246 = vmatprep.mubr.f32.mxu0 0.0
  %v1247 = vand.u32 %v271, 4294901760
  %1248 = vmatmul.mubr.f32.gmra.mrb[0].mxu0 %v1247
  %v1249 = vpop.f32.mrb[0].mxu0
  %v1250 = vadd.f32 %v1043, %v1249
  %v1251 = vpop.f32.mrb[0].mxu0
  %1252 = vmatprep.mubr.f32.mxu0 0.0
  %v1253 = vand.u32 %v274, 4294901760
  %1254 = vmatmul.mubr.f32.gmra.mrb[0].mxu0 %v1253
  %v1255 = vpop.f32.mrb[0].mxu0
  %v1256 = vadd.f32 %v1051, %v1255
  %v1257 = vpop.f32.mrb[0].mxu0
  %1258 = vmatprep.mubr.f32.mxu0 0.0
  %v1259 = vand.u32 %v277, 4294901760
  %1260 = vmatmul.mubr.f32.gmra.mrb[0].mxu0 %v1259
  %v1261 = vpop.f32.mrb[0].mxu0
  %v1262 = vadd.f32 %v1059, %v1261
  %v1263 = vpop.f32.mrb[0].mxu0
  %1264 = vmatprep.mubr.f32.mxu0 0.0
  %v1265 = vand.u32 %v280, 4294901760
  %1266 = vmatmul.mubr.f32.gmra.mrb[0].mxu0 %v1265
  %v1267 = vpop.f32.mrb[0].mxu0
  %v1268 = vadd.f32 %v1067, %v1267
  %v1269 = vpop.f32.mrb[0].mxu0
  %1270 = vmatprep.mubr.f32.mxu0 0.0
  %v1271 = vand.u32 %v283, 4294901760
  %1272 = vmatmul.mubr.f32.gmra.mrb[0].mxu0 %v1271
  %v1273 = vpop.f32.mrb[0].mxu0
  %v1274 = vadd.f32 %v1075, %v1273
  %v1275 = vpop.f32.mrb[0].mxu0
  %1276 = vmatprep.mubr.f32.mxu0 0.0
  %v1277 = vand.u32 %v286, 4294901760
  %1278 = vmatmul.mubr.f32.gmra.mrb[0].mxu0 %v1277
  %v1279 = vpop.f32.mrb[0].mxu0
  %v1280 = vadd.f32 %v1083, %v1279
  %v1281 = vpop.f32.mrb[0].mxu0
  %1282 = vmatprep.mubr.f32.mxu0 0.0
  %v1283 = vand.u32 %v289, 4294901760
  %1284 = vmatmul.mubr.f32.gmra.mrb[0].mxu0 %v1283
  %v1285 = vpop.f32.mrb[0].mxu0
  %v1286 = vadd.f32 %v1091, %v1285
  %v1287 = vpop.f32.mrb[0].mxu0
  %1288 = vmatprep.mubr.f32.mxu0 0.0
  %v1289 = vand.u32 %v292, 4294901760
  %1290 = vmatmul.mubr.f32.gmra.mrb[0].mxu0 %v1289
  %v1291 = vpop.f32.mrb[0].mxu0
  %v1292 = vadd.f32 %v1099, %v1291
  %v1293 = vpop.f32.mrb[0].mxu0
  %1294 = vmatprep.mubr.f32.mxu0 0.0
  %v1295 = vand.u32 %v295, 4294901760
  %1296 = vmatmul.mubr.f32.gmra.mrb[0].mxu0 %v1295
  %v1297 = vpop.f32.mrb[0].mxu0
  %v1298 = vadd.f32 %v1107, %v1297
  %v1299 = vpop.f32.mrb[0].mxu0
  %1300 = vmatprep.mubr.f32.mxu0 0.0
  %v1301 = vand.u32 %v298, 4294901760
  %1302 = vmatmul.mubr.f32.gmra.mrb[0].mxu0 %v1301
  %v1303 = vpop.f32.mrb[0].mxu0
  %v1304 = vadd.f32 %v1115, %v1303
  %v1305 = vpop.f32.mrb[0].mxu0
  %1306 = vmatprep.mubr.f32.mxu0 0.0
  %v1307 = vand.u32 %v301, 4294901760
  %1308 = vmatmul.mubr.f32.gmra.mrb[0].mxu0 %v1307
  %v1309 = vpop.f32.mrb[0].mxu0
  %v1310 = vadd.f32 %v1123, %v1309
  %v1311 = vpop.f32.mrb[0].mxu0
  %1312 = vmatprep.mubr.f32.mxu0 0.0
  %v1313 = vand.u32 %v304, 4294901760
  %1314 = vmatmul.mubr.f32.gmra.mrb[0].mxu0 %v1313
  %v1315 = vpop.f32.mrb[0].mxu0
  %v1316 = vadd.f32 %v1131, %v1315
  %v1317 = vpop.f32.mrb[0].mxu0
  %1318 = vdwg.mxu0
  %1319 = vmatprep.subr.mxu0 0.0
  %v1320 = vand.u32 %v49, 4294901760
  %1321 = vmatpush1.msra.mxu0 %v1320
  %1322 = vmatprep.subr.mxu0 0.0
  %v1323 = vand.u32 %v50, 4294901760
  %1324 = vmatpush1.msra.mxu0 %v1323
  %1325 = vmatprep.subr.mxu0 0.0
  %v1326 = vand.u32 %v51, 4294901760
  %1327 = vmatpush1.msra.mxu0 %v1326
  %1328 = vmatprep.subr.mxu0 0.0
  %v1329 = vand.u32 %v52, 4294901760
  %1330 = vmatpush1.msra.mxu0 %v1329
  %1331 = vmatprep.subr.mxu0 0.0
  %v1332 = vand.u32 %v53, 4294901760
  %1333 = vmatpush1.msra.mxu0 %v1332
  %1334 = vmatprep.subr.mxu0 0.0
  %v1335 = vand.u32 %v54, 4294901760
  %1336 = vmatpush1.msra.mxu0 %v1335
  %1337 = vmatprep.subr.mxu0 0.0
  %v1338 = vand.u32 %v55, 4294901760
  %1339 = vmatpush1.msra.mxu0 %v1338
  %1340 = vmatprep.subr.mxu0 0.0
  %v1341 = vand.u32 %v56, 4294901760
  %1342 = vmatpush1.msra.mxu0 %v1341
  %1343 = vmatprep.subr.mxu0 0.0
  %1344 = vmatpush1.msra.mxu0 0.0
  %1345 = vmatprep.subr.mxu0 0.0
  %1346 = vmatpush1.msra.mxu0 0.0
  %1347 = vmatprep.subr.mxu0 0.0
  %1348 = vmatpush1.msra.mxu0 0.0
  %1349 = vmatprep.subr.mxu0 0.0
  %1350 = vmatpush1.msra.mxu0 0.0
  %1351 = vmatprep.subr.mxu0 0.0
  %1352 = vmatpush1.msra.mxu0 0.0
  %1353 = vmatprep.subr.mxu0 0.0
  %1354 = vmatpush1.msra.mxu0 0.0
  %1355 = vmatprep.subr.mxu0 0.0
  %1356 = vmatpush1.msra.mxu0 0.0
  %1357 = vmatprep.subr.mxu0 0.0
  %1358 = vmatpush1.msra.mxu0 0.0
  %1359 = vmatprep.subr.mxu0 0.0
  %1360 = vmatpush1.msra.mxu0 0.0
  %1361 = vmatprep.subr.mxu0 0.0
  %1362 = vmatpush1.msra.mxu0 0.0
  %1363 = vmatprep.subr.mxu0 0.0
  %1364 = vmatpush1.msra.mxu0 0.0
  %1365 = vmatprep.subr.mxu0 0.0
  %1366 = vmatpush1.msra.mxu0 0.0
  %1367 = vmatprep.subr.mxu0 0.0
  %1368 = vmatpush1.msra.mxu0 0.0
  %1369 = vmatprep.subr.mxu0 0.0
  %1370 = vmatpush1.msra.mxu0 0.0
  %1371 = vmatprep.subr.mxu0 0.0
  %1372 = vmatpush1.msra.mxu0 0.0
  %1373 = vmatprep.subr.mxu0 0.0
  %1374 = vmatpush1.msra.mxu0 0.0
  %1375 = vmatprep.subr.mxu0 0.0
  %1376 = vmatpush1.msra.mxu0 0.0
  %1377 = vmatprep.subr.mxu0 0.0
  %1378 = vmatpush1.msra.mxu0 0.0
  %1379 = vmatprep.subr.mxu0 0.0
  %1380 = vmatpush1.msra.mxu0 0.0
  %1381 = vmatprep.subr.mxu0 0.0
  %1382 = vmatpush1.msra.mxu0 0.0
  %1383 = vmatprep.subr.mxu0 0.0
  %1384 = vmatpush1.msra.mxu0 0.0
  %1385 = vmatprep.subr.mxu0 0.0
  %1386 = vmatpush1.msra.mxu0 0.0
  %1387 = vmatprep.subr.mxu0 0.0
  %1388 = vmatpush1.msra.mxu0 0.0
  %1389 = vmatprep.subr.mxu0 0.0
  %1390 = vmatpush1.msra.mxu0 0.0
  %1391 = vmatprep.mubr.f32.mxu0 0.0
  %v1392 = vand.u32 %v259, 4294901760
  %1393 = vmatmul.mubr.f32.gmra.mrb[0].mxu0 %v1392
  %v1394 = vpop.f32.mrb[0].mxu0
  %v1395 = vadd.f32 %v1226, %v1394
  %v1396 = vpop.f32.mrb[0].mxu0
  %1397 = vmatprep.mubr.f32.mxu0 0.0
  %v1398 = vand.u32 %v262, 4294901760
  %1399 = vmatmul.mubr.f32.gmra.mrb[0].mxu0 %v1398
  %v1400 = vpop.f32.mrb[0].mxu0
  %v1401 = vadd.f32 %v1232, %v1400
  %v1402 = vpop.f32.mrb[0].mxu0
  %1403 = vmatprep.mubr.f32.mxu0 0.0
  %v1404 = vand.u32 %v265, 4294901760
  %1405 = vmatmul.mubr.f32.gmra.mrb[0].mxu0 %v1404
  %v1406 = vpop.f32.mrb[0].mxu0
  %v1407 = vadd.f32 %v1238, %v1406
  %v1408 = vpop.f32.mrb[0].mxu0
  %1409 = vmatprep.mubr.f32.mxu0 0.0
  %v1410 = vand.u32 %v268, 4294901760
  %1411 = vmatmul.mubr.f32.gmra.mrb[0].mxu0 %v1410
  %v1412 = vpop.f32.mrb[0].mxu0
  %v1413 = vadd.f32 %v1244, %v1412
  %v1414 = vpop.f32.mrb[0].mxu0
  %1415 = vmatprep.mubr.f32.mxu0 0.0
  %v1416 = vand.u32 %v271, 4294901760
  %1417 = vmatmul.mubr.f32.gmra.mrb[0].mxu0 %v1416
  %v1418 = vpop.f32.mrb[0].mxu0
  %v1419 = vadd.f32 %v1250, %v1418
  %v1420 = vpop.f32.mrb[0].mxu0
  %1421 = vmatprep.mubr.f32.mxu0 0.0
  %v1422 = vand.u32 %v274, 4294901760
  %1423 = vmatmul.mubr.f32.gmra.mrb[0].mxu0 %v1422
  %v1424 = vpop.f32.mrb[0].mxu0
  %v1425 = vadd.f32 %v1256, %v1424
  %v1426 = vpop.f32.mrb[0].mxu0
  %1427 = vmatprep.mubr.f32.mxu0 0.0
  %v1428 = vand.u32 %v277, 4294901760
  %1429 = vmatmul.mubr.f32.gmra.mrb[0].mxu0 %v1428
  %v1430 = vpop.f32.mrb[0].mxu0
  %v1431 = vadd.f32 %v1262, %v1430
  %v1432 = vpop.f32.mrb[0].mxu0
  %1433 = vmatprep.mubr.f32.mxu0 0.0
  %v1434 = vand.u32 %v280, 4294901760
  %1435 = vmatmul.mubr.f32.gmra.mrb[0].mxu0 %v1434
  %v1436 = vpop.f32.mrb[0].mxu0
  %v1437 = vadd.f32 %v1268, %v1436
  %v1438 = vpop.f32.mrb[0].mxu0
  %1439 = vmatprep.mubr.f32.mxu0 0.0
  %v1440 = vand.u32 %v283, 4294901760
  %1441 = vmatmul.mubr.f32.gmra.mrb[0].mxu0 %v1440
  %v1442 = vpop.f32.mrb[0].mxu0
  %v1443 = vadd.f32 %v1274, %v1442
  %v1444 = vpop.f32.mrb[0].mxu0
  %1445 = vmatprep.mubr.f32.mxu0 0.0
  %v1446 = vand.u32 %v286, 4294901760
  %1447 = vmatmul.mubr.f32.gmra.mrb[0].mxu0 %v1446
  %v1448 = vpop.f32.mrb[0].mxu0
  %v1449 = vadd.f32 %v1280, %v1448
  %v1450 = vpop.f32.mrb[0].mxu0
  %1451 = vmatprep.mubr.f32.mxu0 0.0
  %v1452 = vand.u32 %v289, 4294901760
  %1453 = vmatmul.mubr.f32.gmra.mrb[0].mxu0 %v1452
  %v1454 = vpop.f32.mrb[0].mxu0
  %v1455 = vadd.f32 %v1286, %v1454
  %v1456 = vpop.f32.mrb[0].mxu0
  %1457 = vmatprep.mubr.f32.mxu0 0.0
  %v1458 = vand.u32 %v292, 4294901760
  %1459 = vmatmul.mubr.f32.gmra.mrb[0].mxu0 %v1458
  %v1460 = vpop.f32.mrb[0].mxu0
  %v1461 = vadd.f32 %v1292, %v1460
  %v1462 = vpop.f32.mrb[0].mxu0
  %1463 = vmatprep.mubr.f32.mxu0 0.0
  %v1464 = vand.u32 %v295, 4294901760
  %1465 = vmatmul.mubr.f32.gmra.mrb[0].mxu0 %v1464
  %v1466 = vpop.f32.mrb[0].mxu0
  %v1467 = vadd.f32 %v1298, %v1466
  %v1468 = vpop.f32.mrb[0].mxu0
  %1469 = vmatprep.mubr.f32.mxu0 0.0
  %v1470 = vand.u32 %v298, 4294901760
  %1471 = vmatmul.mubr.f32.gmra.mrb[0].mxu0 %v1470
  %v1472 = vpop.f32.mrb[0].mxu0
  %v1473 = vadd.f32 %v1304, %v1472
  %v1474 = vpop.f32.mrb[0].mxu0
  %1475 = vmatprep.mubr.f32.mxu0 0.0
  %v1476 = vand.u32 %v301, 4294901760
  %1477 = vmatmul.mubr.f32.gmra.mrb[0].mxu0 %v1476
  %v1478 = vpop.f32.mrb[0].mxu0
  %v1479 = vadd.f32 %v1310, %v1478
  %v1480 = vpop.f32.mrb[0].mxu0
  %1481 = vmatprep.mubr.f32.mxu0 0.0
  %v1482 = vand.u32 %v304, 4294901760
  %1483 = vmatmul.mubr.f32.gmra.mrb[0].mxu0 %v1482
  %v1484 = vpop.f32.mrb[0].mxu0
  %v1485 = vadd.f32 %v1316, %v1484
  %v1486 = vpop.f32.mrb[0].mxu0
  %1487 = vdwg.mxu0
  %vm1488 = vcmask 392192
  %v1490 = vsel %vm1488, %v241, 0
  %v1493 = vsel %vm1488, %v242, 0
  %v1496 = vsel %vm1488, %v243, 0
  %v1499 = vsel %vm1488, %v244, 0
  %v1502 = vsel %vm1488, %v245, 0
  %v1505 = vsel %vm1488, %v246, 0
  %v1508 = vsel %vm1488, %v247, 0
  %v1511 = vsel %vm1488, %v248, 0
  %v1514 = vsel %vm1488, %v249, 0
  %v1517 = vsel %vm1488, %v250, 0
  %v1520 = vsel %vm1488, %v251, 0
  %v1523 = vsel %vm1488, %v252, 0
  %v1526 = vsel %vm1488, %v253, 0
  %v1529 = vsel %vm1488, %v254, 0
  %v1532 = vsel %vm1488, %v255, 0
  %v1535 = vsel %vm1488, %v256, 0
  %1537 = vmatprep.subr.mxu0 0.0
  %v1538 = vand.u32 %v57, 4294901760
  %1539 = vmatpush1.msra.mxu0 %v1538
  %1540 = vmatprep.subr.mxu0 0.0
  %v1541 = vand.u32 %v58, 4294901760
  %1542 = vmatpush1.msra.mxu0 %v1541
  %1543 = vmatprep.subr.mxu0 0.0
  %v1544 = vand.u32 %v59, 4294901760
  %1545 = vmatpush1.msra.mxu0 %v1544
  %1546 = vmatprep.subr.mxu0 0.0
  %v1547 = vand.u32 %v60, 4294901760
  %1548 = vmatpush1.msra.mxu0 %v1547
  %1549 = vmatprep.subr.mxu0 0.0
  %v1550 = vand.u32 %v61, 4294901760
  %1551 = vmatpush1.msra.mxu0 %v1550
  %1552 = vmatprep.subr.mxu0 0.0
  %v1553 = vand.u32 %v62, 4294901760
  %1554 = vmatpush1.msra.mxu0 %v1553
  %1555 = vmatprep.subr.mxu0 0.0
  %1556 = vmatpush1.msra.mxu0 0.0
  %1557 = vmatprep.subr.mxu0 0.0
  %1558 = vmatpush1.msra.mxu0 0.0
  %1559 = vmatprep.subr.mxu0 0.0
  %1560 = vmatpush1.msra.mxu0 0.0
  %1561 = vmatprep.subr.mxu0 0.0
  %1562 = vmatpush1.msra.mxu0 0.0
  %1563 = vmatprep.subr.mxu0 0.0
  %1564 = vmatpush1.msra.mxu0 0.0
  %1565 = vmatprep.subr.mxu0 0.0
  %1566 = vmatpush1.msra.mxu0 0.0
  %1567 = vmatprep.subr.mxu0 0.0
  %1568 = vmatpush1.msra.mxu0 0.0
  %1569 = vmatprep.subr.mxu0 0.0
  %1570 = vmatpush1.msra.mxu0 0.0
  %1571 = vmatprep.subr.mxu0 0.0
  %1572 = vmatpush1.msra.mxu0 0.0
  %1573 = vmatprep.subr.mxu0 0.0
  %1574 = vmatpush1.msra.mxu0 0.0
  %1575 = vmatprep.subr.mxu0 0.0
  %1576 = vmatpush1.msra.mxu0 0.0
  %1577 = vmatprep.subr.mxu0 0.0
  %1578 = vmatpush1.msra.mxu0 0.0
  %1579 = vmatprep.subr.mxu0 0.0
  %1580 = vmatpush1.msra.mxu0 0.0
  %1581 = vmatprep.subr.mxu0 0.0
  %1582 = vmatpush1.msra.mxu0 0.0
  %1583 = vmatprep.subr.mxu0 0.0
  %1584 = vmatpush1.msra.mxu0 0.0
  %1585 = vmatprep.subr.mxu0 0.0
  %1586 = vmatpush1.msra.mxu0 0.0
  %1587 = vmatprep.subr.mxu0 0.0
  %1588 = vmatpush1.msra.mxu0 0.0
  %1589 = vmatprep.subr.mxu0 0.0
  %1590 = vmatpush1.msra.mxu0 0.0
  %1591 = vmatprep.subr.mxu0 0.0
  %1592 = vmatpush1.msra.mxu0 0.0
  %1593 = vmatprep.subr.mxu0 0.0
  %1594 = vmatpush1.msra.mxu0 0.0
  %1595 = vmatprep.subr.mxu0 0.0
  %1596 = vmatpush1.msra.mxu0 0.0
  %1597 = vmatprep.subr.mxu0 0.0
  %1598 = vmatpush1.msra.mxu0 0.0
  %1599 = vmatprep.subr.mxu0 0.0
  %1600 = vmatpush1.msra.mxu0 0.0
  %1601 = vmatprep.subr.mxu0 0.0
  %1602 = vmatpush1.msra.mxu0 0.0
  %1603 = vmatprep.subr.mxu0 0.0
  %1604 = vmatpush1.msra.mxu0 0.0
  %1605 = vmatprep.subr.mxu0 0.0
  %1606 = vmatpush1.msra.mxu0 0.0
  %1607 = vmatprep.mubr.f32.mxu0 0.0
  %v1608 = vand.u32 %v1490, 4294901760
  %v1609 = vsub.f32 %v1490, %v1608
  %v1610 = vand.u32 %v1609, 4294901760
  %v1611 = vsub.f32 %v1609, %v1610
  %v1612 = vand.u32 %v1611, 4294901760
  %1613 = vmatmul.mubr.f32.gmra.mrb[0].mxu0 %v1612
  %v1614 = vpop.f32.mrb[0].mxu0
  %v1615 = vadd.f32 0.0, %v1614
  %v1616 = vpop.f32.mrb[0].mxu0
  %1617 = vmatprep.mubr.f32.mxu0 0.0
  %v1618 = vand.u32 %v1493, 4294901760
  %v1619 = vsub.f32 %v1493, %v1618
  %v1620 = vand.u32 %v1619, 4294901760
  %v1621 = vsub.f32 %v1619, %v1620
  %v1622 = vand.u32 %v1621, 4294901760
  %1623 = vmatmul.mubr.f32.gmra.mrb[0].mxu0 %v1622
  %v1624 = vpop.f32.mrb[0].mxu0
  %v1625 = vadd.f32 0.0, %v1624
  %v1626 = vpop.f32.mrb[0].mxu0
  %1627 = vmatprep.mubr.f32.mxu0 0.0
  %v1628 = vand.u32 %v1496, 4294901760
  %v1629 = vsub.f32 %v1496, %v1628
  %v1630 = vand.u32 %v1629, 4294901760
  %v1631 = vsub.f32 %v1629, %v1630
  %v1632 = vand.u32 %v1631, 4294901760
  %1633 = vmatmul.mubr.f32.gmra.mrb[0].mxu0 %v1632
  %v1634 = vpop.f32.mrb[0].mxu0
  %v1635 = vadd.f32 0.0, %v1634
  %v1636 = vpop.f32.mrb[0].mxu0
  %1637 = vmatprep.mubr.f32.mxu0 0.0
  %v1638 = vand.u32 %v1499, 4294901760
  %v1639 = vsub.f32 %v1499, %v1638
  %v1640 = vand.u32 %v1639, 4294901760
  %v1641 = vsub.f32 %v1639, %v1640
  %v1642 = vand.u32 %v1641, 4294901760
  %1643 = vmatmul.mubr.f32.gmra.mrb[0].mxu0 %v1642
  %v1644 = vpop.f32.mrb[0].mxu0
  %v1645 = vadd.f32 0.0, %v1644
  %v1646 = vpop.f32.mrb[0].mxu0
  %1647 = vmatprep.mubr.f32.mxu0 0.0
  %v1648 = vand.u32 %v1502, 4294901760
  %v1649 = vsub.f32 %v1502, %v1648
  %v1650 = vand.u32 %v1649, 4294901760
  %v1651 = vsub.f32 %v1649, %v1650
  %v1652 = vand.u32 %v1651, 4294901760
  %1653 = vmatmul.mubr.f32.gmra.mrb[0].mxu0 %v1652
  %v1654 = vpop.f32.mrb[0].mxu0
  %v1655 = vadd.f32 0.0, %v1654
  %v1656 = vpop.f32.mrb[0].mxu0
  %1657 = vmatprep.mubr.f32.mxu0 0.0
  %v1658 = vand.u32 %v1505, 4294901760
  %v1659 = vsub.f32 %v1505, %v1658
  %v1660 = vand.u32 %v1659, 4294901760
  %v1661 = vsub.f32 %v1659, %v1660
  %v1662 = vand.u32 %v1661, 4294901760
  %1663 = vmatmul.mubr.f32.gmra.mrb[0].mxu0 %v1662
  %v1664 = vpop.f32.mrb[0].mxu0
  %v1665 = vadd.f32 0.0, %v1664
  %v1666 = vpop.f32.mrb[0].mxu0
  %1667 = vmatprep.mubr.f32.mxu0 0.0
  %v1668 = vand.u32 %v1508, 4294901760
  %v1669 = vsub.f32 %v1508, %v1668
  %v1670 = vand.u32 %v1669, 4294901760
  %v1671 = vsub.f32 %v1669, %v1670
  %v1672 = vand.u32 %v1671, 4294901760
  %1673 = vmatmul.mubr.f32.gmra.mrb[0].mxu0 %v1672
  %v1674 = vpop.f32.mrb[0].mxu0
  %v1675 = vadd.f32 0.0, %v1674
  %v1676 = vpop.f32.mrb[0].mxu0
  %1677 = vmatprep.mubr.f32.mxu0 0.0
  %v1678 = vand.u32 %v1511, 4294901760
  %v1679 = vsub.f32 %v1511, %v1678
  %v1680 = vand.u32 %v1679, 4294901760
  %v1681 = vsub.f32 %v1679, %v1680
  %v1682 = vand.u32 %v1681, 4294901760
  %1683 = vmatmul.mubr.f32.gmra.mrb[0].mxu0 %v1682
  %v1684 = vpop.f32.mrb[0].mxu0
  %v1685 = vadd.f32 0.0, %v1684
  %v1686 = vpop.f32.mrb[0].mxu0
  %1687 = vmatprep.mubr.f32.mxu0 0.0
  %v1688 = vand.u32 %v1514, 4294901760
  %v1689 = vsub.f32 %v1514, %v1688
  %v1690 = vand.u32 %v1689, 4294901760
  %v1691 = vsub.f32 %v1689, %v1690
  %v1692 = vand.u32 %v1691, 4294901760
  %1693 = vmatmul.mubr.f32.gmra.mrb[0].mxu0 %v1692
  %v1694 = vpop.f32.mrb[0].mxu0
  %v1695 = vadd.f32 0.0, %v1694
  %v1696 = vpop.f32.mrb[0].mxu0
  %1697 = vmatprep.mubr.f32.mxu0 0.0
  %v1698 = vand.u32 %v1517, 4294901760
  %v1699 = vsub.f32 %v1517, %v1698
  %v1700 = vand.u32 %v1699, 4294901760
  %v1701 = vsub.f32 %v1699, %v1700
  %v1702 = vand.u32 %v1701, 4294901760
  %1703 = vmatmul.mubr.f32.gmra.mrb[0].mxu0 %v1702
  %v1704 = vpop.f32.mrb[0].mxu0
  %v1705 = vadd.f32 0.0, %v1704
  %v1706 = vpop.f32.mrb[0].mxu0
  %1707 = vmatprep.mubr.f32.mxu0 0.0
  %v1708 = vand.u32 %v1520, 4294901760
  %v1709 = vsub.f32 %v1520, %v1708
  %v1710 = vand.u32 %v1709, 4294901760
  %v1711 = vsub.f32 %v1709, %v1710
  %v1712 = vand.u32 %v1711, 4294901760
  %1713 = vmatmul.mubr.f32.gmra.mrb[0].mxu0 %v1712
  %v1714 = vpop.f32.mrb[0].mxu0
  %v1715 = vadd.f32 0.0, %v1714
  %v1716 = vpop.f32.mrb[0].mxu0
  %1717 = vmatprep.mubr.f32.mxu0 0.0
  %v1718 = vand.u32 %v1523, 4294901760
  %v1719 = vsub.f32 %v1523, %v1718
  %v1720 = vand.u32 %v1719, 4294901760
  %v1721 = vsub.f32 %v1719, %v1720
  %v1722 = vand.u32 %v1721, 4294901760
  %1723 = vmatmul.mubr.f32.gmra.mrb[0].mxu0 %v1722
  %v1724 = vpop.f32.mrb[0].mxu0
  %v1725 = vadd.f32 0.0, %v1724
  %v1726 = vpop.f32.mrb[0].mxu0
  %1727 = vmatprep.mubr.f32.mxu0 0.0
  %v1728 = vand.u32 %v1526, 4294901760
  %v1729 = vsub.f32 %v1526, %v1728
  %v1730 = vand.u32 %v1729, 4294901760
  %v1731 = vsub.f32 %v1729, %v1730
  %v1732 = vand.u32 %v1731, 4294901760
  %1733 = vmatmul.mubr.f32.gmra.mrb[0].mxu0 %v1732
  %v1734 = vpop.f32.mrb[0].mxu0
  %v1735 = vadd.f32 0.0, %v1734
  %v1736 = vpop.f32.mrb[0].mxu0
  %1737 = vmatprep.mubr.f32.mxu0 0.0
  %v1738 = vand.u32 %v1529, 4294901760
  %v1739 = vsub.f32 %v1529, %v1738
  %v1740 = vand.u32 %v1739, 4294901760
  %v1741 = vsub.f32 %v1739, %v1740
  %v1742 = vand.u32 %v1741, 4294901760
  %1743 = vmatmul.mubr.f32.gmra.mrb[0].mxu0 %v1742
  %v1744 = vpop.f32.mrb[0].mxu0
  %v1745 = vadd.f32 0.0, %v1744
  %v1746 = vpop.f32.mrb[0].mxu0
  %1747 = vmatprep.mubr.f32.mxu0 0.0
  %v1748 = vand.u32 %v1532, 4294901760
  %v1749 = vsub.f32 %v1532, %v1748
  %v1750 = vand.u32 %v1749, 4294901760
  %v1751 = vsub.f32 %v1749, %v1750
  %v1752 = vand.u32 %v1751, 4294901760
  %1753 = vmatmul.mubr.f32.gmra.mrb[0].mxu0 %v1752
  %v1754 = vpop.f32.mrb[0].mxu0
  %v1755 = vadd.f32 0.0, %v1754
  %v1756 = vpop.f32.mrb[0].mxu0
  %1757 = vmatprep.mubr.f32.mxu0 0.0
  %v1758 = vand.u32 %v1535, 4294901760
  %v1759 = vsub.f32 %v1535, %v1758
  %v1760 = vand.u32 %v1759, 4294901760
  %v1761 = vsub.f32 %v1759, %v1760
  %v1762 = vand.u32 %v1761, 4294901760
  %1763 = vmatmul.mubr.f32.gmra.mrb[0].mxu0 %v1762
  %v1764 = vpop.f32.mrb[0].mxu0
  %v1765 = vadd.f32 0.0, %v1764
  %v1766 = vpop.f32.mrb[0].mxu0
  %1767 = vdwg.mxu0
  %1768 = vmatprep.subr.mxu0 0.0
  %v1769 = vand.u32 %v57, 4294901760
  %v1770 = vsub.f32 %v57, %v1769
  %v1771 = vand.u32 %v1770, 4294901760
  %v1772 = vsub.f32 %v1770, %v1771
  %v1773 = vand.u32 %v1772, 4294901760
  %1774 = vmatpush1.msra.mxu0 %v1773
  %1775 = vmatprep.subr.mxu0 0.0
  %v1776 = vand.u32 %v58, 4294901760
  %v1777 = vsub.f32 %v58, %v1776
  %v1778 = vand.u32 %v1777, 4294901760
  %v1779 = vsub.f32 %v1777, %v1778
  %v1780 = vand.u32 %v1779, 4294901760
  %1781 = vmatpush1.msra.mxu0 %v1780
  %1782 = vmatprep.subr.mxu0 0.0
  %v1783 = vand.u32 %v59, 4294901760
  %v1784 = vsub.f32 %v59, %v1783
  %v1785 = vand.u32 %v1784, 4294901760
  %v1786 = vsub.f32 %v1784, %v1785
  %v1787 = vand.u32 %v1786, 4294901760
  %1788 = vmatpush1.msra.mxu0 %v1787
  %1789 = vmatprep.subr.mxu0 0.0
  %v1790 = vand.u32 %v60, 4294901760
  %v1791 = vsub.f32 %v60, %v1790
  %v1792 = vand.u32 %v1791, 4294901760
  %v1793 = vsub.f32 %v1791, %v1792
  %v1794 = vand.u32 %v1793, 4294901760
  %1795 = vmatpush1.msra.mxu0 %v1794
  %1796 = vmatprep.subr.mxu0 0.0
  %v1797 = vand.u32 %v61, 4294901760
  %v1798 = vsub.f32 %v61, %v1797
  %v1799 = vand.u32 %v1798, 4294901760
  %v1800 = vsub.f32 %v1798, %v1799
  %v1801 = vand.u32 %v1800, 4294901760
  %1802 = vmatpush1.msra.mxu0 %v1801
  %1803 = vmatprep.subr.mxu0 0.0
  %v1804 = vand.u32 %v62, 4294901760
  %v1805 = vsub.f32 %v62, %v1804
  %v1806 = vand.u32 %v1805, 4294901760
  %v1807 = vsub.f32 %v1805, %v1806
  %v1808 = vand.u32 %v1807, 4294901760
  %1809 = vmatpush1.msra.mxu0 %v1808
  %1810 = vmatprep.subr.mxu0 0.0
  %1811 = vmatpush1.msra.mxu0 0.0
  %1812 = vmatprep.subr.mxu0 0.0
  %1813 = vmatpush1.msra.mxu0 0.0
  %1814 = vmatprep.subr.mxu0 0.0
  %1815 = vmatpush1.msra.mxu0 0.0
  %1816 = vmatprep.subr.mxu0 0.0
  %1817 = vmatpush1.msra.mxu0 0.0
  %1818 = vmatprep.subr.mxu0 0.0
  %1819 = vmatpush1.msra.mxu0 0.0
  %1820 = vmatprep.subr.mxu0 0.0
  %1821 = vmatpush1.msra.mxu0 0.0
  %1822 = vmatprep.subr.mxu0 0.0
  %1823 = vmatpush1.msra.mxu0 0.0
  %1824 = vmatprep.subr.mxu0 0.0
  %1825 = vmatpush1.msra.mxu0 0.0
  %1826 = vmatprep.subr.mxu0 0.0
  %1827 = vmatpush1.msra.mxu0 0.0
  %1828 = vmatprep.subr.mxu0 0.0
  %1829 = vmatpush1.msra.mxu0 0.0
  %1830 = vmatprep.subr.mxu0 0.0
  %1831 = vmatpush1.msra.mxu0 0.0
  %1832 = vmatprep.subr.mxu0 0.0
  %1833 = vmatpush1.msra.mxu0 0.0
  %1834 = vmatprep.subr.mxu0 0.0
  %1835 = vmatpush1.msra.mxu0 0.0
  %1836 = vmatprep.subr.mxu0 0.0
  %1837 = vmatpush1.msra.mxu0 0.0
  %1838 = vmatprep.subr.mxu0 0.0
  %1839 = vmatpush1.msra.mxu0 0.0
  %1840 = vmatprep.subr.mxu0 0.0
  %1841 = vmatpush1.msra.mxu0 0.0
  %1842 = vmatprep.subr.mxu0 0.0
  %1843 = vmatpush1.msra.mxu0 0.0
  %1844 = vmatprep.subr.mxu0 0.0
  %1845 = vmatpush1.msra.mxu0 0.0
  %1846 = vmatprep.subr.mxu0 0.0
  %1847 = vmatpush1.msra.mxu0 0.0
  %1848 = vmatprep.subr.mxu0 0.0
  %1849 = vmatpush1.msra.mxu0 0.0
  %1850 = vmatprep.subr.mxu0 0.0
  %1851 = vmatpush1.msra.mxu0 0.0
  %1852 = vmatprep.subr.mxu0 0.0
  %1853 = vmatpush1.msra.mxu0 0.0
  %1854 = vmatprep.subr.mxu0 0.0
  %1855 = vmatpush1.msra.mxu0 0.0
  %1856 = vmatprep.subr.mxu0 0.0
  %1857 = vmatpush1.msra.mxu0 0.0
  %1858 = vmatprep.subr.mxu0 0.0
  %1859 = vmatpush1.msra.mxu0 0.0
  %1860 = vmatprep.subr.mxu0 0.0
  %1861 = vmatpush1.msra.mxu0 0.0
  %1862 = vmatprep.mubr.f32.mxu0 0.0
  %v1863 = vand.u32 %v1490, 4294901760
  %1864 = vmatmul.mubr.f32.gmra.mrb[0].mxu0 %v1863
  %v1865 = vpop.f32.mrb[0].mxu0
  %v1866 = vadd.f32 %v1615, %v1865
  %v1867 = vpop.f32.mrb[0].mxu0
  %1868 = vmatprep.mubr.f32.mxu0 0.0
  %v1869 = vand.u32 %v1493, 4294901760
  %1870 = vmatmul.mubr.f32.gmra.mrb[0].mxu0 %v1869
  %v1871 = vpop.f32.mrb[0].mxu0
  %v1872 = vadd.f32 %v1625, %v1871
  %v1873 = vpop.f32.mrb[0].mxu0
  %1874 = vmatprep.mubr.f32.mxu0 0.0
  %v1875 = vand.u32 %v1496, 4294901760
  %1876 = vmatmul.mubr.f32.gmra.mrb[0].mxu0 %v1875
  %v1877 = vpop.f32.mrb[0].mxu0
  %v1878 = vadd.f32 %v1635, %v1877
  %v1879 = vpop.f32.mrb[0].mxu0
  %1880 = vmatprep.mubr.f32.mxu0 0.0
  %v1881 = vand.u32 %v1499, 4294901760
  %1882 = vmatmul.mubr.f32.gmra.mrb[0].mxu0 %v1881
  %v1883 = vpop.f32.mrb[0].mxu0
  %v1884 = vadd.f32 %v1645, %v1883
  %v1885 = vpop.f32.mrb[0].mxu0
  %1886 = vmatprep.mubr.f32.mxu0 0.0
  %v1887 = vand.u32 %v1502, 4294901760
  %1888 = vmatmul.mubr.f32.gmra.mrb[0].mxu0 %v1887
  %v1889 = vpop.f32.mrb[0].mxu0
  %v1890 = vadd.f32 %v1655, %v1889
  %v1891 = vpop.f32.mrb[0].mxu0
  %1892 = vmatprep.mubr.f32.mxu0 0.0
  %v1893 = vand.u32 %v1505, 4294901760
  %1894 = vmatmul.mubr.f32.gmra.mrb[0].mxu0 %v1893
  %v1895 = vpop.f32.mrb[0].mxu0
  %v1896 = vadd.f32 %v1665, %v1895
  %v1897 = vpop.f32.mrb[0].mxu0
  %1898 = vmatprep.mubr.f32.mxu0 0.0
  %v1899 = vand.u32 %v1508, 4294901760
  %1900 = vmatmul.mubr.f32.gmra.mrb[0].mxu0 %v1899
  %v1901 = vpop.f32.mrb[0].mxu0
  %v1902 = vadd.f32 %v1675, %v1901
  %v1903 = vpop.f32.mrb[0].mxu0
  %1904 = vmatprep.mubr.f32.mxu0 0.0
  %v1905 = vand.u32 %v1511, 4294901760
  %1906 = vmatmul.mubr.f32.gmra.mrb[0].mxu0 %v1905
  %v1907 = vpop.f32.mrb[0].mxu0
  %v1908 = vadd.f32 %v1685, %v1907
  %v1909 = vpop.f32.mrb[0].mxu0
  %1910 = vmatprep.mubr.f32.mxu0 0.0
  %v1911 = vand.u32 %v1514, 4294901760
  %1912 = vmatmul.mubr.f32.gmra.mrb[0].mxu0 %v1911
  %v1913 = vpop.f32.mrb[0].mxu0
  %v1914 = vadd.f32 %v1695, %v1913
  %v1915 = vpop.f32.mrb[0].mxu0
  %1916 = vmatprep.mubr.f32.mxu0 0.0
  %v1917 = vand.u32 %v1517, 4294901760
  %1918 = vmatmul.mubr.f32.gmra.mrb[0].mxu0 %v1917
  %v1919 = vpop.f32.mrb[0].mxu0
  %v1920 = vadd.f32 %v1705, %v1919
  %v1921 = vpop.f32.mrb[0].mxu0
  %1922 = vmatprep.mubr.f32.mxu0 0.0
  %v1923 = vand.u32 %v1520, 4294901760
  %1924 = vmatmul.mubr.f32.gmra.mrb[0].mxu0 %v1923
  %v1925 = vpop.f32.mrb[0].mxu0
  %v1926 = vadd.f32 %v1715, %v1925
  %v1927 = vpop.f32.mrb[0].mxu0
  %1928 = vmatprep.mubr.f32.mxu0 0.0
  %v1929 = vand.u32 %v1523, 4294901760
  %1930 = vmatmul.mubr.f32.gmra.mrb[0].mxu0 %v1929
  %v1931 = vpop.f32.mrb[0].mxu0
  %v1932 = vadd.f32 %v1725, %v1931
  %v1933 = vpop.f32.mrb[0].mxu0
  %1934 = vmatprep.mubr.f32.mxu0 0.0
  %v1935 = vand.u32 %v1526, 4294901760
  %1936 = vmatmul.mubr.f32.gmra.mrb[0].mxu0 %v1935
  %v1937 = vpop.f32.mrb[0].mxu0
  %v1938 = vadd.f32 %v1735, %v1937
  %v1939 = vpop.f32.mrb[0].mxu0
  %1940 = vmatprep.mubr.f32.mxu0 0.0
  %v1941 = vand.u32 %v1529, 4294901760
  %1942 = vmatmul.mubr.f32.gmra.mrb[0].mxu0 %v1941
  %v1943 = vpop.f32.mrb[0].mxu0
  %v1944 = vadd.f32 %v1745, %v1943
  %v1945 = vpop.f32.mrb[0].mxu0
  %1946 = vmatprep.mubr.f32.mxu0 0.0
  %v1947 = vand.u32 %v1532, 4294901760
  %1948 = vmatmul.mubr.f32.gmra.mrb[0].mxu0 %v1947
  %v1949 = vpop.f32.mrb[0].mxu0
  %v1950 = vadd.f32 %v1755, %v1949
  %v1951 = vpop.f32.mrb[0].mxu0
  %1952 = vmatprep.mubr.f32.mxu0 0.0
  %v1953 = vand.u32 %v1535, 4294901760
  %1954 = vmatmul.mubr.f32.gmra.mrb[0].mxu0 %v1953
  %v1955 = vpop.f32.mrb[0].mxu0
  %v1956 = vadd.f32 %v1765, %v1955
  %v1957 = vpop.f32.mrb[0].mxu0
  %1958 = vdwg.mxu0
  %1959 = vmatprep.subr.mxu0 0.0
  %v1960 = vand.u32 %v57, 4294901760
  %v1961 = vsub.f32 %v57, %v1960
  %1962 = vmatpush1.msra.mxu0 %v1961
  %1963 = vmatprep.subr.mxu0 0.0
  %v1964 = vand.u32 %v58, 4294901760
  %v1965 = vsub.f32 %v58, %v1964
  %1966 = vmatpush1.msra.mxu0 %v1965
  %1967 = vmatprep.subr.mxu0 0.0
  %v1968 = vand.u32 %v59, 4294901760
  %v1969 = vsub.f32 %v59, %v1968
  %1970 = vmatpush1.msra.mxu0 %v1969
  %1971 = vmatprep.subr.mxu0 0.0
  %v1972 = vand.u32 %v60, 4294901760
  %v1973 = vsub.f32 %v60, %v1972
  %1974 = vmatpush1.msra.mxu0 %v1973
  %1975 = vmatprep.subr.mxu0 0.0
  %v1976 = vand.u32 %v61, 4294901760
  %v1977 = vsub.f32 %v61, %v1976
  %1978 = vmatpush1.msra.mxu0 %v1977
  %1979 = vmatprep.subr.mxu0 0.0
  %v1980 = vand.u32 %v62, 4294901760
  %v1981 = vsub.f32 %v62, %v1980
  %1982 = vmatpush1.msra.mxu0 %v1981
  %1983 = vmatprep.subr.mxu0 0.0
  %1984 = vmatpush1.msra.mxu0 0.0
  %1985 = vmatprep.subr.mxu0 0.0
  %1986 = vmatpush1.msra.mxu0 0.0
  %1987 = vmatprep.subr.mxu0 0.0
  %1988 = vmatpush1.msra.mxu0 0.0
  %1989 = vmatprep.subr.mxu0 0.0
  %1990 = vmatpush1.msra.mxu0 0.0
  %1991 = vmatprep.subr.mxu0 0.0
  %1992 = vmatpush1.msra.mxu0 0.0
  %1993 = vmatprep.subr.mxu0 0.0
  %1994 = vmatpush1.msra.mxu0 0.0
  %1995 = vmatprep.subr.mxu0 0.0
  %1996 = vmatpush1.msra.mxu0 0.0
  %1997 = vmatprep.subr.mxu0 0.0
  %1998 = vmatpush1.msra.mxu0 0.0
  %1999 = vmatprep.subr.mxu0 0.0
  %2000 = vmatpush1.msra.mxu0 0.0
  %2001 = vmatprep.subr.mxu0 0.0
  %2002 = vmatpush1.msra.mxu0 0.0
  %2003 = vmatprep.subr.mxu0 0.0
  %2004 = vmatpush1.msra.mxu0 0.0
  %2005 = vmatprep.subr.mxu0 0.0
  %2006 = vmatpush1.msra.mxu0 0.0
  %2007 = vmatprep.subr.mxu0 0.0
  %2008 = vmatpush1.msra.mxu0 0.0
  %2009 = vmatprep.subr.mxu0 0.0
  %2010 = vmatpush1.msra.mxu0 0.0
  %2011 = vmatprep.subr.mxu0 0.0
  %2012 = vmatpush1.msra.mxu0 0.0
  %2013 = vmatprep.subr.mxu0 0.0
  %2014 = vmatpush1.msra.mxu0 0.0
  %2015 = vmatprep.subr.mxu0 0.0
  %2016 = vmatpush1.msra.mxu0 0.0
  %2017 = vmatprep.subr.mxu0 0.0
  %2018 = vmatpush1.msra.mxu0 0.0
  %2019 = vmatprep.subr.mxu0 0.0
  %2020 = vmatpush1.msra.mxu0 0.0
  %2021 = vmatprep.subr.mxu0 0.0
  %2022 = vmatpush1.msra.mxu0 0.0
  %2023 = vmatprep.subr.mxu0 0.0
  %2024 = vmatpush1.msra.mxu0 0.0
  %2025 = vmatprep.subr.mxu0 0.0
  %2026 = vmatpush1.msra.mxu0 0.0
  %2027 = vmatprep.subr.mxu0 0.0
  %2028 = vmatpush1.msra.mxu0 0.0
  %2029 = vmatprep.subr.mxu0 0.0
  %2030 = vmatpush1.msra.mxu0 0.0
  %2031 = vmatprep.subr.mxu0 0.0
  %2032 = vmatpush1.msra.mxu0 0.0
  %2033 = vmatprep.subr.mxu0 0.0
  %2034 = vmatpush1.msra.mxu0 0.0
  %2035 = vmatprep.mubr.f32.mxu0 0.0
  %v2036 = vand.u32 %v1490, 4294901760
  %v2037 = vsub.f32 %v1490, %v2036
  %2038 = vmatmul.mubr.f32.gmra.mrb[0].mxu0 %v2037
  %v2039 = vpop.f32.mrb[0].mxu0
  %v2040 = vadd.f32 %v1866, %v2039
  %v2041 = vpop.f32.mrb[0].mxu0
  %2042 = vmatprep.mubr.f32.mxu0 0.0
  %v2043 = vand.u32 %v1493, 4294901760
  %v2044 = vsub.f32 %v1493, %v2043
  %2045 = vmatmul.mubr.f32.gmra.mrb[0].mxu0 %v2044
  %v2046 = vpop.f32.mrb[0].mxu0
  %v2047 = vadd.f32 %v1872, %v2046
  %v2048 = vpop.f32.mrb[0].mxu0
  %2049 = vmatprep.mubr.f32.mxu0 0.0
  %v2050 = vand.u32 %v1496, 4294901760
  %v2051 = vsub.f32 %v1496, %v2050
  %2052 = vmatmul.mubr.f32.gmra.mrb[0].mxu0 %v2051
  %v2053 = vpop.f32.mrb[0].mxu0
  %v2054 = vadd.f32 %v1878, %v2053
  %v2055 = vpop.f32.mrb[0].mxu0
  %2056 = vmatprep.mubr.f32.mxu0 0.0
  %v2057 = vand.u32 %v1499, 4294901760
  %v2058 = vsub.f32 %v1499, %v2057
  %2059 = vmatmul.mubr.f32.gmra.mrb[0].mxu0 %v2058
  %v2060 = vpop.f32.mrb[0].mxu0
  %v2061 = vadd.f32 %v1884, %v2060
  %v2062 = vpop.f32.mrb[0].mxu0
  %2063 = vmatprep.mubr.f32.mxu0 0.0
  %v2064 = vand.u32 %v1502, 4294901760
  %v2065 = vsub.f32 %v1502, %v2064
  %2066 = vmatmul.mubr.f32.gmra.mrb[0].mxu0 %v2065
  %v2067 = vpop.f32.mrb[0].mxu0
  %v2068 = vadd.f32 %v1890, %v2067
  %v2069 = vpop.f32.mrb[0].mxu0
  %2070 = vmatprep.mubr.f32.mxu0 0.0
  %v2071 = vand.u32 %v1505, 4294901760
  %v2072 = vsub.f32 %v1505, %v2071
  %2073 = vmatmul.mubr.f32.gmra.mrb[0].mxu0 %v2072
  %v2074 = vpop.f32.mrb[0].mxu0
  %v2075 = vadd.f32 %v1896, %v2074
  %v2076 = vpop.f32.mrb[0].mxu0
  %2077 = vmatprep.mubr.f32.mxu0 0.0
  %v2078 = vand.u32 %v1508, 4294901760
  %v2079 = vsub.f32 %v1508, %v2078
  %2080 = vmatmul.mubr.f32.gmra.mrb[0].mxu0 %v2079
  %v2081 = vpop.f32.mrb[0].mxu0
  %v2082 = vadd.f32 %v1902, %v2081
  %v2083 = vpop.f32.mrb[0].mxu0
  %2084 = vmatprep.mubr.f32.mxu0 0.0
  %v2085 = vand.u32 %v1511, 4294901760
  %v2086 = vsub.f32 %v1511, %v2085
  %2087 = vmatmul.mubr.f32.gmra.mrb[0].mxu0 %v2086
  %v2088 = vpop.f32.mrb[0].mxu0
  %v2089 = vadd.f32 %v1908, %v2088
  %v2090 = vpop.f32.mrb[0].mxu0
  %2091 = vmatprep.mubr.f32.mxu0 0.0
  %v2092 = vand.u32 %v1514, 4294901760
  %v2093 = vsub.f32 %v1514, %v2092
  %2094 = vmatmul.mubr.f32.gmra.mrb[0].mxu0 %v2093
  %v2095 = vpop.f32.mrb[0].mxu0
  %v2096 = vadd.f32 %v1914, %v2095
  %v2097 = vpop.f32.mrb[0].mxu0
  %2098 = vmatprep.mubr.f32.mxu0 0.0
  %v2099 = vand.u32 %v1517, 4294901760
  %v2100 = vsub.f32 %v1517, %v2099
  %2101 = vmatmul.mubr.f32.gmra.mrb[0].mxu0 %v2100
  %v2102 = vpop.f32.mrb[0].mxu0
  %v2103 = vadd.f32 %v1920, %v2102
  %v2104 = vpop.f32.mrb[0].mxu0
  %2105 = vmatprep.mubr.f32.mxu0 0.0
  %v2106 = vand.u32 %v1520, 4294901760
  %v2107 = vsub.f32 %v1520, %v2106
  %2108 = vmatmul.mubr.f32.gmra.mrb[0].mxu0 %v2107
  %v2109 = vpop.f32.mrb[0].mxu0
  %v2110 = vadd.f32 %v1926, %v2109
  %v2111 = vpop.f32.mrb[0].mxu0
  %2112 = vmatprep.mubr.f32.mxu0 0.0
  %v2113 = vand.u32 %v1523, 4294901760
  %v2114 = vsub.f32 %v1523, %v2113
  %2115 = vmatmul.mubr.f32.gmra.mrb[0].mxu0 %v2114
  %v2116 = vpop.f32.mrb[0].mxu0
  %v2117 = vadd.f32 %v1932, %v2116
  %v2118 = vpop.f32.mrb[0].mxu0
  %2119 = vmatprep.mubr.f32.mxu0 0.0
  %v2120 = vand.u32 %v1526, 4294901760
  %v2121 = vsub.f32 %v1526, %v2120
  %2122 = vmatmul.mubr.f32.gmra.mrb[0].mxu0 %v2121
  %v2123 = vpop.f32.mrb[0].mxu0
  %v2124 = vadd.f32 %v1938, %v2123
  %v2125 = vpop.f32.mrb[0].mxu0
  %2126 = vmatprep.mubr.f32.mxu0 0.0
  %v2127 = vand.u32 %v1529, 4294901760
  %v2128 = vsub.f32 %v1529, %v2127
  %2129 = vmatmul.mubr.f32.gmra.mrb[0].mxu0 %v2128
  %v2130 = vpop.f32.mrb[0].mxu0
  %v2131 = vadd.f32 %v1944, %v2130
  %v2132 = vpop.f32.mrb[0].mxu0
  %2133 = vmatprep.mubr.f32.mxu0 0.0
  %v2134 = vand.u32 %v1532, 4294901760
  %v2135 = vsub.f32 %v1532, %v2134
  %2136 = vmatmul.mubr.f32.gmra.mrb[0].mxu0 %v2135
  %v2137 = vpop.f32.mrb[0].mxu0
  %v2138 = vadd.f32 %v1950, %v2137
  %v2139 = vpop.f32.mrb[0].mxu0
  %2140 = vmatprep.mubr.f32.mxu0 0.0
  %v2141 = vand.u32 %v1535, 4294901760
  %v2142 = vsub.f32 %v1535, %v2141
  %2143 = vmatmul.mubr.f32.gmra.mrb[0].mxu0 %v2142
  %v2144 = vpop.f32.mrb[0].mxu0
  %v2145 = vadd.f32 %v1956, %v2144
  %v2146 = vpop.f32.mrb[0].mxu0
  %2147 = vdwg.mxu0
  %2148 = vmatprep.subr.mxu0 0.0
  %v2149 = vand.u32 %v57, 4294901760
  %2150 = vmatpush1.msra.mxu0 %v2149
  %2151 = vmatprep.subr.mxu0 0.0
  %v2152 = vand.u32 %v58, 4294901760
  %2153 = vmatpush1.msra.mxu0 %v2152
  %2154 = vmatprep.subr.mxu0 0.0
  %v2155 = vand.u32 %v59, 4294901760
  %2156 = vmatpush1.msra.mxu0 %v2155
  %2157 = vmatprep.subr.mxu0 0.0
  %v2158 = vand.u32 %v60, 4294901760
  %2159 = vmatpush1.msra.mxu0 %v2158
  %2160 = vmatprep.subr.mxu0 0.0
  %v2161 = vand.u32 %v61, 4294901760
  %2162 = vmatpush1.msra.mxu0 %v2161
  %2163 = vmatprep.subr.mxu0 0.0
  %v2164 = vand.u32 %v62, 4294901760
  %2165 = vmatpush1.msra.mxu0 %v2164
  %2166 = vmatprep.subr.mxu0 0.0
  %2167 = vmatpush1.msra.mxu0 0.0
  %2168 = vmatprep.subr.mxu0 0.0
  %2169 = vmatpush1.msra.mxu0 0.0
  %2170 = vmatprep.subr.mxu0 0.0
  %2171 = vmatpush1.msra.mxu0 0.0
  %2172 = vmatprep.subr.mxu0 0.0
  %2173 = vmatpush1.msra.mxu0 0.0
  %2174 = vmatprep.subr.mxu0 0.0
  %2175 = vmatpush1.msra.mxu0 0.0
  %2176 = vmatprep.subr.mxu0 0.0
  %2177 = vmatpush1.msra.mxu0 0.0
  %2178 = vmatprep.subr.mxu0 0.0
  %2179 = vmatpush1.msra.mxu0 0.0
  %2180 = vmatprep.subr.mxu0 0.0
  %2181 = vmatpush1.msra.mxu0 0.0
  %2182 = vmatprep.subr.mxu0 0.0
  %2183 = vmatpush1.msra.mxu0 0.0
  %2184 = vmatprep.subr.mxu0 0.0
  %2185 = vmatpush1.msra.mxu0 0.0
  %2186 = vmatprep.subr.mxu0 0.0
  %2187 = vmatpush1.msra.mxu0 0.0
  %2188 = vmatprep.subr.mxu0 0.0
  %2189 = vmatpush1.msra.mxu0 0.0
  %2190 = vmatprep.subr.mxu0 0.0
  %2191 = vmatpush1.msra.mxu0 0.0
  %2192 = vmatprep.subr.mxu0 0.0
  %2193 = vmatpush1.msra.mxu0 0.0
  %2194 = vmatprep.subr.mxu0 0.0
  %2195 = vmatpush1.msra.mxu0 0.0
  %2196 = vmatprep.subr.mxu0 0.0
  %2197 = vmatpush1.msra.mxu0 0.0
  %2198 = vmatprep.subr.mxu0 0.0
  %2199 = vmatpush1.msra.mxu0 0.0
  %2200 = vmatprep.subr.mxu0 0.0
  %2201 = vmatpush1.msra.mxu0 0.0
  %2202 = vmatprep.subr.mxu0 0.0
  %2203 = vmatpush1.msra.mxu0 0.0
  %2204 = vmatprep.subr.mxu0 0.0
  %2205 = vmatpush1.msra.mxu0 0.0
  %2206 = vmatprep.subr.mxu0 0.0
  %2207 = vmatpush1.msra.mxu0 0.0
  %2208 = vmatprep.subr.mxu0 0.0
  %2209 = vmatpush1.msra.mxu0 0.0
  %2210 = vmatprep.subr.mxu0 0.0
  %2211 = vmatpush1.msra.mxu0 0.0
  %2212 = vmatprep.subr.mxu0 0.0
  %2213 = vmatpush1.msra.mxu0 0.0
  %2214 = vmatprep.subr.mxu0 0.0
  %2215 = vmatpush1.msra.mxu0 0.0
  %2216 = vmatprep.subr.mxu0 0.0
  %2217 = vmatpush1.msra.mxu0 0.0
  %2218 = vmatprep.mubr.f32.mxu0 0.0
  %v2219 = vand.u32 %v1490, 4294901760
  %v2220 = vsub.f32 %v1490, %v2219
  %v2221 = vand.u32 %v2220, 4294901760
  %2222 = vmatmul.mubr.f32.gmra.mrb[0].mxu0 %v2221
  %v2223 = vpop.f32.mrb[0].mxu0
  %v2224 = vadd.f32 %v2040, %v2223
  %v2225 = vpop.f32.mrb[0].mxu0
  %2226 = vmatprep.mubr.f32.mxu0 0.0
  %v2227 = vand.u32 %v1493, 4294901760
  %v2228 = vsub.f32 %v1493, %v2227
  %v2229 = vand.u32 %v2228, 4294901760
  %2230 = vmatmul.mubr.f32.gmra.mrb[0].mxu0 %v2229
  %v2231 = vpop.f32.mrb[0].mxu0
  %v2232 = vadd.f32 %v2047, %v2231
  %v2233 = vpop.f32.mrb[0].mxu0
  %2234 = vmatprep.mubr.f32.mxu0 0.0
  %v2235 = vand.u32 %v1496, 4294901760
  %v2236 = vsub.f32 %v1496, %v2235
  %v2237 = vand.u32 %v2236, 4294901760
  %2238 = vmatmul.mubr.f32.gmra.mrb[0].mxu0 %v2237
  %v2239 = vpop.f32.mrb[0].mxu0
  %v2240 = vadd.f32 %v2054, %v2239
  %v2241 = vpop.f32.mrb[0].mxu0
  %2242 = vmatprep.mubr.f32.mxu0 0.0
  %v2243 = vand.u32 %v1499, 4294901760
  %v2244 = vsub.f32 %v1499, %v2243
  %v2245 = vand.u32 %v2244, 4294901760
  %2246 = vmatmul.mubr.f32.gmra.mrb[0].mxu0 %v2245
  %v2247 = vpop.f32.mrb[0].mxu0
  %v2248 = vadd.f32 %v2061, %v2247
  %v2249 = vpop.f32.mrb[0].mxu0
  %2250 = vmatprep.mubr.f32.mxu0 0.0
  %v2251 = vand.u32 %v1502, 4294901760
  %v2252 = vsub.f32 %v1502, %v2251
  %v2253 = vand.u32 %v2252, 4294901760
  %2254 = vmatmul.mubr.f32.gmra.mrb[0].mxu0 %v2253
  %v2255 = vpop.f32.mrb[0].mxu0
  %v2256 = vadd.f32 %v2068, %v2255
  %v2257 = vpop.f32.mrb[0].mxu0
  %2258 = vmatprep.mubr.f32.mxu0 0.0
  %v2259 = vand.u32 %v1505, 4294901760
  %v2260 = vsub.f32 %v1505, %v2259
  %v2261 = vand.u32 %v2260, 4294901760
  %2262 = vmatmul.mubr.f32.gmra.mrb[0].mxu0 %v2261
  %v2263 = vpop.f32.mrb[0].mxu0
  %v2264 = vadd.f32 %v2075, %v2263
  %v2265 = vpop.f32.mrb[0].mxu0
  %2266 = vmatprep.mubr.f32.mxu0 0.0
  %v2267 = vand.u32 %v1508, 4294901760
  %v2268 = vsub.f32 %v1508, %v2267
  %v2269 = vand.u32 %v2268, 4294901760
  %2270 = vmatmul.mubr.f32.gmra.mrb[0].mxu0 %v2269
  %v2271 = vpop.f32.mrb[0].mxu0
  %v2272 = vadd.f32 %v2082, %v2271
  %v2273 = vpop.f32.mrb[0].mxu0
  %2274 = vmatprep.mubr.f32.mxu0 0.0
  %v2275 = vand.u32 %v1511, 4294901760
  %v2276 = vsub.f32 %v1511, %v2275
  %v2277 = vand.u32 %v2276, 4294901760
  %2278 = vmatmul.mubr.f32.gmra.mrb[0].mxu0 %v2277
  %v2279 = vpop.f32.mrb[0].mxu0
  %v2280 = vadd.f32 %v2089, %v2279
  %v2281 = vpop.f32.mrb[0].mxu0
  %2282 = vmatprep.mubr.f32.mxu0 0.0
  %v2283 = vand.u32 %v1514, 4294901760
  %v2284 = vsub.f32 %v1514, %v2283
  %v2285 = vand.u32 %v2284, 4294901760
  %2286 = vmatmul.mubr.f32.gmra.mrb[0].mxu0 %v2285
  %v2287 = vpop.f32.mrb[0].mxu0
  %v2288 = vadd.f32 %v2096, %v2287
  %v2289 = vpop.f32.mrb[0].mxu0
  %2290 = vmatprep.mubr.f32.mxu0 0.0
  %v2291 = vand.u32 %v1517, 4294901760
  %v2292 = vsub.f32 %v1517, %v2291
  %v2293 = vand.u32 %v2292, 4294901760
  %2294 = vmatmul.mubr.f32.gmra.mrb[0].mxu0 %v2293
  %v2295 = vpop.f32.mrb[0].mxu0
  %v2296 = vadd.f32 %v2103, %v2295
  %v2297 = vpop.f32.mrb[0].mxu0
  %2298 = vmatprep.mubr.f32.mxu0 0.0
  %v2299 = vand.u32 %v1520, 4294901760
  %v2300 = vsub.f32 %v1520, %v2299
  %v2301 = vand.u32 %v2300, 4294901760
  %2302 = vmatmul.mubr.f32.gmra.mrb[0].mxu0 %v2301
  %v2303 = vpop.f32.mrb[0].mxu0
  %v2304 = vadd.f32 %v2110, %v2303
  %v2305 = vpop.f32.mrb[0].mxu0
  %2306 = vmatprep.mubr.f32.mxu0 0.0
  %v2307 = vand.u32 %v1523, 4294901760
  %v2308 = vsub.f32 %v1523, %v2307
  %v2309 = vand.u32 %v2308, 4294901760
  %2310 = vmatmul.mubr.f32.gmra.mrb[0].mxu0 %v2309
  %v2311 = vpop.f32.mrb[0].mxu0
  %v2312 = vadd.f32 %v2117, %v2311
  %v2313 = vpop.f32.mrb[0].mxu0
  %2314 = vmatprep.mubr.f32.mxu0 0.0
  %v2315 = vand.u32 %v1526, 4294901760
  %v2316 = vsub.f32 %v1526, %v2315
  %v2317 = vand.u32 %v2316, 4294901760
  %2318 = vmatmul.mubr.f32.gmra.mrb[0].mxu0 %v2317
  %v2319 = vpop.f32.mrb[0].mxu0
  %v2320 = vadd.f32 %v2124, %v2319
  %v2321 = vpop.f32.mrb[0].mxu0
  %2322 = vmatprep.mubr.f32.mxu0 0.0
  %v2323 = vand.u32 %v1529, 4294901760
  %v2324 = vsub.f32 %v1529, %v2323
  %v2325 = vand.u32 %v2324, 4294901760
  %2326 = vmatmul.mubr.f32.gmra.mrb[0].mxu0 %v2325
  %v2327 = vpop.f32.mrb[0].mxu0
  %v2328 = vadd.f32 %v2131, %v2327
  %v2329 = vpop.f32.mrb[0].mxu0
  %2330 = vmatprep.mubr.f32.mxu0 0.0
  %v2331 = vand.u32 %v1532, 4294901760
  %v2332 = vsub.f32 %v1532, %v2331
  %v2333 = vand.u32 %v2332, 4294901760
  %2334 = vmatmul.mubr.f32.gmra.mrb[0].mxu0 %v2333
  %v2335 = vpop.f32.mrb[0].mxu0
  %v2336 = vadd.f32 %v2138, %v2335
  %v2337 = vpop.f32.mrb[0].mxu0
  %2338 = vmatprep.mubr.f32.mxu0 0.0
  %v2339 = vand.u32 %v1535, 4294901760
  %v2340 = vsub.f32 %v1535, %v2339
  %v2341 = vand.u32 %v2340, 4294901760
  %2342 = vmatmul.mubr.f32.gmra.mrb[0].mxu0 %v2341
  %v2343 = vpop.f32.mrb[0].mxu0
  %v2344 = vadd.f32 %v2145, %v2343
  %v2345 = vpop.f32.mrb[0].mxu0
  %2346 = vdwg.mxu0
  %2347 = vmatprep.subr.mxu0 0.0
  %v2348 = vand.u32 %v57, 4294901760
  %v2349 = vsub.f32 %v57, %v2348
  %v2350 = vand.u32 %v2349, 4294901760
  %2351 = vmatpush1.msra.mxu0 %v2350
  %2352 = vmatprep.subr.mxu0 0.0
  %v2353 = vand.u32 %v58, 4294901760
  %v2354 = vsub.f32 %v58, %v2353
  %v2355 = vand.u32 %v2354, 4294901760
  %2356 = vmatpush1.msra.mxu0 %v2355
  %2357 = vmatprep.subr.mxu0 0.0
  %v2358 = vand.u32 %v59, 4294901760
  %v2359 = vsub.f32 %v59, %v2358
  %v2360 = vand.u32 %v2359, 4294901760
  %2361 = vmatpush1.msra.mxu0 %v2360
  %2362 = vmatprep.subr.mxu0 0.0
  %v2363 = vand.u32 %v60, 4294901760
  %v2364 = vsub.f32 %v60, %v2363
  %v2365 = vand.u32 %v2364, 4294901760
  %2366 = vmatpush1.msra.mxu0 %v2365
  %2367 = vmatprep.subr.mxu0 0.0
  %v2368 = vand.u32 %v61, 4294901760
  %v2369 = vsub.f32 %v61, %v2368
  %v2370 = vand.u32 %v2369, 4294901760
  %2371 = vmatpush1.msra.mxu0 %v2370
  %2372 = vmatprep.subr.mxu0 0.0
  %v2373 = vand.u32 %v62, 4294901760
  %v2374 = vsub.f32 %v62, %v2373
  %v2375 = vand.u32 %v2374, 4294901760
  %2376 = vmatpush1.msra.mxu0 %v2375
  %2377 = vmatprep.subr.mxu0 0.0
  %2378 = vmatpush1.msra.mxu0 0.0
  %2379 = vmatprep.subr.mxu0 0.0
  %2380 = vmatpush1.msra.mxu0 0.0
  %2381 = vmatprep.subr.mxu0 0.0
  %2382 = vmatpush1.msra.mxu0 0.0
  %2383 = vmatprep.subr.mxu0 0.0
  %2384 = vmatpush1.msra.mxu0 0.0
  %2385 = vmatprep.subr.mxu0 0.0
  %2386 = vmatpush1.msra.mxu0 0.0
  %2387 = vmatprep.subr.mxu0 0.0
  %2388 = vmatpush1.msra.mxu0 0.0
  %2389 = vmatprep.subr.mxu0 0.0
  %2390 = vmatpush1.msra.mxu0 0.0
  %2391 = vmatprep.subr.mxu0 0.0
  %2392 = vmatpush1.msra.mxu0 0.0
  %2393 = vmatprep.subr.mxu0 0.0
  %2394 = vmatpush1.msra.mxu0 0.0
  %2395 = vmatprep.subr.mxu0 0.0
  %2396 = vmatpush1.msra.mxu0 0.0
  %2397 = vmatprep.subr.mxu0 0.0
  %2398 = vmatpush1.msra.mxu0 0.0
  %2399 = vmatprep.subr.mxu0 0.0
  %2400 = vmatpush1.msra.mxu0 0.0
  %2401 = vmatprep.subr.mxu0 0.0
  %2402 = vmatpush1.msra.mxu0 0.0
  %2403 = vmatprep.subr.mxu0 0.0
  %2404 = vmatpush1.msra.mxu0 0.0
  %2405 = vmatprep.subr.mxu0 0.0
  %2406 = vmatpush1.msra.mxu0 0.0
  %2407 = vmatprep.subr.mxu0 0.0
  %2408 = vmatpush1.msra.mxu0 0.0
  %2409 = vmatprep.subr.mxu0 0.0
  %2410 = vmatpush1.msra.mxu0 0.0
  %2411 = vmatprep.subr.mxu0 0.0
  %2412 = vmatpush1.msra.mxu0 0.0
  %2413 = vmatprep.subr.mxu0 0.0
  %2414 = vmatpush1.msra.mxu0 0.0
  %2415 = vmatprep.subr.mxu0 0.0
  %2416 = vmatpush1.msra.mxu0 0.0
  %2417 = vmatprep.subr.mxu0 0.0
  %2418 = vmatpush1.msra.mxu0 0.0
  %2419 = vmatprep.subr.mxu0 0.0
  %2420 = vmatpush1.msra.mxu0 0.0
  %2421 = vmatprep.subr.mxu0 0.0
  %2422 = vmatpush1.msra.mxu0 0.0
  %2423 = vmatprep.subr.mxu0 0.0
  %2424 = vmatpush1.msra.mxu0 0.0
  %2425 = vmatprep.subr.mxu0 0.0
  %2426 = vmatpush1.msra.mxu0 0.0
  %2427 = vmatprep.subr.mxu0 0.0
  %2428 = vmatpush1.msra.mxu0 0.0
  %2429 = vmatprep.mubr.f32.mxu0 0.0
  %v2430 = vand.u32 %v1490, 4294901760
  %2431 = vmatmul.mubr.f32.gmra.mrb[0].mxu0 %v2430
  %v2432 = vpop.f32.mrb[0].mxu0
  %v2433 = vadd.f32 %v2224, %v2432
  %v2434 = vpop.f32.mrb[0].mxu0
  %2435 = vmatprep.mubr.f32.mxu0 0.0
  %v2436 = vand.u32 %v1493, 4294901760
  %2437 = vmatmul.mubr.f32.gmra.mrb[0].mxu0 %v2436
  %v2438 = vpop.f32.mrb[0].mxu0
  %v2439 = vadd.f32 %v2232, %v2438
  %v2440 = vpop.f32.mrb[0].mxu0
  %2441 = vmatprep.mubr.f32.mxu0 0.0
  %v2442 = vand.u32 %v1496, 4294901760
  %2443 = vmatmul.mubr.f32.gmra.mrb[0].mxu0 %v2442
  %v2444 = vpop.f32.mrb[0].mxu0
  %v2445 = vadd.f32 %v2240, %v2444
  %v2446 = vpop.f32.mrb[0].mxu0
  %2447 = vmatprep.mubr.f32.mxu0 0.0
  %v2448 = vand.u32 %v1499, 4294901760
  %2449 = vmatmul.mubr.f32.gmra.mrb[0].mxu0 %v2448
  %v2450 = vpop.f32.mrb[0].mxu0
  %v2451 = vadd.f32 %v2248, %v2450
  %v2452 = vpop.f32.mrb[0].mxu0
  %2453 = vmatprep.mubr.f32.mxu0 0.0
  %v2454 = vand.u32 %v1502, 4294901760
  %2455 = vmatmul.mubr.f32.gmra.mrb[0].mxu0 %v2454
  %v2456 = vpop.f32.mrb[0].mxu0
  %v2457 = vadd.f32 %v2256, %v2456
  %v2458 = vpop.f32.mrb[0].mxu0
  %2459 = vmatprep.mubr.f32.mxu0 0.0
  %v2460 = vand.u32 %v1505, 4294901760
  %2461 = vmatmul.mubr.f32.gmra.mrb[0].mxu0 %v2460
  %v2462 = vpop.f32.mrb[0].mxu0
  %v2463 = vadd.f32 %v2264, %v2462
  %v2464 = vpop.f32.mrb[0].mxu0
  %2465 = vmatprep.mubr.f32.mxu0 0.0
  %v2466 = vand.u32 %v1508, 4294901760
  %2467 = vmatmul.mubr.f32.gmra.mrb[0].mxu0 %v2466
  %v2468 = vpop.f32.mrb[0].mxu0
  %v2469 = vadd.f32 %v2272, %v2468
  %v2470 = vpop.f32.mrb[0].mxu0
  %2471 = vmatprep.mubr.f32.mxu0 0.0
  %v2472 = vand.u32 %v1511, 4294901760
  %2473 = vmatmul.mubr.f32.gmra.mrb[0].mxu0 %v2472
  %v2474 = vpop.f32.mrb[0].mxu0
  %v2475 = vadd.f32 %v2280, %v2474
  %v2476 = vpop.f32.mrb[0].mxu0
  %2477 = vmatprep.mubr.f32.mxu0 0.0
  %v2478 = vand.u32 %v1514, 4294901760
  %2479 = vmatmul.mubr.f32.gmra.mrb[0].mxu0 %v2478
  %v2480 = vpop.f32.mrb[0].mxu0
  %v2481 = vadd.f32 %v2288, %v2480
  %v2482 = vpop.f32.mrb[0].mxu0
  %2483 = vmatprep.mubr.f32.mxu0 0.0
  %v2484 = vand.u32 %v1517, 4294901760
  %2485 = vmatmul.mubr.f32.gmra.mrb[0].mxu0 %v2484
  %v2486 = vpop.f32.mrb[0].mxu0
  %v2487 = vadd.f32 %v2296, %v2486
  %v2488 = vpop.f32.mrb[0].mxu0
  %2489 = vmatprep.mubr.f32.mxu0 0.0
  %v2490 = vand.u32 %v1520, 4294901760
  %2491 = vmatmul.mubr.f32.gmra.mrb[0].mxu0 %v2490
  %v2492 = vpop.f32.mrb[0].mxu0
  %v2493 = vadd.f32 %v2304, %v2492
  %v2494 = vpop.f32.mrb[0].mxu0
  %2495 = vmatprep.mubr.f32.mxu0 0.0
  %v2496 = vand.u32 %v1523, 4294901760
  %2497 = vmatmul.mubr.f32.gmra.mrb[0].mxu0 %v2496
  %v2498 = vpop.f32.mrb[0].mxu0
  %v2499 = vadd.f32 %v2312, %v2498
  %v2500 = vpop.f32.mrb[0].mxu0
  %2501 = vmatprep.mubr.f32.mxu0 0.0
  %v2502 = vand.u32 %v1526, 4294901760
  %2503 = vmatmul.mubr.f32.gmra.mrb[0].mxu0 %v2502
  %v2504 = vpop.f32.mrb[0].mxu0
  %v2505 = vadd.f32 %v2320, %v2504
  %v2506 = vpop.f32.mrb[0].mxu0
  %2507 = vmatprep.mubr.f32.mxu0 0.0
  %v2508 = vand.u32 %v1529, 4294901760
  %2509 = vmatmul.mubr.f32.gmra.mrb[0].mxu0 %v2508
  %v2510 = vpop.f32.mrb[0].mxu0
  %v2511 = vadd.f32 %v2328, %v2510
  %v2512 = vpop.f32.mrb[0].mxu0
  %2513 = vmatprep.mubr.f32.mxu0 0.0
  %v2514 = vand.u32 %v1532, 4294901760
  %2515 = vmatmul.mubr.f32.gmra.mrb[0].mxu0 %v2514
  %v2516 = vpop.f32.mrb[0].mxu0
  %v2517 = vadd.f32 %v2336, %v2516
  %v2518 = vpop.f32.mrb[0].mxu0
  %2519 = vmatprep.mubr.f32.mxu0 0.0
  %v2520 = vand.u32 %v1535, 4294901760
  %2521 = vmatmul.mubr.f32.gmra.mrb[0].mxu0 %v2520
  %v2522 = vpop.f32.mrb[0].mxu0
  %v2523 = vadd.f32 %v2344, %v2522
  %v2524 = vpop.f32.mrb[0].mxu0
  %2525 = vdwg.mxu0
  %2526 = vmatprep.subr.mxu0 0.0
  %v2527 = vand.u32 %v57, 4294901760
  %2528 = vmatpush1.msra.mxu0 %v2527
  %2529 = vmatprep.subr.mxu0 0.0
  %v2530 = vand.u32 %v58, 4294901760
  %2531 = vmatpush1.msra.mxu0 %v2530
  %2532 = vmatprep.subr.mxu0 0.0
  %v2533 = vand.u32 %v59, 4294901760
  %2534 = vmatpush1.msra.mxu0 %v2533
  %2535 = vmatprep.subr.mxu0 0.0
  %v2536 = vand.u32 %v60, 4294901760
  %2537 = vmatpush1.msra.mxu0 %v2536
  %2538 = vmatprep.subr.mxu0 0.0
  %v2539 = vand.u32 %v61, 4294901760
  %2540 = vmatpush1.msra.mxu0 %v2539
  %2541 = vmatprep.subr.mxu0 0.0
  %v2542 = vand.u32 %v62, 4294901760
  %2543 = vmatpush1.msra.mxu0 %v2542
  %2544 = vmatprep.subr.mxu0 0.0
  %2545 = vmatpush1.msra.mxu0 0.0
  %2546 = vmatprep.subr.mxu0 0.0
  %2547 = vmatpush1.msra.mxu0 0.0
  %2548 = vmatprep.subr.mxu0 0.0
  %2549 = vmatpush1.msra.mxu0 0.0
  %2550 = vmatprep.subr.mxu0 0.0
  %2551 = vmatpush1.msra.mxu0 0.0
  %2552 = vmatprep.subr.mxu0 0.0
  %2553 = vmatpush1.msra.mxu0 0.0
  %2554 = vmatprep.subr.mxu0 0.0
  %2555 = vmatpush1.msra.mxu0 0.0
  %2556 = vmatprep.subr.mxu0 0.0
  %2557 = vmatpush1.msra.mxu0 0.0
  %2558 = vmatprep.subr.mxu0 0.0
  %2559 = vmatpush1.msra.mxu0 0.0
  %2560 = vmatprep.subr.mxu0 0.0
  %2561 = vmatpush1.msra.mxu0 0.0
  %2562 = vmatprep.subr.mxu0 0.0
  %2563 = vmatpush1.msra.mxu0 0.0
  %2564 = vmatprep.subr.mxu0 0.0
  %2565 = vmatpush1.msra.mxu0 0.0
  %2566 = vmatprep.subr.mxu0 0.0
  %2567 = vmatpush1.msra.mxu0 0.0
  %2568 = vmatprep.subr.mxu0 0.0
  %2569 = vmatpush1.msra.mxu0 0.0
  %2570 = vmatprep.subr.mxu0 0.0
  %2571 = vmatpush1.msra.mxu0 0.0
  %2572 = vmatprep.subr.mxu0 0.0
  %2573 = vmatpush1.msra.mxu0 0.0
  %2574 = vmatprep.subr.mxu0 0.0
  %2575 = vmatpush1.msra.mxu0 0.0
  %2576 = vmatprep.subr.mxu0 0.0
  %2577 = vmatpush1.msra.mxu0 0.0
  %2578 = vmatprep.subr.mxu0 0.0
  %2579 = vmatpush1.msra.mxu0 0.0
  %2580 = vmatprep.subr.mxu0 0.0
  %2581 = vmatpush1.msra.mxu0 0.0
  %2582 = vmatprep.subr.mxu0 0.0
  %2583 = vmatpush1.msra.mxu0 0.0
  %2584 = vmatprep.subr.mxu0 0.0
  %2585 = vmatpush1.msra.mxu0 0.0
  %2586 = vmatprep.subr.mxu0 0.0
  %2587 = vmatpush1.msra.mxu0 0.0
  %2588 = vmatprep.subr.mxu0 0.0
  %2589 = vmatpush1.msra.mxu0 0.0
  %2590 = vmatprep.subr.mxu0 0.0
  %2591 = vmatpush1.msra.mxu0 0.0
  %2592 = vmatprep.subr.mxu0 0.0
  %2593 = vmatpush1.msra.mxu0 0.0
  %2594 = vmatprep.subr.mxu0 0.0
  %2595 = vmatpush1.msra.mxu0 0.0
  %2596 = vmatprep.mubr.f32.mxu0 0.0
  %v2597 = vand.u32 %v1490, 4294901760
  %2598 = vmatmul.mubr.f32.gmra.mrb[0].mxu0 %v2597
  %v2599 = vpop.f32.mrb[0].mxu0
  %v2600 = vadd.f32 %v2433, %v2599
  %v2601 = vpop.f32.mrb[0].mxu0
  %2602 = vmatprep.mubr.f32.mxu0 0.0
  %v2603 = vand.u32 %v1493, 4294901760
  %2604 = vmatmul.mubr.f32.gmra.mrb[0].mxu0 %v2603
  %v2605 = vpop.f32.mrb[0].mxu0
  %v2606 = vadd.f32 %v2439, %v2605
  %v2607 = vpop.f32.mrb[0].mxu0
  %2608 = vmatprep.mubr.f32.mxu0 0.0
  %v2609 = vand.u32 %v1496, 4294901760
  %2610 = vmatmul.mubr.f32.gmra.mrb[0].mxu0 %v2609
  %v2611 = vpop.f32.mrb[0].mxu0
  %v2612 = vadd.f32 %v2445, %v2611
  %v2613 = vpop.f32.mrb[0].mxu0
  %2614 = vmatprep.mubr.f32.mxu0 0.0
  %v2615 = vand.u32 %v1499, 4294901760
  %2616 = vmatmul.mubr.f32.gmra.mrb[0].mxu0 %v2615
  %v2617 = vpop.f32.mrb[0].mxu0
  %v2618 = vadd.f32 %v2451, %v2617
  %v2619 = vpop.f32.mrb[0].mxu0
  %2620 = vmatprep.mubr.f32.mxu0 0.0
  %v2621 = vand.u32 %v1502, 4294901760
  %2622 = vmatmul.mubr.f32.gmra.mrb[0].mxu0 %v2621
  %v2623 = vpop.f32.mrb[0].mxu0
  %v2624 = vadd.f32 %v2457, %v2623
  %v2625 = vpop.f32.mrb[0].mxu0
  %2626 = vmatprep.mubr.f32.mxu0 0.0
  %v2627 = vand.u32 %v1505, 4294901760
  %2628 = vmatmul.mubr.f32.gmra.mrb[0].mxu0 %v2627
  %v2629 = vpop.f32.mrb[0].mxu0
  %v2630 = vadd.f32 %v2463, %v2629
  %v2631 = vpop.f32.mrb[0].mxu0
  %2632 = vmatprep.mubr.f32.mxu0 0.0
  %v2633 = vand.u32 %v1508, 4294901760
  %2634 = vmatmul.mubr.f32.gmra.mrb[0].mxu0 %v2633
  %v2635 = vpop.f32.mrb[0].mxu0
  %v2636 = vadd.f32 %v2469, %v2635
  %v2637 = vpop.f32.mrb[0].mxu0
  %2638 = vmatprep.mubr.f32.mxu0 0.0
  %v2639 = vand.u32 %v1511, 4294901760
  %2640 = vmatmul.mubr.f32.gmra.mrb[0].mxu0 %v2639
  %v2641 = vpop.f32.mrb[0].mxu0
  %v2642 = vadd.f32 %v2475, %v2641
  %v2643 = vpop.f32.mrb[0].mxu0
  %2644 = vmatprep.mubr.f32.mxu0 0.0
  %v2645 = vand.u32 %v1514, 4294901760
  %2646 = vmatmul.mubr.f32.gmra.mrb[0].mxu0 %v2645
  %v2647 = vpop.f32.mrb[0].mxu0
  %v2648 = vadd.f32 %v2481, %v2647
  %v2649 = vpop.f32.mrb[0].mxu0
  %2650 = vmatprep.mubr.f32.mxu0 0.0
  %v2651 = vand.u32 %v1517, 4294901760
  %2652 = vmatmul.mubr.f32.gmra.mrb[0].mxu0 %v2651
  %v2653 = vpop.f32.mrb[0].mxu0
  %v2654 = vadd.f32 %v2487, %v2653
  %v2655 = vpop.f32.mrb[0].mxu0
  %2656 = vmatprep.mubr.f32.mxu0 0.0
  %v2657 = vand.u32 %v1520, 4294901760
  %2658 = vmatmul.mubr.f32.gmra.mrb[0].mxu0 %v2657
  %v2659 = vpop.f32.mrb[0].mxu0
  %v2660 = vadd.f32 %v2493, %v2659
  %v2661 = vpop.f32.mrb[0].mxu0
  %2662 = vmatprep.mubr.f32.mxu0 0.0
  %v2663 = vand.u32 %v1523, 4294901760
  %2664 = vmatmul.mubr.f32.gmra.mrb[0].mxu0 %v2663
  %v2665 = vpop.f32.mrb[0].mxu0
  %v2666 = vadd.f32 %v2499, %v2665
  %v2667 = vpop.f32.mrb[0].mxu0
  %2668 = vmatprep.mubr.f32.mxu0 0.0
  %v2669 = vand.u32 %v1526, 4294901760
  %2670 = vmatmul.mubr.f32.gmra.mrb[0].mxu0 %v2669
  %v2671 = vpop.f32.mrb[0].mxu0
  %v2672 = vadd.f32 %v2505, %v2671
  %v2673 = vpop.f32.mrb[0].mxu0
  %2674 = vmatprep.mubr.f32.mxu0 0.0
  %v2675 = vand.u32 %v1529, 4294901760
  %2676 = vmatmul.mubr.f32.gmra.mrb[0].mxu0 %v2675
  %v2677 = vpop.f32.mrb[0].mxu0
  %v2678 = vadd.f32 %v2511, %v2677
  %v2679 = vpop.f32.mrb[0].mxu0
  %2680 = vmatprep.mubr.f32.mxu0 0.0
  %v2681 = vand.u32 %v1532, 4294901760
  %2682 = vmatmul.mubr.f32.gmra.mrb[0].mxu0 %v2681
  %v2683 = vpop.f32.mrb[0].mxu0
  %v2684 = vadd.f32 %v2517, %v2683
  %v2685 = vpop.f32.mrb[0].mxu0
  %2686 = vmatprep.mubr.f32.mxu0 0.0
  %v2687 = vand.u32 %v1535, 4294901760
  %2688 = vmatmul.mubr.f32.gmra.mrb[0].mxu0 %v2687
  %v2689 = vpop.f32.mrb[0].mxu0
  %v2690 = vadd.f32 %v2523, %v2689
  %v2691 = vpop.f32.mrb[0].mxu0
  %2692 = vdwg.mxu0
  %v2693 = vmul.f32 %v1395, %v2600
  %v2694 = vmul.f32 %v1401, %v2606
  %v2695 = vmul.f32 %v1407, %v2612
  %v2696 = vmul.f32 %v1413, %v2618
  %v2697 = vmul.f32 %v1419, %v2624
  %v2698 = vmul.f32 %v1425, %v2630
  %v2699 = vmul.f32 %v1431, %v2636
  %v2700 = vmul.f32 %v1437, %v2642
  %v2701 = vmul.f32 %v1443, %v2648
  %v2702 = vmul.f32 %v1449, %v2654
  %v2703 = vmul.f32 %v1455, %v2660
  %v2704 = vmul.f32 %v1461, %v2666
  %v2705 = vmul.f32 %v1467, %v2672
  %v2706 = vmul.f32 %v1473, %v2678
  %v2707 = vmul.f32 %v1479, %v2684
  %v2708 = vmul.f32 %v1485, %v2690
  %2709 = vadd.xlane.f32.xlu0 %v2693
  %v2710 = vpop.xlane.xlu0 %2709
  %2711 = vadd.xlane.f32.xlu0 %v2694
  %v2712 = vpop.xlane.xlu0 %2711
  %2713 = vadd.xlane.f32.xlu0 %v2695
  %v2714 = vpop.xlane.xlu0 %2713
  %2715 = vadd.xlane.f32.xlu0 %v2696
  %v2716 = vpop.xlane.xlu0 %2715
  %2717 = vadd.xlane.f32.xlu0 %v2697
  %v2718 = vpop.xlane.xlu0 %2717
  %2719 = vadd.xlane.f32.xlu0 %v2698
  %v2720 = vpop.xlane.xlu0 %2719
  %2721 = vadd.xlane.f32.xlu0 %v2699
  %v2722 = vpop.xlane.xlu0 %2721
  %2723 = vadd.xlane.f32.xlu0 %v2700
  %v2724 = vpop.xlane.xlu0 %2723
  %2725 = vadd.xlane.f32.xlu0 %v2701
  %v2726 = vpop.xlane.xlu0 %2725
  %2727 = vadd.xlane.f32.xlu0 %v2702
  %v2728 = vpop.xlane.xlu0 %2727
  %2729 = vadd.xlane.f32.xlu0 %v2703
  %v2730 = vpop.xlane.xlu0 %2729
  %2731 = vadd.xlane.f32.xlu0 %v2704
  %v2732 = vpop.xlane.xlu0 %2731
  %2733 = vadd.xlane.f32.xlu0 %v2705
  %v2734 = vpop.xlane.xlu0 %2733
  %2735 = vadd.xlane.f32.xlu0 %v2706
  %v2736 = vpop.xlane.xlu0 %2735
  %2737 = vadd.xlane.f32.xlu0 %v2707
  %v2738 = vpop.xlane.xlu0 %2737
  %2739 = vadd.xlane.f32.xlu0 %v2708
  %v2740 = vpop.xlane.xlu0 %2739
  %vm2741 = vcmask 7168
  %2742 = vst.msk [vmem:[%s4] sm:$0xff] %vm2741, %v2710
  %2743 = vst.msk [vmem:[%s4 + $0x8] sm:$0xff] %vm2741, %v2712
  %2744 = vst.msk [vmem:[%s4 + $0x10] sm:$0xff] %vm2741, %v2714
  %2745 = vst.msk [vmem:[%s4 + $0x18] sm:$0xff] %vm2741, %v2716
  %2746 = vst.msk [vmem:[%s4 + $0x20] sm:$0xff] %vm2741, %v2718
  %2747 = vst.msk [vmem:[%s4 + $0x28] sm:$0xff] %vm2741, %v2720
  %2748 = vst.msk [vmem:[%s4 + $0x30] sm:$0xff] %vm2741, %v2722
  %2749 = vst.msk [vmem:[%s4 + $0x38] sm:$0xff] %vm2741, %v2724
  %2750 = vst.msk [vmem:[%s4 + $0x40] sm:$0xff] %vm2741, %v2726
  %2751 = vst.msk [vmem:[%s4 + $0x48] sm:$0xff] %vm2741, %v2728
  %2752 = vst.msk [vmem:[%s4 + $0x50] sm:$0xff] %vm2741, %v2730
  %2753 = vst.msk [vmem:[%s4 + $0x58] sm:$0xff] %vm2741, %v2732
  %2754 = vst.msk [vmem:[%s4 + $0x60] sm:$0xff] %vm2741, %v2734
  %2755 = vst.msk [vmem:[%s4 + $0x68] sm:$0xff] %vm2741, %v2736
  %2756 = vst.msk [vmem:[%s4 + $0x70] sm:$0xff] %vm2741, %v2738
  %2757 = vst.msk [vmem:[%s4 + $0x78] sm:$0xff] %vm2741, %v2740
  // Predicated region
  $region18: #{tpu_custom_call.1} parent=0 // pred_check
    _
  $region19: #{tpu_custom_call.1} parent=0 // pred_check_branch
    %2759 = sbr.rel (0) target = $region21
  $region20: #{tpu_custom_call.1} parent=0 // pred_region
    _
  $region21: #{tpu_custom_call.1} parent=0 // pred_fallthru
    _
  // Predicated region
  $region22: #{tpu_custom_call.1} parent=0 // pred_check
    _
  $region23: #{tpu_custom_call.1} parent=0 // pred_check_branch
    %2761 = sbr.rel (0) target = $region25
  $region24: #{tpu_custom_call.1} parent=0 // pred_region
    _
  $region25: #{tpu_custom_call.1} parent=0 // pred_fallthru
    _

// kernel: tpu_custom_call.1
$region0: #{tpu_custom_call.1}
  #allocation0 [shape = 'u32[]', space=smem, size = 0x4, offset = 0x4, fixed_abs, tag = 'smem constant byte address 0x4 - core index']
  #allocation1 [shape = 'u32[144,128]{1,0:T(1,128)}', space=vmem, size = 0x12000, scoped, tag = 'internal scratch']
  %s0 = inlined_call_operand.vmem [shape: s32[128,1], index: 0, kind: input, shape index: {}]
  %s1 = inlined_call_operand.vmem [shape: s32[128,1], index: 1, kind: input, shape index: {}]
  %s2 = inlined_call_operand.vmem [shape: f32[64,128], index: 2, kind: input, shape index: {}]
  %s3 = inlined_call_operand.vmem [shape: f32[48,128], index: 3, kind: input, shape index: {}]
  %s4 = inlined_call_operand.vmem [shape: f32[128,1], index: 4, kind: output, shape index: {}]
  %s5 = sld [smem:[#allocation0]]
  $region26: #{tpu_custom_call.1} parent=0
    _
  %s7 = ssub.s32 1, %s5
  %s8 = scalar_select 0, %s7, %s5
  // Predicated region
  $region2: #{tpu_custom_call.1} parent=0 // pred_check
    _
  $region3: #{tpu_custom_call.1} parent=0 // pred_check_branch
    %10 = sbr.rel (0) target = $region5
  $region4: #{tpu_custom_call.1} parent=0 // pred_region
    _
  $region5: #{tpu_custom_call.1} parent=0 // pred_fallthru
    _
  // Predicated region
  $region6: #{tpu_custom_call.1} parent=0 // pred_check
    _
  $region7: #{tpu_custom_call.1} parent=0 // pred_check_branch
    %12 = sbr.rel (0) target = $region9
  $region8: #{tpu_custom_call.1} parent=0 // pred_region
    _
  $region9: #{tpu_custom_call.1} parent=0 // pred_fallthru
    _
  // Predicated region
  $region10: #{tpu_custom_call.1} parent=0 // pred_check
    _
  $region11: #{tpu_custom_call.1} parent=0 // pred_check_branch
    %14 = sbr.rel (0) target = $region13
  $region12: #{tpu_custom_call.1} parent=0 // pred_region
    _
  $region13: #{tpu_custom_call.1} parent=0 // pred_fallthru
    _
  // Predicated region
  $region14: #{tpu_custom_call.1} parent=0 // pred_check
    _
  $region15: #{tpu_custom_call.1} parent=0 // pred_check_branch
    %16 = sbr.rel (0) target = $region17
  $region16: #{tpu_custom_call.1} parent=0 // pred_region
    _
  $region17: #{tpu_custom_call.1} parent=0 // pred_fallthru
    _
  %v17 = vld [vmem:[%s0] sm:$0xff]
  %v18 = vld [vmem:[%s0 + $0x8] sm:$0xff]
  %v19 = vld [vmem:[%s0 + $0x10] sm:$0xff]
  %v20 = vld [vmem:[%s0 + $0x18] sm:$0xff]
  %v21 = vld [vmem:[%s0 + $0x20] sm:$0xff]
  %v22 = vld [vmem:[%s0 + $0x28] sm:$0xff]
  %v23 = vld [vmem:[%s0 + $0x30] sm:$0xff]
  %v24 = vld [vmem:[%s0 + $0x38] sm:$0xff]
  %v25 = vld [vmem:[%s0 + $0x40] sm:$0xff]
  %v26 = vld [vmem:[%s0 + $0x48] sm:$0xff]
  %v27 = vld [vmem:[%s0 + $0x50] sm:$0xff]
  %v28 = vld [vmem:[%s0 + $0x58] sm:$0xff]
  %v29 = vld [vmem:[%s0 + $0x60] sm:$0xff]
  %v30 = vld [vmem:[%s0 + $0x68] sm:$0xff]
  %v31 = vld [vmem:[%s0 + $0x70] sm:$0xff]
  %v32 = vld [vmem:[%s0 + $0x78] sm:$0xff]
  %v33 = vld [vmem:[%s1] sm:$0xff]
  %v34 = vld [vmem:[%s1 + $0x8] sm:$0xff]
  %v35 = vld [vmem:[%s1 + $0x10] sm:$0xff]
  %v36 = vld [vmem:[%s1 + $0x18] sm:$0xff]
  %v37 = vld [vmem:[%s1 + $0x20] sm:$0xff]
  %v38 = vld [vmem:[%s1 + $0x28] sm:$0xff]
  %v39 = vld [vmem:[%s1 + $0x30] sm:$0xff]
  %v40 = vld [vmem:[%s1 + $0x38] sm:$0xff]
  %v41 = vld [vmem:[%s1 + $0x40] sm:$0xff]
  %v42 = vld [vmem:[%s1 + $0x48] sm:$0xff]
  %v43 = vld [vmem:[%s1 + $0x50] sm:$0xff]
  %v44 = vld [vmem:[%s1 + $0x58] sm:$0xff]
  %v45 = vld [vmem:[%s1 + $0x60] sm:$0xff]
  %v46 = vld [vmem:[%s1 + $0x68] sm:$0xff]
  %v47 = vld [vmem:[%s1 + $0x70] sm:$0xff]
  %v48 = vld [vmem:[%s1 + $0x78] sm:$0xff]
  %v49 = vld [vmem:[%s2] sm:$0xff]
  %v50 = vld [vmem:[%s2 + $0x8] sm:$0xff]
  %v51 = vld [vmem:[%s2 + $0x10] sm:$0xff]
  %v52 = vld [vmem:[%s2 + $0x18] sm:$0xff]
  %v53 = vld [vmem:[%s2 + $0x20] sm:$0xff]
  %v54 = vld [vmem:[%s2 + $0x28] sm:$0xff]
  %v55 = vld [vmem:[%s2 + $0x30] sm:$0xff]
  %v56 = vld [vmem:[%s2 + $0x38] sm:$0xff]
  %v57 = vld [vmem:[%s3] sm:$0xff]
  %v58 = vld [vmem:[%s3 + $0x8] sm:$0xff]
  %v59 = vld [vmem:[%s3 + $0x10] sm:$0xff]
  %v60 = vld [vmem:[%s3 + $0x18] sm:$0xff]
  %v61 = vld [vmem:[%s3 + $0x20] sm:$0xff]
  %v62 = vld [vmem:[%s3 + $0x28] sm:$0xff]
  %v63 = vlaneseq
  %v64 = vand.u32 %v63, 127
  %65 = vset.pattern.permute.xlu0 0
  %66 = vperm.xlu0 %65, %v17
  %v67 = vpop.permute.xlu0 %66
  %68 = vset.pattern.permute.xlu0 0
  %69 = vperm.xlu0 %68, %v18
  %v70 = vpop.permute.xlu0 %69
  %71 = vset.pattern.permute.xlu0 0
  %72 = vperm.xlu0 %71, %v19
  %v73 = vpop.permute.xlu0 %72
  %74 = vset.pattern.permute.xlu0 0
  %75 = vperm.xlu0 %74, %v20
  %v76 = vpop.permute.xlu0 %75
  %77 = vset.pattern.permute.xlu0 0
  %78 = vperm.xlu0 %77, %v21
  %v79 = vpop.permute.xlu0 %78
  %80 = vset.pattern.permute.xlu0 0
  %81 = vperm.xlu0 %80, %v22
  %v82 = vpop.permute.xlu0 %81
  %83 = vset.pattern.permute.xlu0 0
  %84 = vperm.xlu0 %83, %v23
  %v85 = vpop.permute.xlu0 %84
  %86 = vset.pattern.permute.xlu0 0
  %87 = vperm.xlu0 %86, %v24
  %v88 = vpop.permute.xlu0 %87
  %89 = vset.pattern.permute.xlu0 0
  %90 = vperm.xlu0 %89, %v25
  %v91 = vpop.permute.xlu0 %90
  %92 = vset.pattern.permute.xlu0 0
  %93 = vperm.xlu0 %92, %v26
  %v94 = vpop.permute.xlu0 %93
  %95 = vset.pattern.permute.xlu0 0
  %96 = vperm.xlu0 %95, %v27
  %v97 = vpop.permute.xlu0 %96
  %98 = vset.pattern.permute.xlu0 0
  %99 = vperm.xlu0 %98, %v28
  %v100 = vpop.permute.xlu0 %99
  %101 = vset.pattern.permute.xlu0 0
  %102 = vperm.xlu0 %101, %v29
  %v103 = vpop.permute.xlu0 %102
  %104 = vset.pattern.permute.xlu0 0
  %105 = vperm.xlu0 %104, %v30
  %v106 = vpop.permute.xlu0 %105
  %107 = vset.pattern.permute.xlu0 0
  %108 = vperm.xlu0 %107, %v31
  %v109 = vpop.permute.xlu0 %108
  %110 = vset.pattern.permute.xlu0 0
  %111 = vperm.xlu0 %110, %v32
  %v112 = vpop.permute.xlu0 %111
  %vm113 = vcmp.eq.s32.totalorder %v67, %v64
  %vm114 = vcmp.eq.s32.totalorder %v70, %v64
  %vm115 = vcmp.eq.s32.totalorder %v73, %v64
  %vm116 = vcmp.eq.s32.totalorder %v76, %v64
  %vm117 = vcmp.eq.s32.totalorder %v79, %v64
  %vm118 = vcmp.eq.s32.totalorder %v82, %v64
  %vm119 = vcmp.eq.s32.totalorder %v85, %v64
  %vm120 = vcmp.eq.s32.totalorder %v88, %v64
  %vm121 = vcmp.eq.s32.totalorder %v91, %v64
  %vm122 = vcmp.eq.s32.totalorder %v94, %v64
  %vm123 = vcmp.eq.s32.totalorder %v97, %v64
  %vm124 = vcmp.eq.s32.totalorder %v100, %v64
  %vm125 = vcmp.eq.s32.totalorder %v103, %v64
  %vm126 = vcmp.eq.s32.totalorder %v106, %v64
  %vm127 = vcmp.eq.s32.totalorder %v109, %v64
  %vm128 = vcmp.eq.s32.totalorder %v112, %v64
  %v129 = vsel %vm113, 1, 0
  %v130 = vsel %vm114, 1, 0
  %v131 = vsel %vm115, 1, 0
  %v132 = vsel %vm116, 1, 0
  %v133 = vsel %vm117, 1, 0
  %v134 = vsel %vm118, 1, 0
  %v135 = vsel %vm119, 1, 0
  %v136 = vsel %vm120, 1, 0
  %v137 = vsel %vm121, 1, 0
  %v138 = vsel %vm122, 1, 0
  %v139 = vsel %vm123, 1, 0
  %v140 = vsel %vm124, 1, 0
  %v141 = vsel %vm125, 1, 0
  %v142 = vsel %vm126, 1, 0
  %v143 = vsel %vm127, 1, 0
  %v144 = vsel %vm128, 1, 0
  %v145 = vcvt.s32.f32 %v129
  %v146 = vcvt.s32.f32 %v130
  %v147 = vcvt.s32.f32 %v131
  %v148 = vcvt.s32.f32 %v132
  %v149 = vcvt.s32.f32 %v133
  %v150 = vcvt.s32.f32 %v134
  %v151 = vcvt.s32.f32 %v135
  %v152 = vcvt.s32.f32 %v136
  %v153 = vcvt.s32.f32 %v137
  %v154 = vcvt.s32.f32 %v138
  %v155 = vcvt.s32.f32 %v139
  %v156 = vcvt.s32.f32 %v140
  %v157 = vcvt.s32.f32 %v141
  %v158 = vcvt.s32.f32 %v142
  %v159 = vcvt.s32.f32 %v143
  %v160 = vcvt.s32.f32 %v144
  %161 = vset.pattern.permute.xlu0 0
  %162 = vperm.xlu0 %161, %v33
  %v163 = vpop.permute.xlu0 %162
  %164 = vset.pattern.permute.xlu0 0
  %165 = vperm.xlu0 %164, %v34
  %v166 = vpop.permute.xlu0 %165
  %167 = vset.pattern.permute.xlu0 0
  %168 = vperm.xlu0 %167, %v35
  %v169 = vpop.permute.xlu0 %168
  %170 = vset.pattern.permute.xlu0 0
  %171 = vperm.xlu0 %170, %v36
  %v172 = vpop.permute.xlu0 %171
  %173 = vset.pattern.permute.xlu0 0
  %174 = vperm.xlu0 %173, %v37
  %v175 = vpop.permute.xlu0 %174
  %176 = vset.pattern.permute.xlu0 0
  %177 = vperm.xlu0 %176, %v38
  %v178 = vpop.permute.xlu0 %177
  %179 = vset.pattern.permute.xlu0 0
  %180 = vperm.xlu0 %179, %v39
  %v181 = vpop.permute.xlu0 %180
  %182 = vset.pattern.permute.xlu0 0
  %183 = vperm.xlu0 %182, %v40
  %v184 = vpop.permute.xlu0 %183
  %185 = vset.pattern.permute.xlu0 0
  %186 = vperm.xlu0 %185, %v41
  %v187 = vpop.permute.xlu0 %186
  %188 = vset.pattern.permute.xlu0 0
  %189 = vperm.xlu0 %188, %v42
  %v190 = vpop.permute.xlu0 %189
  %191 = vset.pattern.permute.xlu0 0
  %192 = vperm.xlu0 %191, %v43
  %v193 = vpop.permute.xlu0 %192
  %194 = vset.pattern.permute.xlu0 0
  %195 = vperm.xlu0 %194, %v44
  %v196 = vpop.permute.xlu0 %195
  %197 = vset.pattern.permute.xlu0 0
  %198 = vperm.xlu0 %197, %v45
  %v199 = vpop.permute.xlu0 %198
  %200 = vset.pattern.permute.xlu0 0
  %201 = vperm.xlu0 %200, %v46
  %v202 = vpop.permute.xlu0 %201
  %203 = vset.pattern.permute.xlu0 0
  %204 = vperm.xlu0 %203, %v47
  %v205 = vpop.permute.xlu0 %204
  %206 = vset.pattern.permute.xlu0 0
  %207 = vperm.xlu0 %206, %v48
  %v208 = vpop.permute.xlu0 %207
  %vm209 = vcmp.eq.s32.totalorder %v163, %v64
  %vm210 = vcmp.eq.s32.totalorder %v166, %v64
  %vm211 = vcmp.eq.s32.totalorder %v169, %v64
  %vm212 = vcmp.eq.s32.totalorder %v172, %v64
  %vm213 = vcmp.eq.s32.totalorder %v175, %v64
  %vm214 = vcmp.eq.s32.totalorder %v178, %v64
  %vm215 = vcmp.eq.s32.totalorder %v181, %v64
  %vm216 = vcmp.eq.s32.totalorder %v184, %v64
  %vm217 = vcmp.eq.s32.totalorder %v187, %v64
  %vm218 = vcmp.eq.s32.totalorder %v190, %v64
  %vm219 = vcmp.eq.s32.totalorder %v193, %v64
  %vm220 = vcmp.eq.s32.totalorder %v196, %v64
  %vm221 = vcmp.eq.s32.totalorder %v199, %v64
  %vm222 = vcmp.eq.s32.totalorder %v202, %v64
  %vm223 = vcmp.eq.s32.totalorder %v205, %v64
  %vm224 = vcmp.eq.s32.totalorder %v208, %v64
  %v225 = vsel %vm209, 1, 0
  %v226 = vsel %vm210, 1, 0
  %v227 = vsel %vm211, 1, 0
  %v228 = vsel %vm212, 1, 0
  %v229 = vsel %vm213, 1, 0
  %v230 = vsel %vm214, 1, 0
  %v231 = vsel %vm215, 1, 0
  %v232 = vsel %vm216, 1, 0
  %v233 = vsel %vm217, 1, 0
  %v234 = vsel %vm218, 1, 0
  %v235 = vsel %vm219, 1, 0
  %v236 = vsel %vm220, 1, 0
  %v237 = vsel %vm221, 1, 0
  %v238 = vsel %vm222, 1, 0
  %v239 = vsel %vm223, 1, 0
  %v240 = vsel %vm224, 1, 0
  %v241 = vcvt.s32.f32 %v225
  %v242 = vcvt.s32.f32 %v226
  %v243 = vcvt.s32.f32 %v227
  %v244 = vcvt.s32.f32 %v228
  %v245 = vcvt.s32.f32 %v229
  %v246 = vcvt.s32.f32 %v230
  %v247 = vcvt.s32.f32 %v231
  %v248 = vcvt.s32.f32 %v232
  %v249 = vcvt.s32.f32 %v233
  %v250 = vcvt.s32.f32 %v234
  %v251 = vcvt.s32.f32 %v235
  %v252 = vcvt.s32.f32 %v236
  %v253 = vcvt.s32.f32 %v237
  %v254 = vcvt.s32.f32 %v238
  %v255 = vcvt.s32.f32 %v239
  %v256 = vcvt.s32.f32 %v240
  %vm257 = vcmask 523264
  %v259 = vsel %vm257, %v145, 0
  %v262 = vsel %vm257, %v146, 0
  %v265 = vsel %vm257, %v147, 0
  %v268 = vsel %vm257, %v148, 0
  %v271 = vsel %vm257, %v149, 0
  %v274 = vsel %vm257, %v150, 0
  %v277 = vsel %vm257, %v151, 0
  %v280 = vsel %vm257, %v152, 0
  %v283 = vsel %vm257, %v153, 0
  %v286 = vsel %vm257, %v154, 0
  %v289 = vsel %vm257, %v155, 0
  %v292 = vsel %vm257, %v156, 0
  %v295 = vsel %vm257, %v157, 0
  %v298 = vsel %vm257, %v158, 0
  %v301 = vsel %vm257, %v159, 0
  %v304 = vsel %vm257, %v160, 0
  %306 = vmatprep.subr.mxu0 0.0
  %307 = vmatpush1.msra.mxu0 %v49
  %308 = vmatprep.subr.mxu0 0.0
  %309 = vmatpush1.msra.mxu0 %v50
  %310 = vmatprep.subr.mxu0 0.0
  %311 = vmatpush1.msra.mxu0 %v51
  %312 = vmatprep.subr.mxu0 0.0
  %313 = vmatpush1.msra.mxu0 %v52
  %314 = vmatprep.subr.mxu0 0.0
  %315 = vmatpush1.msra.mxu0 %v53
  %316 = vmatprep.subr.mxu0 0.0
  %317 = vmatpush1.msra.mxu0 %v54
  %318 = vmatprep.subr.mxu0 0.0
  %319 = vmatpush1.msra.mxu0 %v55
  %320 = vmatprep.subr.mxu0 0.0
  %321 = vmatpush1.msra.mxu0 %v56
  %322 = vmatprep.subr.mxu0 0.0
  %323 = vmatpush1.msra.mxu0 0.0
  %324 = vmatprep.subr.mxu0 0.0
  %325 = vmatpush1.msra.mxu0 0.0
  %326 = vmatprep.subr.mxu0 0.0
  %327 = vmatpush1.msra.mxu0 0.0
  %328 = vmatprep.subr.mxu0 0.0
  %329 = vmatpush1.msra.mxu0 0.0
  %330 = vmatprep.subr.mxu0 0.0
  %331 = vmatpush1.msra.mxu0 0.0
  %332 = vmatprep.subr.mxu0 0.0
  %333 = vmatpush1.msra.mxu0 0.0
  %334 = vmatprep.subr.mxu0 0.0
  %335 = vmatpush1.msra.mxu0 0.0
  %336 = vmatprep.subr.mxu0 0.0
  %337 = vmatpush1.msra.mxu0 0.0
  %338 = vmatprep.subr.mxu0 0.0
  %339 = vmatpush1.msra.mxu0 0.0
  %340 = vmatprep.subr.mxu0 0.0
  %341 = vmatpush1.msra.mxu0 0.0
  %342 = vmatprep.subr.mxu0 0.0
  %343 = vmatpush1.msra.mxu0 0.0
  %344 = vmatprep.subr.mxu0 0.0
  %345 = vmatpush1.msra.mxu0 0.0
  %346 = vmatprep.subr.mxu0 0.0
  %347 = vmatpush1.msra.mxu0 0.0
  %348 = vmatprep.subr.mxu0 0.0
  %349 = vmatpush1.msra.mxu0 0.0
  %350 = vmatprep.subr.mxu0 0.0
  %351 = vmatpush1.msra.mxu0 0.0
  %352 = vmatprep.subr.mxu0 0.0
  %353 = vmatpush1.msra.mxu0 0.0
  %354 = vmatprep.subr.mxu0 0.0
  %355 = vmatpush1.msra.mxu0 0.0
  %356 = vmatprep.subr.mxu0 0.0
  %357 = vmatpush1.msra.mxu0 0.0
  %358 = vmatprep.subr.mxu0 0.0
  %359 = vmatpush1.msra.mxu0 0.0
  %360 = vmatprep.subr.mxu0 0.0
  %361 = vmatpush1.msra.mxu0 0.0
  %362 = vmatprep.subr.mxu0 0.0
  %363 = vmatpush1.msra.mxu0 0.0
  %364 = vmatprep.subr.mxu0 0.0
  %365 = vmatpush1.msra.mxu0 0.0
  %366 = vmatprep.subr.mxu0 0.0
  %367 = vmatpush1.msra.mxu0 0.0
  %368 = vmatprep.subr.mxu0 0.0
  %369 = vmatpush1.msra.mxu0 0.0
  %370 = vmatprep.mubr.f32.mxu0 0.0
  %371 = vmatmul.mubr.f32.gmra.mrb[0].mxu0 %v259
  %v372 = vpop.f32.mrb[0].mxu0
  %v373 = vadd.f32 0.0, %v372
  %v374 = vpop.f32.mrb[0].mxu0
  %375 = vmatprep.mubr.f32.mxu0 0.0
  %376 = vmatmul.mubr.f32.gmra.mrb[0].mxu0 %v262
  %v377 = vpop.f32.mrb[0].mxu0
  %v378 = vadd.f32 0.0, %v377
  %v379 = vpop.f32.mrb[0].mxu0
  %380 = vmatprep.mubr.f32.mxu0 0.0
  %381 = vmatmul.mubr.f32.gmra.mrb[0].mxu0 %v265
  %v382 = vpop.f32.mrb[0].mxu0
  %v383 = vadd.f32 0.0, %v382
  %v384 = vpop.f32.mrb[0].mxu0
  %385 = vmatprep.mubr.f32.mxu0 0.0
  %386 = vmatmul.mubr.f32.gmra.mrb[0].mxu0 %v268
  %v387 = vpop.f32.mrb[0].mxu0
  %v388 = vadd.f32 0.0, %v387
  %v389 = vpop.f32.mrb[0].mxu0
  %390 = vmatprep.mubr.f32.mxu0 0.0
  %391 = vmatmul.mubr.f32.gmra.mrb[0].mxu0 %v271
  %v392 = vpop.f32.mrb[0].mxu0
  %v393 = vadd.f32 0.0, %v392
  %v394 = vpop.f32.mrb[0].mxu0
  %395 = vmatprep.mubr.f32.mxu0 0.0
  %396 = vmatmul.mubr.f32.gmra.mrb[0].mxu0 %v274
  %v397 = vpop.f32.mrb[0].mxu0
  %v398 = vadd.f32 0.0, %v397
  %v399 = vpop.f32.mrb[0].mxu0
  %400 = vmatprep.mubr.f32.mxu0 0.0
  %401 = vmatmul.mubr.f32.gmra.mrb[0].mxu0 %v277
  %v402 = vpop.f32.mrb[0].mxu0
  %v403 = vadd.f32 0.0, %v402
  %v404 = vpop.f32.mrb[0].mxu0
  %405 = vmatprep.mubr.f32.mxu0 0.0
  %406 = vmatmul.mubr.f32.gmra.mrb[0].mxu0 %v280
  %v407 = vpop.f32.mrb[0].mxu0
  %v408 = vadd.f32 0.0, %v407
  %v409 = vpop.f32.mrb[0].mxu0
  %410 = vmatprep.mubr.f32.mxu0 0.0
  %411 = vmatmul.mubr.f32.gmra.mrb[0].mxu0 %v283
  %v412 = vpop.f32.mrb[0].mxu0
  %v413 = vadd.f32 0.0, %v412
  %v414 = vpop.f32.mrb[0].mxu0
  %415 = vmatprep.mubr.f32.mxu0 0.0
  %416 = vmatmul.mubr.f32.gmra.mrb[0].mxu0 %v286
  %v417 = vpop.f32.mrb[0].mxu0
  %v418 = vadd.f32 0.0, %v417
  %v419 = vpop.f32.mrb[0].mxu0
  %420 = vmatprep.mubr.f32.mxu0 0.0
  %421 = vmatmul.mubr.f32.gmra.mrb[0].mxu0 %v289
  %v422 = vpop.f32.mrb[0].mxu0
  %v423 = vadd.f32 0.0, %v422
  %v424 = vpop.f32.mrb[0].mxu0
  %425 = vmatprep.mubr.f32.mxu0 0.0
  %426 = vmatmul.mubr.f32.gmra.mrb[0].mxu0 %v292
  %v427 = vpop.f32.mrb[0].mxu0
  %v428 = vadd.f32 0.0, %v427
  %v429 = vpop.f32.mrb[0].mxu0
  %430 = vmatprep.mubr.f32.mxu0 0.0
  %431 = vmatmul.mubr.f32.gmra.mrb[0].mxu0 %v295
  %v432 = vpop.f32.mrb[0].mxu0
  %v433 = vadd.f32 0.0, %v432
  %v434 = vpop.f32.mrb[0].mxu0
  %435 = vmatprep.mubr.f32.mxu0 0.0
  %436 = vmatmul.mubr.f32.gmra.mrb[0].mxu0 %v298
  %v437 = vpop.f32.mrb[0].mxu0
  %v438 = vadd.f32 0.0, %v437
  %v439 = vpop.f32.mrb[0].mxu0
  %440 = vmatprep.mubr.f32.mxu0 0.0
  %441 = vmatmul.mubr.f32.gmra.mrb[0].mxu0 %v301
  %v442 = vpop.f32.mrb[0].mxu0
  %v443 = vadd.f32 0.0, %v442
  %v444 = vpop.f32.mrb[0].mxu0
  %445 = vmatprep.mubr.f32.mxu0 0.0
  %446 = vmatmul.mubr.f32.gmra.mrb[0].mxu0 %v304
  %v447 = vpop.f32.mrb[0].mxu0
  %v448 = vadd.f32 0.0, %v447
  %v449 = vpop.f32.mrb[0].mxu0
  %450 = vdwg.mxu0
  %vm451 = vcmask 392192
  %v453 = vsel %vm451, %v241, 0
  %v456 = vsel %vm451, %v242, 0
  %v459 = vsel %vm451, %v243, 0
  %v462 = vsel %vm451, %v244, 0
  %v465 = vsel %vm451, %v245, 0
  %v468 = vsel %vm451, %v246, 0
  %v471 = vsel %vm451, %v247, 0
  %v474 = vsel %vm451, %v248, 0
  %v477 = vsel %vm451, %v249, 0
  %v480 = vsel %vm451, %v250, 0
  %v483 = vsel %vm451, %v251, 0
  %v486 = vsel %vm451, %v252, 0
  %v489 = vsel %vm451, %v253, 0
  %v492 = vsel %vm451, %v254, 0
  %v495 = vsel %vm451, %v255, 0
  %v498 = vsel %vm451, %v256, 0
  %500 = vmatprep.subr.mxu0 0.0
  %501 = vmatpush1.msra.mxu0 %v57
  %502 = vmatprep.subr.mxu0 0.0
  %503 = vmatpush1.msra.mxu0 %v58
  %504 = vmatprep.subr.mxu0 0.0
  %505 = vmatpush1.msra.mxu0 %v59
  %506 = vmatprep.subr.mxu0 0.0
  %507 = vmatpush1.msra.mxu0 %v60
  %508 = vmatprep.subr.mxu0 0.0
  %509 = vmatpush1.msra.mxu0 %v61
  %510 = vmatprep.subr.mxu0 0.0
  %511 = vmatpush1.msra.mxu0 %v62
  %512 = vmatprep.subr.mxu0 0.0
  %513 = vmatpush1.msra.mxu0 0.0
  %514 = vmatprep.subr.mxu0 0.0
  %515 = vmatpush1.msra.mxu0 0.0
  %516 = vmatprep.subr.mxu0 0.0
  %517 = vmatpush1.msra.mxu0 0.0
  %518 = vmatprep.subr.mxu0 0.0
  %519 = vmatpush1.msra.mxu0 0.0
  %520 = vmatprep.subr.mxu0 0.0
  %521 = vmatpush1.msra.mxu0 0.0
  %522 = vmatprep.subr.mxu0 0.0
  %523 = vmatpush1.msra.mxu0 0.0
  %524 = vmatprep.subr.mxu0 0.0
  %525 = vmatpush1.msra.mxu0 0.0
  %526 = vmatprep.subr.mxu0 0.0
  %527 = vmatpush1.msra.mxu0 0.0
  %528 = vmatprep.subr.mxu0 0.0
  %529 = vmatpush1.msra.mxu0 0.0
  %530 = vmatprep.subr.mxu0 0.0
  %531 = vmatpush1.msra.mxu0 0.0
  %532 = vmatprep.subr.mxu0 0.0
  %533 = vmatpush1.msra.mxu0 0.0
  %534 = vmatprep.subr.mxu0 0.0
  %535 = vmatpush1.msra.mxu0 0.0
  %536 = vmatprep.subr.mxu0 0.0
  %537 = vmatpush1.msra.mxu0 0.0
  %538 = vmatprep.subr.mxu0 0.0
  %539 = vmatpush1.msra.mxu0 0.0
  %540 = vmatprep.subr.mxu0 0.0
  %541 = vmatpush1.msra.mxu0 0.0
  %542 = vmatprep.subr.mxu0 0.0
  %543 = vmatpush1.msra.mxu0 0.0
  %544 = vmatprep.subr.mxu0 0.0
  %545 = vmatpush1.msra.mxu0 0.0
  %546 = vmatprep.subr.mxu0 0.0
  %547 = vmatpush1.msra.mxu0 0.0
  %548 = vmatprep.subr.mxu0 0.0
  %549 = vmatpush1.msra.mxu0 0.0
  %550 = vmatprep.subr.mxu0 0.0
  %551 = vmatpush1.msra.mxu0 0.0
  %552 = vmatprep.subr.mxu0 0.0
  %553 = vmatpush1.msra.mxu0 0.0
  %554 = vmatprep.subr.mxu0 0.0
  %555 = vmatpush1.msra.mxu0 0.0
  %556 = vmatprep.subr.mxu0 0.0
  %557 = vmatpush1.msra.mxu0 0.0
  %558 = vmatprep.subr.mxu0 0.0
  %559 = vmatpush1.msra.mxu0 0.0
  %560 = vmatprep.subr.mxu0 0.0
  %561 = vmatpush1.msra.mxu0 0.0
  %562 = vmatprep.subr.mxu0 0.0
  %563 = vmatpush1.msra.mxu0 0.0
  %564 = vmatprep.mubr.f32.mxu0 0.0
  %565 = vmatmul.mubr.f32.gmra.mrb[0].mxu0 %v453
  %v566 = vpop.f32.mrb[0].mxu0
  %v567 = vadd.f32 0.0, %v566
  %v568 = vpop.f32.mrb[0].mxu0
  %569 = vmatprep.mubr.f32.mxu0 0.0
  %570 = vmatmul.mubr.f32.gmra.mrb[0].mxu0 %v456
  %v571 = vpop.f32.mrb[0].mxu0
  %v572 = vadd.f32 0.0, %v571
  %v573 = vpop.f32.mrb[0].mxu0
  %574 = vmatprep.mubr.f32.mxu0 0.0
  %575 = vmatmul.mubr.f32.gmra.mrb[0].mxu0 %v459
  %v576 = vpop.f32.mrb[0].mxu0
  %v577 = vadd.f32 0.0, %v576
  %v578 = vpop.f32.mrb[0].mxu0
  %579 = vmatprep.mubr.f32.mxu0 0.0
  %580 = vmatmul.mubr.f32.gmra.mrb[0].mxu0 %v462
  %v581 = vpop.f32.mrb[0].mxu0
  %v582 = vadd.f32 0.0, %v581
  %v583 = vpop.f32.mrb[0].mxu0
  %584 = vmatprep.mubr.f32.mxu0 0.0
  %585 = vmatmul.mubr.f32.gmra.mrb[0].mxu0 %v465
  %v586 = vpop.f32.mrb[0].mxu0
  %v587 = vadd.f32 0.0, %v586
  %v588 = vpop.f32.mrb[0].mxu0
  %589 = vmatprep.mubr.f32.mxu0 0.0
  %590 = vmatmul.mubr.f32.gmra.mrb[0].mxu0 %v468
  %v591 = vpop.f32.mrb[0].mxu0
  %v592 = vadd.f32 0.0, %v591
  %v593 = vpop.f32.mrb[0].mxu0
  %594 = vmatprep.mubr.f32.mxu0 0.0
  %595 = vmatmul.mubr.f32.gmra.mrb[0].mxu0 %v471
  %v596 = vpop.f32.mrb[0].mxu0
  %v597 = vadd.f32 0.0, %v596
  %v598 = vpop.f32.mrb[0].mxu0
  %599 = vmatprep.mubr.f32.mxu0 0.0
  %600 = vmatmul.mubr.f32.gmra.mrb[0].mxu0 %v474
  %v601 = vpop.f32.mrb[0].mxu0
  %v602 = vadd.f32 0.0, %v601
  %v603 = vpop.f32.mrb[0].mxu0
  %604 = vmatprep.mubr.f32.mxu0 0.0
  %605 = vmatmul.mubr.f32.gmra.mrb[0].mxu0 %v477
  %v606 = vpop.f32.mrb[0].mxu0
  %v607 = vadd.f32 0.0, %v606
  %v608 = vpop.f32.mrb[0].mxu0
  %609 = vmatprep.mubr.f32.mxu0 0.0
  %610 = vmatmul.mubr.f32.gmra.mrb[0].mxu0 %v480
  %v611 = vpop.f32.mrb[0].mxu0
  %v612 = vadd.f32 0.0, %v611
  %v613 = vpop.f32.mrb[0].mxu0
  %614 = vmatprep.mubr.f32.mxu0 0.0
  %615 = vmatmul.mubr.f32.gmra.mrb[0].mxu0 %v483
  %v616 = vpop.f32.mrb[0].mxu0
  %v617 = vadd.f32 0.0, %v616
  %v618 = vpop.f32.mrb[0].mxu0
  %619 = vmatprep.mubr.f32.mxu0 0.0
  %620 = vmatmul.mubr.f32.gmra.mrb[0].mxu0 %v486
  %v621 = vpop.f32.mrb[0].mxu0
  %v622 = vadd.f32 0.0, %v621
  %v623 = vpop.f32.mrb[0].mxu0
  %624 = vmatprep.mubr.f32.mxu0 0.0
  %625 = vmatmul.mubr.f32.gmra.mrb[0].mxu0 %v489
  %v626 = vpop.f32.mrb[0].mxu0
  %v627 = vadd.f32 0.0, %v626
  %v628 = vpop.f32.mrb[0].mxu0
  %629 = vmatprep.mubr.f32.mxu0 0.0
  %630 = vmatmul.mubr.f32.gmra.mrb[0].mxu0 %v492
  %v631 = vpop.f32.mrb[0].mxu0
  %v632 = vadd.f32 0.0, %v631
  %v633 = vpop.f32.mrb[0].mxu0
  %634 = vmatprep.mubr.f32.mxu0 0.0
  %635 = vmatmul.mubr.f32.gmra.mrb[0].mxu0 %v495
  %v636 = vpop.f32.mrb[0].mxu0
  %v637 = vadd.f32 0.0, %v636
  %v638 = vpop.f32.mrb[0].mxu0
  %639 = vmatprep.mubr.f32.mxu0 0.0
  %640 = vmatmul.mubr.f32.gmra.mrb[0].mxu0 %v498
  %v641 = vpop.f32.mrb[0].mxu0
  %v642 = vadd.f32 0.0, %v641
  %v643 = vpop.f32.mrb[0].mxu0
  %644 = vdwg.mxu0
  %v645 = vmul.f32 %v373, %v567
  %v646 = vmul.f32 %v378, %v572
  %v647 = vmul.f32 %v383, %v577
  %v648 = vmul.f32 %v388, %v582
  %v649 = vmul.f32 %v393, %v587
  %v650 = vmul.f32 %v398, %v592
  %v651 = vmul.f32 %v403, %v597
  %v652 = vmul.f32 %v408, %v602
  %v653 = vmul.f32 %v413, %v607
  %v654 = vmul.f32 %v418, %v612
  %v655 = vmul.f32 %v423, %v617
  %v656 = vmul.f32 %v428, %v622
  %v657 = vmul.f32 %v433, %v627
  %v658 = vmul.f32 %v438, %v632
  %v659 = vmul.f32 %v443, %v637
  %v660 = vmul.f32 %v448, %v642
  %661 = vadd.xlane.f32.xlu0 %v645
  %v662 = vpop.xlane.xlu0 %661
  %663 = vadd.xlane.f32.xlu0 %v646
  %v664 = vpop.xlane.xlu0 %663
  %665 = vadd.xlane.f32.xlu0 %v647
  %v666 = vpop.xlane.xlu0 %665
  %667 = vadd.xlane.f32.xlu0 %v648
  %v668 = vpop.xlane.xlu0 %667
  %669 = vadd.xlane.f32.xlu0 %v649
  %v670 = vpop.xlane.xlu0 %669
  %671 = vadd.xlane.f32.xlu0 %v650
  %v672 = vpop.xlane.xlu0 %671
  %673 = vadd.xlane.f32.xlu0 %v651
  %v674 = vpop.xlane.xlu0 %673
  %675 = vadd.xlane.f32.xlu0 %v652
  %v676 = vpop.xlane.xlu0 %675
  %677 = vadd.xlane.f32.xlu0 %v653
  %v678 = vpop.xlane.xlu0 %677
  %679 = vadd.xlane.f32.xlu0 %v654
  %v680 = vpop.xlane.xlu0 %679
  %681 = vadd.xlane.f32.xlu0 %v655
  %v682 = vpop.xlane.xlu0 %681
  %683 = vadd.xlane.f32.xlu0 %v656
  %v684 = vpop.xlane.xlu0 %683
  %685 = vadd.xlane.f32.xlu0 %v657
  %v686 = vpop.xlane.xlu0 %685
  %687 = vadd.xlane.f32.xlu0 %v658
  %v688 = vpop.xlane.xlu0 %687
  %689 = vadd.xlane.f32.xlu0 %v659
  %v690 = vpop.xlane.xlu0 %689
  %691 = vadd.xlane.f32.xlu0 %v660
  %v692 = vpop.xlane.xlu0 %691
  %vm693 = vcmask 7168
  %694 = vst.msk [vmem:[%s4] sm:$0xff] %vm693, %v662
  %695 = vst.msk [vmem:[%s4 + $0x8] sm:$0xff] %vm693, %v664
  %696 = vst.msk [vmem:[%s4 + $0x10] sm:$0xff] %vm693, %v666
  %697 = vst.msk [vmem:[%s4 + $0x18] sm:$0xff] %vm693, %v668
  %698 = vst.msk [vmem:[%s4 + $0x20] sm:$0xff] %vm693, %v670
  %699 = vst.msk [vmem:[%s4 + $0x28] sm:$0xff] %vm693, %v672
  %700 = vst.msk [vmem:[%s4 + $0x30] sm:$0xff] %vm693, %v674
  %701 = vst.msk [vmem:[%s4 + $0x38] sm:$0xff] %vm693, %v676
  %702 = vst.msk [vmem:[%s4 + $0x40] sm:$0xff] %vm693, %v678
  %703 = vst.msk [vmem:[%s4 + $0x48] sm:$0xff] %vm693, %v680
  %704 = vst.msk [vmem:[%s4 + $0x50] sm:$0xff] %vm693, %v682
  %705 = vst.msk [vmem:[%s4 + $0x58] sm:$0xff] %vm693, %v684
  %706 = vst.msk [vmem:[%s4 + $0x60] sm:$0xff] %vm693, %v686
  %707 = vst.msk [vmem:[%s4 + $0x68] sm:$0xff] %vm693, %v688
  %708 = vst.msk [vmem:[%s4 + $0x70] sm:$0xff] %vm693, %v690
  %709 = vst.msk [vmem:[%s4 + $0x78] sm:$0xff] %vm693, %v692
  // Predicated region
  $region18: #{tpu_custom_call.1} parent=0 // pred_check
    _
  $region19: #{tpu_custom_call.1} parent=0 // pred_check_branch
    %711 = sbr.rel (0) target = $region21
  $region20: #{tpu_custom_call.1} parent=0 // pred_region
    _
  $region21: #{tpu_custom_call.1} parent=0 // pred_fallthru
    _
  // Predicated region
  $region22: #{tpu_custom_call.1} parent=0 // pred_check
    _
  $region23: #{tpu_custom_call.1} parent=0 // pred_check_branch
    %713 = sbr.rel (0) target = $region25
  $region24: #{tpu_custom_call.1} parent=0 // pred_region
    _
  $region25: #{tpu_custom_call.1} parent=0 // pred_fallthru
    _

</llo_original>
